<compile_context>
chip_gen: v7x
topology: tpu7x:2x2x1
jax: 0.10.0
libtpu: 0.0.40
codegen_flags: <defaults>
</compile_context>

<pallas_src>
import jax
import jax.numpy as jnp
from jax.experimental import pallas as pl
from jax.experimental.pallas import tpu as pltpu

HIDDEN = 1024
KC = 256        # hidden-dim chunk for layer-1 / layer-2 overlap
TB_MAX = 1024   # max batch tile (multiple of 256 MXU rows)


def mlp_kernel(x_ref, w1_ref, b1_ref, w2_ref, b2_ref, w3_ref, b3_ref, o_ref):
    # x_ref / o_ref: [1, TB]  f32  (lane-dense batch tile)
    # w1_ref: [1, H] bf16,  b1_ref: [1, H] f32
    # w2_ref: [H, H] bf16,  b2_ref: [1, H] f32
    # w3_ref: [1, H] bf16 (Linear(H,1).weight transposed), b3_ref: [1, 1] f32
    tb = x_ref.shape[1]

    # Lane-dense load, then relayout to a batch-major column (cheap XLU pass).
    x_col = x_ref[...].reshape(tb, 1)                                # [TB, 1] f32

    # Layers 1 + 2, K-chunked so layer-1 VPU work for chunk k+1 overlaps the
    # MXU pushes of chunk k.  Layer 1 (K == 1) is a VPU broadcast-multiply,
    # never a degenerate MXU matmul.  f32 elementwise (safe on v5e); matmul is
    # bf16 x bf16 -> f32 accumulation on the MXU.
    acc = jnp.zeros((tb, HIDDEN), jnp.float32)
    for kc in range(HIDDEN // KC):
        sl = slice(kc * KC, (kc + 1) * KC)
        w1_c = w1_ref[:, sl].astype(jnp.float32)                     # [1, KC]
        h1_c = jnp.maximum(x_col * w1_c + b1_ref[:, sl], 0.0)        # [TB, KC]
        acc += jnp.dot(h1_c.astype(jnp.bfloat16), w2_ref[sl, :],
                       preferred_element_type=jnp.float32)           # [TB, H]
    h2 = jnp.maximum(acc + b2_ref[...], 0.0)                         # [TB, H]

    # Layer 3: Linear(H, 1).  N == 1 -> XLU lane reduction (no MXU).
    w3 = w3_ref[...].astype(jnp.float32)                             # [1, H]
    out_col = jnp.sum(h2 * w3, axis=-1, keepdims=True) + b3_ref[...]  # [TB, 1]

    # Relayout back to the lane-dense output block.
    o_ref[...] = out_col.reshape(1, tb)


def _round_up(n, m):
    return ((n + m - 1) // m) * m


def _pick_tb(B):
    # Biggest tile up to TB_MAX, multiple of 256; keep >= 2 tiles when there is
    # enough work so v7x can shard the "parallel" batch axis over its 2 TCs.
    tb = min(TB_MAX, _round_up(B, 256))
    if B > 256 and pl.cdiv(B, tb) < 2:
        tb = _round_up(pl.cdiv(B, 2), 256)
    return tb


def mlp_forward(x, params, tb=None):
    w1, b1, w2, b2, w3, b3 = params
    B = x.shape[0]
    if tb is None:
        tb = _pick_tb(B)
    n_blocks = pl.cdiv(B, tb)
    Bp = n_blocks * tb
    if Bp != B:
        x = jnp.pad(x, ((0, Bp - B), (0, 0)))
    # Lane-dense layout: each grid step reads/writes one contiguous (1, tb) row.
    x_ld = x.reshape(n_blocks, tb)

    const2d = lambda i: (0, 0)  # weights/biases: same block every step (resident)
    out = pl.pallas_call(
        mlp_kernel,
        out_shape=jax.ShapeDtypeStruct((n_blocks, tb), jnp.float32),
        grid=(n_blocks,),
        in_specs=[
            pl.BlockSpec((1, tb), lambda i: (i, 0)),          # x (lane-dense)
            pl.BlockSpec((1, HIDDEN), const2d),               # w1
            pl.BlockSpec((1, HIDDEN), const2d),               # b1
            pl.BlockSpec((HIDDEN, HIDDEN), const2d),          # w2 (bf16, 2 MiB)
            pl.BlockSpec((1, HIDDEN), const2d),               # b2
            pl.BlockSpec((1, HIDDEN), const2d),               # w3
            pl.BlockSpec((1, 1), const2d),                    # b3
        ],
        out_specs=pl.BlockSpec((1, tb), lambda i: (i, 0)),
        compiler_params=pltpu.CompilerParams(
            dimension_semantics=("parallel",),   # v7x: shard batch tiles over 2 TCs
            vmem_limit_bytes=32 << 20,           # ~16 MiB peak at tb=1024; fits v7x 64 MiB
        ),
    )(x_ld, w1, b1, w2, b2, w3, b3)
    return out.reshape(Bp, 1)[:B]


def init_params(key):
    """Deterministic init mimicking torch.nn.Linear default U[-1/sqrt(fan_in), +].

    Weights stored as [in_features, out_features] (x @ W + b) in bfloat16;
    biases kept in float32.
    """
    k1, k2, k3, k4, k5, k6 = jax.random.split(key, 6)

    def uniform(k, shape, fan_in, dtype):
        bound = 1.0 / (fan_in ** 0.5)
        return jax.random.uniform(k, shape, jnp.float32, -bound, bound).astype(dtype)

    w1 = uniform(k1, (1, HIDDEN), 1, jnp.bfloat16)            # Linear(1, 1024)
    b1 = uniform(k2, (1, HIDDEN), 1, jnp.float32)
    w2 = uniform(k3, (HIDDEN, HIDDEN), HIDDEN, jnp.bfloat16)  # Linear(1024, 1024)
    b2 = uniform(k4, (1, HIDDEN), HIDDEN, jnp.float32)
    w3 = uniform(k5, (1, HIDDEN), HIDDEN, jnp.bfloat16)       # Linear(1024, 1) weight.T
    b3 = uniform(k6, (1, 1), HIDDEN, jnp.float32)
    return (w1, b1, w2, b2, w3, b3)


def mlp_reference(x, params):
    """Plain-JAX reference with matching numerics (bf16 weights, f32 accum)."""
    w1, b1, w2, b2, w3, b3 = params
    h1 = jnp.maximum(x * w1.astype(jnp.float32) + b1, 0.0)
    h2 = jnp.dot(h1.astype(jnp.bfloat16), w2, preferred_element_type=jnp.float32)
    h2 = jnp.maximum(h2 + b2, 0.0)
    return jnp.sum(h2 * w3.astype(jnp.float32), axis=-1, keepdims=True) + b3


if __name__ == "__main__":
    key = jax.random.PRNGKey(0)
    pkey, xkey, xkey2 = jax.random.split(key, 3)
    params = init_params(pkey)

    # Small toy batch (single grid step, padded to the tile size internally).
    B = 8
    x = jax.random.normal(xkey, (B, 1), jnp.float32)
    out = jax.block_until_ready(mlp_forward(x, params))
    ref = mlp_reference(x, params)
    assert out.shape == (B, 1), out.shape
    assert jnp.allclose(out, ref, atol=2e-3, rtol=2e-3), (out, ref)

    # Multi-tile batch: exercises the grid, weight residency, and pad/slice path.
    B2 = 260
    x2 = jax.random.normal(xkey2, (B2, 1), jnp.float32)
    out2 = jax.block_until_ready(mlp_forward(x2, params))
    ref2 = mlp_reference(x2, params)
    assert out2.shape == (B2, 1), out2.shape
    assert jnp.allclose(out2, ref2, atol=2e-3, rtol=2e-3)

    print("KERNEL_OK")
</pallas_src>

<mosaic_0001>
module attributes {stable_mosaic.version = 11 : i64} {
  func.func @mlp_kernel(%arg0: i32, %arg1: memref<1x256xf32, #tpu.memory_space<vmem>>, %arg2: memref<1x1024xbf16, #tpu.memory_space<vmem>>, %arg3: memref<1x1024xf32, #tpu.memory_space<vmem>>, %arg4: memref<1024x1024xbf16, #tpu.memory_space<vmem>>, %arg5: memref<1x1024xf32, #tpu.memory_space<vmem>>, %arg6: memref<1x1024xbf16, #tpu.memory_space<vmem>>, %arg7: memref<1x1xf32, #tpu.memory_space<vmem>>, %arg8: memref<1x256xf32, #tpu.memory_space<vmem>>) attributes {dimension_semantics = [#tpu.dimension_semantics<parallel>], iteration_bounds = array<i64: 1>, scalar_prefetch = 0 : i64, scratch_operands = 0 : i64, tpu.core_type = #tpu.core_type<tc>, window_params = [{transform_indices = @transform_0, window_bounds = array<i64: 1, 256>}, {pipeline_mode = #tpu.pipeline_mode<synchronous>, transform_indices = @transform_1, window_bounds = array<i64: 1, 1024>}, {pipeline_mode = #tpu.pipeline_mode<synchronous>, transform_indices = @transform_2, window_bounds = array<i64: 1, 1024>}, {pipeline_mode = #tpu.pipeline_mode<synchronous>, transform_indices = @transform_3, window_bounds = array<i64: 1024, 1024>}, {pipeline_mode = #tpu.pipeline_mode<synchronous>, transform_indices = @transform_4, window_bounds = array<i64: 1, 1024>}, {pipeline_mode = #tpu.pipeline_mode<synchronous>, transform_indices = @transform_5, window_bounds = array<i64: 1, 1024>}, {pipeline_mode = #tpu.pipeline_mode<synchronous>, transform_indices = @transform_6, window_bounds = array<i64: 1, 1>}, {transform_indices = @transform_7, window_bounds = array<i64: 1, 256>}]} {
    %c0 = arith.constant 0 : index
    %c0_0 = arith.constant 0 : index
    %0 = vector.load %arg1[%c0, %c0_0] : memref<1x256xf32, #tpu.memory_space<vmem>>, vector<1x256xf32>
    %1 = vector.shape_cast %0 : vector<1x256xf32> to vector<256x1xf32>
    %cst = arith.constant 0.000000e+00 : f32
    %2 = vector.broadcast %cst : f32 to vector<256x1024xf32>
    %c0_1 = arith.constant 0 : index
    %c0_2 = arith.constant 0 : index
    %3 = vector.load %arg2[%c0_1, %c0_2] : memref<1x1024xbf16, #tpu.memory_space<vmem>>, vector<1x256xbf16>
    %4 = arith.extf %3 : vector<1x256xbf16> to vector<1x256xf32>
    %5 = vector.broadcast %1 : vector<256x1xf32> to vector<256x256xf32>
    %6 = vector.broadcast %4 : vector<1x256xf32> to vector<256x256xf32>
    %7 = arith.mulf %5, %6 : vector<256x256xf32>
    %c0_3 = arith.constant 0 : index
    %c0_4 = arith.constant 0 : index
    %8 = vector.load %arg3[%c0_3, %c0_4] : memref<1x1024xf32, #tpu.memory_space<vmem>>, vector<1x256xf32>
    %9 = vector.broadcast %8 : vector<1x256xf32> to vector<256x256xf32>
    %10 = arith.addf %7, %9 : vector<256x256xf32>
    %cst_5 = arith.constant 0.000000e+00 : f32
    %11 = vector.broadcast %cst_5 : f32 to vector<256x256xf32>
    %12 = arith.maximumf %10, %11 : vector<256x256xf32>
    %13 = arith.truncf %12 : vector<256x256xf32> to vector<256x256xbf16>
    %c0_6 = arith.constant 0 : index
    %c0_7 = arith.constant 0 : index
    %14 = vector.load %arg4[%c0_6, %c0_7] : memref<1024x1024xbf16, #tpu.memory_space<vmem>>, vector<256x1024xbf16>
    %cst_8 = arith.constant dense<0.000000e+00> : vector<256x1024xf32>
    %15 = tpu.matmul %13, %14, %cst_8 {dimension_numbers = #tpu.dot_dimension_numbers<[1], [0], [0], [1], [0, 0, 1, 1], [], []>} : vector<256x256xbf16>, vector<256x1024xbf16>, vector<256x1024xf32> -> vector<256x1024xf32>
    %16 = arith.addf %2, %15 : vector<256x1024xf32>
    %c0_9 = arith.constant 0 : index
    %c256 = arith.constant 256 : index
    %17 = vector.load %arg2[%c0_9, %c256] : memref<1x1024xbf16, #tpu.memory_space<vmem>>, vector<1x256xbf16>
    %18 = arith.extf %17 : vector<1x256xbf16> to vector<1x256xf32>
    %19 = vector.broadcast %1 : vector<256x1xf32> to vector<256x256xf32>
    %20 = vector.broadcast %18 : vector<1x256xf32> to vector<256x256xf32>
    %21 = arith.mulf %19, %20 : vector<256x256xf32>
    %c0_10 = arith.constant 0 : index
    %c256_11 = arith.constant 256 : index
    %22 = vector.load %arg3[%c0_10, %c256_11] : memref<1x1024xf32, #tpu.memory_space<vmem>>, vector<1x256xf32>
    %23 = vector.broadcast %22 : vector<1x256xf32> to vector<256x256xf32>
    %24 = arith.addf %21, %23 : vector<256x256xf32>
    %cst_12 = arith.constant 0.000000e+00 : f32
    %25 = vector.broadcast %cst_12 : f32 to vector<256x256xf32>
    %26 = arith.maximumf %24, %25 : vector<256x256xf32>
    %27 = arith.truncf %26 : vector<256x256xf32> to vector<256x256xbf16>
    %c256_13 = arith.constant 256 : index
    %c0_14 = arith.constant 0 : index
    %28 = vector.load %arg4[%c256_13, %c0_14] : memref<1024x1024xbf16, #tpu.memory_space<vmem>>, vector<256x1024xbf16>
    %cst_15 = arith.constant dense<0.000000e+00> : vector<256x1024xf32>
    %29 = tpu.matmul %27, %28, %cst_15 {dimension_numbers = #tpu.dot_dimension_numbers<[1], [0], [0], [1], [0, 0, 1, 1], [], []>} : vector<256x256xbf16>, vector<256x1024xbf16>, vector<256x1024xf32> -> vector<256x1024xf32>
    %30 = arith.addf %16, %29 : vector<256x1024xf32>
    %c0_16 = arith.constant 0 : index
    %c512 = arith.constant 512 : index
    %31 = vector.load %arg2[%c0_16, %c512] : memref<1x1024xbf16, #tpu.memory_space<vmem>>, vector<1x256xbf16>
    %32 = arith.extf %31 : vector<1x256xbf16> to vector<1x256xf32>
    %33 = vector.broadcast %1 : vector<256x1xf32> to vector<256x256xf32>
    %34 = vector.broadcast %32 : vector<1x256xf32> to vector<256x256xf32>
    %35 = arith.mulf %33, %34 : vector<256x256xf32>
    %c0_17 = arith.constant 0 : index
    %c512_18 = arith.constant 512 : index
    %36 = vector.load %arg3[%c0_17, %c512_18] : memref<1x1024xf32, #tpu.memory_space<vmem>>, vector<1x256xf32>
    %37 = vector.broadcast %36 : vector<1x256xf32> to vector<256x256xf32>
    %38 = arith.addf %35, %37 : vector<256x256xf32>
    %cst_19 = arith.constant 0.000000e+00 : f32
    %39 = vector.broadcast %cst_19 : f32 to vector<256x256xf32>
    %40 = arith.maximumf %38, %39 : vector<256x256xf32>
    %41 = arith.truncf %40 : vector<256x256xf32> to vector<256x256xbf16>
    %c512_20 = arith.constant 512 : index
    %c0_21 = arith.constant 0 : index
    %42 = vector.load %arg4[%c512_20, %c0_21] : memref<1024x1024xbf16, #tpu.memory_space<vmem>>, vector<256x1024xbf16>
    %cst_22 = arith.constant dense<0.000000e+00> : vector<256x1024xf32>
    %43 = tpu.matmul %41, %42, %cst_22 {dimension_numbers = #tpu.dot_dimension_numbers<[1], [0], [0], [1], [0, 0, 1, 1], [], []>} : vector<256x256xbf16>, vector<256x1024xbf16>, vector<256x1024xf32> -> vector<256x1024xf32>
    %44 = arith.addf %30, %43 : vector<256x1024xf32>
    %c0_23 = arith.constant 0 : index
    %c768 = arith.constant 768 : index
    %45 = vector.load %arg2[%c0_23, %c768] : memref<1x1024xbf16, #tpu.memory_space<vmem>>, vector<1x256xbf16>
    %46 = arith.extf %45 : vector<1x256xbf16> to vector<1x256xf32>
    %47 = vector.broadcast %1 : vector<256x1xf32> to vector<256x256xf32>
    %48 = vector.broadcast %46 : vector<1x256xf32> to vector<256x256xf32>
    %49 = arith.mulf %47, %48 : vector<256x256xf32>
    %c0_24 = arith.constant 0 : index
    %c768_25 = arith.constant 768 : index
    %50 = vector.load %arg3[%c0_24, %c768_25] : memref<1x1024xf32, #tpu.memory_space<vmem>>, vector<1x256xf32>
    %51 = vector.broadcast %50 : vector<1x256xf32> to vector<256x256xf32>
    %52 = arith.addf %49, %51 : vector<256x256xf32>
    %cst_26 = arith.constant 0.000000e+00 : f32
    %53 = vector.broadcast %cst_26 : f32 to vector<256x256xf32>
    %54 = arith.maximumf %52, %53 : vector<256x256xf32>
    %55 = arith.truncf %54 : vector<256x256xf32> to vector<256x256xbf16>
    %c768_27 = arith.constant 768 : index
    %c0_28 = arith.constant 0 : index
    %56 = vector.load %arg4[%c768_27, %c0_28] : memref<1024x1024xbf16, #tpu.memory_space<vmem>>, vector<256x1024xbf16>
    %cst_29 = arith.constant dense<0.000000e+00> : vector<256x1024xf32>
    %57 = tpu.matmul %55, %56, %cst_29 {dimension_numbers = #tpu.dot_dimension_numbers<[1], [0], [0], [1], [0, 0, 1, 1], [], []>} : vector<256x256xbf16>, vector<256x1024xbf16>, vector<256x1024xf32> -> vector<256x1024xf32>
    %58 = arith.addf %44, %57 : vector<256x1024xf32>
    %c0_30 = arith.constant 0 : index
    %c0_31 = arith.constant 0 : index
    %59 = vector.load %arg5[%c0_30, %c0_31] : memref<1x1024xf32, #tpu.memory_space<vmem>>, vector<1x1024xf32>
    %60 = vector.broadcast %59 : vector<1x1024xf32> to vector<256x1024xf32>
    %61 = arith.addf %58, %60 : vector<256x1024xf32>
    %cst_32 = arith.constant 0.000000e+00 : f32
    %62 = vector.broadcast %cst_32 : f32 to vector<256x1024xf32>
    %63 = arith.maximumf %61, %62 : vector<256x1024xf32>
    %c0_33 = arith.constant 0 : index
    %c0_34 = arith.constant 0 : index
    %64 = vector.load %arg6[%c0_33, %c0_34] : memref<1x1024xbf16, #tpu.memory_space<vmem>>, vector<1x1024xbf16>
    %65 = arith.extf %64 : vector<1x1024xbf16> to vector<1x1024xf32>
    %66 = vector.broadcast %65 : vector<1x1024xf32> to vector<256x1024xf32>
    %67 = arith.mulf %63, %66 : vector<256x1024xf32>
    %cst_35 = arith.constant dense<0.000000e+00> : vector<256xf32>
    %68 = vector.multi_reduction <add>, %67, %cst_35 [1] : vector<256x1024xf32> to vector<256xf32>
    %69 = vector.shape_cast %68 : vector<256xf32> to vector<256x1xf32>
    %c0_36 = arith.constant 0 : index
    %c0_37 = arith.constant 0 : index
    %70 = vector.load %arg7[%c0_36, %c0_37] : memref<1x1xf32, #tpu.memory_space<vmem>>, vector<1x1xf32>
    %71 = vector.broadcast %70 : vector<1x1xf32> to vector<256x1xf32>
    %72 = arith.addf %69, %71 : vector<256x1xf32>
    %73 = vector.shape_cast %72 : vector<256x1xf32> to vector<1x256xf32>
    %c0_38 = arith.constant 0 : index
    %c0_39 = arith.constant 0 : index
    %74 = vector.load %arg8[%c0_38, %c0_39] : memref<1x256xf32, #tpu.memory_space<vmem>>, vector<1x256xf32>
    tpu.vector_store %arg8[%c0_38, %c0_39], %73 {strides = array<i32>} : memref<1x256xf32, #tpu.memory_space<vmem>>, vector<1x256xf32>,
    return
  }
  func.func @transform_0(%arg0: i32) -> (i32, i32) {
    %c0_i32 = arith.constant 0 : i32
    %c0_i32_0 = arith.constant 0 : i32
    return %arg0, %c0_i32 : i32, i32
  }
  func.func @transform_1(%arg0: i32) -> (i32, i32) {
    %c0_i32 = arith.constant 0 : i32
    %c0_i32_0 = arith.constant 0 : i32
    %c0_i32_1 = arith.constant 0 : i32
    return %c0_i32, %c0_i32_0 : i32, i32
  }
  func.func @transform_2(%arg0: i32) -> (i32, i32) {
    %c0_i32 = arith.constant 0 : i32
    %c0_i32_0 = arith.constant 0 : i32
    %c0_i32_1 = arith.constant 0 : i32
    return %c0_i32, %c0_i32_0 : i32, i32
  }
  func.func @transform_3(%arg0: i32) -> (i32, i32) {
    %c0_i32 = arith.constant 0 : i32
    %c0_i32_0 = arith.constant 0 : i32
    %c0_i32_1 = arith.constant 0 : i32
    return %c0_i32, %c0_i32_0 : i32, i32
  }
  func.func @transform_4(%arg0: i32) -> (i32, i32) {
    %c0_i32 = arith.constant 0 : i32
    %c0_i32_0 = arith.constant 0 : i32
    %c0_i32_1 = arith.constant 0 : i32
    return %c0_i32, %c0_i32_0 : i32, i32
  }
  func.func @transform_5(%arg0: i32) -> (i32, i32) {
    %c0_i32 = arith.constant 0 : i32
    %c0_i32_0 = arith.constant 0 : i32
    %c0_i32_1 = arith.constant 0 : i32
    return %c0_i32, %c0_i32_0 : i32, i32
  }
  func.func @transform_6(%arg0: i32) -> (i32, i32) {
    %c0_i32 = arith.constant 0 : i32
    %c0_i32_0 = arith.constant 0 : i32
    %c0_i32_1 = arith.constant 0 : i32
    return %c0_i32, %c0_i32_0 : i32, i32
  }
  func.func @transform_7(%arg0: i32) -> (i32, i32) {
    %c0_i32 = arith.constant 0 : i32
    %c0_i32_0 = arith.constant 0 : i32
    return %arg0, %c0_i32 : i32, i32
  }
}

</mosaic_0001>

<llo_original>
// kernel: tpu_custom_call.1
$region0: #{tpu_custom_call.1}
  #allocation0 [shape = 'u32[]', space=smem, size = 0x4, offset = 0x4, fixed_abs, tag = 'smem constant byte address 0x4 - core index']
  #allocation1 [shape = 'u32[144,128]{1,0:T(1,128)}', space=vmem, size = 0x12000, scoped, tag = 'internal scratch']
  #allocation2 [shape = 'f32[1,1]{1,0:T(1,128)S(1)}', space=vmem, size = 0x200, scoped, tag = 'scoped memory for tpu_custom_call.1']
  %s0 = inlined_call_operand.hbm [shape: f32[1,256], index: 0, kind: input, shape index: {}]
  %s1 = inlined_call_operand.hbm [shape: bf16[1,1024], index: 1, kind: input, shape index: {}]
  %s2 = inlined_call_operand.hbm [shape: f32[1,1024], index: 2, kind: input, shape index: {}]
  %s3 = inlined_call_operand.hbm [shape: bf16[1024,1024], index: 3, kind: input, shape index: {}]
  %s4 = inlined_call_operand.hbm [shape: f32[1,1024], index: 4, kind: input, shape index: {}]
  %s5 = inlined_call_operand.hbm [shape: bf16[1,1024], index: 5, kind: input, shape index: {}]
  %s6 = inlined_call_operand.<no memory space> [shape: f32[1,1], index: 6, kind: input, shape index: {}]
  %s7 = inlined_call_operand.hbm [shape: f32[1,256], index: 7, kind: output, shape index: {}]
  %s8 = sld [smem:[#allocation0]]
  $region62: #{tpu_custom_call.1} parent=0
    _
  %s10 = ssub.s32 1, %s8
  %s11 = scalar_select 0, %s10, %s8
  %v12 = vstv %s6
  %13 = vst [vmem:[#allocation2] sm:$0x1] %v12
  $region1: #{tpu_custom_call.1} parent=0
    #allocation3 [shape = 'u8[1024]{0}', space=vmem, size = 0x400, scoped, tag = 'input window, operand 0, single buffered']
    #allocation4 [shape = 's32[1]{0}', space=sflag, size = 0x4, scoped, tag = 'scoped memory for tpu_custom_call.1']
    #allocation5 [shape = 's32[1]{0}', space=sflag, size = 0x4, scoped, tag = 'scoped memory for tpu_custom_call.1']
    #allocation6 [shape = 'u8[4096]{0}', space=vmem, size = 0x1000, scoped, tag = 'input window, operand 1, single buffered']
    #allocation7 [shape = 's32[1]{0}', space=sflag, size = 0x4, scoped, tag = 'scoped memory for tpu_custom_call.1']
    #allocation8 [shape = 'u8[4096]{0}', space=vmem, size = 0x1000, scoped, tag = 'input window, operand 2, single buffered']
    #allocation9 [shape = 'u8[2097152]{0}', space=vmem, size = 0x200000, scoped, tag = 'input window, operand 3, single buffered']
    #allocation10 [shape = 's32[1]{0}', space=sflag, size = 0x4, scoped, tag = 'scoped memory for tpu_custom_call.1']
    #allocation11 [shape = 'u8[4096]{0}', space=vmem, size = 0x1000, scoped, tag = 'input window, operand 4, single buffered']
    #allocation12 [shape = 'u8[4096]{0}', space=vmem, size = 0x1000, scoped, tag = 'input window, operand 5, single buffered']
    #allocation13 [shape = 's32[1]{0}', space=sflag, size = 0x4, scoped, tag = 'scoped memory for tpu_custom_call.1']
    #allocation14 [shape = 'u8[1024]{0}', space=vmem, size = 0x400, scoped, tag = 'output window, operand 0, single buffered']
    %14 = vsyncpa [#allocation4], 0
    %15 = vsyncpa [#allocation7], 0
    %16 = vsyncpa [#allocation10], 0
    %17 = vsyncpa [#allocation13], 0
    %18 = vsyncpa [#allocation5], 0
    // Predicated region
    $region2: #{tpu_custom_call.1} parent=1 // pred_check
      _
    $region3: #{tpu_custom_call.1} parent=1 // pred_check_branch
      %20 = sbr.rel (0) target = $region5
    $region4: #{tpu_custom_call.1} parent=1 // pred_region
      %s22 = ssub.s32 32, 32
      %23 = vsyncadd [#allocation4], %s22
      %s25 = sshll.u32 [#allocation3], 4
      %s26 = int_to_ptr.vmem [resolvable:$true] %s25
      %28 = dma.hbm_to_vmem [thread:$0]  %s0, 32, %s26, [#allocation4]
    $region5: #{tpu_custom_call.1} parent=1 // pred_fallthru
      _
    // Predicated region
    $region6: #{tpu_custom_call.1} parent=1 // pred_check
      _
    $region7: #{tpu_custom_call.1} parent=1 // pred_check_branch
      %30 = sbr.rel (0) target = $region9
    $region8: #{tpu_custom_call.1} parent=1 // pred_region
      %s32 = ssub.s32 128, 128
      %33 = vsyncadd [#allocation7], %s32
      %s35 = sshll.u32 [#allocation6], 4
      %s36 = int_to_ptr.vmem [resolvable:$true] %s35
      %38 = dma.hbm_to_vmem [thread:$0]  %s1, 128, %s36, [#allocation7]
    $region9: #{tpu_custom_call.1} parent=1 // pred_fallthru
      _
    // Predicated region
    $region10: #{tpu_custom_call.1} parent=1 // pred_check
      _
    $region11: #{tpu_custom_call.1} parent=1 // pred_check_branch
      %40 = sbr.rel (0) target = $region13
    $region12: #{tpu_custom_call.1} parent=1 // pred_region
      %s42 = ssub.s32 128, 128
      %43 = vsyncadd [#allocation7], %s42
      %s45 = sshll.u32 [#allocation8], 4
      %s46 = int_to_ptr.vmem [resolvable:$true] %s45
      %48 = dma.hbm_to_vmem [thread:$0]  %s2, 128, %s46, [#allocation7]
    $region13: #{tpu_custom_call.1} parent=1 // pred_fallthru
      _
    // Predicated region
    $region14: #{tpu_custom_call.1} parent=1 // pred_check
      _
    $region15: #{tpu_custom_call.1} parent=1 // pred_check_branch
      %50 = sbr.rel (0) target = $region17
    $region16: #{tpu_custom_call.1} parent=1 // pred_region
      %s52 = ssub.s32 65536, 65536
      %53 = vsyncadd [#allocation10], %s52
      %s54 = sshll.u32 [#allocation9], 4
      %s55 = int_to_ptr.vmem [resolvable:$true] %s54
      %60 = dma.hbm_to_vmem [thread:$0]  %s3, 65536, %s55, [#allocation10], 512, 512, 32
    $region17: #{tpu_custom_call.1} parent=1 // pred_fallthru
      _
    // Predicated region
    $region18: #{tpu_custom_call.1} parent=1 // pred_check
      _
    $region19: #{tpu_custom_call.1} parent=1 // pred_check_branch
      %62 = sbr.rel (0) target = $region21
    $region20: #{tpu_custom_call.1} parent=1 // pred_region
      %s64 = ssub.s32 128, 128
      %65 = vsyncadd [#allocation10], %s64
      %s67 = sshll.u32 [#allocation11], 4
      %s68 = int_to_ptr.vmem [resolvable:$true] %s67
      %70 = dma.hbm_to_vmem [thread:$0]  %s4, 128, %s68, [#allocation10]
    $region21: #{tpu_custom_call.1} parent=1 // pred_fallthru
      _
    // Predicated region
    $region22: #{tpu_custom_call.1} parent=1 // pred_check
      _
    $region23: #{tpu_custom_call.1} parent=1 // pred_check_branch
      %72 = sbr.rel (0) target = $region25
    $region24: #{tpu_custom_call.1} parent=1 // pred_region
      %s74 = ssub.s32 128, 128
      %75 = vsyncadd [#allocation13], %s74
      %s77 = sshll.u32 [#allocation12], 4
      %s78 = int_to_ptr.vmem [resolvable:$true] %s77
      %80 = dma.hbm_to_vmem [thread:$0]  %s5, 128, %s78, [#allocation13]
    $region25: #{tpu_custom_call.1} parent=1 // pred_fallthru
      _
    // Predicated region
    $region26: #{tpu_custom_call.1} parent=1 // pred_check
      _
    $region27: #{tpu_custom_call.1} parent=1 // pred_check_branch
      %82 = sbr.rel (0) target = $region29
    $region28: #{tpu_custom_call.1} parent=1 // pred_region
      _
    $region29: #{tpu_custom_call.1} parent=1 // pred_fallthru
      _
    // Predicated region
    $region30: #{tpu_custom_call.1} parent=1 // pred_check
      _
    $region31: #{tpu_custom_call.1} parent=1 // pred_check_branch
      %84 = sbr.rel (0) target = $region33
    $region32: #{tpu_custom_call.1} parent=1 // pred_region
      %85 = dma.done [#allocation4], 32
    $region33: #{tpu_custom_call.1} parent=1 // pred_fallthru
      _
    // Predicated region
    $region34: #{tpu_custom_call.1} parent=1 // pred_check
      _
    $region35: #{tpu_custom_call.1} parent=1 // pred_check_branch
      %87 = sbr.rel (0) target = $region37
    $region36: #{tpu_custom_call.1} parent=1 // pred_region
      %88 = dma.done [#allocation7], 128
    $region37: #{tpu_custom_call.1} parent=1 // pred_fallthru
      _
    // Predicated region
    $region38: #{tpu_custom_call.1} parent=1 // pred_check
      _
    $region39: #{tpu_custom_call.1} parent=1 // pred_check_branch
      %90 = sbr.rel (0) target = $region41
    $region40: #{tpu_custom_call.1} parent=1 // pred_region
      %91 = dma.done [#allocation7], 128
    $region41: #{tpu_custom_call.1} parent=1 // pred_fallthru
      _
    // Predicated region
    $region42: #{tpu_custom_call.1} parent=1 // pred_check
      _
    $region43: #{tpu_custom_call.1} parent=1 // pred_check_branch
      %93 = sbr.rel (0) target = $region45
    $region44: #{tpu_custom_call.1} parent=1 // pred_region
      %94 = dma.done [#allocation10], 65536
    $region45: #{tpu_custom_call.1} parent=1 // pred_fallthru
      _
    // Predicated region
    $region46: #{tpu_custom_call.1} parent=1 // pred_check
      _
    $region47: #{tpu_custom_call.1} parent=1 // pred_check_branch
      %96 = sbr.rel (0) target = $region49
    $region48: #{tpu_custom_call.1} parent=1 // pred_region
      %97 = dma.done [#allocation10], 128
    $region49: #{tpu_custom_call.1} parent=1 // pred_fallthru
      _
    // Predicated region
    $region50: #{tpu_custom_call.1} parent=1 // pred_check
      _
    $region51: #{tpu_custom_call.1} parent=1 // pred_check_branch
      %99 = sbr.rel (0) target = $region53
    $region52: #{tpu_custom_call.1} parent=1 // pred_region
      %100 = dma.done [#allocation13], 128
    $region53: #{tpu_custom_call.1} parent=1 // pred_fallthru
      _
    %v101 = vld [vmem:[#allocation3] sm:$0x3]
    %v103 = vlaneseq
    %v104 = vshrl.u32 %v103, 7
    %v105 = vsub.s32 0, %v104
    %v106 = vrot.slane %v101, %v105
    %v107 = vlaneseq
    %v108 = vshrl.u32 %v107, 7
    %v109 = vsub.s32 1, %v108
    %v110 = vrot.slane %v101, %v109
    %v113 = vlaneseq
    %v114 = vshrl.u32 %v113, 7
    %v115 = vsub.s32 0, %v114
    %v116 = vrot.slane %v106, %v115
    %118 = vbcast.lane.b32.xlu0 %v116, 256
    %v119 = vpop.permute.xlu0 %118
    %s121 = sor.u32 256, 8
    %122 = vbcast.lane.b32.xlu0 %v116, %s121
    %v123 = vpop.permute.xlu0 %122
    %s125 = sor.u32 256, 16
    %126 = vbcast.lane.b32.xlu0 %v116, %s125
    %v127 = vpop.permute.xlu0 %126
    %s129 = sor.u32 256, 24
    %130 = vbcast.lane.b32.xlu0 %v116, %s129
    %v131 = vpop.permute.xlu0 %130
    %s133 = sor.u32 256, 32
    %134 = vbcast.lane.b32.xlu0 %v116, %s133
    %v135 = vpop.permute.xlu0 %134
    %s137 = sor.u32 256, 40
    %138 = vbcast.lane.b32.xlu0 %v116, %s137
    %v139 = vpop.permute.xlu0 %138
    %s141 = sor.u32 256, 48
    %142 = vbcast.lane.b32.xlu0 %v116, %s141
    %v143 = vpop.permute.xlu0 %142
    %s145 = sor.u32 256, 56
    %146 = vbcast.lane.b32.xlu0 %v116, %s145
    %v147 = vpop.permute.xlu0 %146
    %s149 = sor.u32 256, 64
    %150 = vbcast.lane.b32.xlu0 %v116, %s149
    %v151 = vpop.permute.xlu0 %150
    %s153 = sor.u32 256, 72
    %154 = vbcast.lane.b32.xlu0 %v116, %s153
    %v155 = vpop.permute.xlu0 %154
    %s157 = sor.u32 256, 80
    %158 = vbcast.lane.b32.xlu0 %v116, %s157
    %v159 = vpop.permute.xlu0 %158
    %s161 = sor.u32 256, 88
    %162 = vbcast.lane.b32.xlu0 %v116, %s161
    %v163 = vpop.permute.xlu0 %162
    %s165 = sor.u32 256, 96
    %166 = vbcast.lane.b32.xlu0 %v116, %s165
    %v167 = vpop.permute.xlu0 %166
    %s169 = sor.u32 256, 104
    %170 = vbcast.lane.b32.xlu0 %v116, %s169
    %v171 = vpop.permute.xlu0 %170
    %s173 = sor.u32 256, 112
    %174 = vbcast.lane.b32.xlu0 %v116, %s173
    %v175 = vpop.permute.xlu0 %174
    %s177 = sor.u32 256, 120
    %178 = vbcast.lane.b32.xlu0 %v116, %s177
    %v179 = vpop.permute.xlu0 %178
    %v180 = vlaneseq
    %v181 = vshrl.u32 %v180, 7
    %v182 = vsub.s32 0, %v181
    %v183 = vrot.slane %v110, %v182
    %185 = vbcast.lane.b32.xlu0 %v183, 256
    %v186 = vpop.permute.xlu0 %185
    %s188 = sor.u32 256, 8
    %189 = vbcast.lane.b32.xlu0 %v183, %s188
    %v190 = vpop.permute.xlu0 %189
    %s192 = sor.u32 256, 16
    %193 = vbcast.lane.b32.xlu0 %v183, %s192
    %v194 = vpop.permute.xlu0 %193
    %s196 = sor.u32 256, 24
    %197 = vbcast.lane.b32.xlu0 %v183, %s196
    %v198 = vpop.permute.xlu0 %197
    %s200 = sor.u32 256, 32
    %201 = vbcast.lane.b32.xlu0 %v183, %s200
    %v202 = vpop.permute.xlu0 %201
    %s204 = sor.u32 256, 40
    %205 = vbcast.lane.b32.xlu0 %v183, %s204
    %v206 = vpop.permute.xlu0 %205
    %s208 = sor.u32 256, 48
    %209 = vbcast.lane.b32.xlu0 %v183, %s208
    %v210 = vpop.permute.xlu0 %209
    %s212 = sor.u32 256, 56
    %213 = vbcast.lane.b32.xlu0 %v183, %s212
    %v214 = vpop.permute.xlu0 %213
    %s216 = sor.u32 256, 64
    %217 = vbcast.lane.b32.xlu0 %v183, %s216
    %v218 = vpop.permute.xlu0 %217
    %s220 = sor.u32 256, 72
    %221 = vbcast.lane.b32.xlu0 %v183, %s220
    %v222 = vpop.permute.xlu0 %221
    %s224 = sor.u32 256, 80
    %225 = vbcast.lane.b32.xlu0 %v183, %s224
    %v226 = vpop.permute.xlu0 %225
    %s228 = sor.u32 256, 88
    %229 = vbcast.lane.b32.xlu0 %v183, %s228
    %v230 = vpop.permute.xlu0 %229
    %s232 = sor.u32 256, 96
    %233 = vbcast.lane.b32.xlu0 %v183, %s232
    %v234 = vpop.permute.xlu0 %233
    %s236 = sor.u32 256, 104
    %237 = vbcast.lane.b32.xlu0 %v183, %s236
    %v238 = vpop.permute.xlu0 %237
    %s240 = sor.u32 256, 112
    %241 = vbcast.lane.b32.xlu0 %v183, %s240
    %v242 = vpop.permute.xlu0 %241
    %s244 = sor.u32 256, 120
    %245 = vbcast.lane.b32.xlu0 %v183, %s244
    %v246 = vpop.permute.xlu0 %245
    %v247 = vld [vmem:[#allocation6] sm:$0x3]
    %v248 = vunpack.c.l.bf16 %v247
    %v250 = vlaneseq
    %v251 = vshrl.u32 %v250, 7
    %v252 = vsub.s32 0, %v251
    %v253 = vrot.slane %v248, %v252
    %v254 = vlaneseq
    %v255 = vshrl.u32 %v254, 7
    %v256 = vsub.s32 2, %v255
    %v257 = vrot.slane %v248, %v256
    %v260 = vlaneseq
    %v261 = vshrl.u32 %v260, 7
    %v262 = vsub.s32 0, %v261
    %v263 = vrot.slane %v253, %v262
    %v264 = vlaneseq
    %v265 = vshrl.u32 %v264, 7
    %v266 = vsub.s32 0, %v265
    %v267 = vrot.slane %v257, %v266
    %v268 = vmul.f32 %v119, %v263
    %v269 = vmul.f32 %v119, %v267
    %v270 = vmul.f32 %v123, %v263
    %v271 = vmul.f32 %v123, %v267
    %v272 = vmul.f32 %v127, %v263
    %v273 = vmul.f32 %v127, %v267
    %v274 = vmul.f32 %v131, %v263
    %v275 = vmul.f32 %v131, %v267
    %v276 = vmul.f32 %v135, %v263
    %v277 = vmul.f32 %v135, %v267
    %v278 = vmul.f32 %v139, %v263
    %v279 = vmul.f32 %v139, %v267
    %v280 = vmul.f32 %v143, %v263
    %v281 = vmul.f32 %v143, %v267
    %v282 = vmul.f32 %v147, %v263
    %v283 = vmul.f32 %v147, %v267
    %v284 = vmul.f32 %v151, %v263
    %v285 = vmul.f32 %v151, %v267
    %v286 = vmul.f32 %v155, %v263
    %v287 = vmul.f32 %v155, %v267
    %v288 = vmul.f32 %v159, %v263
    %v289 = vmul.f32 %v159, %v267
    %v290 = vmul.f32 %v163, %v263
    %v291 = vmul.f32 %v163, %v267
    %v292 = vmul.f32 %v167, %v263
    %v293 = vmul.f32 %v167, %v267
    %v294 = vmul.f32 %v171, %v263
    %v295 = vmul.f32 %v171, %v267
    %v296 = vmul.f32 %v175, %v263
    %v297 = vmul.f32 %v175, %v267
    %v298 = vmul.f32 %v179, %v263
    %v299 = vmul.f32 %v179, %v267
    %v300 = vmul.f32 %v186, %v263
    %v301 = vmul.f32 %v186, %v267
    %v302 = vmul.f32 %v190, %v263
    %v303 = vmul.f32 %v190, %v267
    %v304 = vmul.f32 %v194, %v263
    %v305 = vmul.f32 %v194, %v267
    %v306 = vmul.f32 %v198, %v263
    %v307 = vmul.f32 %v198, %v267
    %v308 = vmul.f32 %v202, %v263
    %v309 = vmul.f32 %v202, %v267
    %v310 = vmul.f32 %v206, %v263
    %v311 = vmul.f32 %v206, %v267
    %v312 = vmul.f32 %v210, %v263
    %v313 = vmul.f32 %v210, %v267
    %v314 = vmul.f32 %v214, %v263
    %v315 = vmul.f32 %v214, %v267
    %v316 = vmul.f32 %v218, %v263
    %v317 = vmul.f32 %v218, %v267
    %v318 = vmul.f32 %v222, %v263
    %v319 = vmul.f32 %v222, %v267
    %v320 = vmul.f32 %v226, %v263
    %v321 = vmul.f32 %v226, %v267
    %v322 = vmul.f32 %v230, %v263
    %v323 = vmul.f32 %v230, %v267
    %v324 = vmul.f32 %v234, %v263
    %v325 = vmul.f32 %v234, %v267
    %v326 = vmul.f32 %v238, %v263
    %v327 = vmul.f32 %v238, %v267
    %v328 = vmul.f32 %v242, %v263
    %v329 = vmul.f32 %v242, %v267
    %v330 = vmul.f32 %v246, %v263
    %v331 = vmul.f32 %v246, %v267
    %v332 = vld [vmem:[#allocation8] sm:$0x3]
    %v334 = vlaneseq
    %v335 = vshrl.u32 %v334, 7
    %v336 = vsub.s32 0, %v335
    %v337 = vrot.slane %v332, %v336
    %v338 = vlaneseq
    %v339 = vshrl.u32 %v338, 7
    %v340 = vsub.s32 1, %v339
    %v341 = vrot.slane %v332, %v340
    %v344 = vadd.f32 %v268, %v337
    %v345 = vadd.f32 %v269, %v341
    %v346 = vadd.f32 %v270, %v337
    %v347 = vadd.f32 %v271, %v341
    %v348 = vadd.f32 %v272, %v337
    %v349 = vadd.f32 %v273, %v341
    %v350 = vadd.f32 %v274, %v337
    %v351 = vadd.f32 %v275, %v341
    %v352 = vadd.f32 %v276, %v337
    %v353 = vadd.f32 %v277, %v341
    %v354 = vadd.f32 %v278, %v337
    %v355 = vadd.f32 %v279, %v341
    %v356 = vadd.f32 %v280, %v337
    %v357 = vadd.f32 %v281, %v341
    %v358 = vadd.f32 %v282, %v337
    %v359 = vadd.f32 %v283, %v341
    %v360 = vadd.f32 %v284, %v337
    %v361 = vadd.f32 %v285, %v341
    %v362 = vadd.f32 %v286, %v337
    %v363 = vadd.f32 %v287, %v341
    %v364 = vadd.f32 %v288, %v337
    %v365 = vadd.f32 %v289, %v341
    %v366 = vadd.f32 %v290, %v337
    %v367 = vadd.f32 %v291, %v341
    %v368 = vadd.f32 %v292, %v337
    %v369 = vadd.f32 %v293, %v341
    %v370 = vadd.f32 %v294, %v337
    %v371 = vadd.f32 %v295, %v341
    %v372 = vadd.f32 %v296, %v337
    %v373 = vadd.f32 %v297, %v341
    %v374 = vadd.f32 %v298, %v337
    %v375 = vadd.f32 %v299, %v341
    %v376 = vadd.f32 %v300, %v337
    %v377 = vadd.f32 %v301, %v341
    %v378 = vadd.f32 %v302, %v337
    %v379 = vadd.f32 %v303, %v341
    %v380 = vadd.f32 %v304, %v337
    %v381 = vadd.f32 %v305, %v341
    %v382 = vadd.f32 %v306, %v337
    %v383 = vadd.f32 %v307, %v341
    %v384 = vadd.f32 %v308, %v337
    %v385 = vadd.f32 %v309, %v341
    %v386 = vadd.f32 %v310, %v337
    %v387 = vadd.f32 %v311, %v341
    %v388 = vadd.f32 %v312, %v337
    %v389 = vadd.f32 %v313, %v341
    %v390 = vadd.f32 %v314, %v337
    %v391 = vadd.f32 %v315, %v341
    %v392 = vadd.f32 %v316, %v337
    %v393 = vadd.f32 %v317, %v341
    %v394 = vadd.f32 %v318, %v337
    %v395 = vadd.f32 %v319, %v341
    %v396 = vadd.f32 %v320, %v337
    %v397 = vadd.f32 %v321, %v341
    %v398 = vadd.f32 %v322, %v337
    %v399 = vadd.f32 %v323, %v341
    %v400 = vadd.f32 %v324, %v337
    %v401 = vadd.f32 %v325, %v341
    %v402 = vadd.f32 %v326, %v337
    %v403 = vadd.f32 %v327, %v341
    %v404 = vadd.f32 %v328, %v337
    %v405 = vadd.f32 %v329, %v341
    %v406 = vadd.f32 %v330, %v337
    %v407 = vadd.f32 %v331, %v341
    %v408 = vmax.f32 %v344, 0.0
    %v409 = vmax.f32 %v345, 0.0
    %v410 = vmax.f32 %v346, 0.0
    %v411 = vmax.f32 %v347, 0.0
    %v412 = vmax.f32 %v348, 0.0
    %v413 = vmax.f32 %v349, 0.0
    %v414 = vmax.f32 %v350, 0.0
    %v415 = vmax.f32 %v351, 0.0
    %v416 = vmax.f32 %v352, 0.0
    %v417 = vmax.f32 %v353, 0.0
    %v418 = vmax.f32 %v354, 0.0
    %v419 = vmax.f32 %v355, 0.0
    %v420 = vmax.f32 %v356, 0.0
    %v421 = vmax.f32 %v357, 0.0
    %v422 = vmax.f32 %v358, 0.0
    %v423 = vmax.f32 %v359, 0.0
    %v424 = vmax.f32 %v360, 0.0
    %v425 = vmax.f32 %v361, 0.0
    %v426 = vmax.f32 %v362, 0.0
    %v427 = vmax.f32 %v363, 0.0
    %v428 = vmax.f32 %v364, 0.0
    %v429 = vmax.f32 %v365, 0.0
    %v430 = vmax.f32 %v366, 0.0
    %v431 = vmax.f32 %v367, 0.0
    %v432 = vmax.f32 %v368, 0.0
    %v433 = vmax.f32 %v369, 0.0
    %v434 = vmax.f32 %v370, 0.0
    %v435 = vmax.f32 %v371, 0.0
    %v436 = vmax.f32 %v372, 0.0
    %v437 = vmax.f32 %v373, 0.0
    %v438 = vmax.f32 %v374, 0.0
    %v439 = vmax.f32 %v375, 0.0
    %v440 = vmax.f32 %v376, 0.0
    %v441 = vmax.f32 %v377, 0.0
    %v442 = vmax.f32 %v378, 0.0
    %v443 = vmax.f32 %v379, 0.0
    %v444 = vmax.f32 %v380, 0.0
    %v445 = vmax.f32 %v381, 0.0
    %v446 = vmax.f32 %v382, 0.0
    %v447 = vmax.f32 %v383, 0.0
    %v448 = vmax.f32 %v384, 0.0
    %v449 = vmax.f32 %v385, 0.0
    %v450 = vmax.f32 %v386, 0.0
    %v451 = vmax.f32 %v387, 0.0
    %v452 = vmax.f32 %v388, 0.0
    %v453 = vmax.f32 %v389, 0.0
    %v454 = vmax.f32 %v390, 0.0
    %v455 = vmax.f32 %v391, 0.0
    %v456 = vmax.f32 %v392, 0.0
    %v457 = vmax.f32 %v393, 0.0
    %v458 = vmax.f32 %v394, 0.0
    %v459 = vmax.f32 %v395, 0.0
    %v460 = vmax.f32 %v396, 0.0
    %v461 = vmax.f32 %v397, 0.0
    %v462 = vmax.f32 %v398, 0.0
    %v463 = vmax.f32 %v399, 0.0
    %v464 = vmax.f32 %v400, 0.0
    %v465 = vmax.f32 %v401, 0.0
    %v466 = vmax.f32 %v402, 0.0
    %v467 = vmax.f32 %v403, 0.0
    %v468 = vmax.f32 %v404, 0.0
    %v469 = vmax.f32 %v405, 0.0
    %v470 = vmax.f32 %v406, 0.0
    %v471 = vmax.f32 %v407, 0.0
    %v472 = vpack.c.bf16 %v410, %v408
    %v473 = vpack.c.bf16 %v411, %v409
    %v474 = vpack.c.bf16 %v414, %v412
    %v475 = vpack.c.bf16 %v415, %v413
    %v476 = vpack.c.bf16 %v418, %v416
    %v477 = vpack.c.bf16 %v419, %v417
    %v478 = vpack.c.bf16 %v422, %v420
    %v479 = vpack.c.bf16 %v423, %v421
    %v480 = vpack.c.bf16 %v426, %v424
    %v481 = vpack.c.bf16 %v427, %v425
    %v482 = vpack.c.bf16 %v430, %v428
    %v483 = vpack.c.bf16 %v431, %v429
    %v484 = vpack.c.bf16 %v434, %v432
    %v485 = vpack.c.bf16 %v435, %v433
    %v486 = vpack.c.bf16 %v438, %v436
    %v487 = vpack.c.bf16 %v439, %v437
    %v488 = vpack.c.bf16 %v442, %v440
    %v489 = vpack.c.bf16 %v443, %v441
    %v490 = vpack.c.bf16 %v446, %v444
    %v491 = vpack.c.bf16 %v447, %v445
    %v492 = vpack.c.bf16 %v450, %v448
    %v493 = vpack.c.bf16 %v451, %v449
    %v494 = vpack.c.bf16 %v454, %v452
    %v495 = vpack.c.bf16 %v455, %v453
    %v496 = vpack.c.bf16 %v458, %v456
    %v497 = vpack.c.bf16 %v459, %v457
    %v498 = vpack.c.bf16 %v462, %v460
    %v499 = vpack.c.bf16 %v463, %v461
    %v500 = vpack.c.bf16 %v466, %v464
    %v501 = vpack.c.bf16 %v467, %v465
    %v502 = vpack.c.bf16 %v470, %v468
    %v503 = vpack.c.bf16 %v471, %v469
    %v504 = vld [vmem:[#allocation9] sm:$0xff]
    %v505 = vld [vmem:[#allocation9 + $0x8] sm:$0xff]
    %v506 = vld [vmem:[#allocation9 + $0x10] sm:$0xff]
    %v507 = vld [vmem:[#allocation9 + $0x18] sm:$0xff]
    %v508 = vld [vmem:[#allocation9 + $0x20] sm:$0xff]
    %v509 = vld [vmem:[#allocation9 + $0x28] sm:$0xff]
    %v510 = vld [vmem:[#allocation9 + $0x30] sm:$0xff]
    %v511 = vld [vmem:[#allocation9 + $0x38] sm:$0xff]
    %v512 = vld [vmem:[#allocation9 + $0x40] sm:$0xff]
    %v513 = vld [vmem:[#allocation9 + $0x48] sm:$0xff]
    %v514 = vld [vmem:[#allocation9 + $0x50] sm:$0xff]
    %v515 = vld [vmem:[#allocation9 + $0x58] sm:$0xff]
    %v516 = vld [vmem:[#allocation9 + $0x60] sm:$0xff]
    %v517 = vld [vmem:[#allocation9 + $0x68] sm:$0xff]
    %v518 = vld [vmem:[#allocation9 + $0x70] sm:$0xff]
    %v519 = vld [vmem:[#allocation9 + $0x78] sm:$0xff]
    %v520 = vld [vmem:[#allocation9 + $0x80] sm:$0xff]
    %v521 = vld [vmem:[#allocation9 + $0x88] sm:$0xff]
    %v522 = vld [vmem:[#allocation9 + $0x90] sm:$0xff]
    %v523 = vld [vmem:[#allocation9 + $0x98] sm:$0xff]
    %v524 = vld [vmem:[#allocation9 + $0xa0] sm:$0xff]
    %v525 = vld [vmem:[#allocation9 + $0xa8] sm:$0xff]
    %v526 = vld [vmem:[#allocation9 + $0xb0] sm:$0xff]
    %v527 = vld [vmem:[#allocation9 + $0xb8] sm:$0xff]
    %v528 = vld [vmem:[#allocation9 + $0xc0] sm:$0xff]
    %v529 = vld [vmem:[#allocation9 + $0xc8] sm:$0xff]
    %v530 = vld [vmem:[#allocation9 + $0xd0] sm:$0xff]
    %v531 = vld [vmem:[#allocation9 + $0xd8] sm:$0xff]
    %v532 = vld [vmem:[#allocation9 + $0xe0] sm:$0xff]
    %v533 = vld [vmem:[#allocation9 + $0xe8] sm:$0xff]
    %v534 = vld [vmem:[#allocation9 + $0xf0] sm:$0xff]
    %v535 = vld [vmem:[#allocation9 + $0xf8] sm:$0xff]
    %v536 = vld [vmem:[#allocation9 + $0x100] sm:$0xff]
    %v537 = vld [vmem:[#allocation9 + $0x108] sm:$0xff]
    %v538 = vld [vmem:[#allocation9 + $0x110] sm:$0xff]
    %v539 = vld [vmem:[#allocation9 + $0x118] sm:$0xff]
    %v540 = vld [vmem:[#allocation9 + $0x120] sm:$0xff]
    %v541 = vld [vmem:[#allocation9 + $0x128] sm:$0xff]
    %v542 = vld [vmem:[#allocation9 + $0x130] sm:$0xff]
    %v543 = vld [vmem:[#allocation9 + $0x138] sm:$0xff]
    %v544 = vld [vmem:[#allocation9 + $0x140] sm:$0xff]
    %v545 = vld [vmem:[#allocation9 + $0x148] sm:$0xff]
    %v546 = vld [vmem:[#allocation9 + $0x150] sm:$0xff]
    %v547 = vld [vmem:[#allocation9 + $0x158] sm:$0xff]
    %v548 = vld [vmem:[#allocation9 + $0x160] sm:$0xff]
    %v549 = vld [vmem:[#allocation9 + $0x168] sm:$0xff]
    %v550 = vld [vmem:[#allocation9 + $0x170] sm:$0xff]
    %v551 = vld [vmem:[#allocation9 + $0x178] sm:$0xff]
    %v552 = vld [vmem:[#allocation9 + $0x180] sm:$0xff]
    %v553 = vld [vmem:[#allocation9 + $0x188] sm:$0xff]
    %v554 = vld [vmem:[#allocation9 + $0x190] sm:$0xff]
    %v555 = vld [vmem:[#allocation9 + $0x198] sm:$0xff]
    %v556 = vld [vmem:[#allocation9 + $0x1a0] sm:$0xff]
    %v557 = vld [vmem:[#allocation9 + $0x1a8] sm:$0xff]
    %v558 = vld [vmem:[#allocation9 + $0x1b0] sm:$0xff]
    %v559 = vld [vmem:[#allocation9 + $0x1b8] sm:$0xff]
    %v560 = vld [vmem:[#allocation9 + $0x1c0] sm:$0xff]
    %v561 = vld [vmem:[#allocation9 + $0x1c8] sm:$0xff]
    %v562 = vld [vmem:[#allocation9 + $0x1d0] sm:$0xff]
    %v563 = vld [vmem:[#allocation9 + $0x1d8] sm:$0xff]
    %v564 = vld [vmem:[#allocation9 + $0x1e0] sm:$0xff]
    %v565 = vld [vmem:[#allocation9 + $0x1e8] sm:$0xff]
    %v566 = vld [vmem:[#allocation9 + $0x1f0] sm:$0xff]
    %v567 = vld [vmem:[#allocation9 + $0x1f8] sm:$0xff]
    %v568 = vld [vmem:[#allocation9 + $0x200] sm:$0xff]
    %v569 = vld [vmem:[#allocation9 + $0x208] sm:$0xff]
    %v570 = vld [vmem:[#allocation9 + $0x210] sm:$0xff]
    %v571 = vld [vmem:[#allocation9 + $0x218] sm:$0xff]
    %v572 = vld [vmem:[#allocation9 + $0x220] sm:$0xff]
    %v573 = vld [vmem:[#allocation9 + $0x228] sm:$0xff]
    %v574 = vld [vmem:[#allocation9 + $0x230] sm:$0xff]
    %v575 = vld [vmem:[#allocation9 + $0x238] sm:$0xff]
    %v576 = vld [vmem:[#allocation9 + $0x240] sm:$0xff]
    %v577 = vld [vmem:[#allocation9 + $0x248] sm:$0xff]
    %v578 = vld [vmem:[#allocation9 + $0x250] sm:$0xff]
    %v579 = vld [vmem:[#allocation9 + $0x258] sm:$0xff]
    %v580 = vld [vmem:[#allocation9 + $0x260] sm:$0xff]
    %v581 = vld [vmem:[#allocation9 + $0x268] sm:$0xff]
    %v582 = vld [vmem:[#allocation9 + $0x270] sm:$0xff]
    %v583 = vld [vmem:[#allocation9 + $0x278] sm:$0xff]
    %v584 = vld [vmem:[#allocation9 + $0x280] sm:$0xff]
    %v585 = vld [vmem:[#allocation9 + $0x288] sm:$0xff]
    %v586 = vld [vmem:[#allocation9 + $0x290] sm:$0xff]
    %v587 = vld [vmem:[#allocation9 + $0x298] sm:$0xff]
    %v588 = vld [vmem:[#allocation9 + $0x2a0] sm:$0xff]
    %v589 = vld [vmem:[#allocation9 + $0x2a8] sm:$0xff]
    %v590 = vld [vmem:[#allocation9 + $0x2b0] sm:$0xff]
    %v591 = vld [vmem:[#allocation9 + $0x2b8] sm:$0xff]
    %v592 = vld [vmem:[#allocation9 + $0x2c0] sm:$0xff]
    %v593 = vld [vmem:[#allocation9 + $0x2c8] sm:$0xff]
    %v594 = vld [vmem:[#allocation9 + $0x2d0] sm:$0xff]
    %v595 = vld [vmem:[#allocation9 + $0x2d8] sm:$0xff]
    %v596 = vld [vmem:[#allocation9 + $0x2e0] sm:$0xff]
    %v597 = vld [vmem:[#allocation9 + $0x2e8] sm:$0xff]
    %v598 = vld [vmem:[#allocation9 + $0x2f0] sm:$0xff]
    %v599 = vld [vmem:[#allocation9 + $0x2f8] sm:$0xff]
    %v600 = vld [vmem:[#allocation9 + $0x300] sm:$0xff]
    %v601 = vld [vmem:[#allocation9 + $0x308] sm:$0xff]
    %v602 = vld [vmem:[#allocation9 + $0x310] sm:$0xff]
    %v603 = vld [vmem:[#allocation9 + $0x318] sm:$0xff]
    %v604 = vld [vmem:[#allocation9 + $0x320] sm:$0xff]
    %v605 = vld [vmem:[#allocation9 + $0x328] sm:$0xff]
    %v606 = vld [vmem:[#allocation9 + $0x330] sm:$0xff]
    %v607 = vld [vmem:[#allocation9 + $0x338] sm:$0xff]
    %v608 = vld [vmem:[#allocation9 + $0x340] sm:$0xff]
    %v609 = vld [vmem:[#allocation9 + $0x348] sm:$0xff]
    %v610 = vld [vmem:[#allocation9 + $0x350] sm:$0xff]
    %v611 = vld [vmem:[#allocation9 + $0x358] sm:$0xff]
    %v612 = vld [vmem:[#allocation9 + $0x360] sm:$0xff]
    %v613 = vld [vmem:[#allocation9 + $0x368] sm:$0xff]
    %v614 = vld [vmem:[#allocation9 + $0x370] sm:$0xff]
    %v615 = vld [vmem:[#allocation9 + $0x378] sm:$0xff]
    %v616 = vld [vmem:[#allocation9 + $0x380] sm:$0xff]
    %v617 = vld [vmem:[#allocation9 + $0x388] sm:$0xff]
    %v618 = vld [vmem:[#allocation9 + $0x390] sm:$0xff]
    %v619 = vld [vmem:[#allocation9 + $0x398] sm:$0xff]
    %v620 = vld [vmem:[#allocation9 + $0x3a0] sm:$0xff]
    %v621 = vld [vmem:[#allocation9 + $0x3a8] sm:$0xff]
    %v622 = vld [vmem:[#allocation9 + $0x3b0] sm:$0xff]
    %v623 = vld [vmem:[#allocation9 + $0x3b8] sm:$0xff]
    %v624 = vld [vmem:[#allocation9 + $0x3c0] sm:$0xff]
    %v625 = vld [vmem:[#allocation9 + $0x3c8] sm:$0xff]
    %v626 = vld [vmem:[#allocation9 + $0x3d0] sm:$0xff]
    %v627 = vld [vmem:[#allocation9 + $0x3d8] sm:$0xff]
    %v628 = vld [vmem:[#allocation9 + $0x3e0] sm:$0xff]
    %v629 = vld [vmem:[#allocation9 + $0x3e8] sm:$0xff]
    %v630 = vld [vmem:[#allocation9 + $0x3f0] sm:$0xff]
    %v631 = vld [vmem:[#allocation9 + $0x3f8] sm:$0xff]
    %v632 = vld [vmem:[#allocation6 + $0x2] sm:$0x3]
    %v633 = vunpack.c.l.bf16 %v632
    %v635 = vlaneseq
    %v636 = vshrl.u32 %v635, 7
    %v637 = vsub.s32 0, %v636
    %v638 = vrot.slane %v633, %v637
    %v639 = vlaneseq
    %v640 = vshrl.u32 %v639, 7
    %v641 = vsub.s32 2, %v640
    %v642 = vrot.slane %v633, %v641
    %v645 = vlaneseq
    %v646 = vshrl.u32 %v645, 7
    %v647 = vsub.s32 0, %v646
    %v648 = vrot.slane %v638, %v647
    %v649 = vlaneseq
    %v650 = vshrl.u32 %v649, 7
    %v651 = vsub.s32 0, %v650
    %v652 = vrot.slane %v642, %v651
    %v653 = vmul.f32 %v119, %v648
    %v654 = vmul.f32 %v119, %v652
    %v655 = vmul.f32 %v123, %v648
    %v656 = vmul.f32 %v123, %v652
    %v657 = vmul.f32 %v127, %v648
    %v658 = vmul.f32 %v127, %v652
    %v659 = vmul.f32 %v131, %v648
    %v660 = vmul.f32 %v131, %v652
    %v661 = vmul.f32 %v135, %v648
    %v662 = vmul.f32 %v135, %v652
    %v663 = vmul.f32 %v139, %v648
    %v664 = vmul.f32 %v139, %v652
    %v665 = vmul.f32 %v143, %v648
    %v666 = vmul.f32 %v143, %v652
    %v667 = vmul.f32 %v147, %v648
    %v668 = vmul.f32 %v147, %v652
    %v669 = vmul.f32 %v151, %v648
    %v670 = vmul.f32 %v151, %v652
    %v671 = vmul.f32 %v155, %v648
    %v672 = vmul.f32 %v155, %v652
    %v673 = vmul.f32 %v159, %v648
    %v674 = vmul.f32 %v159, %v652
    %v675 = vmul.f32 %v163, %v648
    %v676 = vmul.f32 %v163, %v652
    %v677 = vmul.f32 %v167, %v648
    %v678 = vmul.f32 %v167, %v652
    %v679 = vmul.f32 %v171, %v648
    %v680 = vmul.f32 %v171, %v652
    %v681 = vmul.f32 %v175, %v648
    %v682 = vmul.f32 %v175, %v652
    %v683 = vmul.f32 %v179, %v648
    %v684 = vmul.f32 %v179, %v652
    %v685 = vmul.f32 %v186, %v648
    %v686 = vmul.f32 %v186, %v652
    %v687 = vmul.f32 %v190, %v648
    %v688 = vmul.f32 %v190, %v652
    %v689 = vmul.f32 %v194, %v648
    %v690 = vmul.f32 %v194, %v652
    %v691 = vmul.f32 %v198, %v648
    %v692 = vmul.f32 %v198, %v652
    %v693 = vmul.f32 %v202, %v648
    %v694 = vmul.f32 %v202, %v652
    %v695 = vmul.f32 %v206, %v648
    %v696 = vmul.f32 %v206, %v652
    %v697 = vmul.f32 %v210, %v648
    %v698 = vmul.f32 %v210, %v652
    %v699 = vmul.f32 %v214, %v648
    %v700 = vmul.f32 %v214, %v652
    %v701 = vmul.f32 %v218, %v648
    %v702 = vmul.f32 %v218, %v652
    %v703 = vmul.f32 %v222, %v648
    %v704 = vmul.f32 %v222, %v652
    %v705 = vmul.f32 %v226, %v648
    %v706 = vmul.f32 %v226, %v652
    %v707 = vmul.f32 %v230, %v648
    %v708 = vmul.f32 %v230, %v652
    %v709 = vmul.f32 %v234, %v648
    %v710 = vmul.f32 %v234, %v652
    %v711 = vmul.f32 %v238, %v648
    %v712 = vmul.f32 %v238, %v652
    %v713 = vmul.f32 %v242, %v648
    %v714 = vmul.f32 %v242, %v652
    %v715 = vmul.f32 %v246, %v648
    %v716 = vmul.f32 %v246, %v652
    %v717 = vld [vmem:[#allocation8 + $0x2] sm:$0x3]
    %v719 = vlaneseq
    %v720 = vshrl.u32 %v719, 7
    %v721 = vsub.s32 0, %v720
    %v722 = vrot.slane %v717, %v721
    %v723 = vlaneseq
    %v724 = vshrl.u32 %v723, 7
    %v725 = vsub.s32 1, %v724
    %v726 = vrot.slane %v717, %v725
    %v729 = vadd.f32 %v653, %v722
    %v730 = vadd.f32 %v654, %v726
    %v731 = vadd.f32 %v655, %v722
    %v732 = vadd.f32 %v656, %v726
    %v733 = vadd.f32 %v657, %v722
    %v734 = vadd.f32 %v658, %v726
    %v735 = vadd.f32 %v659, %v722
    %v736 = vadd.f32 %v660, %v726
    %v737 = vadd.f32 %v661, %v722
    %v738 = vadd.f32 %v662, %v726
    %v739 = vadd.f32 %v663, %v722
    %v740 = vadd.f32 %v664, %v726
    %v741 = vadd.f32 %v665, %v722
    %v742 = vadd.f32 %v666, %v726
    %v743 = vadd.f32 %v667, %v722
    %v744 = vadd.f32 %v668, %v726
    %v745 = vadd.f32 %v669, %v722
    %v746 = vadd.f32 %v670, %v726
    %v747 = vadd.f32 %v671, %v722
    %v748 = vadd.f32 %v672, %v726
    %v749 = vadd.f32 %v673, %v722
    %v750 = vadd.f32 %v674, %v726
    %v751 = vadd.f32 %v675, %v722
    %v752 = vadd.f32 %v676, %v726
    %v753 = vadd.f32 %v677, %v722
    %v754 = vadd.f32 %v678, %v726
    %v755 = vadd.f32 %v679, %v722
    %v756 = vadd.f32 %v680, %v726
    %v757 = vadd.f32 %v681, %v722
    %v758 = vadd.f32 %v682, %v726
    %v759 = vadd.f32 %v683, %v722
    %v760 = vadd.f32 %v684, %v726
    %v761 = vadd.f32 %v685, %v722
    %v762 = vadd.f32 %v686, %v726
    %v763 = vadd.f32 %v687, %v722
    %v764 = vadd.f32 %v688, %v726
    %v765 = vadd.f32 %v689, %v722
    %v766 = vadd.f32 %v690, %v726
    %v767 = vadd.f32 %v691, %v722
    %v768 = vadd.f32 %v692, %v726
    %v769 = vadd.f32 %v693, %v722
    %v770 = vadd.f32 %v694, %v726
    %v771 = vadd.f32 %v695, %v722
    %v772 = vadd.f32 %v696, %v726
    %v773 = vadd.f32 %v697, %v722
    %v774 = vadd.f32 %v698, %v726
    %v775 = vadd.f32 %v699, %v722
    %v776 = vadd.f32 %v700, %v726
    %v777 = vadd.f32 %v701, %v722
    %v778 = vadd.f32 %v702, %v726
    %v779 = vadd.f32 %v703, %v722
    %v780 = vadd.f32 %v704, %v726
    %v781 = vadd.f32 %v705, %v722
    %v782 = vadd.f32 %v706, %v726
    %v783 = vadd.f32 %v707, %v722
    %v784 = vadd.f32 %v708, %v726
    %v785 = vadd.f32 %v709, %v722
    %v786 = vadd.f32 %v710, %v726
    %v787 = vadd.f32 %v711, %v722
    %v788 = vadd.f32 %v712, %v726
    %v789 = vadd.f32 %v713, %v722
    %v790 = vadd.f32 %v714, %v726
    %v791 = vadd.f32 %v715, %v722
    %v792 = vadd.f32 %v716, %v726
    %v793 = vmax.f32 %v729, 0.0
    %v794 = vmax.f32 %v730, 0.0
    %v795 = vmax.f32 %v731, 0.0
    %v796 = vmax.f32 %v732, 0.0
    %v797 = vmax.f32 %v733, 0.0
    %v798 = vmax.f32 %v734, 0.0
    %v799 = vmax.f32 %v735, 0.0
    %v800 = vmax.f32 %v736, 0.0
    %v801 = vmax.f32 %v737, 0.0
    %v802 = vmax.f32 %v738, 0.0
    %v803 = vmax.f32 %v739, 0.0
    %v804 = vmax.f32 %v740, 0.0
    %v805 = vmax.f32 %v741, 0.0
    %v806 = vmax.f32 %v742, 0.0
    %v807 = vmax.f32 %v743, 0.0
    %v808 = vmax.f32 %v744, 0.0
    %v809 = vmax.f32 %v745, 0.0
    %v810 = vmax.f32 %v746, 0.0
    %v811 = vmax.f32 %v747, 0.0
    %v812 = vmax.f32 %v748, 0.0
    %v813 = vmax.f32 %v749, 0.0
    %v814 = vmax.f32 %v750, 0.0
    %v815 = vmax.f32 %v751, 0.0
    %v816 = vmax.f32 %v752, 0.0
    %v817 = vmax.f32 %v753, 0.0
    %v818 = vmax.f32 %v754, 0.0
    %v819 = vmax.f32 %v755, 0.0
    %v820 = vmax.f32 %v756, 0.0
    %v821 = vmax.f32 %v757, 0.0
    %v822 = vmax.f32 %v758, 0.0
    %v823 = vmax.f32 %v759, 0.0
    %v824 = vmax.f32 %v760, 0.0
    %v825 = vmax.f32 %v761, 0.0
    %v826 = vmax.f32 %v762, 0.0
    %v827 = vmax.f32 %v763, 0.0
    %v828 = vmax.f32 %v764, 0.0
    %v829 = vmax.f32 %v765, 0.0
    %v830 = vmax.f32 %v766, 0.0
    %v831 = vmax.f32 %v767, 0.0
    %v832 = vmax.f32 %v768, 0.0
    %v833 = vmax.f32 %v769, 0.0
    %v834 = vmax.f32 %v770, 0.0
    %v835 = vmax.f32 %v771, 0.0
    %v836 = vmax.f32 %v772, 0.0
    %v837 = vmax.f32 %v773, 0.0
    %v838 = vmax.f32 %v774, 0.0
    %v839 = vmax.f32 %v775, 0.0
    %v840 = vmax.f32 %v776, 0.0
    %v841 = vmax.f32 %v777, 0.0
    %v842 = vmax.f32 %v778, 0.0
    %v843 = vmax.f32 %v779, 0.0
    %v844 = vmax.f32 %v780, 0.0
    %v845 = vmax.f32 %v781, 0.0
    %v846 = vmax.f32 %v782, 0.0
    %v847 = vmax.f32 %v783, 0.0
    %v848 = vmax.f32 %v784, 0.0
    %v849 = vmax.f32 %v785, 0.0
    %v850 = vmax.f32 %v786, 0.0
    %v851 = vmax.f32 %v787, 0.0
    %v852 = vmax.f32 %v788, 0.0
    %v853 = vmax.f32 %v789, 0.0
    %v854 = vmax.f32 %v790, 0.0
    %v855 = vmax.f32 %v791, 0.0
    %v856 = vmax.f32 %v792, 0.0
    %v857 = vpack.c.bf16 %v795, %v793
    %v858 = vpack.c.bf16 %v796, %v794
    %v859 = vpack.c.bf16 %v799, %v797
    %v860 = vpack.c.bf16 %v800, %v798
    %v861 = vpack.c.bf16 %v803, %v801
    %v862 = vpack.c.bf16 %v804, %v802
    %v863 = vpack.c.bf16 %v807, %v805
    %v864 = vpack.c.bf16 %v808, %v806
    %v865 = vpack.c.bf16 %v811, %v809
    %v866 = vpack.c.bf16 %v812, %v810
    %v867 = vpack.c.bf16 %v815, %v813
    %v868 = vpack.c.bf16 %v816, %v814
    %v869 = vpack.c.bf16 %v819, %v817
    %v870 = vpack.c.bf16 %v820, %v818
    %v871 = vpack.c.bf16 %v823, %v821
    %v872 = vpack.c.bf16 %v824, %v822
    %v873 = vpack.c.bf16 %v827, %v825
    %v874 = vpack.c.bf16 %v828, %v826
    %v875 = vpack.c.bf16 %v831, %v829
    %v876 = vpack.c.bf16 %v832, %v830
    %v877 = vpack.c.bf16 %v835, %v833
    %v878 = vpack.c.bf16 %v836, %v834
    %v879 = vpack.c.bf16 %v839, %v837
    %v880 = vpack.c.bf16 %v840, %v838
    %v881 = vpack.c.bf16 %v843, %v841
    %v882 = vpack.c.bf16 %v844, %v842
    %v883 = vpack.c.bf16 %v847, %v845
    %v884 = vpack.c.bf16 %v848, %v846
    %v885 = vpack.c.bf16 %v851, %v849
    %v886 = vpack.c.bf16 %v852, %v850
    %v887 = vpack.c.bf16 %v855, %v853
    %v888 = vpack.c.bf16 %v856, %v854
    %v889 = vld [vmem:[#allocation9 + $0x400] sm:$0xff]
    %v890 = vld [vmem:[#allocation9 + $0x408] sm:$0xff]
    %v891 = vld [vmem:[#allocation9 + $0x410] sm:$0xff]
    %v892 = vld [vmem:[#allocation9 + $0x418] sm:$0xff]
    %v893 = vld [vmem:[#allocation9 + $0x420] sm:$0xff]
    %v894 = vld [vmem:[#allocation9 + $0x428] sm:$0xff]
    %v895 = vld [vmem:[#allocation9 + $0x430] sm:$0xff]
    %v896 = vld [vmem:[#allocation9 + $0x438] sm:$0xff]
    %v897 = vld [vmem:[#allocation9 + $0x440] sm:$0xff]
    %v898 = vld [vmem:[#allocation9 + $0x448] sm:$0xff]
    %v899 = vld [vmem:[#allocation9 + $0x450] sm:$0xff]
    %v900 = vld [vmem:[#allocation9 + $0x458] sm:$0xff]
    %v901 = vld [vmem:[#allocation9 + $0x460] sm:$0xff]
    %v902 = vld [vmem:[#allocation9 + $0x468] sm:$0xff]
    %v903 = vld [vmem:[#allocation9 + $0x470] sm:$0xff]
    %v904 = vld [vmem:[#allocation9 + $0x478] sm:$0xff]
    %v905 = vld [vmem:[#allocation9 + $0x480] sm:$0xff]
    %v906 = vld [vmem:[#allocation9 + $0x488] sm:$0xff]
    %v907 = vld [vmem:[#allocation9 + $0x490] sm:$0xff]
    %v908 = vld [vmem:[#allocation9 + $0x498] sm:$0xff]
    %v909 = vld [vmem:[#allocation9 + $0x4a0] sm:$0xff]
    %v910 = vld [vmem:[#allocation9 + $0x4a8] sm:$0xff]
    %v911 = vld [vmem:[#allocation9 + $0x4b0] sm:$0xff]
    %v912 = vld [vmem:[#allocation9 + $0x4b8] sm:$0xff]
    %v913 = vld [vmem:[#allocation9 + $0x4c0] sm:$0xff]
    %v914 = vld [vmem:[#allocation9 + $0x4c8] sm:$0xff]
    %v915 = vld [vmem:[#allocation9 + $0x4d0] sm:$0xff]
    %v916 = vld [vmem:[#allocation9 + $0x4d8] sm:$0xff]
    %v917 = vld [vmem:[#allocation9 + $0x4e0] sm:$0xff]
    %v918 = vld [vmem:[#allocation9 + $0x4e8] sm:$0xff]
    %v919 = vld [vmem:[#allocation9 + $0x4f0] sm:$0xff]
    %v920 = vld [vmem:[#allocation9 + $0x4f8] sm:$0xff]
    %v921 = vld [vmem:[#allocation9 + $0x500] sm:$0xff]
    %v922 = vld [vmem:[#allocation9 + $0x508] sm:$0xff]
    %v923 = vld [vmem:[#allocation9 + $0x510] sm:$0xff]
    %v924 = vld [vmem:[#allocation9 + $0x518] sm:$0xff]
    %v925 = vld [vmem:[#allocation9 + $0x520] sm:$0xff]
    %v926 = vld [vmem:[#allocation9 + $0x528] sm:$0xff]
    %v927 = vld [vmem:[#allocation9 + $0x530] sm:$0xff]
    %v928 = vld [vmem:[#allocation9 + $0x538] sm:$0xff]
    %v929 = vld [vmem:[#allocation9 + $0x540] sm:$0xff]
    %v930 = vld [vmem:[#allocation9 + $0x548] sm:$0xff]
    %v931 = vld [vmem:[#allocation9 + $0x550] sm:$0xff]
    %v932 = vld [vmem:[#allocation9 + $0x558] sm:$0xff]
    %v933 = vld [vmem:[#allocation9 + $0x560] sm:$0xff]
    %v934 = vld [vmem:[#allocation9 + $0x568] sm:$0xff]
    %v935 = vld [vmem:[#allocation9 + $0x570] sm:$0xff]
    %v936 = vld [vmem:[#allocation9 + $0x578] sm:$0xff]
    %v937 = vld [vmem:[#allocation9 + $0x580] sm:$0xff]
    %v938 = vld [vmem:[#allocation9 + $0x588] sm:$0xff]
    %v939 = vld [vmem:[#allocation9 + $0x590] sm:$0xff]
    %v940 = vld [vmem:[#allocation9 + $0x598] sm:$0xff]
    %v941 = vld [vmem:[#allocation9 + $0x5a0] sm:$0xff]
    %v942 = vld [vmem:[#allocation9 + $0x5a8] sm:$0xff]
    %v943 = vld [vmem:[#allocation9 + $0x5b0] sm:$0xff]
    %v944 = vld [vmem:[#allocation9 + $0x5b8] sm:$0xff]
    %v945 = vld [vmem:[#allocation9 + $0x5c0] sm:$0xff]
    %v946 = vld [vmem:[#allocation9 + $0x5c8] sm:$0xff]
    %v947 = vld [vmem:[#allocation9 + $0x5d0] sm:$0xff]
    %v948 = vld [vmem:[#allocation9 + $0x5d8] sm:$0xff]
    %v949 = vld [vmem:[#allocation9 + $0x5e0] sm:$0xff]
    %v950 = vld [vmem:[#allocation9 + $0x5e8] sm:$0xff]
    %v951 = vld [vmem:[#allocation9 + $0x5f0] sm:$0xff]
    %v952 = vld [vmem:[#allocation9 + $0x5f8] sm:$0xff]
    %v953 = vld [vmem:[#allocation9 + $0x600] sm:$0xff]
    %v954 = vld [vmem:[#allocation9 + $0x608] sm:$0xff]
    %v955 = vld [vmem:[#allocation9 + $0x610] sm:$0xff]
    %v956 = vld [vmem:[#allocation9 + $0x618] sm:$0xff]
    %v957 = vld [vmem:[#allocation9 + $0x620] sm:$0xff]
    %v958 = vld [vmem:[#allocation9 + $0x628] sm:$0xff]
    %v959 = vld [vmem:[#allocation9 + $0x630] sm:$0xff]
    %v960 = vld [vmem:[#allocation9 + $0x638] sm:$0xff]
    %v961 = vld [vmem:[#allocation9 + $0x640] sm:$0xff]
    %v962 = vld [vmem:[#allocation9 + $0x648] sm:$0xff]
    %v963 = vld [vmem:[#allocation9 + $0x650] sm:$0xff]
    %v964 = vld [vmem:[#allocation9 + $0x658] sm:$0xff]
    %v965 = vld [vmem:[#allocation9 + $0x660] sm:$0xff]
    %v966 = vld [vmem:[#allocation9 + $0x668] sm:$0xff]
    %v967 = vld [vmem:[#allocation9 + $0x670] sm:$0xff]
    %v968 = vld [vmem:[#allocation9 + $0x678] sm:$0xff]
    %v969 = vld [vmem:[#allocation9 + $0x680] sm:$0xff]
    %v970 = vld [vmem:[#allocation9 + $0x688] sm:$0xff]
    %v971 = vld [vmem:[#allocation9 + $0x690] sm:$0xff]
    %v972 = vld [vmem:[#allocation9 + $0x698] sm:$0xff]
    %v973 = vld [vmem:[#allocation9 + $0x6a0] sm:$0xff]
    %v974 = vld [vmem:[#allocation9 + $0x6a8] sm:$0xff]
    %v975 = vld [vmem:[#allocation9 + $0x6b0] sm:$0xff]
    %v976 = vld [vmem:[#allocation9 + $0x6b8] sm:$0xff]
    %v977 = vld [vmem:[#allocation9 + $0x6c0] sm:$0xff]
    %v978 = vld [vmem:[#allocation9 + $0x6c8] sm:$0xff]
    %v979 = vld [vmem:[#allocation9 + $0x6d0] sm:$0xff]
    %v980 = vld [vmem:[#allocation9 + $0x6d8] sm:$0xff]
    %v981 = vld [vmem:[#allocation9 + $0x6e0] sm:$0xff]
    %v982 = vld [vmem:[#allocation9 + $0x6e8] sm:$0xff]
    %v983 = vld [vmem:[#allocation9 + $0x6f0] sm:$0xff]
    %v984 = vld [vmem:[#allocation9 + $0x6f8] sm:$0xff]
    %v985 = vld [vmem:[#allocation9 + $0x700] sm:$0xff]
    %v986 = vld [vmem:[#allocation9 + $0x708] sm:$0xff]
    %v987 = vld [vmem:[#allocation9 + $0x710] sm:$0xff]
    %v988 = vld [vmem:[#allocation9 + $0x718] sm:$0xff]
    %v989 = vld [vmem:[#allocation9 + $0x720] sm:$0xff]
    %v990 = vld [vmem:[#allocation9 + $0x728] sm:$0xff]
    %v991 = vld [vmem:[#allocation9 + $0x730] sm:$0xff]
    %v992 = vld [vmem:[#allocation9 + $0x738] sm:$0xff]
    %v993 = vld [vmem:[#allocation9 + $0x740] sm:$0xff]
    %v994 = vld [vmem:[#allocation9 + $0x748] sm:$0xff]
    %v995 = vld [vmem:[#allocation9 + $0x750] sm:$0xff]
    %v996 = vld [vmem:[#allocation9 + $0x758] sm:$0xff]
    %v997 = vld [vmem:[#allocation9 + $0x760] sm:$0xff]
    %v998 = vld [vmem:[#allocation9 + $0x768] sm:$0xff]
    %v999 = vld [vmem:[#allocation9 + $0x770] sm:$0xff]
    %v1000 = vld [vmem:[#allocation9 + $0x778] sm:$0xff]
    %v1001 = vld [vmem:[#allocation9 + $0x780] sm:$0xff]
    %v1002 = vld [vmem:[#allocation9 + $0x788] sm:$0xff]
    %v1003 = vld [vmem:[#allocation9 + $0x790] sm:$0xff]
    %v1004 = vld [vmem:[#allocation9 + $0x798] sm:$0xff]
    %v1005 = vld [vmem:[#allocation9 + $0x7a0] sm:$0xff]
    %v1006 = vld [vmem:[#allocation9 + $0x7a8] sm:$0xff]
    %v1007 = vld [vmem:[#allocation9 + $0x7b0] sm:$0xff]
    %v1008 = vld [vmem:[#allocation9 + $0x7b8] sm:$0xff]
    %v1009 = vld [vmem:[#allocation9 + $0x7c0] sm:$0xff]
    %v1010 = vld [vmem:[#allocation9 + $0x7c8] sm:$0xff]
    %v1011 = vld [vmem:[#allocation9 + $0x7d0] sm:$0xff]
    %v1012 = vld [vmem:[#allocation9 + $0x7d8] sm:$0xff]
    %v1013 = vld [vmem:[#allocation9 + $0x7e0] sm:$0xff]
    %v1014 = vld [vmem:[#allocation9 + $0x7e8] sm:$0xff]
    %v1015 = vld [vmem:[#allocation9 + $0x7f0] sm:$0xff]
    %v1016 = vld [vmem:[#allocation9 + $0x7f8] sm:$0xff]
    %v1145 = vunpack.c.l.b16 %v889
    %v1146 = vunpack.c.h.b16 %v889
    %v1147 = vunpack.c.l.b16 %v890
    %v1148 = vunpack.c.h.b16 %v890
    %v1149 = vunpack.c.l.b16 %v891
    %v1150 = vunpack.c.h.b16 %v891
    %v1151 = vunpack.c.l.b16 %v892
    %v1152 = vunpack.c.h.b16 %v892
    %v1153 = vunpack.c.l.b16 %v893
    %v1154 = vunpack.c.h.b16 %v893
    %v1155 = vunpack.c.l.b16 %v894
    %v1156 = vunpack.c.h.b16 %v894
    %v1157 = vunpack.c.l.b16 %v895
    %v1158 = vunpack.c.h.b16 %v895
    %v1159 = vunpack.c.l.b16 %v896
    %v1160 = vunpack.c.h.b16 %v896
    %v1161 = vunpack.c.l.b16 %v897
    %v1162 = vunpack.c.h.b16 %v897
    %v1163 = vunpack.c.l.b16 %v898
    %v1164 = vunpack.c.h.b16 %v898
    %v1165 = vunpack.c.l.b16 %v899
    %v1166 = vunpack.c.h.b16 %v899
    %v1167 = vunpack.c.l.b16 %v900
    %v1168 = vunpack.c.h.b16 %v900
    %v1169 = vunpack.c.l.b16 %v901
    %v1170 = vunpack.c.h.b16 %v901
    %v1171 = vunpack.c.l.b16 %v902
    %v1172 = vunpack.c.h.b16 %v902
    %v1173 = vunpack.c.l.b16 %v903
    %v1174 = vunpack.c.h.b16 %v903
    %v1175 = vunpack.c.l.b16 %v904
    %v1176 = vunpack.c.h.b16 %v904
    %v1177 = vunpack.c.l.b16 %v905
    %v1178 = vunpack.c.h.b16 %v905
    %v1179 = vunpack.c.l.b16 %v906
    %v1180 = vunpack.c.h.b16 %v906
    %v1181 = vunpack.c.l.b16 %v907
    %v1182 = vunpack.c.h.b16 %v907
    %v1183 = vunpack.c.l.b16 %v908
    %v1184 = vunpack.c.h.b16 %v908
    %v1185 = vunpack.c.l.b16 %v909
    %v1186 = vunpack.c.h.b16 %v909
    %v1187 = vunpack.c.l.b16 %v910
    %v1188 = vunpack.c.h.b16 %v910
    %v1189 = vunpack.c.l.b16 %v911
    %v1190 = vunpack.c.h.b16 %v911
    %v1191 = vunpack.c.l.b16 %v912
    %v1192 = vunpack.c.h.b16 %v912
    %v1193 = vunpack.c.l.b16 %v913
    %v1194 = vunpack.c.h.b16 %v913
    %v1195 = vunpack.c.l.b16 %v914
    %v1196 = vunpack.c.h.b16 %v914
    %v1197 = vunpack.c.l.b16 %v915
    %v1198 = vunpack.c.h.b16 %v915
    %v1199 = vunpack.c.l.b16 %v916
    %v1200 = vunpack.c.h.b16 %v916
    %v1201 = vunpack.c.l.b16 %v917
    %v1202 = vunpack.c.h.b16 %v917
    %v1203 = vunpack.c.l.b16 %v918
    %v1204 = vunpack.c.h.b16 %v918
    %v1205 = vunpack.c.l.b16 %v919
    %v1206 = vunpack.c.h.b16 %v919
    %v1207 = vunpack.c.l.b16 %v920
    %v1208 = vunpack.c.h.b16 %v920
    %v1209 = vunpack.c.l.b16 %v921
    %v1210 = vunpack.c.h.b16 %v921
    %v1211 = vunpack.c.l.b16 %v922
    %v1212 = vunpack.c.h.b16 %v922
    %v1213 = vunpack.c.l.b16 %v923
    %v1214 = vunpack.c.h.b16 %v923
    %v1215 = vunpack.c.l.b16 %v924
    %v1216 = vunpack.c.h.b16 %v924
    %v1217 = vunpack.c.l.b16 %v925
    %v1218 = vunpack.c.h.b16 %v925
    %v1219 = vunpack.c.l.b16 %v926
    %v1220 = vunpack.c.h.b16 %v926
    %v1221 = vunpack.c.l.b16 %v927
    %v1222 = vunpack.c.h.b16 %v927
    %v1223 = vunpack.c.l.b16 %v928
    %v1224 = vunpack.c.h.b16 %v928
    %v1225 = vunpack.c.l.b16 %v929
    %v1226 = vunpack.c.h.b16 %v929
    %v1227 = vunpack.c.l.b16 %v930
    %v1228 = vunpack.c.h.b16 %v930
    %v1229 = vunpack.c.l.b16 %v931
    %v1230 = vunpack.c.h.b16 %v931
    %v1231 = vunpack.c.l.b16 %v932
    %v1232 = vunpack.c.h.b16 %v932
    %v1233 = vunpack.c.l.b16 %v933
    %v1234 = vunpack.c.h.b16 %v933
    %v1235 = vunpack.c.l.b16 %v934
    %v1236 = vunpack.c.h.b16 %v934
    %v1237 = vunpack.c.l.b16 %v935
    %v1238 = vunpack.c.h.b16 %v935
    %v1239 = vunpack.c.l.b16 %v936
    %v1240 = vunpack.c.h.b16 %v936
    %v1241 = vunpack.c.l.b16 %v937
    %v1242 = vunpack.c.h.b16 %v937
    %v1243 = vunpack.c.l.b16 %v938
    %v1244 = vunpack.c.h.b16 %v938
    %v1245 = vunpack.c.l.b16 %v939
    %v1246 = vunpack.c.h.b16 %v939
    %v1247 = vunpack.c.l.b16 %v940
    %v1248 = vunpack.c.h.b16 %v940
    %v1249 = vunpack.c.l.b16 %v941
    %v1250 = vunpack.c.h.b16 %v941
    %v1251 = vunpack.c.l.b16 %v942
    %v1252 = vunpack.c.h.b16 %v942
    %v1253 = vunpack.c.l.b16 %v943
    %v1254 = vunpack.c.h.b16 %v943
    %v1255 = vunpack.c.l.b16 %v944
    %v1256 = vunpack.c.h.b16 %v944
    %v1257 = vunpack.c.l.b16 %v945
    %v1258 = vunpack.c.h.b16 %v945
    %v1259 = vunpack.c.l.b16 %v946
    %v1260 = vunpack.c.h.b16 %v946
    %v1261 = vunpack.c.l.b16 %v947
    %v1262 = vunpack.c.h.b16 %v947
    %v1263 = vunpack.c.l.b16 %v948
    %v1264 = vunpack.c.h.b16 %v948
    %v1265 = vunpack.c.l.b16 %v949
    %v1266 = vunpack.c.h.b16 %v949
    %v1267 = vunpack.c.l.b16 %v950
    %v1268 = vunpack.c.h.b16 %v950
    %v1269 = vunpack.c.l.b16 %v951
    %v1270 = vunpack.c.h.b16 %v951
    %v1271 = vunpack.c.l.b16 %v952
    %v1272 = vunpack.c.h.b16 %v952
    %v1273 = vunpack.c.l.b16 %v953
    %v1274 = vunpack.c.h.b16 %v953
    %v1275 = vunpack.c.l.b16 %v954
    %v1276 = vunpack.c.h.b16 %v954
    %v1277 = vunpack.c.l.b16 %v955
    %v1278 = vunpack.c.h.b16 %v955
    %v1279 = vunpack.c.l.b16 %v956
    %v1280 = vunpack.c.h.b16 %v956
    %v1281 = vunpack.c.l.b16 %v957
    %v1282 = vunpack.c.h.b16 %v957
    %v1283 = vunpack.c.l.b16 %v958
    %v1284 = vunpack.c.h.b16 %v958
    %v1285 = vunpack.c.l.b16 %v959
    %v1286 = vunpack.c.h.b16 %v959
    %v1287 = vunpack.c.l.b16 %v960
    %v1288 = vunpack.c.h.b16 %v960
    %v1289 = vunpack.c.l.b16 %v961
    %v1290 = vunpack.c.h.b16 %v961
    %v1291 = vunpack.c.l.b16 %v962
    %v1292 = vunpack.c.h.b16 %v962
    %v1293 = vunpack.c.l.b16 %v963
    %v1294 = vunpack.c.h.b16 %v963
    %v1295 = vunpack.c.l.b16 %v964
    %v1296 = vunpack.c.h.b16 %v964
    %v1297 = vunpack.c.l.b16 %v965
    %v1298 = vunpack.c.h.b16 %v965
    %v1299 = vunpack.c.l.b16 %v966
    %v1300 = vunpack.c.h.b16 %v966
    %v1301 = vunpack.c.l.b16 %v967
    %v1302 = vunpack.c.h.b16 %v967
    %v1303 = vunpack.c.l.b16 %v968
    %v1304 = vunpack.c.h.b16 %v968
    %v1305 = vunpack.c.l.b16 %v969
    %v1306 = vunpack.c.h.b16 %v969
    %v1307 = vunpack.c.l.b16 %v970
    %v1308 = vunpack.c.h.b16 %v970
    %v1309 = vunpack.c.l.b16 %v971
    %v1310 = vunpack.c.h.b16 %v971
    %v1311 = vunpack.c.l.b16 %v972
    %v1312 = vunpack.c.h.b16 %v972
    %v1313 = vunpack.c.l.b16 %v973
    %v1314 = vunpack.c.h.b16 %v973
    %v1315 = vunpack.c.l.b16 %v974
    %v1316 = vunpack.c.h.b16 %v974
    %v1317 = vunpack.c.l.b16 %v975
    %v1318 = vunpack.c.h.b16 %v975
    %v1319 = vunpack.c.l.b16 %v976
    %v1320 = vunpack.c.h.b16 %v976
    %v1321 = vunpack.c.l.b16 %v977
    %v1322 = vunpack.c.h.b16 %v977
    %v1323 = vunpack.c.l.b16 %v978
    %v1324 = vunpack.c.h.b16 %v978
    %v1325 = vunpack.c.l.b16 %v979
    %v1326 = vunpack.c.h.b16 %v979
    %v1327 = vunpack.c.l.b16 %v980
    %v1328 = vunpack.c.h.b16 %v980
    %v1329 = vunpack.c.l.b16 %v981
    %v1330 = vunpack.c.h.b16 %v981
    %v1331 = vunpack.c.l.b16 %v982
    %v1332 = vunpack.c.h.b16 %v982
    %v1333 = vunpack.c.l.b16 %v983
    %v1334 = vunpack.c.h.b16 %v983
    %v1335 = vunpack.c.l.b16 %v984
    %v1336 = vunpack.c.h.b16 %v984
    %v1337 = vunpack.c.l.b16 %v985
    %v1338 = vunpack.c.h.b16 %v985
    %v1339 = vunpack.c.l.b16 %v986
    %v1340 = vunpack.c.h.b16 %v986
    %v1341 = vunpack.c.l.b16 %v987
    %v1342 = vunpack.c.h.b16 %v987
    %v1343 = vunpack.c.l.b16 %v988
    %v1344 = vunpack.c.h.b16 %v988
    %v1345 = vunpack.c.l.b16 %v989
    %v1346 = vunpack.c.h.b16 %v989
    %v1347 = vunpack.c.l.b16 %v990
    %v1348 = vunpack.c.h.b16 %v990
    %v1349 = vunpack.c.l.b16 %v991
    %v1350 = vunpack.c.h.b16 %v991
    %v1351 = vunpack.c.l.b16 %v992
    %v1352 = vunpack.c.h.b16 %v992
    %v1353 = vunpack.c.l.b16 %v993
    %v1354 = vunpack.c.h.b16 %v993
    %v1355 = vunpack.c.l.b16 %v994
    %v1356 = vunpack.c.h.b16 %v994
    %v1357 = vunpack.c.l.b16 %v995
    %v1358 = vunpack.c.h.b16 %v995
    %v1359 = vunpack.c.l.b16 %v996
    %v1360 = vunpack.c.h.b16 %v996
    %v1361 = vunpack.c.l.b16 %v997
    %v1362 = vunpack.c.h.b16 %v997
    %v1363 = vunpack.c.l.b16 %v998
    %v1364 = vunpack.c.h.b16 %v998
    %v1365 = vunpack.c.l.b16 %v999
    %v1366 = vunpack.c.h.b16 %v999
    %v1367 = vunpack.c.l.b16 %v1000
    %v1368 = vunpack.c.h.b16 %v1000
    %v1369 = vunpack.c.l.b16 %v1001
    %v1370 = vunpack.c.h.b16 %v1001
    %v1371 = vunpack.c.l.b16 %v1002
    %v1372 = vunpack.c.h.b16 %v1002
    %v1373 = vunpack.c.l.b16 %v1003
    %v1374 = vunpack.c.h.b16 %v1003
    %v1375 = vunpack.c.l.b16 %v1004
    %v1376 = vunpack.c.h.b16 %v1004
    %v1377 = vunpack.c.l.b16 %v1005
    %v1378 = vunpack.c.h.b16 %v1005
    %v1379 = vunpack.c.l.b16 %v1006
    %v1380 = vunpack.c.h.b16 %v1006
    %v1381 = vunpack.c.l.b16 %v1007
    %v1382 = vunpack.c.h.b16 %v1007
    %v1383 = vunpack.c.l.b16 %v1008
    %v1384 = vunpack.c.h.b16 %v1008
    %v1385 = vunpack.c.l.b16 %v1009
    %v1386 = vunpack.c.h.b16 %v1009
    %v1387 = vunpack.c.l.b16 %v1010
    %v1388 = vunpack.c.h.b16 %v1010
    %v1389 = vunpack.c.l.b16 %v1011
    %v1390 = vunpack.c.h.b16 %v1011
    %v1391 = vunpack.c.l.b16 %v1012
    %v1392 = vunpack.c.h.b16 %v1012
    %v1393 = vunpack.c.l.b16 %v1013
    %v1394 = vunpack.c.h.b16 %v1013
    %v1395 = vunpack.c.l.b16 %v1014
    %v1396 = vunpack.c.h.b16 %v1014
    %v1397 = vunpack.c.l.b16 %v1015
    %v1398 = vunpack.c.h.b16 %v1015
    %v1399 = vunpack.c.l.b16 %v1016
    %v1400 = vunpack.c.h.b16 %v1016
    %v1401 = vpack.c.b16 %v1153, %v1145
    %v1402 = vpack.c.b16 %v1154, %v1146
    %v1403 = vpack.c.b16 %v1155, %v1147
    %v1404 = vpack.c.b16 %v1156, %v1148
    %v1405 = vpack.c.b16 %v1157, %v1149
    %v1406 = vpack.c.b16 %v1158, %v1150
    %v1407 = vpack.c.b16 %v1159, %v1151
    %v1408 = vpack.c.b16 %v1160, %v1152
    %v1409 = vpack.c.b16 %v1169, %v1161
    %v1410 = vpack.c.b16 %v1170, %v1162
    %v1411 = vpack.c.b16 %v1171, %v1163
    %v1412 = vpack.c.b16 %v1172, %v1164
    %v1413 = vpack.c.b16 %v1173, %v1165
    %v1414 = vpack.c.b16 %v1174, %v1166
    %v1415 = vpack.c.b16 %v1175, %v1167
    %v1416 = vpack.c.b16 %v1176, %v1168
    %v1417 = vpack.c.b16 %v1185, %v1177
    %v1418 = vpack.c.b16 %v1186, %v1178
    %v1419 = vpack.c.b16 %v1187, %v1179
    %v1420 = vpack.c.b16 %v1188, %v1180
    %v1421 = vpack.c.b16 %v1189, %v1181
    %v1422 = vpack.c.b16 %v1190, %v1182
    %v1423 = vpack.c.b16 %v1191, %v1183
    %v1424 = vpack.c.b16 %v1192, %v1184
    %v1425 = vpack.c.b16 %v1201, %v1193
    %v1426 = vpack.c.b16 %v1202, %v1194
    %v1427 = vpack.c.b16 %v1203, %v1195
    %v1428 = vpack.c.b16 %v1204, %v1196
    %v1429 = vpack.c.b16 %v1205, %v1197
    %v1430 = vpack.c.b16 %v1206, %v1198
    %v1431 = vpack.c.b16 %v1207, %v1199
    %v1432 = vpack.c.b16 %v1208, %v1200
    %v1433 = vpack.c.b16 %v1217, %v1209
    %v1434 = vpack.c.b16 %v1218, %v1210
    %v1435 = vpack.c.b16 %v1219, %v1211
    %v1436 = vpack.c.b16 %v1220, %v1212
    %v1437 = vpack.c.b16 %v1221, %v1213
    %v1438 = vpack.c.b16 %v1222, %v1214
    %v1439 = vpack.c.b16 %v1223, %v1215
    %v1440 = vpack.c.b16 %v1224, %v1216
    %v1441 = vpack.c.b16 %v1233, %v1225
    %v1442 = vpack.c.b16 %v1234, %v1226
    %v1443 = vpack.c.b16 %v1235, %v1227
    %v1444 = vpack.c.b16 %v1236, %v1228
    %v1445 = vpack.c.b16 %v1237, %v1229
    %v1446 = vpack.c.b16 %v1238, %v1230
    %v1447 = vpack.c.b16 %v1239, %v1231
    %v1448 = vpack.c.b16 %v1240, %v1232
    %v1449 = vpack.c.b16 %v1249, %v1241
    %v1450 = vpack.c.b16 %v1250, %v1242
    %v1451 = vpack.c.b16 %v1251, %v1243
    %v1452 = vpack.c.b16 %v1252, %v1244
    %v1453 = vpack.c.b16 %v1253, %v1245
    %v1454 = vpack.c.b16 %v1254, %v1246
    %v1455 = vpack.c.b16 %v1255, %v1247
    %v1456 = vpack.c.b16 %v1256, %v1248
    %v1457 = vpack.c.b16 %v1265, %v1257
    %v1458 = vpack.c.b16 %v1266, %v1258
    %v1459 = vpack.c.b16 %v1267, %v1259
    %v1460 = vpack.c.b16 %v1268, %v1260
    %v1461 = vpack.c.b16 %v1269, %v1261
    %v1462 = vpack.c.b16 %v1270, %v1262
    %v1463 = vpack.c.b16 %v1271, %v1263
    %v1464 = vpack.c.b16 %v1272, %v1264
    %v1465 = vpack.c.b16 %v1281, %v1273
    %v1466 = vpack.c.b16 %v1282, %v1274
    %v1467 = vpack.c.b16 %v1283, %v1275
    %v1468 = vpack.c.b16 %v1284, %v1276
    %v1469 = vpack.c.b16 %v1285, %v1277
    %v1470 = vpack.c.b16 %v1286, %v1278
    %v1471 = vpack.c.b16 %v1287, %v1279
    %v1472 = vpack.c.b16 %v1288, %v1280
    %v1473 = vpack.c.b16 %v1297, %v1289
    %v1474 = vpack.c.b16 %v1298, %v1290
    %v1475 = vpack.c.b16 %v1299, %v1291
    %v1476 = vpack.c.b16 %v1300, %v1292
    %v1477 = vpack.c.b16 %v1301, %v1293
    %v1478 = vpack.c.b16 %v1302, %v1294
    %v1479 = vpack.c.b16 %v1303, %v1295
    %v1480 = vpack.c.b16 %v1304, %v1296
    %v1481 = vpack.c.b16 %v1313, %v1305
    %v1482 = vpack.c.b16 %v1314, %v1306
    %v1483 = vpack.c.b16 %v1315, %v1307
    %v1484 = vpack.c.b16 %v1316, %v1308
    %v1485 = vpack.c.b16 %v1317, %v1309
    %v1486 = vpack.c.b16 %v1318, %v1310
    %v1487 = vpack.c.b16 %v1319, %v1311
    %v1488 = vpack.c.b16 %v1320, %v1312
    %v1489 = vpack.c.b16 %v1329, %v1321
    %v1490 = vpack.c.b16 %v1330, %v1322
    %v1491 = vpack.c.b16 %v1331, %v1323
    %v1492 = vpack.c.b16 %v1332, %v1324
    %v1493 = vpack.c.b16 %v1333, %v1325
    %v1494 = vpack.c.b16 %v1334, %v1326
    %v1495 = vpack.c.b16 %v1335, %v1327
    %v1496 = vpack.c.b16 %v1336, %v1328
    %v1497 = vpack.c.b16 %v1345, %v1337
    %v1498 = vpack.c.b16 %v1346, %v1338
    %v1499 = vpack.c.b16 %v1347, %v1339
    %v1500 = vpack.c.b16 %v1348, %v1340
    %v1501 = vpack.c.b16 %v1349, %v1341
    %v1502 = vpack.c.b16 %v1350, %v1342
    %v1503 = vpack.c.b16 %v1351, %v1343
    %v1504 = vpack.c.b16 %v1352, %v1344
    %v1505 = vpack.c.b16 %v1361, %v1353
    %v1506 = vpack.c.b16 %v1362, %v1354
    %v1507 = vpack.c.b16 %v1363, %v1355
    %v1508 = vpack.c.b16 %v1364, %v1356
    %v1509 = vpack.c.b16 %v1365, %v1357
    %v1510 = vpack.c.b16 %v1366, %v1358
    %v1511 = vpack.c.b16 %v1367, %v1359
    %v1512 = vpack.c.b16 %v1368, %v1360
    %v1513 = vpack.c.b16 %v1377, %v1369
    %v1514 = vpack.c.b16 %v1378, %v1370
    %v1515 = vpack.c.b16 %v1379, %v1371
    %v1516 = vpack.c.b16 %v1380, %v1372
    %v1517 = vpack.c.b16 %v1381, %v1373
    %v1518 = vpack.c.b16 %v1382, %v1374
    %v1519 = vpack.c.b16 %v1383, %v1375
    %v1520 = vpack.c.b16 %v1384, %v1376
    %v1521 = vpack.c.b16 %v1393, %v1385
    %v1522 = vpack.c.b16 %v1394, %v1386
    %v1523 = vpack.c.b16 %v1395, %v1387
    %v1524 = vpack.c.b16 %v1396, %v1388
    %v1525 = vpack.c.b16 %v1397, %v1389
    %v1526 = vpack.c.b16 %v1398, %v1390
    %v1527 = vpack.c.b16 %v1399, %v1391
    %v1528 = vpack.c.b16 %v1400, %v1392
    %1657 = vmatprep.subr.bf16.mxu0 %v1402
    %1658 = vmatpush1.bf16.msra.mxu0 %v1401
    %1659 = vmatprep.subr.bf16.mxu0 %v1410
    %1660 = vmatpush1.bf16.msra.mxu0 %v1409
    %1661 = vmatprep.subr.bf16.mxu0 %v1418
    %1662 = vmatpush1.bf16.msra.mxu0 %v1417
    %1663 = vmatprep.subr.bf16.mxu0 %v1426
    %1664 = vmatpush1.bf16.msra.mxu0 %v1425
    %1665 = vmatprep.subr.bf16.mxu0 %v1434
    %1666 = vmatpush1.bf16.msra.mxu0 %v1433
    %1667 = vmatprep.subr.bf16.mxu0 %v1442
    %1668 = vmatpush1.bf16.msra.mxu0 %v1441
    %1669 = vmatprep.subr.bf16.mxu0 %v1450
    %1670 = vmatpush1.bf16.msra.mxu0 %v1449
    %1671 = vmatprep.subr.bf16.mxu0 %v1458
    %1672 = vmatpush1.bf16.msra.mxu0 %v1457
    %1673 = vmatprep.subr.bf16.mxu0 %v1466
    %1674 = vmatpush1.bf16.msra.mxu0 %v1465
    %1675 = vmatprep.subr.bf16.mxu0 %v1474
    %1676 = vmatpush1.bf16.msra.mxu0 %v1473
    %1677 = vmatprep.subr.bf16.mxu0 %v1482
    %1678 = vmatpush1.bf16.msra.mxu0 %v1481
    %1679 = vmatprep.subr.bf16.mxu0 %v1490
    %1680 = vmatpush1.bf16.msra.mxu0 %v1489
    %1681 = vmatprep.subr.bf16.mxu0 %v1498
    %1682 = vmatpush1.bf16.msra.mxu0 %v1497
    %1683 = vmatprep.subr.bf16.mxu0 %v1506
    %1684 = vmatpush1.bf16.msra.mxu0 %v1505
    %1685 = vmatprep.subr.bf16.mxu0 %v1514
    %1686 = vmatpush1.bf16.msra.mxu0 %v1513
    %1687 = vmatprep.subr.bf16.mxu0 %v1522
    %1688 = vmatpush1.bf16.msra.mxu0 %v1521
    %1689 = vmatprep.mubr.bf16.mxu0 %v858
    %1690 = vmatmul.mubr.bf16.gmra.mrb[0].mxu0 %v857
    %v1691 = vpop.f32.mrb[0].mxu0
    %v1692 = vadd.f32 0.0, %v1691
    %v1693 = vpop.f32.mrb[0].mxu0
    %v1694 = vadd.f32 0.0, %v1693
    %v1695 = vpop.f32.mrb[0].mxu0
    %v1696 = vadd.f32 0.0, %v1695
    %v1697 = vpop.f32.mrb[0].mxu0
    %v1698 = vadd.f32 0.0, %v1697
    %1699 = vmatprep.mubr.bf16.mxu0 %v860
    %1700 = vmatmul.mubr.bf16.gmra.mrb[0].mxu0 %v859
    %v1701 = vpop.f32.mrb[0].mxu0
    %v1702 = vadd.f32 0.0, %v1701
    %v1703 = vpop.f32.mrb[0].mxu0
    %v1704 = vadd.f32 0.0, %v1703
    %v1705 = vpop.f32.mrb[0].mxu0
    %v1706 = vadd.f32 0.0, %v1705
    %v1707 = vpop.f32.mrb[0].mxu0
    %v1708 = vadd.f32 0.0, %v1707
    %1709 = vmatprep.mubr.bf16.mxu0 %v862
    %1710 = vmatmul.mubr.bf16.gmra.mrb[0].mxu0 %v861
    %v1711 = vpop.f32.mrb[0].mxu0
    %v1712 = vadd.f32 0.0, %v1711
    %v1713 = vpop.f32.mrb[0].mxu0
    %v1714 = vadd.f32 0.0, %v1713
    %v1715 = vpop.f32.mrb[0].mxu0
    %v1716 = vadd.f32 0.0, %v1715
    %v1717 = vpop.f32.mrb[0].mxu0
    %v1718 = vadd.f32 0.0, %v1717
    %1719 = vmatprep.mubr.bf16.mxu0 %v864
    %1720 = vmatmul.mubr.bf16.gmra.mrb[0].mxu0 %v863
    %v1721 = vpop.f32.mrb[0].mxu0
    %v1722 = vadd.f32 0.0, %v1721
    %v1723 = vpop.f32.mrb[0].mxu0
    %v1724 = vadd.f32 0.0, %v1723
    %v1725 = vpop.f32.mrb[0].mxu0
    %v1726 = vadd.f32 0.0, %v1725
    %v1727 = vpop.f32.mrb[0].mxu0
    %v1728 = vadd.f32 0.0, %v1727
    %1729 = vmatprep.mubr.bf16.mxu0 %v866
    %1730 = vmatmul.mubr.bf16.gmra.mrb[0].mxu0 %v865
    %v1731 = vpop.f32.mrb[0].mxu0
    %v1732 = vadd.f32 0.0, %v1731
    %v1733 = vpop.f32.mrb[0].mxu0
    %v1734 = vadd.f32 0.0, %v1733
    %v1735 = vpop.f32.mrb[0].mxu0
    %v1736 = vadd.f32 0.0, %v1735
    %v1737 = vpop.f32.mrb[0].mxu0
    %v1738 = vadd.f32 0.0, %v1737
    %1739 = vmatprep.mubr.bf16.mxu0 %v868
    %1740 = vmatmul.mubr.bf16.gmra.mrb[0].mxu0 %v867
    %v1741 = vpop.f32.mrb[0].mxu0
    %v1742 = vadd.f32 0.0, %v1741
    %v1743 = vpop.f32.mrb[0].mxu0
    %v1744 = vadd.f32 0.0, %v1743
    %v1745 = vpop.f32.mrb[0].mxu0
    %v1746 = vadd.f32 0.0, %v1745
    %v1747 = vpop.f32.mrb[0].mxu0
    %v1748 = vadd.f32 0.0, %v1747
    %1749 = vmatprep.mubr.bf16.mxu0 %v870
    %1750 = vmatmul.mubr.bf16.gmra.mrb[0].mxu0 %v869
    %v1751 = vpop.f32.mrb[0].mxu0
    %v1752 = vadd.f32 0.0, %v1751
    %v1753 = vpop.f32.mrb[0].mxu0
    %v1754 = vadd.f32 0.0, %v1753
    %v1755 = vpop.f32.mrb[0].mxu0
    %v1756 = vadd.f32 0.0, %v1755
    %v1757 = vpop.f32.mrb[0].mxu0
    %v1758 = vadd.f32 0.0, %v1757
    %1759 = vmatprep.mubr.bf16.mxu0 %v872
    %1760 = vmatmul.mubr.bf16.gmra.mrb[0].mxu0 %v871
    %v1761 = vpop.f32.mrb[0].mxu0
    %v1762 = vadd.f32 0.0, %v1761
    %v1763 = vpop.f32.mrb[0].mxu0
    %v1764 = vadd.f32 0.0, %v1763
    %v1765 = vpop.f32.mrb[0].mxu0
    %v1766 = vadd.f32 0.0, %v1765
    %v1767 = vpop.f32.mrb[0].mxu0
    %v1768 = vadd.f32 0.0, %v1767
    %1769 = vmatprep.mubr.bf16.mxu0 %v874
    %1770 = vmatmul.mubr.bf16.gmra.mrb[0].mxu0 %v873
    %v1771 = vpop.f32.mrb[0].mxu0
    %v1772 = vadd.f32 0.0, %v1771
    %v1773 = vpop.f32.mrb[0].mxu0
    %v1774 = vadd.f32 0.0, %v1773
    %v1775 = vpop.f32.mrb[0].mxu0
    %v1776 = vadd.f32 0.0, %v1775
    %v1777 = vpop.f32.mrb[0].mxu0
    %v1778 = vadd.f32 0.0, %v1777
    %1779 = vmatprep.mubr.bf16.mxu0 %v876
    %1780 = vmatmul.mubr.bf16.gmra.mrb[0].mxu0 %v875
    %v1781 = vpop.f32.mrb[0].mxu0
    %v1782 = vadd.f32 0.0, %v1781
    %v1783 = vpop.f32.mrb[0].mxu0
    %v1784 = vadd.f32 0.0, %v1783
    %v1785 = vpop.f32.mrb[0].mxu0
    %v1786 = vadd.f32 0.0, %v1785
    %v1787 = vpop.f32.mrb[0].mxu0
    %v1788 = vadd.f32 0.0, %v1787
    %1789 = vmatprep.mubr.bf16.mxu0 %v878
    %1790 = vmatmul.mubr.bf16.gmra.mrb[0].mxu0 %v877
    %v1791 = vpop.f32.mrb[0].mxu0
    %v1792 = vadd.f32 0.0, %v1791
    %v1793 = vpop.f32.mrb[0].mxu0
    %v1794 = vadd.f32 0.0, %v1793
    %v1795 = vpop.f32.mrb[0].mxu0
    %v1796 = vadd.f32 0.0, %v1795
    %v1797 = vpop.f32.mrb[0].mxu0
    %v1798 = vadd.f32 0.0, %v1797
    %1799 = vmatprep.mubr.bf16.mxu0 %v880
    %1800 = vmatmul.mubr.bf16.gmra.mrb[0].mxu0 %v879
    %v1801 = vpop.f32.mrb[0].mxu0
    %v1802 = vadd.f32 0.0, %v1801
    %v1803 = vpop.f32.mrb[0].mxu0
    %v1804 = vadd.f32 0.0, %v1803
    %v1805 = vpop.f32.mrb[0].mxu0
    %v1806 = vadd.f32 0.0, %v1805
    %v1807 = vpop.f32.mrb[0].mxu0
    %v1808 = vadd.f32 0.0, %v1807
    %1809 = vmatprep.mubr.bf16.mxu0 %v882
    %1810 = vmatmul.mubr.bf16.gmra.mrb[0].mxu0 %v881
    %v1811 = vpop.f32.mrb[0].mxu0
    %v1812 = vadd.f32 0.0, %v1811
    %v1813 = vpop.f32.mrb[0].mxu0
    %v1814 = vadd.f32 0.0, %v1813
    %v1815 = vpop.f32.mrb[0].mxu0
    %v1816 = vadd.f32 0.0, %v1815
    %v1817 = vpop.f32.mrb[0].mxu0
    %v1818 = vadd.f32 0.0, %v1817
    %1819 = vmatprep.mubr.bf16.mxu0 %v884
    %1820 = vmatmul.mubr.bf16.gmra.mrb[0].mxu0 %v883
    %v1821 = vpop.f32.mrb[0].mxu0
    %v1822 = vadd.f32 0.0, %v1821
    %v1823 = vpop.f32.mrb[0].mxu0
    %v1824 = vadd.f32 0.0, %v1823
    %v1825 = vpop.f32.mrb[0].mxu0
    %v1826 = vadd.f32 0.0, %v1825
    %v1827 = vpop.f32.mrb[0].mxu0
    %v1828 = vadd.f32 0.0, %v1827
    %1829 = vmatprep.mubr.bf16.mxu0 %v886
    %1830 = vmatmul.mubr.bf16.gmra.mrb[0].mxu0 %v885
    %v1831 = vpop.f32.mrb[0].mxu0
    %v1832 = vadd.f32 0.0, %v1831
    %v1833 = vpop.f32.mrb[0].mxu0
    %v1834 = vadd.f32 0.0, %v1833
    %v1835 = vpop.f32.mrb[0].mxu0
    %v1836 = vadd.f32 0.0, %v1835
    %v1837 = vpop.f32.mrb[0].mxu0
    %v1838 = vadd.f32 0.0, %v1837
    %1839 = vmatprep.mubr.bf16.mxu0 %v888
    %1840 = vmatmul.mubr.bf16.gmra.mrb[0].mxu0 %v887
    %v1841 = vpop.f32.mrb[0].mxu0
    %v1842 = vadd.f32 0.0, %v1841
    %v1843 = vpop.f32.mrb[0].mxu0
    %v1844 = vadd.f32 0.0, %v1843
    %v1845 = vpop.f32.mrb[0].mxu0
    %v1846 = vadd.f32 0.0, %v1845
    %v1847 = vpop.f32.mrb[0].mxu0
    %v1848 = vadd.f32 0.0, %v1847
    %1849 = vdwg.mxu0
    %1850 = vmatprep.subr.bf16.mxu0 %v1404
    %1851 = vmatpush1.bf16.msra.mxu0 %v1403
    %1852 = vmatprep.subr.bf16.mxu0 %v1412
    %1853 = vmatpush1.bf16.msra.mxu0 %v1411
    %1854 = vmatprep.subr.bf16.mxu0 %v1420
    %1855 = vmatpush1.bf16.msra.mxu0 %v1419
    %1856 = vmatprep.subr.bf16.mxu0 %v1428
    %1857 = vmatpush1.bf16.msra.mxu0 %v1427
    %1858 = vmatprep.subr.bf16.mxu0 %v1436
    %1859 = vmatpush1.bf16.msra.mxu0 %v1435
    %1860 = vmatprep.subr.bf16.mxu0 %v1444
    %1861 = vmatpush1.bf16.msra.mxu0 %v1443
    %1862 = vmatprep.subr.bf16.mxu0 %v1452
    %1863 = vmatpush1.bf16.msra.mxu0 %v1451
    %1864 = vmatprep.subr.bf16.mxu0 %v1460
    %1865 = vmatpush1.bf16.msra.mxu0 %v1459
    %1866 = vmatprep.subr.bf16.mxu0 %v1468
    %1867 = vmatpush1.bf16.msra.mxu0 %v1467
    %1868 = vmatprep.subr.bf16.mxu0 %v1476
    %1869 = vmatpush1.bf16.msra.mxu0 %v1475
    %1870 = vmatprep.subr.bf16.mxu0 %v1484
    %1871 = vmatpush1.bf16.msra.mxu0 %v1483
    %1872 = vmatprep.subr.bf16.mxu0 %v1492
    %1873 = vmatpush1.bf16.msra.mxu0 %v1491
    %1874 = vmatprep.subr.bf16.mxu0 %v1500
    %1875 = vmatpush1.bf16.msra.mxu0 %v1499
    %1876 = vmatprep.subr.bf16.mxu0 %v1508
    %1877 = vmatpush1.bf16.msra.mxu0 %v1507
    %1878 = vmatprep.subr.bf16.mxu0 %v1516
    %1879 = vmatpush1.bf16.msra.mxu0 %v1515
    %1880 = vmatprep.subr.bf16.mxu0 %v1524
    %1881 = vmatpush1.bf16.msra.mxu0 %v1523
    %1882 = vmatprep.mubr.bf16.mxu0 %v858
    %1883 = vmatmul.mubr.bf16.gmra.mrb[0].mxu0 %v857
    %v1884 = vpop.f32.mrb[0].mxu0
    %v1885 = vadd.f32 0.0, %v1884
    %v1886 = vpop.f32.mrb[0].mxu0
    %v1887 = vadd.f32 0.0, %v1886
    %v1888 = vpop.f32.mrb[0].mxu0
    %v1889 = vadd.f32 0.0, %v1888
    %v1890 = vpop.f32.mrb[0].mxu0
    %v1891 = vadd.f32 0.0, %v1890
    %1892 = vmatprep.mubr.bf16.mxu0 %v860
    %1893 = vmatmul.mubr.bf16.gmra.mrb[0].mxu0 %v859
    %v1894 = vpop.f32.mrb[0].mxu0
    %v1895 = vadd.f32 0.0, %v1894
    %v1896 = vpop.f32.mrb[0].mxu0
    %v1897 = vadd.f32 0.0, %v1896
    %v1898 = vpop.f32.mrb[0].mxu0
    %v1899 = vadd.f32 0.0, %v1898
    %v1900 = vpop.f32.mrb[0].mxu0
    %v1901 = vadd.f32 0.0, %v1900
    %1902 = vmatprep.mubr.bf16.mxu0 %v862
    %1903 = vmatmul.mubr.bf16.gmra.mrb[0].mxu0 %v861
    %v1904 = vpop.f32.mrb[0].mxu0
    %v1905 = vadd.f32 0.0, %v1904
    %v1906 = vpop.f32.mrb[0].mxu0
    %v1907 = vadd.f32 0.0, %v1906
    %v1908 = vpop.f32.mrb[0].mxu0
    %v1909 = vadd.f32 0.0, %v1908
    %v1910 = vpop.f32.mrb[0].mxu0
    %v1911 = vadd.f32 0.0, %v1910
    %1912 = vmatprep.mubr.bf16.mxu0 %v864
    %1913 = vmatmul.mubr.bf16.gmra.mrb[0].mxu0 %v863
    %v1914 = vpop.f32.mrb[0].mxu0
    %v1915 = vadd.f32 0.0, %v1914
    %v1916 = vpop.f32.mrb[0].mxu0
    %v1917 = vadd.f32 0.0, %v1916
    %v1918 = vpop.f32.mrb[0].mxu0
    %v1919 = vadd.f32 0.0, %v1918
    %v1920 = vpop.f32.mrb[0].mxu0
    %v1921 = vadd.f32 0.0, %v1920
    %1922 = vmatprep.mubr.bf16.mxu0 %v866
    %1923 = vmatmul.mubr.bf16.gmra.mrb[0].mxu0 %v865
    %v1924 = vpop.f32.mrb[0].mxu0
    %v1925 = vadd.f32 0.0, %v1924
    %v1926 = vpop.f32.mrb[0].mxu0
    %v1927 = vadd.f32 0.0, %v1926
    %v1928 = vpop.f32.mrb[0].mxu0
    %v1929 = vadd.f32 0.0, %v1928
    %v1930 = vpop.f32.mrb[0].mxu0
    %v1931 = vadd.f32 0.0, %v1930
    %1932 = vmatprep.mubr.bf16.mxu0 %v868
    %1933 = vmatmul.mubr.bf16.gmra.mrb[0].mxu0 %v867
    %v1934 = vpop.f32.mrb[0].mxu0
    %v1935 = vadd.f32 0.0, %v1934
    %v1936 = vpop.f32.mrb[0].mxu0
    %v1937 = vadd.f32 0.0, %v1936
    %v1938 = vpop.f32.mrb[0].mxu0
    %v1939 = vadd.f32 0.0, %v1938
    %v1940 = vpop.f32.mrb[0].mxu0
    %v1941 = vadd.f32 0.0, %v1940
    %1942 = vmatprep.mubr.bf16.mxu0 %v870
    %1943 = vmatmul.mubr.bf16.gmra.mrb[0].mxu0 %v869
    %v1944 = vpop.f32.mrb[0].mxu0
    %v1945 = vadd.f32 0.0, %v1944
    %v1946 = vpop.f32.mrb[0].mxu0
    %v1947 = vadd.f32 0.0, %v1946
    %v1948 = vpop.f32.mrb[0].mxu0
    %v1949 = vadd.f32 0.0, %v1948
    %v1950 = vpop.f32.mrb[0].mxu0
    %v1951 = vadd.f32 0.0, %v1950
    %1952 = vmatprep.mubr.bf16.mxu0 %v872
    %1953 = vmatmul.mubr.bf16.gmra.mrb[0].mxu0 %v871
    %v1954 = vpop.f32.mrb[0].mxu0
    %v1955 = vadd.f32 0.0, %v1954
    %v1956 = vpop.f32.mrb[0].mxu0
    %v1957 = vadd.f32 0.0, %v1956
    %v1958 = vpop.f32.mrb[0].mxu0
    %v1959 = vadd.f32 0.0, %v1958
    %v1960 = vpop.f32.mrb[0].mxu0
    %v1961 = vadd.f32 0.0, %v1960
    %1962 = vmatprep.mubr.bf16.mxu0 %v874
    %1963 = vmatmul.mubr.bf16.gmra.mrb[0].mxu0 %v873
    %v1964 = vpop.f32.mrb[0].mxu0
    %v1965 = vadd.f32 0.0, %v1964
    %v1966 = vpop.f32.mrb[0].mxu0
    %v1967 = vadd.f32 0.0, %v1966
    %v1968 = vpop.f32.mrb[0].mxu0
    %v1969 = vadd.f32 0.0, %v1968
    %v1970 = vpop.f32.mrb[0].mxu0
    %v1971 = vadd.f32 0.0, %v1970
    %1972 = vmatprep.mubr.bf16.mxu0 %v876
    %1973 = vmatmul.mubr.bf16.gmra.mrb[0].mxu0 %v875
    %v1974 = vpop.f32.mrb[0].mxu0
    %v1975 = vadd.f32 0.0, %v1974
    %v1976 = vpop.f32.mrb[0].mxu0
    %v1977 = vadd.f32 0.0, %v1976
    %v1978 = vpop.f32.mrb[0].mxu0
    %v1979 = vadd.f32 0.0, %v1978
    %v1980 = vpop.f32.mrb[0].mxu0
    %v1981 = vadd.f32 0.0, %v1980
    %1982 = vmatprep.mubr.bf16.mxu0 %v878
    %1983 = vmatmul.mubr.bf16.gmra.mrb[0].mxu0 %v877
    %v1984 = vpop.f32.mrb[0].mxu0
    %v1985 = vadd.f32 0.0, %v1984
    %v1986 = vpop.f32.mrb[0].mxu0
    %v1987 = vadd.f32 0.0, %v1986
    %v1988 = vpop.f32.mrb[0].mxu0
    %v1989 = vadd.f32 0.0, %v1988
    %v1990 = vpop.f32.mrb[0].mxu0
    %v1991 = vadd.f32 0.0, %v1990
    %1992 = vmatprep.mubr.bf16.mxu0 %v880
    %1993 = vmatmul.mubr.bf16.gmra.mrb[0].mxu0 %v879
    %v1994 = vpop.f32.mrb[0].mxu0
    %v1995 = vadd.f32 0.0, %v1994
    %v1996 = vpop.f32.mrb[0].mxu0
    %v1997 = vadd.f32 0.0, %v1996
    %v1998 = vpop.f32.mrb[0].mxu0
    %v1999 = vadd.f32 0.0, %v1998
    %v2000 = vpop.f32.mrb[0].mxu0
    %v2001 = vadd.f32 0.0, %v2000
    %2002 = vmatprep.mubr.bf16.mxu0 %v882
    %2003 = vmatmul.mubr.bf16.gmra.mrb[0].mxu0 %v881
    %v2004 = vpop.f32.mrb[0].mxu0
    %v2005 = vadd.f32 0.0, %v2004
    %v2006 = vpop.f32.mrb[0].mxu0
    %v2007 = vadd.f32 0.0, %v2006
    %v2008 = vpop.f32.mrb[0].mxu0
    %v2009 = vadd.f32 0.0, %v2008
    %v2010 = vpop.f32.mrb[0].mxu0
    %v2011 = vadd.f32 0.0, %v2010
    %2012 = vmatprep.mubr.bf16.mxu0 %v884
    %2013 = vmatmul.mubr.bf16.gmra.mrb[0].mxu0 %v883
    %v2014 = vpop.f32.mrb[0].mxu0
    %v2015 = vadd.f32 0.0, %v2014
    %v2016 = vpop.f32.mrb[0].mxu0
    %v2017 = vadd.f32 0.0, %v2016
    %v2018 = vpop.f32.mrb[0].mxu0
    %v2019 = vadd.f32 0.0, %v2018
    %v2020 = vpop.f32.mrb[0].mxu0
    %v2021 = vadd.f32 0.0, %v2020
    %2022 = vmatprep.mubr.bf16.mxu0 %v886
    %2023 = vmatmul.mubr.bf16.gmra.mrb[0].mxu0 %v885
    %v2024 = vpop.f32.mrb[0].mxu0
    %v2025 = vadd.f32 0.0, %v2024
    %v2026 = vpop.f32.mrb[0].mxu0
    %v2027 = vadd.f32 0.0, %v2026
    %v2028 = vpop.f32.mrb[0].mxu0
    %v2029 = vadd.f32 0.0, %v2028
    %v2030 = vpop.f32.mrb[0].mxu0
    %v2031 = vadd.f32 0.0, %v2030
    %2032 = vmatprep.mubr.bf16.mxu0 %v888
    %2033 = vmatmul.mubr.bf16.gmra.mrb[0].mxu0 %v887
    %v2034 = vpop.f32.mrb[0].mxu0
    %v2035 = vadd.f32 0.0, %v2034
    %v2036 = vpop.f32.mrb[0].mxu0
    %v2037 = vadd.f32 0.0, %v2036
    %v2038 = vpop.f32.mrb[0].mxu0
    %v2039 = vadd.f32 0.0, %v2038
    %v2040 = vpop.f32.mrb[0].mxu0
    %v2041 = vadd.f32 0.0, %v2040
    %2042 = vdwg.mxu0
    %2043 = vmatprep.subr.bf16.mxu0 %v1406
    %2044 = vmatpush1.bf16.msra.mxu0 %v1405
    %2045 = vmatprep.subr.bf16.mxu0 %v1414
    %2046 = vmatpush1.bf16.msra.mxu0 %v1413
    %2047 = vmatprep.subr.bf16.mxu0 %v1422
    %2048 = vmatpush1.bf16.msra.mxu0 %v1421
    %2049 = vmatprep.subr.bf16.mxu0 %v1430
    %2050 = vmatpush1.bf16.msra.mxu0 %v1429
    %2051 = vmatprep.subr.bf16.mxu0 %v1438
    %2052 = vmatpush1.bf16.msra.mxu0 %v1437
    %2053 = vmatprep.subr.bf16.mxu0 %v1446
    %2054 = vmatpush1.bf16.msra.mxu0 %v1445
    %2055 = vmatprep.subr.bf16.mxu0 %v1454
    %2056 = vmatpush1.bf16.msra.mxu0 %v1453
    %2057 = vmatprep.subr.bf16.mxu0 %v1462
    %2058 = vmatpush1.bf16.msra.mxu0 %v1461
    %2059 = vmatprep.subr.bf16.mxu0 %v1470
    %2060 = vmatpush1.bf16.msra.mxu0 %v1469
    %2061 = vmatprep.subr.bf16.mxu0 %v1478
    %2062 = vmatpush1.bf16.msra.mxu0 %v1477
    %2063 = vmatprep.subr.bf16.mxu0 %v1486
    %2064 = vmatpush1.bf16.msra.mxu0 %v1485
    %2065 = vmatprep.subr.bf16.mxu0 %v1494
    %2066 = vmatpush1.bf16.msra.mxu0 %v1493
    %2067 = vmatprep.subr.bf16.mxu0 %v1502
    %2068 = vmatpush1.bf16.msra.mxu0 %v1501
    %2069 = vmatprep.subr.bf16.mxu0 %v1510
    %2070 = vmatpush1.bf16.msra.mxu0 %v1509
    %2071 = vmatprep.subr.bf16.mxu0 %v1518
    %2072 = vmatpush1.bf16.msra.mxu0 %v1517
    %2073 = vmatprep.subr.bf16.mxu0 %v1526
    %2074 = vmatpush1.bf16.msra.mxu0 %v1525
    %2075 = vmatprep.mubr.bf16.mxu0 %v858
    %2076 = vmatmul.mubr.bf16.gmra.mrb[0].mxu0 %v857
    %v2077 = vpop.f32.mrb[0].mxu0
    %v2078 = vadd.f32 0.0, %v2077
    %v2079 = vpop.f32.mrb[0].mxu0
    %v2080 = vadd.f32 0.0, %v2079
    %v2081 = vpop.f32.mrb[0].mxu0
    %v2082 = vadd.f32 0.0, %v2081
    %v2083 = vpop.f32.mrb[0].mxu0
    %v2084 = vadd.f32 0.0, %v2083
    %2085 = vmatprep.mubr.bf16.mxu0 %v860
    %2086 = vmatmul.mubr.bf16.gmra.mrb[0].mxu0 %v859
    %v2087 = vpop.f32.mrb[0].mxu0
    %v2088 = vadd.f32 0.0, %v2087
    %v2089 = vpop.f32.mrb[0].mxu0
    %v2090 = vadd.f32 0.0, %v2089
    %v2091 = vpop.f32.mrb[0].mxu0
    %v2092 = vadd.f32 0.0, %v2091
    %v2093 = vpop.f32.mrb[0].mxu0
    %v2094 = vadd.f32 0.0, %v2093
    %2095 = vmatprep.mubr.bf16.mxu0 %v862
    %2096 = vmatmul.mubr.bf16.gmra.mrb[0].mxu0 %v861
    %v2097 = vpop.f32.mrb[0].mxu0
    %v2098 = vadd.f32 0.0, %v2097
    %v2099 = vpop.f32.mrb[0].mxu0
    %v2100 = vadd.f32 0.0, %v2099
    %v2101 = vpop.f32.mrb[0].mxu0
    %v2102 = vadd.f32 0.0, %v2101
    %v2103 = vpop.f32.mrb[0].mxu0
    %v2104 = vadd.f32 0.0, %v2103
    %2105 = vmatprep.mubr.bf16.mxu0 %v864
    %2106 = vmatmul.mubr.bf16.gmra.mrb[0].mxu0 %v863
    %v2107 = vpop.f32.mrb[0].mxu0
    %v2108 = vadd.f32 0.0, %v2107
    %v2109 = vpop.f32.mrb[0].mxu0
    %v2110 = vadd.f32 0.0, %v2109
    %v2111 = vpop.f32.mrb[0].mxu0
    %v2112 = vadd.f32 0.0, %v2111
    %v2113 = vpop.f32.mrb[0].mxu0
    %v2114 = vadd.f32 0.0, %v2113
    %2115 = vmatprep.mubr.bf16.mxu0 %v866
    %2116 = vmatmul.mubr.bf16.gmra.mrb[0].mxu0 %v865
    %v2117 = vpop.f32.mrb[0].mxu0
    %v2118 = vadd.f32 0.0, %v2117
    %v2119 = vpop.f32.mrb[0].mxu0
    %v2120 = vadd.f32 0.0, %v2119
    %v2121 = vpop.f32.mrb[0].mxu0
    %v2122 = vadd.f32 0.0, %v2121
    %v2123 = vpop.f32.mrb[0].mxu0
    %v2124 = vadd.f32 0.0, %v2123
    %2125 = vmatprep.mubr.bf16.mxu0 %v868
    %2126 = vmatmul.mubr.bf16.gmra.mrb[0].mxu0 %v867
    %v2127 = vpop.f32.mrb[0].mxu0
    %v2128 = vadd.f32 0.0, %v2127
    %v2129 = vpop.f32.mrb[0].mxu0
    %v2130 = vadd.f32 0.0, %v2129
    %v2131 = vpop.f32.mrb[0].mxu0
    %v2132 = vadd.f32 0.0, %v2131
    %v2133 = vpop.f32.mrb[0].mxu0
    %v2134 = vadd.f32 0.0, %v2133
    %2135 = vmatprep.mubr.bf16.mxu0 %v870
    %2136 = vmatmul.mubr.bf16.gmra.mrb[0].mxu0 %v869
    %v2137 = vpop.f32.mrb[0].mxu0
    %v2138 = vadd.f32 0.0, %v2137
    %v2139 = vpop.f32.mrb[0].mxu0
    %v2140 = vadd.f32 0.0, %v2139
    %v2141 = vpop.f32.mrb[0].mxu0
    %v2142 = vadd.f32 0.0, %v2141
    %v2143 = vpop.f32.mrb[0].mxu0
    %v2144 = vadd.f32 0.0, %v2143
    %2145 = vmatprep.mubr.bf16.mxu0 %v872
    %2146 = vmatmul.mubr.bf16.gmra.mrb[0].mxu0 %v871
    %v2147 = vpop.f32.mrb[0].mxu0
    %v2148 = vadd.f32 0.0, %v2147
    %v2149 = vpop.f32.mrb[0].mxu0
    %v2150 = vadd.f32 0.0, %v2149
    %v2151 = vpop.f32.mrb[0].mxu0
    %v2152 = vadd.f32 0.0, %v2151
    %v2153 = vpop.f32.mrb[0].mxu0
    %v2154 = vadd.f32 0.0, %v2153
    %2155 = vmatprep.mubr.bf16.mxu0 %v874
    %2156 = vmatmul.mubr.bf16.gmra.mrb[0].mxu0 %v873
    %v2157 = vpop.f32.mrb[0].mxu0
    %v2158 = vadd.f32 0.0, %v2157
    %v2159 = vpop.f32.mrb[0].mxu0
    %v2160 = vadd.f32 0.0, %v2159
    %v2161 = vpop.f32.mrb[0].mxu0
    %v2162 = vadd.f32 0.0, %v2161
    %v2163 = vpop.f32.mrb[0].mxu0
    %v2164 = vadd.f32 0.0, %v2163
    %2165 = vmatprep.mubr.bf16.mxu0 %v876
    %2166 = vmatmul.mubr.bf16.gmra.mrb[0].mxu0 %v875
    %v2167 = vpop.f32.mrb[0].mxu0
    %v2168 = vadd.f32 0.0, %v2167
    %v2169 = vpop.f32.mrb[0].mxu0
    %v2170 = vadd.f32 0.0, %v2169
    %v2171 = vpop.f32.mrb[0].mxu0
    %v2172 = vadd.f32 0.0, %v2171
    %v2173 = vpop.f32.mrb[0].mxu0
    %v2174 = vadd.f32 0.0, %v2173
    %2175 = vmatprep.mubr.bf16.mxu0 %v878
    %2176 = vmatmul.mubr.bf16.gmra.mrb[0].mxu0 %v877
    %v2177 = vpop.f32.mrb[0].mxu0
    %v2178 = vadd.f32 0.0, %v2177
    %v2179 = vpop.f32.mrb[0].mxu0
    %v2180 = vadd.f32 0.0, %v2179
    %v2181 = vpop.f32.mrb[0].mxu0
    %v2182 = vadd.f32 0.0, %v2181
    %v2183 = vpop.f32.mrb[0].mxu0
    %v2184 = vadd.f32 0.0, %v2183
    %2185 = vmatprep.mubr.bf16.mxu0 %v880
    %2186 = vmatmul.mubr.bf16.gmra.mrb[0].mxu0 %v879
    %v2187 = vpop.f32.mrb[0].mxu0
    %v2188 = vadd.f32 0.0, %v2187
    %v2189 = vpop.f32.mrb[0].mxu0
    %v2190 = vadd.f32 0.0, %v2189
    %v2191 = vpop.f32.mrb[0].mxu0
    %v2192 = vadd.f32 0.0, %v2191
    %v2193 = vpop.f32.mrb[0].mxu0
    %v2194 = vadd.f32 0.0, %v2193
    %2195 = vmatprep.mubr.bf16.mxu0 %v882
    %2196 = vmatmul.mubr.bf16.gmra.mrb[0].mxu0 %v881
    %v2197 = vpop.f32.mrb[0].mxu0
    %v2198 = vadd.f32 0.0, %v2197
    %v2199 = vpop.f32.mrb[0].mxu0
    %v2200 = vadd.f32 0.0, %v2199
    %v2201 = vpop.f32.mrb[0].mxu0
    %v2202 = vadd.f32 0.0, %v2201
    %v2203 = vpop.f32.mrb[0].mxu0
    %v2204 = vadd.f32 0.0, %v2203
    %2205 = vmatprep.mubr.bf16.mxu0 %v884
    %2206 = vmatmul.mubr.bf16.gmra.mrb[0].mxu0 %v883
    %v2207 = vpop.f32.mrb[0].mxu0
    %v2208 = vadd.f32 0.0, %v2207
    %v2209 = vpop.f32.mrb[0].mxu0
    %v2210 = vadd.f32 0.0, %v2209
    %v2211 = vpop.f32.mrb[0].mxu0
    %v2212 = vadd.f32 0.0, %v2211
    %v2213 = vpop.f32.mrb[0].mxu0
    %v2214 = vadd.f32 0.0, %v2213
    %2215 = vmatprep.mubr.bf16.mxu0 %v886
    %2216 = vmatmul.mubr.bf16.gmra.mrb[0].mxu0 %v885
    %v2217 = vpop.f32.mrb[0].mxu0
    %v2218 = vadd.f32 0.0, %v2217
    %v2219 = vpop.f32.mrb[0].mxu0
    %v2220 = vadd.f32 0.0, %v2219
    %v2221 = vpop.f32.mrb[0].mxu0
    %v2222 = vadd.f32 0.0, %v2221
    %v2223 = vpop.f32.mrb[0].mxu0
    %v2224 = vadd.f32 0.0, %v2223
    %2225 = vmatprep.mubr.bf16.mxu0 %v888
    %2226 = vmatmul.mubr.bf16.gmra.mrb[0].mxu0 %v887
    %v2227 = vpop.f32.mrb[0].mxu0
    %v2228 = vadd.f32 0.0, %v2227
    %v2229 = vpop.f32.mrb[0].mxu0
    %v2230 = vadd.f32 0.0, %v2229
    %v2231 = vpop.f32.mrb[0].mxu0
    %v2232 = vadd.f32 0.0, %v2231
    %v2233 = vpop.f32.mrb[0].mxu0
    %v2234 = vadd.f32 0.0, %v2233
    %2235 = vdwg.mxu0
    %2236 = vmatprep.subr.bf16.mxu0 %v1408
    %2237 = vmatpush1.bf16.msra.mxu0 %v1407
    %2238 = vmatprep.subr.bf16.mxu0 %v1416
    %2239 = vmatpush1.bf16.msra.mxu0 %v1415
    %2240 = vmatprep.subr.bf16.mxu0 %v1424
    %2241 = vmatpush1.bf16.msra.mxu0 %v1423
    %2242 = vmatprep.subr.bf16.mxu0 %v1432
    %2243 = vmatpush1.bf16.msra.mxu0 %v1431
    %2244 = vmatprep.subr.bf16.mxu0 %v1440
    %2245 = vmatpush1.bf16.msra.mxu0 %v1439
    %2246 = vmatprep.subr.bf16.mxu0 %v1448
    %2247 = vmatpush1.bf16.msra.mxu0 %v1447
    %2248 = vmatprep.subr.bf16.mxu0 %v1456
    %2249 = vmatpush1.bf16.msra.mxu0 %v1455
    %2250 = vmatprep.subr.bf16.mxu0 %v1464
    %2251 = vmatpush1.bf16.msra.mxu0 %v1463
    %2252 = vmatprep.subr.bf16.mxu0 %v1472
    %2253 = vmatpush1.bf16.msra.mxu0 %v1471
    %2254 = vmatprep.subr.bf16.mxu0 %v1480
    %2255 = vmatpush1.bf16.msra.mxu0 %v1479
    %2256 = vmatprep.subr.bf16.mxu0 %v1488
    %2257 = vmatpush1.bf16.msra.mxu0 %v1487
    %2258 = vmatprep.subr.bf16.mxu0 %v1496
    %2259 = vmatpush1.bf16.msra.mxu0 %v1495
    %2260 = vmatprep.subr.bf16.mxu0 %v1504
    %2261 = vmatpush1.bf16.msra.mxu0 %v1503
    %2262 = vmatprep.subr.bf16.mxu0 %v1512
    %2263 = vmatpush1.bf16.msra.mxu0 %v1511
    %2264 = vmatprep.subr.bf16.mxu0 %v1520
    %2265 = vmatpush1.bf16.msra.mxu0 %v1519
    %2266 = vmatprep.subr.bf16.mxu0 %v1528
    %2267 = vmatpush1.bf16.msra.mxu0 %v1527
    %2268 = vmatprep.mubr.bf16.mxu0 %v858
    %2269 = vmatmul.mubr.bf16.gmra.mrb[0].mxu0 %v857
    %v2270 = vpop.f32.mrb[0].mxu0
    %v2271 = vadd.f32 0.0, %v2270
    %v2272 = vpop.f32.mrb[0].mxu0
    %v2273 = vadd.f32 0.0, %v2272
    %v2274 = vpop.f32.mrb[0].mxu0
    %v2275 = vadd.f32 0.0, %v2274
    %v2276 = vpop.f32.mrb[0].mxu0
    %v2277 = vadd.f32 0.0, %v2276
    %2278 = vmatprep.mubr.bf16.mxu0 %v860
    %2279 = vmatmul.mubr.bf16.gmra.mrb[0].mxu0 %v859
    %v2280 = vpop.f32.mrb[0].mxu0
    %v2281 = vadd.f32 0.0, %v2280
    %v2282 = vpop.f32.mrb[0].mxu0
    %v2283 = vadd.f32 0.0, %v2282
    %v2284 = vpop.f32.mrb[0].mxu0
    %v2285 = vadd.f32 0.0, %v2284
    %v2286 = vpop.f32.mrb[0].mxu0
    %v2287 = vadd.f32 0.0, %v2286
    %2288 = vmatprep.mubr.bf16.mxu0 %v862
    %2289 = vmatmul.mubr.bf16.gmra.mrb[0].mxu0 %v861
    %v2290 = vpop.f32.mrb[0].mxu0
    %v2291 = vadd.f32 0.0, %v2290
    %v2292 = vpop.f32.mrb[0].mxu0
    %v2293 = vadd.f32 0.0, %v2292
    %v2294 = vpop.f32.mrb[0].mxu0
    %v2295 = vadd.f32 0.0, %v2294
    %v2296 = vpop.f32.mrb[0].mxu0
    %v2297 = vadd.f32 0.0, %v2296
    %2298 = vmatprep.mubr.bf16.mxu0 %v864
    %2299 = vmatmul.mubr.bf16.gmra.mrb[0].mxu0 %v863
    %v2300 = vpop.f32.mrb[0].mxu0
    %v2301 = vadd.f32 0.0, %v2300
    %v2302 = vpop.f32.mrb[0].mxu0
    %v2303 = vadd.f32 0.0, %v2302
    %v2304 = vpop.f32.mrb[0].mxu0
    %v2305 = vadd.f32 0.0, %v2304
    %v2306 = vpop.f32.mrb[0].mxu0
    %v2307 = vadd.f32 0.0, %v2306
    %2308 = vmatprep.mubr.bf16.mxu0 %v866
    %2309 = vmatmul.mubr.bf16.gmra.mrb[0].mxu0 %v865
    %v2310 = vpop.f32.mrb[0].mxu0
    %v2311 = vadd.f32 0.0, %v2310
    %v2312 = vpop.f32.mrb[0].mxu0
    %v2313 = vadd.f32 0.0, %v2312
    %v2314 = vpop.f32.mrb[0].mxu0
    %v2315 = vadd.f32 0.0, %v2314
    %v2316 = vpop.f32.mrb[0].mxu0
    %v2317 = vadd.f32 0.0, %v2316
    %2318 = vmatprep.mubr.bf16.mxu0 %v868
    %2319 = vmatmul.mubr.bf16.gmra.mrb[0].mxu0 %v867
    %v2320 = vpop.f32.mrb[0].mxu0
    %v2321 = vadd.f32 0.0, %v2320
    %v2322 = vpop.f32.mrb[0].mxu0
    %v2323 = vadd.f32 0.0, %v2322
    %v2324 = vpop.f32.mrb[0].mxu0
    %v2325 = vadd.f32 0.0, %v2324
    %v2326 = vpop.f32.mrb[0].mxu0
    %v2327 = vadd.f32 0.0, %v2326
    %2328 = vmatprep.mubr.bf16.mxu0 %v870
    %2329 = vmatmul.mubr.bf16.gmra.mrb[0].mxu0 %v869
    %v2330 = vpop.f32.mrb[0].mxu0
    %v2331 = vadd.f32 0.0, %v2330
    %v2332 = vpop.f32.mrb[0].mxu0
    %v2333 = vadd.f32 0.0, %v2332
    %v2334 = vpop.f32.mrb[0].mxu0
    %v2335 = vadd.f32 0.0, %v2334
    %v2336 = vpop.f32.mrb[0].mxu0
    %v2337 = vadd.f32 0.0, %v2336
    %2338 = vmatprep.mubr.bf16.mxu0 %v872
    %2339 = vmatmul.mubr.bf16.gmra.mrb[0].mxu0 %v871
    %v2340 = vpop.f32.mrb[0].mxu0
    %v2341 = vadd.f32 0.0, %v2340
    %v2342 = vpop.f32.mrb[0].mxu0
    %v2343 = vadd.f32 0.0, %v2342
    %v2344 = vpop.f32.mrb[0].mxu0
    %v2345 = vadd.f32 0.0, %v2344
    %v2346 = vpop.f32.mrb[0].mxu0
    %v2347 = vadd.f32 0.0, %v2346
    %2348 = vmatprep.mubr.bf16.mxu0 %v874
    %2349 = vmatmul.mubr.bf16.gmra.mrb[0].mxu0 %v873
    %v2350 = vpop.f32.mrb[0].mxu0
    %v2351 = vadd.f32 0.0, %v2350
    %v2352 = vpop.f32.mrb[0].mxu0
    %v2353 = vadd.f32 0.0, %v2352
    %v2354 = vpop.f32.mrb[0].mxu0
    %v2355 = vadd.f32 0.0, %v2354
    %v2356 = vpop.f32.mrb[0].mxu0
    %v2357 = vadd.f32 0.0, %v2356
    %2358 = vmatprep.mubr.bf16.mxu0 %v876
    %2359 = vmatmul.mubr.bf16.gmra.mrb[0].mxu0 %v875
    %v2360 = vpop.f32.mrb[0].mxu0
    %v2361 = vadd.f32 0.0, %v2360
    %v2362 = vpop.f32.mrb[0].mxu0
    %v2363 = vadd.f32 0.0, %v2362
    %v2364 = vpop.f32.mrb[0].mxu0
    %v2365 = vadd.f32 0.0, %v2364
    %v2366 = vpop.f32.mrb[0].mxu0
    %v2367 = vadd.f32 0.0, %v2366
    %2368 = vmatprep.mubr.bf16.mxu0 %v878
    %2369 = vmatmul.mubr.bf16.gmra.mrb[0].mxu0 %v877
    %v2370 = vpop.f32.mrb[0].mxu0
    %v2371 = vadd.f32 0.0, %v2370
    %v2372 = vpop.f32.mrb[0].mxu0
    %v2373 = vadd.f32 0.0, %v2372
    %v2374 = vpop.f32.mrb[0].mxu0
    %v2375 = vadd.f32 0.0, %v2374
    %v2376 = vpop.f32.mrb[0].mxu0
    %v2377 = vadd.f32 0.0, %v2376
    %2378 = vmatprep.mubr.bf16.mxu0 %v880
    %2379 = vmatmul.mubr.bf16.gmra.mrb[0].mxu0 %v879
    %v2380 = vpop.f32.mrb[0].mxu0
    %v2381 = vadd.f32 0.0, %v2380
    %v2382 = vpop.f32.mrb[0].mxu0
    %v2383 = vadd.f32 0.0, %v2382
    %v2384 = vpop.f32.mrb[0].mxu0
    %v2385 = vadd.f32 0.0, %v2384
    %v2386 = vpop.f32.mrb[0].mxu0
    %v2387 = vadd.f32 0.0, %v2386
    %2388 = vmatprep.mubr.bf16.mxu0 %v882
    %2389 = vmatmul.mubr.bf16.gmra.mrb[0].mxu0 %v881
    %v2390 = vpop.f32.mrb[0].mxu0
    %v2391 = vadd.f32 0.0, %v2390
    %v2392 = vpop.f32.mrb[0].mxu0
    %v2393 = vadd.f32 0.0, %v2392
    %v2394 = vpop.f32.mrb[0].mxu0
    %v2395 = vadd.f32 0.0, %v2394
    %v2396 = vpop.f32.mrb[0].mxu0
    %v2397 = vadd.f32 0.0, %v2396
    %2398 = vmatprep.mubr.bf16.mxu0 %v884
    %2399 = vmatmul.mubr.bf16.gmra.mrb[0].mxu0 %v883
    %v2400 = vpop.f32.mrb[0].mxu0
    %v2401 = vadd.f32 0.0, %v2400
    %v2402 = vpop.f32.mrb[0].mxu0
    %v2403 = vadd.f32 0.0, %v2402
    %v2404 = vpop.f32.mrb[0].mxu0
    %v2405 = vadd.f32 0.0, %v2404
    %v2406 = vpop.f32.mrb[0].mxu0
    %v2407 = vadd.f32 0.0, %v2406
    %2408 = vmatprep.mubr.bf16.mxu0 %v886
    %2409 = vmatmul.mubr.bf16.gmra.mrb[0].mxu0 %v885
    %v2410 = vpop.f32.mrb[0].mxu0
    %v2411 = vadd.f32 0.0, %v2410
    %v2412 = vpop.f32.mrb[0].mxu0
    %v2413 = vadd.f32 0.0, %v2412
    %v2414 = vpop.f32.mrb[0].mxu0
    %v2415 = vadd.f32 0.0, %v2414
    %v2416 = vpop.f32.mrb[0].mxu0
    %v2417 = vadd.f32 0.0, %v2416
    %2418 = vmatprep.mubr.bf16.mxu0 %v888
    %2419 = vmatmul.mubr.bf16.gmra.mrb[0].mxu0 %v887
    %v2420 = vpop.f32.mrb[0].mxu0
    %v2421 = vadd.f32 0.0, %v2420
    %v2422 = vpop.f32.mrb[0].mxu0
    %v2423 = vadd.f32 0.0, %v2422
    %v2424 = vpop.f32.mrb[0].mxu0
    %v2425 = vadd.f32 0.0, %v2424
    %v2426 = vpop.f32.mrb[0].mxu0
    %v2427 = vadd.f32 0.0, %v2426
    %2428 = vdwg.mxu0
    %v2557 = vunpack.c.l.b16 %v504
    %v2558 = vunpack.c.h.b16 %v504
    %v2559 = vunpack.c.l.b16 %v505
    %v2560 = vunpack.c.h.b16 %v505
    %v2561 = vunpack.c.l.b16 %v506
    %v2562 = vunpack.c.h.b16 %v506
    %v2563 = vunpack.c.l.b16 %v507
    %v2564 = vunpack.c.h.b16 %v507
    %v2565 = vunpack.c.l.b16 %v508
    %v2566 = vunpack.c.h.b16 %v508
    %v2567 = vunpack.c.l.b16 %v509
    %v2568 = vunpack.c.h.b16 %v509
    %v2569 = vunpack.c.l.b16 %v510
    %v2570 = vunpack.c.h.b16 %v510
    %v2571 = vunpack.c.l.b16 %v511
    %v2572 = vunpack.c.h.b16 %v511
    %v2573 = vunpack.c.l.b16 %v512
    %v2574 = vunpack.c.h.b16 %v512
    %v2575 = vunpack.c.l.b16 %v513
    %v2576 = vunpack.c.h.b16 %v513
    %v2577 = vunpack.c.l.b16 %v514
    %v2578 = vunpack.c.h.b16 %v514
    %v2579 = vunpack.c.l.b16 %v515
    %v2580 = vunpack.c.h.b16 %v515
    %v2581 = vunpack.c.l.b16 %v516
    %v2582 = vunpack.c.h.b16 %v516
    %v2583 = vunpack.c.l.b16 %v517
    %v2584 = vunpack.c.h.b16 %v517
    %v2585 = vunpack.c.l.b16 %v518
    %v2586 = vunpack.c.h.b16 %v518
    %v2587 = vunpack.c.l.b16 %v519
    %v2588 = vunpack.c.h.b16 %v519
    %v2589 = vunpack.c.l.b16 %v520
    %v2590 = vunpack.c.h.b16 %v520
    %v2591 = vunpack.c.l.b16 %v521
    %v2592 = vunpack.c.h.b16 %v521
    %v2593 = vunpack.c.l.b16 %v522
    %v2594 = vunpack.c.h.b16 %v522
    %v2595 = vunpack.c.l.b16 %v523
    %v2596 = vunpack.c.h.b16 %v523
    %v2597 = vunpack.c.l.b16 %v524
    %v2598 = vunpack.c.h.b16 %v524
    %v2599 = vunpack.c.l.b16 %v525
    %v2600 = vunpack.c.h.b16 %v525
    %v2601 = vunpack.c.l.b16 %v526
    %v2602 = vunpack.c.h.b16 %v526
    %v2603 = vunpack.c.l.b16 %v527
    %v2604 = vunpack.c.h.b16 %v527
    %v2605 = vunpack.c.l.b16 %v528
    %v2606 = vunpack.c.h.b16 %v528
    %v2607 = vunpack.c.l.b16 %v529
    %v2608 = vunpack.c.h.b16 %v529
    %v2609 = vunpack.c.l.b16 %v530
    %v2610 = vunpack.c.h.b16 %v530
    %v2611 = vunpack.c.l.b16 %v531
    %v2612 = vunpack.c.h.b16 %v531
    %v2613 = vunpack.c.l.b16 %v532
    %v2614 = vunpack.c.h.b16 %v532
    %v2615 = vunpack.c.l.b16 %v533
    %v2616 = vunpack.c.h.b16 %v533
    %v2617 = vunpack.c.l.b16 %v534
    %v2618 = vunpack.c.h.b16 %v534
    %v2619 = vunpack.c.l.b16 %v535
    %v2620 = vunpack.c.h.b16 %v535
    %v2621 = vunpack.c.l.b16 %v536
    %v2622 = vunpack.c.h.b16 %v536
    %v2623 = vunpack.c.l.b16 %v537
    %v2624 = vunpack.c.h.b16 %v537
    %v2625 = vunpack.c.l.b16 %v538
    %v2626 = vunpack.c.h.b16 %v538
    %v2627 = vunpack.c.l.b16 %v539
    %v2628 = vunpack.c.h.b16 %v539
    %v2629 = vunpack.c.l.b16 %v540
    %v2630 = vunpack.c.h.b16 %v540
    %v2631 = vunpack.c.l.b16 %v541
    %v2632 = vunpack.c.h.b16 %v541
    %v2633 = vunpack.c.l.b16 %v542
    %v2634 = vunpack.c.h.b16 %v542
    %v2635 = vunpack.c.l.b16 %v543
    %v2636 = vunpack.c.h.b16 %v543
    %v2637 = vunpack.c.l.b16 %v544
    %v2638 = vunpack.c.h.b16 %v544
    %v2639 = vunpack.c.l.b16 %v545
    %v2640 = vunpack.c.h.b16 %v545
    %v2641 = vunpack.c.l.b16 %v546
    %v2642 = vunpack.c.h.b16 %v546
    %v2643 = vunpack.c.l.b16 %v547
    %v2644 = vunpack.c.h.b16 %v547
    %v2645 = vunpack.c.l.b16 %v548
    %v2646 = vunpack.c.h.b16 %v548
    %v2647 = vunpack.c.l.b16 %v549
    %v2648 = vunpack.c.h.b16 %v549
    %v2649 = vunpack.c.l.b16 %v550
    %v2650 = vunpack.c.h.b16 %v550
    %v2651 = vunpack.c.l.b16 %v551
    %v2652 = vunpack.c.h.b16 %v551
    %v2653 = vunpack.c.l.b16 %v552
    %v2654 = vunpack.c.h.b16 %v552
    %v2655 = vunpack.c.l.b16 %v553
    %v2656 = vunpack.c.h.b16 %v553
    %v2657 = vunpack.c.l.b16 %v554
    %v2658 = vunpack.c.h.b16 %v554
    %v2659 = vunpack.c.l.b16 %v555
    %v2660 = vunpack.c.h.b16 %v555
    %v2661 = vunpack.c.l.b16 %v556
    %v2662 = vunpack.c.h.b16 %v556
    %v2663 = vunpack.c.l.b16 %v557
    %v2664 = vunpack.c.h.b16 %v557
    %v2665 = vunpack.c.l.b16 %v558
    %v2666 = vunpack.c.h.b16 %v558
    %v2667 = vunpack.c.l.b16 %v559
    %v2668 = vunpack.c.h.b16 %v559
    %v2669 = vunpack.c.l.b16 %v560
    %v2670 = vunpack.c.h.b16 %v560
    %v2671 = vunpack.c.l.b16 %v561
    %v2672 = vunpack.c.h.b16 %v561
    %v2673 = vunpack.c.l.b16 %v562
    %v2674 = vunpack.c.h.b16 %v562
    %v2675 = vunpack.c.l.b16 %v563
    %v2676 = vunpack.c.h.b16 %v563
    %v2677 = vunpack.c.l.b16 %v564
    %v2678 = vunpack.c.h.b16 %v564
    %v2679 = vunpack.c.l.b16 %v565
    %v2680 = vunpack.c.h.b16 %v565
    %v2681 = vunpack.c.l.b16 %v566
    %v2682 = vunpack.c.h.b16 %v566
    %v2683 = vunpack.c.l.b16 %v567
    %v2684 = vunpack.c.h.b16 %v567
    %v2685 = vunpack.c.l.b16 %v568
    %v2686 = vunpack.c.h.b16 %v568
    %v2687 = vunpack.c.l.b16 %v569
    %v2688 = vunpack.c.h.b16 %v569
    %v2689 = vunpack.c.l.b16 %v570
    %v2690 = vunpack.c.h.b16 %v570
    %v2691 = vunpack.c.l.b16 %v571
    %v2692 = vunpack.c.h.b16 %v571
    %v2693 = vunpack.c.l.b16 %v572
    %v2694 = vunpack.c.h.b16 %v572
    %v2695 = vunpack.c.l.b16 %v573
    %v2696 = vunpack.c.h.b16 %v573
    %v2697 = vunpack.c.l.b16 %v574
    %v2698 = vunpack.c.h.b16 %v574
    %v2699 = vunpack.c.l.b16 %v575
    %v2700 = vunpack.c.h.b16 %v575
    %v2701 = vunpack.c.l.b16 %v576
    %v2702 = vunpack.c.h.b16 %v576
    %v2703 = vunpack.c.l.b16 %v577
    %v2704 = vunpack.c.h.b16 %v577
    %v2705 = vunpack.c.l.b16 %v578
    %v2706 = vunpack.c.h.b16 %v578
    %v2707 = vunpack.c.l.b16 %v579
    %v2708 = vunpack.c.h.b16 %v579
    %v2709 = vunpack.c.l.b16 %v580
    %v2710 = vunpack.c.h.b16 %v580
    %v2711 = vunpack.c.l.b16 %v581
    %v2712 = vunpack.c.h.b16 %v581
    %v2713 = vunpack.c.l.b16 %v582
    %v2714 = vunpack.c.h.b16 %v582
    %v2715 = vunpack.c.l.b16 %v583
    %v2716 = vunpack.c.h.b16 %v583
    %v2717 = vunpack.c.l.b16 %v584
    %v2718 = vunpack.c.h.b16 %v584
    %v2719 = vunpack.c.l.b16 %v585
    %v2720 = vunpack.c.h.b16 %v585
    %v2721 = vunpack.c.l.b16 %v586
    %v2722 = vunpack.c.h.b16 %v586
    %v2723 = vunpack.c.l.b16 %v587
    %v2724 = vunpack.c.h.b16 %v587
    %v2725 = vunpack.c.l.b16 %v588
    %v2726 = vunpack.c.h.b16 %v588
    %v2727 = vunpack.c.l.b16 %v589
    %v2728 = vunpack.c.h.b16 %v589
    %v2729 = vunpack.c.l.b16 %v590
    %v2730 = vunpack.c.h.b16 %v590
    %v2731 = vunpack.c.l.b16 %v591
    %v2732 = vunpack.c.h.b16 %v591
    %v2733 = vunpack.c.l.b16 %v592
    %v2734 = vunpack.c.h.b16 %v592
    %v2735 = vunpack.c.l.b16 %v593
    %v2736 = vunpack.c.h.b16 %v593
    %v2737 = vunpack.c.l.b16 %v594
    %v2738 = vunpack.c.h.b16 %v594
    %v2739 = vunpack.c.l.b16 %v595
    %v2740 = vunpack.c.h.b16 %v595
    %v2741 = vunpack.c.l.b16 %v596
    %v2742 = vunpack.c.h.b16 %v596
    %v2743 = vunpack.c.l.b16 %v597
    %v2744 = vunpack.c.h.b16 %v597
    %v2745 = vunpack.c.l.b16 %v598
    %v2746 = vunpack.c.h.b16 %v598
    %v2747 = vunpack.c.l.b16 %v599
    %v2748 = vunpack.c.h.b16 %v599
    %v2749 = vunpack.c.l.b16 %v600
    %v2750 = vunpack.c.h.b16 %v600
    %v2751 = vunpack.c.l.b16 %v601
    %v2752 = vunpack.c.h.b16 %v601
    %v2753 = vunpack.c.l.b16 %v602
    %v2754 = vunpack.c.h.b16 %v602
    %v2755 = vunpack.c.l.b16 %v603
    %v2756 = vunpack.c.h.b16 %v603
    %v2757 = vunpack.c.l.b16 %v604
    %v2758 = vunpack.c.h.b16 %v604
    %v2759 = vunpack.c.l.b16 %v605
    %v2760 = vunpack.c.h.b16 %v605
    %v2761 = vunpack.c.l.b16 %v606
    %v2762 = vunpack.c.h.b16 %v606
    %v2763 = vunpack.c.l.b16 %v607
    %v2764 = vunpack.c.h.b16 %v607
    %v2765 = vunpack.c.l.b16 %v608
    %v2766 = vunpack.c.h.b16 %v608
    %v2767 = vunpack.c.l.b16 %v609
    %v2768 = vunpack.c.h.b16 %v609
    %v2769 = vunpack.c.l.b16 %v610
    %v2770 = vunpack.c.h.b16 %v610
    %v2771 = vunpack.c.l.b16 %v611
    %v2772 = vunpack.c.h.b16 %v611
    %v2773 = vunpack.c.l.b16 %v612
    %v2774 = vunpack.c.h.b16 %v612
    %v2775 = vunpack.c.l.b16 %v613
    %v2776 = vunpack.c.h.b16 %v613
    %v2777 = vunpack.c.l.b16 %v614
    %v2778 = vunpack.c.h.b16 %v614
    %v2779 = vunpack.c.l.b16 %v615
    %v2780 = vunpack.c.h.b16 %v615
    %v2781 = vunpack.c.l.b16 %v616
    %v2782 = vunpack.c.h.b16 %v616
    %v2783 = vunpack.c.l.b16 %v617
    %v2784 = vunpack.c.h.b16 %v617
    %v2785 = vunpack.c.l.b16 %v618
    %v2786 = vunpack.c.h.b16 %v618
    %v2787 = vunpack.c.l.b16 %v619
    %v2788 = vunpack.c.h.b16 %v619
    %v2789 = vunpack.c.l.b16 %v620
    %v2790 = vunpack.c.h.b16 %v620
    %v2791 = vunpack.c.l.b16 %v621
    %v2792 = vunpack.c.h.b16 %v621
    %v2793 = vunpack.c.l.b16 %v622
    %v2794 = vunpack.c.h.b16 %v622
    %v2795 = vunpack.c.l.b16 %v623
    %v2796 = vunpack.c.h.b16 %v623
    %v2797 = vunpack.c.l.b16 %v624
    %v2798 = vunpack.c.h.b16 %v624
    %v2799 = vunpack.c.l.b16 %v625
    %v2800 = vunpack.c.h.b16 %v625
    %v2801 = vunpack.c.l.b16 %v626
    %v2802 = vunpack.c.h.b16 %v626
    %v2803 = vunpack.c.l.b16 %v627
    %v2804 = vunpack.c.h.b16 %v627
    %v2805 = vunpack.c.l.b16 %v628
    %v2806 = vunpack.c.h.b16 %v628
    %v2807 = vunpack.c.l.b16 %v629
    %v2808 = vunpack.c.h.b16 %v629
    %v2809 = vunpack.c.l.b16 %v630
    %v2810 = vunpack.c.h.b16 %v630
    %v2811 = vunpack.c.l.b16 %v631
    %v2812 = vunpack.c.h.b16 %v631
    %v2813 = vpack.c.b16 %v2565, %v2557
    %v2814 = vpack.c.b16 %v2566, %v2558
    %v2815 = vpack.c.b16 %v2567, %v2559
    %v2816 = vpack.c.b16 %v2568, %v2560
    %v2817 = vpack.c.b16 %v2569, %v2561
    %v2818 = vpack.c.b16 %v2570, %v2562
    %v2819 = vpack.c.b16 %v2571, %v2563
    %v2820 = vpack.c.b16 %v2572, %v2564
    %v2821 = vpack.c.b16 %v2581, %v2573
    %v2822 = vpack.c.b16 %v2582, %v2574
    %v2823 = vpack.c.b16 %v2583, %v2575
    %v2824 = vpack.c.b16 %v2584, %v2576
    %v2825 = vpack.c.b16 %v2585, %v2577
    %v2826 = vpack.c.b16 %v2586, %v2578
    %v2827 = vpack.c.b16 %v2587, %v2579
    %v2828 = vpack.c.b16 %v2588, %v2580
    %v2829 = vpack.c.b16 %v2597, %v2589
    %v2830 = vpack.c.b16 %v2598, %v2590
    %v2831 = vpack.c.b16 %v2599, %v2591
    %v2832 = vpack.c.b16 %v2600, %v2592
    %v2833 = vpack.c.b16 %v2601, %v2593
    %v2834 = vpack.c.b16 %v2602, %v2594
    %v2835 = vpack.c.b16 %v2603, %v2595
    %v2836 = vpack.c.b16 %v2604, %v2596
    %v2837 = vpack.c.b16 %v2613, %v2605
    %v2838 = vpack.c.b16 %v2614, %v2606
    %v2839 = vpack.c.b16 %v2615, %v2607
    %v2840 = vpack.c.b16 %v2616, %v2608
    %v2841 = vpack.c.b16 %v2617, %v2609
    %v2842 = vpack.c.b16 %v2618, %v2610
    %v2843 = vpack.c.b16 %v2619, %v2611
    %v2844 = vpack.c.b16 %v2620, %v2612
    %v2845 = vpack.c.b16 %v2629, %v2621
    %v2846 = vpack.c.b16 %v2630, %v2622
    %v2847 = vpack.c.b16 %v2631, %v2623
    %v2848 = vpack.c.b16 %v2632, %v2624
    %v2849 = vpack.c.b16 %v2633, %v2625
    %v2850 = vpack.c.b16 %v2634, %v2626
    %v2851 = vpack.c.b16 %v2635, %v2627
    %v2852 = vpack.c.b16 %v2636, %v2628
    %v2853 = vpack.c.b16 %v2645, %v2637
    %v2854 = vpack.c.b16 %v2646, %v2638
    %v2855 = vpack.c.b16 %v2647, %v2639
    %v2856 = vpack.c.b16 %v2648, %v2640
    %v2857 = vpack.c.b16 %v2649, %v2641
    %v2858 = vpack.c.b16 %v2650, %v2642
    %v2859 = vpack.c.b16 %v2651, %v2643
    %v2860 = vpack.c.b16 %v2652, %v2644
    %v2861 = vpack.c.b16 %v2661, %v2653
    %v2862 = vpack.c.b16 %v2662, %v2654
    %v2863 = vpack.c.b16 %v2663, %v2655
    %v2864 = vpack.c.b16 %v2664, %v2656
    %v2865 = vpack.c.b16 %v2665, %v2657
    %v2866 = vpack.c.b16 %v2666, %v2658
    %v2867 = vpack.c.b16 %v2667, %v2659
    %v2868 = vpack.c.b16 %v2668, %v2660
    %v2869 = vpack.c.b16 %v2677, %v2669
    %v2870 = vpack.c.b16 %v2678, %v2670
    %v2871 = vpack.c.b16 %v2679, %v2671
    %v2872 = vpack.c.b16 %v2680, %v2672
    %v2873 = vpack.c.b16 %v2681, %v2673
    %v2874 = vpack.c.b16 %v2682, %v2674
    %v2875 = vpack.c.b16 %v2683, %v2675
    %v2876 = vpack.c.b16 %v2684, %v2676
    %v2877 = vpack.c.b16 %v2693, %v2685
    %v2878 = vpack.c.b16 %v2694, %v2686
    %v2879 = vpack.c.b16 %v2695, %v2687
    %v2880 = vpack.c.b16 %v2696, %v2688
    %v2881 = vpack.c.b16 %v2697, %v2689
    %v2882 = vpack.c.b16 %v2698, %v2690
    %v2883 = vpack.c.b16 %v2699, %v2691
    %v2884 = vpack.c.b16 %v2700, %v2692
    %v2885 = vpack.c.b16 %v2709, %v2701
    %v2886 = vpack.c.b16 %v2710, %v2702
    %v2887 = vpack.c.b16 %v2711, %v2703
    %v2888 = vpack.c.b16 %v2712, %v2704
    %v2889 = vpack.c.b16 %v2713, %v2705
    %v2890 = vpack.c.b16 %v2714, %v2706
    %v2891 = vpack.c.b16 %v2715, %v2707
    %v2892 = vpack.c.b16 %v2716, %v2708
    %v2893 = vpack.c.b16 %v2725, %v2717
    %v2894 = vpack.c.b16 %v2726, %v2718
    %v2895 = vpack.c.b16 %v2727, %v2719
    %v2896 = vpack.c.b16 %v2728, %v2720
    %v2897 = vpack.c.b16 %v2729, %v2721
    %v2898 = vpack.c.b16 %v2730, %v2722
    %v2899 = vpack.c.b16 %v2731, %v2723
    %v2900 = vpack.c.b16 %v2732, %v2724
    %v2901 = vpack.c.b16 %v2741, %v2733
    %v2902 = vpack.c.b16 %v2742, %v2734
    %v2903 = vpack.c.b16 %v2743, %v2735
    %v2904 = vpack.c.b16 %v2744, %v2736
    %v2905 = vpack.c.b16 %v2745, %v2737
    %v2906 = vpack.c.b16 %v2746, %v2738
    %v2907 = vpack.c.b16 %v2747, %v2739
    %v2908 = vpack.c.b16 %v2748, %v2740
    %v2909 = vpack.c.b16 %v2757, %v2749
    %v2910 = vpack.c.b16 %v2758, %v2750
    %v2911 = vpack.c.b16 %v2759, %v2751
    %v2912 = vpack.c.b16 %v2760, %v2752
    %v2913 = vpack.c.b16 %v2761, %v2753
    %v2914 = vpack.c.b16 %v2762, %v2754
    %v2915 = vpack.c.b16 %v2763, %v2755
    %v2916 = vpack.c.b16 %v2764, %v2756
    %v2917 = vpack.c.b16 %v2773, %v2765
    %v2918 = vpack.c.b16 %v2774, %v2766
    %v2919 = vpack.c.b16 %v2775, %v2767
    %v2920 = vpack.c.b16 %v2776, %v2768
    %v2921 = vpack.c.b16 %v2777, %v2769
    %v2922 = vpack.c.b16 %v2778, %v2770
    %v2923 = vpack.c.b16 %v2779, %v2771
    %v2924 = vpack.c.b16 %v2780, %v2772
    %v2925 = vpack.c.b16 %v2789, %v2781
    %v2926 = vpack.c.b16 %v2790, %v2782
    %v2927 = vpack.c.b16 %v2791, %v2783
    %v2928 = vpack.c.b16 %v2792, %v2784
    %v2929 = vpack.c.b16 %v2793, %v2785
    %v2930 = vpack.c.b16 %v2794, %v2786
    %v2931 = vpack.c.b16 %v2795, %v2787
    %v2932 = vpack.c.b16 %v2796, %v2788
    %v2933 = vpack.c.b16 %v2805, %v2797
    %v2934 = vpack.c.b16 %v2806, %v2798
    %v2935 = vpack.c.b16 %v2807, %v2799
    %v2936 = vpack.c.b16 %v2808, %v2800
    %v2937 = vpack.c.b16 %v2809, %v2801
    %v2938 = vpack.c.b16 %v2810, %v2802
    %v2939 = vpack.c.b16 %v2811, %v2803
    %v2940 = vpack.c.b16 %v2812, %v2804
    %3069 = vmatprep.subr.bf16.mxu0 %v2814
    %3070 = vmatpush1.bf16.msra.mxu0 %v2813
    %3071 = vmatprep.subr.bf16.mxu0 %v2822
    %3072 = vmatpush1.bf16.msra.mxu0 %v2821
    %3073 = vmatprep.subr.bf16.mxu0 %v2830
    %3074 = vmatpush1.bf16.msra.mxu0 %v2829
    %3075 = vmatprep.subr.bf16.mxu0 %v2838
    %3076 = vmatpush1.bf16.msra.mxu0 %v2837
    %3077 = vmatprep.subr.bf16.mxu0 %v2846
    %3078 = vmatpush1.bf16.msra.mxu0 %v2845
    %3079 = vmatprep.subr.bf16.mxu0 %v2854
    %3080 = vmatpush1.bf16.msra.mxu0 %v2853
    %3081 = vmatprep.subr.bf16.mxu0 %v2862
    %3082 = vmatpush1.bf16.msra.mxu0 %v2861
    %3083 = vmatprep.subr.bf16.mxu0 %v2870
    %3084 = vmatpush1.bf16.msra.mxu0 %v2869
    %3085 = vmatprep.subr.bf16.mxu0 %v2878
    %3086 = vmatpush1.bf16.msra.mxu0 %v2877
    %3087 = vmatprep.subr.bf16.mxu0 %v2886
    %3088 = vmatpush1.bf16.msra.mxu0 %v2885
    %3089 = vmatprep.subr.bf16.mxu0 %v2894
    %3090 = vmatpush1.bf16.msra.mxu0 %v2893
    %3091 = vmatprep.subr.bf16.mxu0 %v2902
    %3092 = vmatpush1.bf16.msra.mxu0 %v2901
    %3093 = vmatprep.subr.bf16.mxu0 %v2910
    %3094 = vmatpush1.bf16.msra.mxu0 %v2909
    %3095 = vmatprep.subr.bf16.mxu0 %v2918
    %3096 = vmatpush1.bf16.msra.mxu0 %v2917
    %3097 = vmatprep.subr.bf16.mxu0 %v2926
    %3098 = vmatpush1.bf16.msra.mxu0 %v2925
    %3099 = vmatprep.subr.bf16.mxu0 %v2934
    %3100 = vmatpush1.bf16.msra.mxu0 %v2933
    %3101 = vmatprep.mubr.bf16.mxu0 %v473
    %3102 = vmatmul.mubr.bf16.gmra.mrb[0].mxu0 %v472
    %v3103 = vpop.f32.mrb[0].mxu0
    %v3104 = vadd.f32 %v1692, %v3103
    %v3105 = vpop.f32.mrb[0].mxu0
    %v3106 = vadd.f32 %v1694, %v3105
    %v3107 = vpop.f32.mrb[0].mxu0
    %v3108 = vadd.f32 %v1696, %v3107
    %v3109 = vpop.f32.mrb[0].mxu0
    %v3110 = vadd.f32 %v1698, %v3109
    %3111 = vmatprep.mubr.bf16.mxu0 %v475
    %3112 = vmatmul.mubr.bf16.gmra.mrb[0].mxu0 %v474
    %v3113 = vpop.f32.mrb[0].mxu0
    %v3114 = vadd.f32 %v1702, %v3113
    %v3115 = vpop.f32.mrb[0].mxu0
    %v3116 = vadd.f32 %v1704, %v3115
    %v3117 = vpop.f32.mrb[0].mxu0
    %v3118 = vadd.f32 %v1706, %v3117
    %v3119 = vpop.f32.mrb[0].mxu0
    %v3120 = vadd.f32 %v1708, %v3119
    %3121 = vmatprep.mubr.bf16.mxu0 %v477
    %3122 = vmatmul.mubr.bf16.gmra.mrb[0].mxu0 %v476
    %v3123 = vpop.f32.mrb[0].mxu0
    %v3124 = vadd.f32 %v1712, %v3123
    %v3125 = vpop.f32.mrb[0].mxu0
    %v3126 = vadd.f32 %v1714, %v3125
    %v3127 = vpop.f32.mrb[0].mxu0
    %v3128 = vadd.f32 %v1716, %v3127
    %v3129 = vpop.f32.mrb[0].mxu0
    %v3130 = vadd.f32 %v1718, %v3129
    %3131 = vmatprep.mubr.bf16.mxu0 %v479
    %3132 = vmatmul.mubr.bf16.gmra.mrb[0].mxu0 %v478
    %v3133 = vpop.f32.mrb[0].mxu0
    %v3134 = vadd.f32 %v1722, %v3133
    %v3135 = vpop.f32.mrb[0].mxu0
    %v3136 = vadd.f32 %v1724, %v3135
    %v3137 = vpop.f32.mrb[0].mxu0
    %v3138 = vadd.f32 %v1726, %v3137
    %v3139 = vpop.f32.mrb[0].mxu0
    %v3140 = vadd.f32 %v1728, %v3139
    %3141 = vmatprep.mubr.bf16.mxu0 %v481
    %3142 = vmatmul.mubr.bf16.gmra.mrb[0].mxu0 %v480
    %v3143 = vpop.f32.mrb[0].mxu0
    %v3144 = vadd.f32 %v1732, %v3143
    %v3145 = vpop.f32.mrb[0].mxu0
    %v3146 = vadd.f32 %v1734, %v3145
    %v3147 = vpop.f32.mrb[0].mxu0
    %v3148 = vadd.f32 %v1736, %v3147
    %v3149 = vpop.f32.mrb[0].mxu0
    %v3150 = vadd.f32 %v1738, %v3149
    %3151 = vmatprep.mubr.bf16.mxu0 %v483
    %3152 = vmatmul.mubr.bf16.gmra.mrb[0].mxu0 %v482
    %v3153 = vpop.f32.mrb[0].mxu0
    %v3154 = vadd.f32 %v1742, %v3153
    %v3155 = vpop.f32.mrb[0].mxu0
    %v3156 = vadd.f32 %v1744, %v3155
    %v3157 = vpop.f32.mrb[0].mxu0
    %v3158 = vadd.f32 %v1746, %v3157
    %v3159 = vpop.f32.mrb[0].mxu0
    %v3160 = vadd.f32 %v1748, %v3159
    %3161 = vmatprep.mubr.bf16.mxu0 %v485
    %3162 = vmatmul.mubr.bf16.gmra.mrb[0].mxu0 %v484
    %v3163 = vpop.f32.mrb[0].mxu0
    %v3164 = vadd.f32 %v1752, %v3163
    %v3165 = vpop.f32.mrb[0].mxu0
    %v3166 = vadd.f32 %v1754, %v3165
    %v3167 = vpop.f32.mrb[0].mxu0
    %v3168 = vadd.f32 %v1756, %v3167
    %v3169 = vpop.f32.mrb[0].mxu0
    %v3170 = vadd.f32 %v1758, %v3169
    %3171 = vmatprep.mubr.bf16.mxu0 %v487
    %3172 = vmatmul.mubr.bf16.gmra.mrb[0].mxu0 %v486
    %v3173 = vpop.f32.mrb[0].mxu0
    %v3174 = vadd.f32 %v1762, %v3173
    %v3175 = vpop.f32.mrb[0].mxu0
    %v3176 = vadd.f32 %v1764, %v3175
    %v3177 = vpop.f32.mrb[0].mxu0
    %v3178 = vadd.f32 %v1766, %v3177
    %v3179 = vpop.f32.mrb[0].mxu0
    %v3180 = vadd.f32 %v1768, %v3179
    %3181 = vmatprep.mubr.bf16.mxu0 %v489
    %3182 = vmatmul.mubr.bf16.gmra.mrb[0].mxu0 %v488
    %v3183 = vpop.f32.mrb[0].mxu0
    %v3184 = vadd.f32 %v1772, %v3183
    %v3185 = vpop.f32.mrb[0].mxu0
    %v3186 = vadd.f32 %v1774, %v3185
    %v3187 = vpop.f32.mrb[0].mxu0
    %v3188 = vadd.f32 %v1776, %v3187
    %v3189 = vpop.f32.mrb[0].mxu0
    %v3190 = vadd.f32 %v1778, %v3189
    %3191 = vmatprep.mubr.bf16.mxu0 %v491
    %3192 = vmatmul.mubr.bf16.gmra.mrb[0].mxu0 %v490
    %v3193 = vpop.f32.mrb[0].mxu0
    %v3194 = vadd.f32 %v1782, %v3193
    %v3195 = vpop.f32.mrb[0].mxu0
    %v3196 = vadd.f32 %v1784, %v3195
    %v3197 = vpop.f32.mrb[0].mxu0
    %v3198 = vadd.f32 %v1786, %v3197
    %v3199 = vpop.f32.mrb[0].mxu0
    %v3200 = vadd.f32 %v1788, %v3199
    %3201 = vmatprep.mubr.bf16.mxu0 %v493
    %3202 = vmatmul.mubr.bf16.gmra.mrb[0].mxu0 %v492
    %v3203 = vpop.f32.mrb[0].mxu0
    %v3204 = vadd.f32 %v1792, %v3203
    %v3205 = vpop.f32.mrb[0].mxu0
    %v3206 = vadd.f32 %v1794, %v3205
    %v3207 = vpop.f32.mrb[0].mxu0
    %v3208 = vadd.f32 %v1796, %v3207
    %v3209 = vpop.f32.mrb[0].mxu0
    %v3210 = vadd.f32 %v1798, %v3209
    %3211 = vmatprep.mubr.bf16.mxu0 %v495
    %3212 = vmatmul.mubr.bf16.gmra.mrb[0].mxu0 %v494
    %v3213 = vpop.f32.mrb[0].mxu0
    %v3214 = vadd.f32 %v1802, %v3213
    %v3215 = vpop.f32.mrb[0].mxu0
    %v3216 = vadd.f32 %v1804, %v3215
    %v3217 = vpop.f32.mrb[0].mxu0
    %v3218 = vadd.f32 %v1806, %v3217
    %v3219 = vpop.f32.mrb[0].mxu0
    %v3220 = vadd.f32 %v1808, %v3219
    %3221 = vmatprep.mubr.bf16.mxu0 %v497
    %3222 = vmatmul.mubr.bf16.gmra.mrb[0].mxu0 %v496
    %v3223 = vpop.f32.mrb[0].mxu0
    %v3224 = vadd.f32 %v1812, %v3223
    %v3225 = vpop.f32.mrb[0].mxu0
    %v3226 = vadd.f32 %v1814, %v3225
    %v3227 = vpop.f32.mrb[0].mxu0
    %v3228 = vadd.f32 %v1816, %v3227
    %v3229 = vpop.f32.mrb[0].mxu0
    %v3230 = vadd.f32 %v1818, %v3229
    %3231 = vmatprep.mubr.bf16.mxu0 %v499
    %3232 = vmatmul.mubr.bf16.gmra.mrb[0].mxu0 %v498
    %v3233 = vpop.f32.mrb[0].mxu0
    %v3234 = vadd.f32 %v1822, %v3233
    %v3235 = vpop.f32.mrb[0].mxu0
    %v3236 = vadd.f32 %v1824, %v3235
    %v3237 = vpop.f32.mrb[0].mxu0
    %v3238 = vadd.f32 %v1826, %v3237
    %v3239 = vpop.f32.mrb[0].mxu0
    %v3240 = vadd.f32 %v1828, %v3239
    %3241 = vmatprep.mubr.bf16.mxu0 %v501
    %3242 = vmatmul.mubr.bf16.gmra.mrb[0].mxu0 %v500
    %v3243 = vpop.f32.mrb[0].mxu0
    %v3244 = vadd.f32 %v1832, %v3243
    %v3245 = vpop.f32.mrb[0].mxu0
    %v3246 = vadd.f32 %v1834, %v3245
    %v3247 = vpop.f32.mrb[0].mxu0
    %v3248 = vadd.f32 %v1836, %v3247
    %v3249 = vpop.f32.mrb[0].mxu0
    %v3250 = vadd.f32 %v1838, %v3249
    %3251 = vmatprep.mubr.bf16.mxu0 %v503
    %3252 = vmatmul.mubr.bf16.gmra.mrb[0].mxu0 %v502
    %v3253 = vpop.f32.mrb[0].mxu0
    %v3254 = vadd.f32 %v1842, %v3253
    %v3255 = vpop.f32.mrb[0].mxu0
    %v3256 = vadd.f32 %v1844, %v3255
    %v3257 = vpop.f32.mrb[0].mxu0
    %v3258 = vadd.f32 %v1846, %v3257
    %v3259 = vpop.f32.mrb[0].mxu0
    %v3260 = vadd.f32 %v1848, %v3259
    %3261 = vdwg.mxu0
    %3262 = vmatprep.subr.bf16.mxu0 %v2816
    %3263 = vmatpush1.bf16.msra.mxu0 %v2815
    %3264 = vmatprep.subr.bf16.mxu0 %v2824
    %3265 = vmatpush1.bf16.msra.mxu0 %v2823
    %3266 = vmatprep.subr.bf16.mxu0 %v2832
    %3267 = vmatpush1.bf16.msra.mxu0 %v2831
    %3268 = vmatprep.subr.bf16.mxu0 %v2840
    %3269 = vmatpush1.bf16.msra.mxu0 %v2839
    %3270 = vmatprep.subr.bf16.mxu0 %v2848
    %3271 = vmatpush1.bf16.msra.mxu0 %v2847
    %3272 = vmatprep.subr.bf16.mxu0 %v2856
    %3273 = vmatpush1.bf16.msra.mxu0 %v2855
    %3274 = vmatprep.subr.bf16.mxu0 %v2864
    %3275 = vmatpush1.bf16.msra.mxu0 %v2863
    %3276 = vmatprep.subr.bf16.mxu0 %v2872
    %3277 = vmatpush1.bf16.msra.mxu0 %v2871
    %3278 = vmatprep.subr.bf16.mxu0 %v2880
    %3279 = vmatpush1.bf16.msra.mxu0 %v2879
    %3280 = vmatprep.subr.bf16.mxu0 %v2888
    %3281 = vmatpush1.bf16.msra.mxu0 %v2887
    %3282 = vmatprep.subr.bf16.mxu0 %v2896
    %3283 = vmatpush1.bf16.msra.mxu0 %v2895
    %3284 = vmatprep.subr.bf16.mxu0 %v2904
    %3285 = vmatpush1.bf16.msra.mxu0 %v2903
    %3286 = vmatprep.subr.bf16.mxu0 %v2912
    %3287 = vmatpush1.bf16.msra.mxu0 %v2911
    %3288 = vmatprep.subr.bf16.mxu0 %v2920
    %3289 = vmatpush1.bf16.msra.mxu0 %v2919
    %3290 = vmatprep.subr.bf16.mxu0 %v2928
    %3291 = vmatpush1.bf16.msra.mxu0 %v2927
    %3292 = vmatprep.subr.bf16.mxu0 %v2936
    %3293 = vmatpush1.bf16.msra.mxu0 %v2935
    %3294 = vmatprep.mubr.bf16.mxu0 %v473
    %3295 = vmatmul.mubr.bf16.gmra.mrb[0].mxu0 %v472
    %v3296 = vpop.f32.mrb[0].mxu0
    %v3297 = vadd.f32 %v1885, %v3296
    %v3298 = vpop.f32.mrb[0].mxu0
    %v3299 = vadd.f32 %v1887, %v3298
    %v3300 = vpop.f32.mrb[0].mxu0
    %v3301 = vadd.f32 %v1889, %v3300
    %v3302 = vpop.f32.mrb[0].mxu0
    %v3303 = vadd.f32 %v1891, %v3302
    %3304 = vmatprep.mubr.bf16.mxu0 %v475
    %3305 = vmatmul.mubr.bf16.gmra.mrb[0].mxu0 %v474
    %v3306 = vpop.f32.mrb[0].mxu0
    %v3307 = vadd.f32 %v1895, %v3306
    %v3308 = vpop.f32.mrb[0].mxu0
    %v3309 = vadd.f32 %v1897, %v3308
    %v3310 = vpop.f32.mrb[0].mxu0
    %v3311 = vadd.f32 %v1899, %v3310
    %v3312 = vpop.f32.mrb[0].mxu0
    %v3313 = vadd.f32 %v1901, %v3312
    %3314 = vmatprep.mubr.bf16.mxu0 %v477
    %3315 = vmatmul.mubr.bf16.gmra.mrb[0].mxu0 %v476
    %v3316 = vpop.f32.mrb[0].mxu0
    %v3317 = vadd.f32 %v1905, %v3316
    %v3318 = vpop.f32.mrb[0].mxu0
    %v3319 = vadd.f32 %v1907, %v3318
    %v3320 = vpop.f32.mrb[0].mxu0
    %v3321 = vadd.f32 %v1909, %v3320
    %v3322 = vpop.f32.mrb[0].mxu0
    %v3323 = vadd.f32 %v1911, %v3322
    %3324 = vmatprep.mubr.bf16.mxu0 %v479
    %3325 = vmatmul.mubr.bf16.gmra.mrb[0].mxu0 %v478
    %v3326 = vpop.f32.mrb[0].mxu0
    %v3327 = vadd.f32 %v1915, %v3326
    %v3328 = vpop.f32.mrb[0].mxu0
    %v3329 = vadd.f32 %v1917, %v3328
    %v3330 = vpop.f32.mrb[0].mxu0
    %v3331 = vadd.f32 %v1919, %v3330
    %v3332 = vpop.f32.mrb[0].mxu0
    %v3333 = vadd.f32 %v1921, %v3332
    %3334 = vmatprep.mubr.bf16.mxu0 %v481
    %3335 = vmatmul.mubr.bf16.gmra.mrb[0].mxu0 %v480
    %v3336 = vpop.f32.mrb[0].mxu0
    %v3337 = vadd.f32 %v1925, %v3336
    %v3338 = vpop.f32.mrb[0].mxu0
    %v3339 = vadd.f32 %v1927, %v3338
    %v3340 = vpop.f32.mrb[0].mxu0
    %v3341 = vadd.f32 %v1929, %v3340
    %v3342 = vpop.f32.mrb[0].mxu0
    %v3343 = vadd.f32 %v1931, %v3342
    %3344 = vmatprep.mubr.bf16.mxu0 %v483
    %3345 = vmatmul.mubr.bf16.gmra.mrb[0].mxu0 %v482
    %v3346 = vpop.f32.mrb[0].mxu0
    %v3347 = vadd.f32 %v1935, %v3346
    %v3348 = vpop.f32.mrb[0].mxu0
    %v3349 = vadd.f32 %v1937, %v3348
    %v3350 = vpop.f32.mrb[0].mxu0
    %v3351 = vadd.f32 %v1939, %v3350
    %v3352 = vpop.f32.mrb[0].mxu0
    %v3353 = vadd.f32 %v1941, %v3352
    %3354 = vmatprep.mubr.bf16.mxu0 %v485
    %3355 = vmatmul.mubr.bf16.gmra.mrb[0].mxu0 %v484
    %v3356 = vpop.f32.mrb[0].mxu0
    %v3357 = vadd.f32 %v1945, %v3356
    %v3358 = vpop.f32.mrb[0].mxu0
    %v3359 = vadd.f32 %v1947, %v3358
    %v3360 = vpop.f32.mrb[0].mxu0
    %v3361 = vadd.f32 %v1949, %v3360
    %v3362 = vpop.f32.mrb[0].mxu0
    %v3363 = vadd.f32 %v1951, %v3362
    %3364 = vmatprep.mubr.bf16.mxu0 %v487
    %3365 = vmatmul.mubr.bf16.gmra.mrb[0].mxu0 %v486
    %v3366 = vpop.f32.mrb[0].mxu0
    %v3367 = vadd.f32 %v1955, %v3366
    %v3368 = vpop.f32.mrb[0].mxu0
    %v3369 = vadd.f32 %v1957, %v3368
    %v3370 = vpop.f32.mrb[0].mxu0
    %v3371 = vadd.f32 %v1959, %v3370
    %v3372 = vpop.f32.mrb[0].mxu0
    %v3373 = vadd.f32 %v1961, %v3372
    %3374 = vmatprep.mubr.bf16.mxu0 %v489
    %3375 = vmatmul.mubr.bf16.gmra.mrb[0].mxu0 %v488
    %v3376 = vpop.f32.mrb[0].mxu0
    %v3377 = vadd.f32 %v1965, %v3376
    %v3378 = vpop.f32.mrb[0].mxu0
    %v3379 = vadd.f32 %v1967, %v3378
    %v3380 = vpop.f32.mrb[0].mxu0
    %v3381 = vadd.f32 %v1969, %v3380
    %v3382 = vpop.f32.mrb[0].mxu0
    %v3383 = vadd.f32 %v1971, %v3382
    %3384 = vmatprep.mubr.bf16.mxu0 %v491
    %3385 = vmatmul.mubr.bf16.gmra.mrb[0].mxu0 %v490
    %v3386 = vpop.f32.mrb[0].mxu0
    %v3387 = vadd.f32 %v1975, %v3386
    %v3388 = vpop.f32.mrb[0].mxu0
    %v3389 = vadd.f32 %v1977, %v3388
    %v3390 = vpop.f32.mrb[0].mxu0
    %v3391 = vadd.f32 %v1979, %v3390
    %v3392 = vpop.f32.mrb[0].mxu0
    %v3393 = vadd.f32 %v1981, %v3392
    %3394 = vmatprep.mubr.bf16.mxu0 %v493
    %3395 = vmatmul.mubr.bf16.gmra.mrb[0].mxu0 %v492
    %v3396 = vpop.f32.mrb[0].mxu0
    %v3397 = vadd.f32 %v1985, %v3396
    %v3398 = vpop.f32.mrb[0].mxu0
    %v3399 = vadd.f32 %v1987, %v3398
    %v3400 = vpop.f32.mrb[0].mxu0
    %v3401 = vadd.f32 %v1989, %v3400
    %v3402 = vpop.f32.mrb[0].mxu0
    %v3403 = vadd.f32 %v1991, %v3402
    %3404 = vmatprep.mubr.bf16.mxu0 %v495
    %3405 = vmatmul.mubr.bf16.gmra.mrb[0].mxu0 %v494
    %v3406 = vpop.f32.mrb[0].mxu0
    %v3407 = vadd.f32 %v1995, %v3406
    %v3408 = vpop.f32.mrb[0].mxu0
    %v3409 = vadd.f32 %v1997, %v3408
    %v3410 = vpop.f32.mrb[0].mxu0
    %v3411 = vadd.f32 %v1999, %v3410
    %v3412 = vpop.f32.mrb[0].mxu0
    %v3413 = vadd.f32 %v2001, %v3412
    %3414 = vmatprep.mubr.bf16.mxu0 %v497
    %3415 = vmatmul.mubr.bf16.gmra.mrb[0].mxu0 %v496
    %v3416 = vpop.f32.mrb[0].mxu0
    %v3417 = vadd.f32 %v2005, %v3416
    %v3418 = vpop.f32.mrb[0].mxu0
    %v3419 = vadd.f32 %v2007, %v3418
    %v3420 = vpop.f32.mrb[0].mxu0
    %v3421 = vadd.f32 %v2009, %v3420
    %v3422 = vpop.f32.mrb[0].mxu0
    %v3423 = vadd.f32 %v2011, %v3422
    %3424 = vmatprep.mubr.bf16.mxu0 %v499
    %3425 = vmatmul.mubr.bf16.gmra.mrb[0].mxu0 %v498
    %v3426 = vpop.f32.mrb[0].mxu0
    %v3427 = vadd.f32 %v2015, %v3426
    %v3428 = vpop.f32.mrb[0].mxu0
    %v3429 = vadd.f32 %v2017, %v3428
    %v3430 = vpop.f32.mrb[0].mxu0
    %v3431 = vadd.f32 %v2019, %v3430
    %v3432 = vpop.f32.mrb[0].mxu0
    %v3433 = vadd.f32 %v2021, %v3432
    %3434 = vmatprep.mubr.bf16.mxu0 %v501
    %3435 = vmatmul.mubr.bf16.gmra.mrb[0].mxu0 %v500
    %v3436 = vpop.f32.mrb[0].mxu0
    %v3437 = vadd.f32 %v2025, %v3436
    %v3438 = vpop.f32.mrb[0].mxu0
    %v3439 = vadd.f32 %v2027, %v3438
    %v3440 = vpop.f32.mrb[0].mxu0
    %v3441 = vadd.f32 %v2029, %v3440
    %v3442 = vpop.f32.mrb[0].mxu0
    %v3443 = vadd.f32 %v2031, %v3442
    %3444 = vmatprep.mubr.bf16.mxu0 %v503
    %3445 = vmatmul.mubr.bf16.gmra.mrb[0].mxu0 %v502
    %v3446 = vpop.f32.mrb[0].mxu0
    %v3447 = vadd.f32 %v2035, %v3446
    %v3448 = vpop.f32.mrb[0].mxu0
    %v3449 = vadd.f32 %v2037, %v3448
    %v3450 = vpop.f32.mrb[0].mxu0
    %v3451 = vadd.f32 %v2039, %v3450
    %v3452 = vpop.f32.mrb[0].mxu0
    %v3453 = vadd.f32 %v2041, %v3452
    %3454 = vdwg.mxu0
    %3455 = vmatprep.subr.bf16.mxu0 %v2818
    %3456 = vmatpush1.bf16.msra.mxu0 %v2817
    %3457 = vmatprep.subr.bf16.mxu0 %v2826
    %3458 = vmatpush1.bf16.msra.mxu0 %v2825
    %3459 = vmatprep.subr.bf16.mxu0 %v2834
    %3460 = vmatpush1.bf16.msra.mxu0 %v2833
    %3461 = vmatprep.subr.bf16.mxu0 %v2842
    %3462 = vmatpush1.bf16.msra.mxu0 %v2841
    %3463 = vmatprep.subr.bf16.mxu0 %v2850
    %3464 = vmatpush1.bf16.msra.mxu0 %v2849
    %3465 = vmatprep.subr.bf16.mxu0 %v2858
    %3466 = vmatpush1.bf16.msra.mxu0 %v2857
    %3467 = vmatprep.subr.bf16.mxu0 %v2866
    %3468 = vmatpush1.bf16.msra.mxu0 %v2865
    %3469 = vmatprep.subr.bf16.mxu0 %v2874
    %3470 = vmatpush1.bf16.msra.mxu0 %v2873
    %3471 = vmatprep.subr.bf16.mxu0 %v2882
    %3472 = vmatpush1.bf16.msra.mxu0 %v2881
    %3473 = vmatprep.subr.bf16.mxu0 %v2890
    %3474 = vmatpush1.bf16.msra.mxu0 %v2889
    %3475 = vmatprep.subr.bf16.mxu0 %v2898
    %3476 = vmatpush1.bf16.msra.mxu0 %v2897
    %3477 = vmatprep.subr.bf16.mxu0 %v2906
    %3478 = vmatpush1.bf16.msra.mxu0 %v2905
    %3479 = vmatprep.subr.bf16.mxu0 %v2914
    %3480 = vmatpush1.bf16.msra.mxu0 %v2913
    %3481 = vmatprep.subr.bf16.mxu0 %v2922
    %3482 = vmatpush1.bf16.msra.mxu0 %v2921
    %3483 = vmatprep.subr.bf16.mxu0 %v2930
    %3484 = vmatpush1.bf16.msra.mxu0 %v2929
    %3485 = vmatprep.subr.bf16.mxu0 %v2938
    %3486 = vmatpush1.bf16.msra.mxu0 %v2937
    %3487 = vmatprep.mubr.bf16.mxu0 %v473
    %3488 = vmatmul.mubr.bf16.gmra.mrb[0].mxu0 %v472
    %v3489 = vpop.f32.mrb[0].mxu0
    %v3490 = vadd.f32 %v2078, %v3489
    %v3491 = vpop.f32.mrb[0].mxu0
    %v3492 = vadd.f32 %v2080, %v3491
    %v3493 = vpop.f32.mrb[0].mxu0
    %v3494 = vadd.f32 %v2082, %v3493
    %v3495 = vpop.f32.mrb[0].mxu0
    %v3496 = vadd.f32 %v2084, %v3495
    %3497 = vmatprep.mubr.bf16.mxu0 %v475
    %3498 = vmatmul.mubr.bf16.gmra.mrb[0].mxu0 %v474
    %v3499 = vpop.f32.mrb[0].mxu0
    %v3500 = vadd.f32 %v2088, %v3499
    %v3501 = vpop.f32.mrb[0].mxu0
    %v3502 = vadd.f32 %v2090, %v3501
    %v3503 = vpop.f32.mrb[0].mxu0
    %v3504 = vadd.f32 %v2092, %v3503
    %v3505 = vpop.f32.mrb[0].mxu0
    %v3506 = vadd.f32 %v2094, %v3505
    %3507 = vmatprep.mubr.bf16.mxu0 %v477
    %3508 = vmatmul.mubr.bf16.gmra.mrb[0].mxu0 %v476
    %v3509 = vpop.f32.mrb[0].mxu0
    %v3510 = vadd.f32 %v2098, %v3509
    %v3511 = vpop.f32.mrb[0].mxu0
    %v3512 = vadd.f32 %v2100, %v3511
    %v3513 = vpop.f32.mrb[0].mxu0
    %v3514 = vadd.f32 %v2102, %v3513
    %v3515 = vpop.f32.mrb[0].mxu0
    %v3516 = vadd.f32 %v2104, %v3515
    %3517 = vmatprep.mubr.bf16.mxu0 %v479
    %3518 = vmatmul.mubr.bf16.gmra.mrb[0].mxu0 %v478
    %v3519 = vpop.f32.mrb[0].mxu0
    %v3520 = vadd.f32 %v2108, %v3519
    %v3521 = vpop.f32.mrb[0].mxu0
    %v3522 = vadd.f32 %v2110, %v3521
    %v3523 = vpop.f32.mrb[0].mxu0
    %v3524 = vadd.f32 %v2112, %v3523
    %v3525 = vpop.f32.mrb[0].mxu0
    %v3526 = vadd.f32 %v2114, %v3525
    %3527 = vmatprep.mubr.bf16.mxu0 %v481
    %3528 = vmatmul.mubr.bf16.gmra.mrb[0].mxu0 %v480
    %v3529 = vpop.f32.mrb[0].mxu0
    %v3530 = vadd.f32 %v2118, %v3529
    %v3531 = vpop.f32.mrb[0].mxu0
    %v3532 = vadd.f32 %v2120, %v3531
    %v3533 = vpop.f32.mrb[0].mxu0
    %v3534 = vadd.f32 %v2122, %v3533
    %v3535 = vpop.f32.mrb[0].mxu0
    %v3536 = vadd.f32 %v2124, %v3535
    %3537 = vmatprep.mubr.bf16.mxu0 %v483
    %3538 = vmatmul.mubr.bf16.gmra.mrb[0].mxu0 %v482
    %v3539 = vpop.f32.mrb[0].mxu0
    %v3540 = vadd.f32 %v2128, %v3539
    %v3541 = vpop.f32.mrb[0].mxu0
    %v3542 = vadd.f32 %v2130, %v3541
    %v3543 = vpop.f32.mrb[0].mxu0
    %v3544 = vadd.f32 %v2132, %v3543
    %v3545 = vpop.f32.mrb[0].mxu0
    %v3546 = vadd.f32 %v2134, %v3545
    %3547 = vmatprep.mubr.bf16.mxu0 %v485
    %3548 = vmatmul.mubr.bf16.gmra.mrb[0].mxu0 %v484
    %v3549 = vpop.f32.mrb[0].mxu0
    %v3550 = vadd.f32 %v2138, %v3549
    %v3551 = vpop.f32.mrb[0].mxu0
    %v3552 = vadd.f32 %v2140, %v3551
    %v3553 = vpop.f32.mrb[0].mxu0
    %v3554 = vadd.f32 %v2142, %v3553
    %v3555 = vpop.f32.mrb[0].mxu0
    %v3556 = vadd.f32 %v2144, %v3555
    %3557 = vmatprep.mubr.bf16.mxu0 %v487
    %3558 = vmatmul.mubr.bf16.gmra.mrb[0].mxu0 %v486
    %v3559 = vpop.f32.mrb[0].mxu0
    %v3560 = vadd.f32 %v2148, %v3559
    %v3561 = vpop.f32.mrb[0].mxu0
    %v3562 = vadd.f32 %v2150, %v3561
    %v3563 = vpop.f32.mrb[0].mxu0
    %v3564 = vadd.f32 %v2152, %v3563
    %v3565 = vpop.f32.mrb[0].mxu0
    %v3566 = vadd.f32 %v2154, %v3565
    %3567 = vmatprep.mubr.bf16.mxu0 %v489
    %3568 = vmatmul.mubr.bf16.gmra.mrb[0].mxu0 %v488
    %v3569 = vpop.f32.mrb[0].mxu0
    %v3570 = vadd.f32 %v2158, %v3569
    %v3571 = vpop.f32.mrb[0].mxu0
    %v3572 = vadd.f32 %v2160, %v3571
    %v3573 = vpop.f32.mrb[0].mxu0
    %v3574 = vadd.f32 %v2162, %v3573
    %v3575 = vpop.f32.mrb[0].mxu0
    %v3576 = vadd.f32 %v2164, %v3575
    %3577 = vmatprep.mubr.bf16.mxu0 %v491
    %3578 = vmatmul.mubr.bf16.gmra.mrb[0].mxu0 %v490
    %v3579 = vpop.f32.mrb[0].mxu0
    %v3580 = vadd.f32 %v2168, %v3579
    %v3581 = vpop.f32.mrb[0].mxu0
    %v3582 = vadd.f32 %v2170, %v3581
    %v3583 = vpop.f32.mrb[0].mxu0
    %v3584 = vadd.f32 %v2172, %v3583
    %v3585 = vpop.f32.mrb[0].mxu0
    %v3586 = vadd.f32 %v2174, %v3585
    %3587 = vmatprep.mubr.bf16.mxu0 %v493
    %3588 = vmatmul.mubr.bf16.gmra.mrb[0].mxu0 %v492
    %v3589 = vpop.f32.mrb[0].mxu0
    %v3590 = vadd.f32 %v2178, %v3589
    %v3591 = vpop.f32.mrb[0].mxu0
    %v3592 = vadd.f32 %v2180, %v3591
    %v3593 = vpop.f32.mrb[0].mxu0
    %v3594 = vadd.f32 %v2182, %v3593
    %v3595 = vpop.f32.mrb[0].mxu0
    %v3596 = vadd.f32 %v2184, %v3595
    %3597 = vmatprep.mubr.bf16.mxu0 %v495
    %3598 = vmatmul.mubr.bf16.gmra.mrb[0].mxu0 %v494
    %v3599 = vpop.f32.mrb[0].mxu0
    %v3600 = vadd.f32 %v2188, %v3599
    %v3601 = vpop.f32.mrb[0].mxu0
    %v3602 = vadd.f32 %v2190, %v3601
    %v3603 = vpop.f32.mrb[0].mxu0
    %v3604 = vadd.f32 %v2192, %v3603
    %v3605 = vpop.f32.mrb[0].mxu0
    %v3606 = vadd.f32 %v2194, %v3605
    %3607 = vmatprep.mubr.bf16.mxu0 %v497
    %3608 = vmatmul.mubr.bf16.gmra.mrb[0].mxu0 %v496
    %v3609 = vpop.f32.mrb[0].mxu0
    %v3610 = vadd.f32 %v2198, %v3609
    %v3611 = vpop.f32.mrb[0].mxu0
    %v3612 = vadd.f32 %v2200, %v3611
    %v3613 = vpop.f32.mrb[0].mxu0
    %v3614 = vadd.f32 %v2202, %v3613
    %v3615 = vpop.f32.mrb[0].mxu0
    %v3616 = vadd.f32 %v2204, %v3615
    %3617 = vmatprep.mubr.bf16.mxu0 %v499
    %3618 = vmatmul.mubr.bf16.gmra.mrb[0].mxu0 %v498
    %v3619 = vpop.f32.mrb[0].mxu0
    %v3620 = vadd.f32 %v2208, %v3619
    %v3621 = vpop.f32.mrb[0].mxu0
    %v3622 = vadd.f32 %v2210, %v3621
    %v3623 = vpop.f32.mrb[0].mxu0
    %v3624 = vadd.f32 %v2212, %v3623
    %v3625 = vpop.f32.mrb[0].mxu0
    %v3626 = vadd.f32 %v2214, %v3625
    %3627 = vmatprep.mubr.bf16.mxu0 %v501
    %3628 = vmatmul.mubr.bf16.gmra.mrb[0].mxu0 %v500
    %v3629 = vpop.f32.mrb[0].mxu0
    %v3630 = vadd.f32 %v2218, %v3629
    %v3631 = vpop.f32.mrb[0].mxu0
    %v3632 = vadd.f32 %v2220, %v3631
    %v3633 = vpop.f32.mrb[0].mxu0
    %v3634 = vadd.f32 %v2222, %v3633
    %v3635 = vpop.f32.mrb[0].mxu0
    %v3636 = vadd.f32 %v2224, %v3635
    %3637 = vmatprep.mubr.bf16.mxu0 %v503
    %3638 = vmatmul.mubr.bf16.gmra.mrb[0].mxu0 %v502
    %v3639 = vpop.f32.mrb[0].mxu0
    %v3640 = vadd.f32 %v2228, %v3639
    %v3641 = vpop.f32.mrb[0].mxu0
    %v3642 = vadd.f32 %v2230, %v3641
    %v3643 = vpop.f32.mrb[0].mxu0
    %v3644 = vadd.f32 %v2232, %v3643
    %v3645 = vpop.f32.mrb[0].mxu0
    %v3646 = vadd.f32 %v2234, %v3645
    %3647 = vdwg.mxu0
    %3648 = vmatprep.subr.bf16.mxu0 %v2820
    %3649 = vmatpush1.bf16.msra.mxu0 %v2819
    %3650 = vmatprep.subr.bf16.mxu0 %v2828
    %3651 = vmatpush1.bf16.msra.mxu0 %v2827
    %3652 = vmatprep.subr.bf16.mxu0 %v2836
    %3653 = vmatpush1.bf16.msra.mxu0 %v2835
    %3654 = vmatprep.subr.bf16.mxu0 %v2844
    %3655 = vmatpush1.bf16.msra.mxu0 %v2843
    %3656 = vmatprep.subr.bf16.mxu0 %v2852
    %3657 = vmatpush1.bf16.msra.mxu0 %v2851
    %3658 = vmatprep.subr.bf16.mxu0 %v2860
    %3659 = vmatpush1.bf16.msra.mxu0 %v2859
    %3660 = vmatprep.subr.bf16.mxu0 %v2868
    %3661 = vmatpush1.bf16.msra.mxu0 %v2867
    %3662 = vmatprep.subr.bf16.mxu0 %v2876
    %3663 = vmatpush1.bf16.msra.mxu0 %v2875
    %3664 = vmatprep.subr.bf16.mxu0 %v2884
    %3665 = vmatpush1.bf16.msra.mxu0 %v2883
    %3666 = vmatprep.subr.bf16.mxu0 %v2892
    %3667 = vmatpush1.bf16.msra.mxu0 %v2891
    %3668 = vmatprep.subr.bf16.mxu0 %v2900
    %3669 = vmatpush1.bf16.msra.mxu0 %v2899
    %3670 = vmatprep.subr.bf16.mxu0 %v2908
    %3671 = vmatpush1.bf16.msra.mxu0 %v2907
    %3672 = vmatprep.subr.bf16.mxu0 %v2916
    %3673 = vmatpush1.bf16.msra.mxu0 %v2915
    %3674 = vmatprep.subr.bf16.mxu0 %v2924
    %3675 = vmatpush1.bf16.msra.mxu0 %v2923
    %3676 = vmatprep.subr.bf16.mxu0 %v2932
    %3677 = vmatpush1.bf16.msra.mxu0 %v2931
    %3678 = vmatprep.subr.bf16.mxu0 %v2940
    %3679 = vmatpush1.bf16.msra.mxu0 %v2939
    %3680 = vmatprep.mubr.bf16.mxu0 %v473
    %3681 = vmatmul.mubr.bf16.gmra.mrb[0].mxu0 %v472
    %v3682 = vpop.f32.mrb[0].mxu0
    %v3683 = vadd.f32 %v2271, %v3682
    %v3684 = vpop.f32.mrb[0].mxu0
    %v3685 = vadd.f32 %v2273, %v3684
    %v3686 = vpop.f32.mrb[0].mxu0
    %v3687 = vadd.f32 %v2275, %v3686
    %v3688 = vpop.f32.mrb[0].mxu0
    %v3689 = vadd.f32 %v2277, %v3688
    %3690 = vmatprep.mubr.bf16.mxu0 %v475
    %3691 = vmatmul.mubr.bf16.gmra.mrb[0].mxu0 %v474
    %v3692 = vpop.f32.mrb[0].mxu0
    %v3693 = vadd.f32 %v2281, %v3692
    %v3694 = vpop.f32.mrb[0].mxu0
    %v3695 = vadd.f32 %v2283, %v3694
    %v3696 = vpop.f32.mrb[0].mxu0
    %v3697 = vadd.f32 %v2285, %v3696
    %v3698 = vpop.f32.mrb[0].mxu0
    %v3699 = vadd.f32 %v2287, %v3698
    %3700 = vmatprep.mubr.bf16.mxu0 %v477
    %3701 = vmatmul.mubr.bf16.gmra.mrb[0].mxu0 %v476
    %v3702 = vpop.f32.mrb[0].mxu0
    %v3703 = vadd.f32 %v2291, %v3702
    %v3704 = vpop.f32.mrb[0].mxu0
    %v3705 = vadd.f32 %v2293, %v3704
    %v3706 = vpop.f32.mrb[0].mxu0
    %v3707 = vadd.f32 %v2295, %v3706
    %v3708 = vpop.f32.mrb[0].mxu0
    %v3709 = vadd.f32 %v2297, %v3708
    %3710 = vmatprep.mubr.bf16.mxu0 %v479
    %3711 = vmatmul.mubr.bf16.gmra.mrb[0].mxu0 %v478
    %v3712 = vpop.f32.mrb[0].mxu0
    %v3713 = vadd.f32 %v2301, %v3712
    %v3714 = vpop.f32.mrb[0].mxu0
    %v3715 = vadd.f32 %v2303, %v3714
    %v3716 = vpop.f32.mrb[0].mxu0
    %v3717 = vadd.f32 %v2305, %v3716
    %v3718 = vpop.f32.mrb[0].mxu0
    %v3719 = vadd.f32 %v2307, %v3718
    %3720 = vmatprep.mubr.bf16.mxu0 %v481
    %3721 = vmatmul.mubr.bf16.gmra.mrb[0].mxu0 %v480
    %v3722 = vpop.f32.mrb[0].mxu0
    %v3723 = vadd.f32 %v2311, %v3722
    %v3724 = vpop.f32.mrb[0].mxu0
    %v3725 = vadd.f32 %v2313, %v3724
    %v3726 = vpop.f32.mrb[0].mxu0
    %v3727 = vadd.f32 %v2315, %v3726
    %v3728 = vpop.f32.mrb[0].mxu0
    %v3729 = vadd.f32 %v2317, %v3728
    %3730 = vmatprep.mubr.bf16.mxu0 %v483
    %3731 = vmatmul.mubr.bf16.gmra.mrb[0].mxu0 %v482
    %v3732 = vpop.f32.mrb[0].mxu0
    %v3733 = vadd.f32 %v2321, %v3732
    %v3734 = vpop.f32.mrb[0].mxu0
    %v3735 = vadd.f32 %v2323, %v3734
    %v3736 = vpop.f32.mrb[0].mxu0
    %v3737 = vadd.f32 %v2325, %v3736
    %v3738 = vpop.f32.mrb[0].mxu0
    %v3739 = vadd.f32 %v2327, %v3738
    %3740 = vmatprep.mubr.bf16.mxu0 %v485
    %3741 = vmatmul.mubr.bf16.gmra.mrb[0].mxu0 %v484
    %v3742 = vpop.f32.mrb[0].mxu0
    %v3743 = vadd.f32 %v2331, %v3742
    %v3744 = vpop.f32.mrb[0].mxu0
    %v3745 = vadd.f32 %v2333, %v3744
    %v3746 = vpop.f32.mrb[0].mxu0
    %v3747 = vadd.f32 %v2335, %v3746
    %v3748 = vpop.f32.mrb[0].mxu0
    %v3749 = vadd.f32 %v2337, %v3748
    %3750 = vmatprep.mubr.bf16.mxu0 %v487
    %3751 = vmatmul.mubr.bf16.gmra.mrb[0].mxu0 %v486
    %v3752 = vpop.f32.mrb[0].mxu0
    %v3753 = vadd.f32 %v2341, %v3752
    %v3754 = vpop.f32.mrb[0].mxu0
    %v3755 = vadd.f32 %v2343, %v3754
    %v3756 = vpop.f32.mrb[0].mxu0
    %v3757 = vadd.f32 %v2345, %v3756
    %v3758 = vpop.f32.mrb[0].mxu0
    %v3759 = vadd.f32 %v2347, %v3758
    %3760 = vmatprep.mubr.bf16.mxu0 %v489
    %3761 = vmatmul.mubr.bf16.gmra.mrb[0].mxu0 %v488
    %v3762 = vpop.f32.mrb[0].mxu0
    %v3763 = vadd.f32 %v2351, %v3762
    %v3764 = vpop.f32.mrb[0].mxu0
    %v3765 = vadd.f32 %v2353, %v3764
    %v3766 = vpop.f32.mrb[0].mxu0
    %v3767 = vadd.f32 %v2355, %v3766
    %v3768 = vpop.f32.mrb[0].mxu0
    %v3769 = vadd.f32 %v2357, %v3768
    %3770 = vmatprep.mubr.bf16.mxu0 %v491
    %3771 = vmatmul.mubr.bf16.gmra.mrb[0].mxu0 %v490
    %v3772 = vpop.f32.mrb[0].mxu0
    %v3773 = vadd.f32 %v2361, %v3772
    %v3774 = vpop.f32.mrb[0].mxu0
    %v3775 = vadd.f32 %v2363, %v3774
    %v3776 = vpop.f32.mrb[0].mxu0
    %v3777 = vadd.f32 %v2365, %v3776
    %v3778 = vpop.f32.mrb[0].mxu0
    %v3779 = vadd.f32 %v2367, %v3778
    %3780 = vmatprep.mubr.bf16.mxu0 %v493
    %3781 = vmatmul.mubr.bf16.gmra.mrb[0].mxu0 %v492
    %v3782 = vpop.f32.mrb[0].mxu0
    %v3783 = vadd.f32 %v2371, %v3782
    %v3784 = vpop.f32.mrb[0].mxu0
    %v3785 = vadd.f32 %v2373, %v3784
    %v3786 = vpop.f32.mrb[0].mxu0
    %v3787 = vadd.f32 %v2375, %v3786
    %v3788 = vpop.f32.mrb[0].mxu0
    %v3789 = vadd.f32 %v2377, %v3788
    %3790 = vmatprep.mubr.bf16.mxu0 %v495
    %3791 = vmatmul.mubr.bf16.gmra.mrb[0].mxu0 %v494
    %v3792 = vpop.f32.mrb[0].mxu0
    %v3793 = vadd.f32 %v2381, %v3792
    %v3794 = vpop.f32.mrb[0].mxu0
    %v3795 = vadd.f32 %v2383, %v3794
    %v3796 = vpop.f32.mrb[0].mxu0
    %v3797 = vadd.f32 %v2385, %v3796
    %v3798 = vpop.f32.mrb[0].mxu0
    %v3799 = vadd.f32 %v2387, %v3798
    %3800 = vmatprep.mubr.bf16.mxu0 %v497
    %3801 = vmatmul.mubr.bf16.gmra.mrb[0].mxu0 %v496
    %v3802 = vpop.f32.mrb[0].mxu0
    %v3803 = vadd.f32 %v2391, %v3802
    %v3804 = vpop.f32.mrb[0].mxu0
    %v3805 = vadd.f32 %v2393, %v3804
    %v3806 = vpop.f32.mrb[0].mxu0
    %v3807 = vadd.f32 %v2395, %v3806
    %v3808 = vpop.f32.mrb[0].mxu0
    %v3809 = vadd.f32 %v2397, %v3808
    %3810 = vmatprep.mubr.bf16.mxu0 %v499
    %3811 = vmatmul.mubr.bf16.gmra.mrb[0].mxu0 %v498
    %v3812 = vpop.f32.mrb[0].mxu0
    %v3813 = vadd.f32 %v2401, %v3812
    %v3814 = vpop.f32.mrb[0].mxu0
    %v3815 = vadd.f32 %v2403, %v3814
    %v3816 = vpop.f32.mrb[0].mxu0
    %v3817 = vadd.f32 %v2405, %v3816
    %v3818 = vpop.f32.mrb[0].mxu0
    %v3819 = vadd.f32 %v2407, %v3818
    %3820 = vmatprep.mubr.bf16.mxu0 %v501
    %3821 = vmatmul.mubr.bf16.gmra.mrb[0].mxu0 %v500
    %v3822 = vpop.f32.mrb[0].mxu0
    %v3823 = vadd.f32 %v2411, %v3822
    %v3824 = vpop.f32.mrb[0].mxu0
    %v3825 = vadd.f32 %v2413, %v3824
    %v3826 = vpop.f32.mrb[0].mxu0
    %v3827 = vadd.f32 %v2415, %v3826
    %v3828 = vpop.f32.mrb[0].mxu0
    %v3829 = vadd.f32 %v2417, %v3828
    %3830 = vmatprep.mubr.bf16.mxu0 %v503
    %3831 = vmatmul.mubr.bf16.gmra.mrb[0].mxu0 %v502
    %v3832 = vpop.f32.mrb[0].mxu0
    %v3833 = vadd.f32 %v2421, %v3832
    %v3834 = vpop.f32.mrb[0].mxu0
    %v3835 = vadd.f32 %v2423, %v3834
    %v3836 = vpop.f32.mrb[0].mxu0
    %v3837 = vadd.f32 %v2425, %v3836
    %v3838 = vpop.f32.mrb[0].mxu0
    %v3839 = vadd.f32 %v2427, %v3838
    %3840 = vdwg.mxu0
    %v3841 = vld [vmem:[#allocation6 + $0x4] sm:$0x3]
    %v3842 = vunpack.c.l.bf16 %v3841
    %v3844 = vlaneseq
    %v3845 = vshrl.u32 %v3844, 7
    %v3846 = vsub.s32 0, %v3845
    %v3847 = vrot.slane %v3842, %v3846
    %v3848 = vlaneseq
    %v3849 = vshrl.u32 %v3848, 7
    %v3850 = vsub.s32 2, %v3849
    %v3851 = vrot.slane %v3842, %v3850
    %v3854 = vlaneseq
    %v3855 = vshrl.u32 %v3854, 7
    %v3856 = vsub.s32 0, %v3855
    %v3857 = vrot.slane %v3847, %v3856
    %v3858 = vlaneseq
    %v3859 = vshrl.u32 %v3858, 7
    %v3860 = vsub.s32 0, %v3859
    %v3861 = vrot.slane %v3851, %v3860
    %v3862 = vmul.f32 %v119, %v3857
    %v3863 = vmul.f32 %v119, %v3861
    %v3864 = vmul.f32 %v123, %v3857
    %v3865 = vmul.f32 %v123, %v3861
    %v3866 = vmul.f32 %v127, %v3857
    %v3867 = vmul.f32 %v127, %v3861
    %v3868 = vmul.f32 %v131, %v3857
    %v3869 = vmul.f32 %v131, %v3861
    %v3870 = vmul.f32 %v135, %v3857
    %v3871 = vmul.f32 %v135, %v3861
    %v3872 = vmul.f32 %v139, %v3857
    %v3873 = vmul.f32 %v139, %v3861
    %v3874 = vmul.f32 %v143, %v3857
    %v3875 = vmul.f32 %v143, %v3861
    %v3876 = vmul.f32 %v147, %v3857
    %v3877 = vmul.f32 %v147, %v3861
    %v3878 = vmul.f32 %v151, %v3857
    %v3879 = vmul.f32 %v151, %v3861
    %v3880 = vmul.f32 %v155, %v3857
    %v3881 = vmul.f32 %v155, %v3861
    %v3882 = vmul.f32 %v159, %v3857
    %v3883 = vmul.f32 %v159, %v3861
    %v3884 = vmul.f32 %v163, %v3857
    %v3885 = vmul.f32 %v163, %v3861
    %v3886 = vmul.f32 %v167, %v3857
    %v3887 = vmul.f32 %v167, %v3861
    %v3888 = vmul.f32 %v171, %v3857
    %v3889 = vmul.f32 %v171, %v3861
    %v3890 = vmul.f32 %v175, %v3857
    %v3891 = vmul.f32 %v175, %v3861
    %v3892 = vmul.f32 %v179, %v3857
    %v3893 = vmul.f32 %v179, %v3861
    %v3894 = vmul.f32 %v186, %v3857
    %v3895 = vmul.f32 %v186, %v3861
    %v3896 = vmul.f32 %v190, %v3857
    %v3897 = vmul.f32 %v190, %v3861
    %v3898 = vmul.f32 %v194, %v3857
    %v3899 = vmul.f32 %v194, %v3861
    %v3900 = vmul.f32 %v198, %v3857
    %v3901 = vmul.f32 %v198, %v3861
    %v3902 = vmul.f32 %v202, %v3857
    %v3903 = vmul.f32 %v202, %v3861
    %v3904 = vmul.f32 %v206, %v3857
    %v3905 = vmul.f32 %v206, %v3861
    %v3906 = vmul.f32 %v210, %v3857
    %v3907 = vmul.f32 %v210, %v3861
    %v3908 = vmul.f32 %v214, %v3857
    %v3909 = vmul.f32 %v214, %v3861
    %v3910 = vmul.f32 %v218, %v3857
    %v3911 = vmul.f32 %v218, %v3861
    %v3912 = vmul.f32 %v222, %v3857
    %v3913 = vmul.f32 %v222, %v3861
    %v3914 = vmul.f32 %v226, %v3857
    %v3915 = vmul.f32 %v226, %v3861
    %v3916 = vmul.f32 %v230, %v3857
    %v3917 = vmul.f32 %v230, %v3861
    %v3918 = vmul.f32 %v234, %v3857
    %v3919 = vmul.f32 %v234, %v3861
    %v3920 = vmul.f32 %v238, %v3857
    %v3921 = vmul.f32 %v238, %v3861
    %v3922 = vmul.f32 %v242, %v3857
    %v3923 = vmul.f32 %v242, %v3861
    %v3924 = vmul.f32 %v246, %v3857
    %v3925 = vmul.f32 %v246, %v3861
    %v3926 = vld [vmem:[#allocation8 + $0x4] sm:$0x3]
    %v3928 = vlaneseq
    %v3929 = vshrl.u32 %v3928, 7
    %v3930 = vsub.s32 0, %v3929
    %v3931 = vrot.slane %v3926, %v3930
    %v3932 = vlaneseq
    %v3933 = vshrl.u32 %v3932, 7
    %v3934 = vsub.s32 1, %v3933
    %v3935 = vrot.slane %v3926, %v3934
    %v3938 = vadd.f32 %v3862, %v3931
    %v3939 = vadd.f32 %v3863, %v3935
    %v3940 = vadd.f32 %v3864, %v3931
    %v3941 = vadd.f32 %v3865, %v3935
    %v3942 = vadd.f32 %v3866, %v3931
    %v3943 = vadd.f32 %v3867, %v3935
    %v3944 = vadd.f32 %v3868, %v3931
    %v3945 = vadd.f32 %v3869, %v3935
    %v3946 = vadd.f32 %v3870, %v3931
    %v3947 = vadd.f32 %v3871, %v3935
    %v3948 = vadd.f32 %v3872, %v3931
    %v3949 = vadd.f32 %v3873, %v3935
    %v3950 = vadd.f32 %v3874, %v3931
    %v3951 = vadd.f32 %v3875, %v3935
    %v3952 = vadd.f32 %v3876, %v3931
    %v3953 = vadd.f32 %v3877, %v3935
    %v3954 = vadd.f32 %v3878, %v3931
    %v3955 = vadd.f32 %v3879, %v3935
    %v3956 = vadd.f32 %v3880, %v3931
    %v3957 = vadd.f32 %v3881, %v3935
    %v3958 = vadd.f32 %v3882, %v3931
    %v3959 = vadd.f32 %v3883, %v3935
    %v3960 = vadd.f32 %v3884, %v3931
    %v3961 = vadd.f32 %v3885, %v3935
    %v3962 = vadd.f32 %v3886, %v3931
    %v3963 = vadd.f32 %v3887, %v3935
    %v3964 = vadd.f32 %v3888, %v3931
    %v3965 = vadd.f32 %v3889, %v3935
    %v3966 = vadd.f32 %v3890, %v3931
    %v3967 = vadd.f32 %v3891, %v3935
    %v3968 = vadd.f32 %v3892, %v3931
    %v3969 = vadd.f32 %v3893, %v3935
    %v3970 = vadd.f32 %v3894, %v3931
    %v3971 = vadd.f32 %v3895, %v3935
    %v3972 = vadd.f32 %v3896, %v3931
    %v3973 = vadd.f32 %v3897, %v3935
    %v3974 = vadd.f32 %v3898, %v3931
    %v3975 = vadd.f32 %v3899, %v3935
    %v3976 = vadd.f32 %v3900, %v3931
    %v3977 = vadd.f32 %v3901, %v3935
    %v3978 = vadd.f32 %v3902, %v3931
    %v3979 = vadd.f32 %v3903, %v3935
    %v3980 = vadd.f32 %v3904, %v3931
    %v3981 = vadd.f32 %v3905, %v3935
    %v3982 = vadd.f32 %v3906, %v3931
    %v3983 = vadd.f32 %v3907, %v3935
    %v3984 = vadd.f32 %v3908, %v3931
    %v3985 = vadd.f32 %v3909, %v3935
    %v3986 = vadd.f32 %v3910, %v3931
    %v3987 = vadd.f32 %v3911, %v3935
    %v3988 = vadd.f32 %v3912, %v3931
    %v3989 = vadd.f32 %v3913, %v3935
    %v3990 = vadd.f32 %v3914, %v3931
    %v3991 = vadd.f32 %v3915, %v3935
    %v3992 = vadd.f32 %v3916, %v3931
    %v3993 = vadd.f32 %v3917, %v3935
    %v3994 = vadd.f32 %v3918, %v3931
    %v3995 = vadd.f32 %v3919, %v3935
    %v3996 = vadd.f32 %v3920, %v3931
    %v3997 = vadd.f32 %v3921, %v3935
    %v3998 = vadd.f32 %v3922, %v3931
    %v3999 = vadd.f32 %v3923, %v3935
    %v4000 = vadd.f32 %v3924, %v3931
    %v4001 = vadd.f32 %v3925, %v3935
    %v4002 = vmax.f32 %v3938, 0.0
    %v4003 = vmax.f32 %v3939, 0.0
    %v4004 = vmax.f32 %v3940, 0.0
    %v4005 = vmax.f32 %v3941, 0.0
    %v4006 = vmax.f32 %v3942, 0.0
    %v4007 = vmax.f32 %v3943, 0.0
    %v4008 = vmax.f32 %v3944, 0.0
    %v4009 = vmax.f32 %v3945, 0.0
    %v4010 = vmax.f32 %v3946, 0.0
    %v4011 = vmax.f32 %v3947, 0.0
    %v4012 = vmax.f32 %v3948, 0.0
    %v4013 = vmax.f32 %v3949, 0.0
    %v4014 = vmax.f32 %v3950, 0.0
    %v4015 = vmax.f32 %v3951, 0.0
    %v4016 = vmax.f32 %v3952, 0.0
    %v4017 = vmax.f32 %v3953, 0.0
    %v4018 = vmax.f32 %v3954, 0.0
    %v4019 = vmax.f32 %v3955, 0.0
    %v4020 = vmax.f32 %v3956, 0.0
    %v4021 = vmax.f32 %v3957, 0.0
    %v4022 = vmax.f32 %v3958, 0.0
    %v4023 = vmax.f32 %v3959, 0.0
    %v4024 = vmax.f32 %v3960, 0.0
    %v4025 = vmax.f32 %v3961, 0.0
    %v4026 = vmax.f32 %v3962, 0.0
    %v4027 = vmax.f32 %v3963, 0.0
    %v4028 = vmax.f32 %v3964, 0.0
    %v4029 = vmax.f32 %v3965, 0.0
    %v4030 = vmax.f32 %v3966, 0.0
    %v4031 = vmax.f32 %v3967, 0.0
    %v4032 = vmax.f32 %v3968, 0.0
    %v4033 = vmax.f32 %v3969, 0.0
    %v4034 = vmax.f32 %v3970, 0.0
    %v4035 = vmax.f32 %v3971, 0.0
    %v4036 = vmax.f32 %v3972, 0.0
    %v4037 = vmax.f32 %v3973, 0.0
    %v4038 = vmax.f32 %v3974, 0.0
    %v4039 = vmax.f32 %v3975, 0.0
    %v4040 = vmax.f32 %v3976, 0.0
    %v4041 = vmax.f32 %v3977, 0.0
    %v4042 = vmax.f32 %v3978, 0.0
    %v4043 = vmax.f32 %v3979, 0.0
    %v4044 = vmax.f32 %v3980, 0.0
    %v4045 = vmax.f32 %v3981, 0.0
    %v4046 = vmax.f32 %v3982, 0.0
    %v4047 = vmax.f32 %v3983, 0.0
    %v4048 = vmax.f32 %v3984, 0.0
    %v4049 = vmax.f32 %v3985, 0.0
    %v4050 = vmax.f32 %v3986, 0.0
    %v4051 = vmax.f32 %v3987, 0.0
    %v4052 = vmax.f32 %v3988, 0.0
    %v4053 = vmax.f32 %v3989, 0.0
    %v4054 = vmax.f32 %v3990, 0.0
    %v4055 = vmax.f32 %v3991, 0.0
    %v4056 = vmax.f32 %v3992, 0.0
    %v4057 = vmax.f32 %v3993, 0.0
    %v4058 = vmax.f32 %v3994, 0.0
    %v4059 = vmax.f32 %v3995, 0.0
    %v4060 = vmax.f32 %v3996, 0.0
    %v4061 = vmax.f32 %v3997, 0.0
    %v4062 = vmax.f32 %v3998, 0.0
    %v4063 = vmax.f32 %v3999, 0.0
    %v4064 = vmax.f32 %v4000, 0.0
    %v4065 = vmax.f32 %v4001, 0.0
    %v4066 = vpack.c.bf16 %v4004, %v4002
    %v4067 = vpack.c.bf16 %v4005, %v4003
    %v4068 = vpack.c.bf16 %v4008, %v4006
    %v4069 = vpack.c.bf16 %v4009, %v4007
    %v4070 = vpack.c.bf16 %v4012, %v4010
    %v4071 = vpack.c.bf16 %v4013, %v4011
    %v4072 = vpack.c.bf16 %v4016, %v4014
    %v4073 = vpack.c.bf16 %v4017, %v4015
    %v4074 = vpack.c.bf16 %v4020, %v4018
    %v4075 = vpack.c.bf16 %v4021, %v4019
    %v4076 = vpack.c.bf16 %v4024, %v4022
    %v4077 = vpack.c.bf16 %v4025, %v4023
    %v4078 = vpack.c.bf16 %v4028, %v4026
    %v4079 = vpack.c.bf16 %v4029, %v4027
    %v4080 = vpack.c.bf16 %v4032, %v4030
    %v4081 = vpack.c.bf16 %v4033, %v4031
    %v4082 = vpack.c.bf16 %v4036, %v4034
    %v4083 = vpack.c.bf16 %v4037, %v4035
    %v4084 = vpack.c.bf16 %v4040, %v4038
    %v4085 = vpack.c.bf16 %v4041, %v4039
    %v4086 = vpack.c.bf16 %v4044, %v4042
    %v4087 = vpack.c.bf16 %v4045, %v4043
    %v4088 = vpack.c.bf16 %v4048, %v4046
    %v4089 = vpack.c.bf16 %v4049, %v4047
    %v4090 = vpack.c.bf16 %v4052, %v4050
    %v4091 = vpack.c.bf16 %v4053, %v4051
    %v4092 = vpack.c.bf16 %v4056, %v4054
    %v4093 = vpack.c.bf16 %v4057, %v4055
    %v4094 = vpack.c.bf16 %v4060, %v4058
    %v4095 = vpack.c.bf16 %v4061, %v4059
    %v4096 = vpack.c.bf16 %v4064, %v4062
    %v4097 = vpack.c.bf16 %v4065, %v4063
    %v4098 = vld [vmem:[#allocation9 + $0x800] sm:$0xff]
    %v4099 = vld [vmem:[#allocation9 + $0x808] sm:$0xff]
    %v4100 = vld [vmem:[#allocation9 + $0x810] sm:$0xff]
    %v4101 = vld [vmem:[#allocation9 + $0x818] sm:$0xff]
    %v4102 = vld [vmem:[#allocation9 + $0x820] sm:$0xff]
    %v4103 = vld [vmem:[#allocation9 + $0x828] sm:$0xff]
    %v4104 = vld [vmem:[#allocation9 + $0x830] sm:$0xff]
    %v4105 = vld [vmem:[#allocation9 + $0x838] sm:$0xff]
    %v4106 = vld [vmem:[#allocation9 + $0x840] sm:$0xff]
    %v4107 = vld [vmem:[#allocation9 + $0x848] sm:$0xff]
    %v4108 = vld [vmem:[#allocation9 + $0x850] sm:$0xff]
    %v4109 = vld [vmem:[#allocation9 + $0x858] sm:$0xff]
    %v4110 = vld [vmem:[#allocation9 + $0x860] sm:$0xff]
    %v4111 = vld [vmem:[#allocation9 + $0x868] sm:$0xff]
    %v4112 = vld [vmem:[#allocation9 + $0x870] sm:$0xff]
    %v4113 = vld [vmem:[#allocation9 + $0x878] sm:$0xff]
    %v4114 = vld [vmem:[#allocation9 + $0x880] sm:$0xff]
    %v4115 = vld [vmem:[#allocation9 + $0x888] sm:$0xff]
    %v4116 = vld [vmem:[#allocation9 + $0x890] sm:$0xff]
    %v4117 = vld [vmem:[#allocation9 + $0x898] sm:$0xff]
    %v4118 = vld [vmem:[#allocation9 + $0x8a0] sm:$0xff]
    %v4119 = vld [vmem:[#allocation9 + $0x8a8] sm:$0xff]
    %v4120 = vld [vmem:[#allocation9 + $0x8b0] sm:$0xff]
    %v4121 = vld [vmem:[#allocation9 + $0x8b8] sm:$0xff]
    %v4122 = vld [vmem:[#allocation9 + $0x8c0] sm:$0xff]
    %v4123 = vld [vmem:[#allocation9 + $0x8c8] sm:$0xff]
    %v4124 = vld [vmem:[#allocation9 + $0x8d0] sm:$0xff]
    %v4125 = vld [vmem:[#allocation9 + $0x8d8] sm:$0xff]
    %v4126 = vld [vmem:[#allocation9 + $0x8e0] sm:$0xff]
    %v4127 = vld [vmem:[#allocation9 + $0x8e8] sm:$0xff]
    %v4128 = vld [vmem:[#allocation9 + $0x8f0] sm:$0xff]
    %v4129 = vld [vmem:[#allocation9 + $0x8f8] sm:$0xff]
    %v4130 = vld [vmem:[#allocation9 + $0x900] sm:$0xff]
    %v4131 = vld [vmem:[#allocation9 + $0x908] sm:$0xff]
    %v4132 = vld [vmem:[#allocation9 + $0x910] sm:$0xff]
    %v4133 = vld [vmem:[#allocation9 + $0x918] sm:$0xff]
    %v4134 = vld [vmem:[#allocation9 + $0x920] sm:$0xff]
    %v4135 = vld [vmem:[#allocation9 + $0x928] sm:$0xff]
    %v4136 = vld [vmem:[#allocation9 + $0x930] sm:$0xff]
    %v4137 = vld [vmem:[#allocation9 + $0x938] sm:$0xff]
    %v4138 = vld [vmem:[#allocation9 + $0x940] sm:$0xff]
    %v4139 = vld [vmem:[#allocation9 + $0x948] sm:$0xff]
    %v4140 = vld [vmem:[#allocation9 + $0x950] sm:$0xff]
    %v4141 = vld [vmem:[#allocation9 + $0x958] sm:$0xff]
    %v4142 = vld [vmem:[#allocation9 + $0x960] sm:$0xff]
    %v4143 = vld [vmem:[#allocation9 + $0x968] sm:$0xff]
    %v4144 = vld [vmem:[#allocation9 + $0x970] sm:$0xff]
    %v4145 = vld [vmem:[#allocation9 + $0x978] sm:$0xff]
    %v4146 = vld [vmem:[#allocation9 + $0x980] sm:$0xff]
    %v4147 = vld [vmem:[#allocation9 + $0x988] sm:$0xff]
    %v4148 = vld [vmem:[#allocation9 + $0x990] sm:$0xff]
    %v4149 = vld [vmem:[#allocation9 + $0x998] sm:$0xff]
    %v4150 = vld [vmem:[#allocation9 + $0x9a0] sm:$0xff]
    %v4151 = vld [vmem:[#allocation9 + $0x9a8] sm:$0xff]
    %v4152 = vld [vmem:[#allocation9 + $0x9b0] sm:$0xff]
    %v4153 = vld [vmem:[#allocation9 + $0x9b8] sm:$0xff]
    %v4154 = vld [vmem:[#allocation9 + $0x9c0] sm:$0xff]
    %v4155 = vld [vmem:[#allocation9 + $0x9c8] sm:$0xff]
    %v4156 = vld [vmem:[#allocation9 + $0x9d0] sm:$0xff]
    %v4157 = vld [vmem:[#allocation9 + $0x9d8] sm:$0xff]
    %v4158 = vld [vmem:[#allocation9 + $0x9e0] sm:$0xff]
    %v4159 = vld [vmem:[#allocation9 + $0x9e8] sm:$0xff]
    %v4160 = vld [vmem:[#allocation9 + $0x9f0] sm:$0xff]
    %v4161 = vld [vmem:[#allocation9 + $0x9f8] sm:$0xff]
    %v4162 = vld [vmem:[#allocation9 + $0xa00] sm:$0xff]
    %v4163 = vld [vmem:[#allocation9 + $0xa08] sm:$0xff]
    %v4164 = vld [vmem:[#allocation9 + $0xa10] sm:$0xff]
    %v4165 = vld [vmem:[#allocation9 + $0xa18] sm:$0xff]
    %v4166 = vld [vmem:[#allocation9 + $0xa20] sm:$0xff]
    %v4167 = vld [vmem:[#allocation9 + $0xa28] sm:$0xff]
    %v4168 = vld [vmem:[#allocation9 + $0xa30] sm:$0xff]
    %v4169 = vld [vmem:[#allocation9 + $0xa38] sm:$0xff]
    %v4170 = vld [vmem:[#allocation9 + $0xa40] sm:$0xff]
    %v4171 = vld [vmem:[#allocation9 + $0xa48] sm:$0xff]
    %v4172 = vld [vmem:[#allocation9 + $0xa50] sm:$0xff]
    %v4173 = vld [vmem:[#allocation9 + $0xa58] sm:$0xff]
    %v4174 = vld [vmem:[#allocation9 + $0xa60] sm:$0xff]
    %v4175 = vld [vmem:[#allocation9 + $0xa68] sm:$0xff]
    %v4176 = vld [vmem:[#allocation9 + $0xa70] sm:$0xff]
    %v4177 = vld [vmem:[#allocation9 + $0xa78] sm:$0xff]
    %v4178 = vld [vmem:[#allocation9 + $0xa80] sm:$0xff]
    %v4179 = vld [vmem:[#allocation9 + $0xa88] sm:$0xff]
    %v4180 = vld [vmem:[#allocation9 + $0xa90] sm:$0xff]
    %v4181 = vld [vmem:[#allocation9 + $0xa98] sm:$0xff]
    %v4182 = vld [vmem:[#allocation9 + $0xaa0] sm:$0xff]
    %v4183 = vld [vmem:[#allocation9 + $0xaa8] sm:$0xff]
    %v4184 = vld [vmem:[#allocation9 + $0xab0] sm:$0xff]
    %v4185 = vld [vmem:[#allocation9 + $0xab8] sm:$0xff]
    %v4186 = vld [vmem:[#allocation9 + $0xac0] sm:$0xff]
    %v4187 = vld [vmem:[#allocation9 + $0xac8] sm:$0xff]
    %v4188 = vld [vmem:[#allocation9 + $0xad0] sm:$0xff]
    %v4189 = vld [vmem:[#allocation9 + $0xad8] sm:$0xff]
    %v4190 = vld [vmem:[#allocation9 + $0xae0] sm:$0xff]
    %v4191 = vld [vmem:[#allocation9 + $0xae8] sm:$0xff]
    %v4192 = vld [vmem:[#allocation9 + $0xaf0] sm:$0xff]
    %v4193 = vld [vmem:[#allocation9 + $0xaf8] sm:$0xff]
    %v4194 = vld [vmem:[#allocation9 + $0xb00] sm:$0xff]
    %v4195 = vld [vmem:[#allocation9 + $0xb08] sm:$0xff]
    %v4196 = vld [vmem:[#allocation9 + $0xb10] sm:$0xff]
    %v4197 = vld [vmem:[#allocation9 + $0xb18] sm:$0xff]
    %v4198 = vld [vmem:[#allocation9 + $0xb20] sm:$0xff]
    %v4199 = vld [vmem:[#allocation9 + $0xb28] sm:$0xff]
    %v4200 = vld [vmem:[#allocation9 + $0xb30] sm:$0xff]
    %v4201 = vld [vmem:[#allocation9 + $0xb38] sm:$0xff]
    %v4202 = vld [vmem:[#allocation9 + $0xb40] sm:$0xff]
    %v4203 = vld [vmem:[#allocation9 + $0xb48] sm:$0xff]
    %v4204 = vld [vmem:[#allocation9 + $0xb50] sm:$0xff]
    %v4205 = vld [vmem:[#allocation9 + $0xb58] sm:$0xff]
    %v4206 = vld [vmem:[#allocation9 + $0xb60] sm:$0xff]
    %v4207 = vld [vmem:[#allocation9 + $0xb68] sm:$0xff]
    %v4208 = vld [vmem:[#allocation9 + $0xb70] sm:$0xff]
    %v4209 = vld [vmem:[#allocation9 + $0xb78] sm:$0xff]
    %v4210 = vld [vmem:[#allocation9 + $0xb80] sm:$0xff]
    %v4211 = vld [vmem:[#allocation9 + $0xb88] sm:$0xff]
    %v4212 = vld [vmem:[#allocation9 + $0xb90] sm:$0xff]
    %v4213 = vld [vmem:[#allocation9 + $0xb98] sm:$0xff]
    %v4214 = vld [vmem:[#allocation9 + $0xba0] sm:$0xff]
    %v4215 = vld [vmem:[#allocation9 + $0xba8] sm:$0xff]
    %v4216 = vld [vmem:[#allocation9 + $0xbb0] sm:$0xff]
    %v4217 = vld [vmem:[#allocation9 + $0xbb8] sm:$0xff]
    %v4218 = vld [vmem:[#allocation9 + $0xbc0] sm:$0xff]
    %v4219 = vld [vmem:[#allocation9 + $0xbc8] sm:$0xff]
    %v4220 = vld [vmem:[#allocation9 + $0xbd0] sm:$0xff]
    %v4221 = vld [vmem:[#allocation9 + $0xbd8] sm:$0xff]
    %v4222 = vld [vmem:[#allocation9 + $0xbe0] sm:$0xff]
    %v4223 = vld [vmem:[#allocation9 + $0xbe8] sm:$0xff]
    %v4224 = vld [vmem:[#allocation9 + $0xbf0] sm:$0xff]
    %v4225 = vld [vmem:[#allocation9 + $0xbf8] sm:$0xff]
    %v4354 = vunpack.c.l.b16 %v4098
    %v4355 = vunpack.c.h.b16 %v4098
    %v4356 = vunpack.c.l.b16 %v4099
    %v4357 = vunpack.c.h.b16 %v4099
    %v4358 = vunpack.c.l.b16 %v4100
    %v4359 = vunpack.c.h.b16 %v4100
    %v4360 = vunpack.c.l.b16 %v4101
    %v4361 = vunpack.c.h.b16 %v4101
    %v4362 = vunpack.c.l.b16 %v4102
    %v4363 = vunpack.c.h.b16 %v4102
    %v4364 = vunpack.c.l.b16 %v4103
    %v4365 = vunpack.c.h.b16 %v4103
    %v4366 = vunpack.c.l.b16 %v4104
    %v4367 = vunpack.c.h.b16 %v4104
    %v4368 = vunpack.c.l.b16 %v4105
    %v4369 = vunpack.c.h.b16 %v4105
    %v4370 = vunpack.c.l.b16 %v4106
    %v4371 = vunpack.c.h.b16 %v4106
    %v4372 = vunpack.c.l.b16 %v4107
    %v4373 = vunpack.c.h.b16 %v4107
    %v4374 = vunpack.c.l.b16 %v4108
    %v4375 = vunpack.c.h.b16 %v4108
    %v4376 = vunpack.c.l.b16 %v4109
    %v4377 = vunpack.c.h.b16 %v4109
    %v4378 = vunpack.c.l.b16 %v4110
    %v4379 = vunpack.c.h.b16 %v4110
    %v4380 = vunpack.c.l.b16 %v4111
    %v4381 = vunpack.c.h.b16 %v4111
    %v4382 = vunpack.c.l.b16 %v4112
    %v4383 = vunpack.c.h.b16 %v4112
    %v4384 = vunpack.c.l.b16 %v4113
    %v4385 = vunpack.c.h.b16 %v4113
    %v4386 = vunpack.c.l.b16 %v4114
    %v4387 = vunpack.c.h.b16 %v4114
    %v4388 = vunpack.c.l.b16 %v4115
    %v4389 = vunpack.c.h.b16 %v4115
    %v4390 = vunpack.c.l.b16 %v4116
    %v4391 = vunpack.c.h.b16 %v4116
    %v4392 = vunpack.c.l.b16 %v4117
    %v4393 = vunpack.c.h.b16 %v4117
    %v4394 = vunpack.c.l.b16 %v4118
    %v4395 = vunpack.c.h.b16 %v4118
    %v4396 = vunpack.c.l.b16 %v4119
    %v4397 = vunpack.c.h.b16 %v4119
    %v4398 = vunpack.c.l.b16 %v4120
    %v4399 = vunpack.c.h.b16 %v4120
    %v4400 = vunpack.c.l.b16 %v4121
    %v4401 = vunpack.c.h.b16 %v4121
    %v4402 = vunpack.c.l.b16 %v4122
    %v4403 = vunpack.c.h.b16 %v4122
    %v4404 = vunpack.c.l.b16 %v4123
    %v4405 = vunpack.c.h.b16 %v4123
    %v4406 = vunpack.c.l.b16 %v4124
    %v4407 = vunpack.c.h.b16 %v4124
    %v4408 = vunpack.c.l.b16 %v4125
    %v4409 = vunpack.c.h.b16 %v4125
    %v4410 = vunpack.c.l.b16 %v4126
    %v4411 = vunpack.c.h.b16 %v4126
    %v4412 = vunpack.c.l.b16 %v4127
    %v4413 = vunpack.c.h.b16 %v4127
    %v4414 = vunpack.c.l.b16 %v4128
    %v4415 = vunpack.c.h.b16 %v4128
    %v4416 = vunpack.c.l.b16 %v4129
    %v4417 = vunpack.c.h.b16 %v4129
    %v4418 = vunpack.c.l.b16 %v4130
    %v4419 = vunpack.c.h.b16 %v4130
    %v4420 = vunpack.c.l.b16 %v4131
    %v4421 = vunpack.c.h.b16 %v4131
    %v4422 = vunpack.c.l.b16 %v4132
    %v4423 = vunpack.c.h.b16 %v4132
    %v4424 = vunpack.c.l.b16 %v4133
    %v4425 = vunpack.c.h.b16 %v4133
    %v4426 = vunpack.c.l.b16 %v4134
    %v4427 = vunpack.c.h.b16 %v4134
    %v4428 = vunpack.c.l.b16 %v4135
    %v4429 = vunpack.c.h.b16 %v4135
    %v4430 = vunpack.c.l.b16 %v4136
    %v4431 = vunpack.c.h.b16 %v4136
    %v4432 = vunpack.c.l.b16 %v4137
    %v4433 = vunpack.c.h.b16 %v4137
    %v4434 = vunpack.c.l.b16 %v4138
    %v4435 = vunpack.c.h.b16 %v4138
    %v4436 = vunpack.c.l.b16 %v4139
    %v4437 = vunpack.c.h.b16 %v4139
    %v4438 = vunpack.c.l.b16 %v4140
    %v4439 = vunpack.c.h.b16 %v4140
    %v4440 = vunpack.c.l.b16 %v4141
    %v4441 = vunpack.c.h.b16 %v4141
    %v4442 = vunpack.c.l.b16 %v4142
    %v4443 = vunpack.c.h.b16 %v4142
    %v4444 = vunpack.c.l.b16 %v4143
    %v4445 = vunpack.c.h.b16 %v4143
    %v4446 = vunpack.c.l.b16 %v4144
    %v4447 = vunpack.c.h.b16 %v4144
    %v4448 = vunpack.c.l.b16 %v4145
    %v4449 = vunpack.c.h.b16 %v4145
    %v4450 = vunpack.c.l.b16 %v4146
    %v4451 = vunpack.c.h.b16 %v4146
    %v4452 = vunpack.c.l.b16 %v4147
    %v4453 = vunpack.c.h.b16 %v4147
    %v4454 = vunpack.c.l.b16 %v4148
    %v4455 = vunpack.c.h.b16 %v4148
    %v4456 = vunpack.c.l.b16 %v4149
    %v4457 = vunpack.c.h.b16 %v4149
    %v4458 = vunpack.c.l.b16 %v4150
    %v4459 = vunpack.c.h.b16 %v4150
    %v4460 = vunpack.c.l.b16 %v4151
    %v4461 = vunpack.c.h.b16 %v4151
    %v4462 = vunpack.c.l.b16 %v4152
    %v4463 = vunpack.c.h.b16 %v4152
    %v4464 = vunpack.c.l.b16 %v4153
    %v4465 = vunpack.c.h.b16 %v4153
    %v4466 = vunpack.c.l.b16 %v4154
    %v4467 = vunpack.c.h.b16 %v4154
    %v4468 = vunpack.c.l.b16 %v4155
    %v4469 = vunpack.c.h.b16 %v4155
    %v4470 = vunpack.c.l.b16 %v4156
    %v4471 = vunpack.c.h.b16 %v4156
    %v4472 = vunpack.c.l.b16 %v4157
    %v4473 = vunpack.c.h.b16 %v4157
    %v4474 = vunpack.c.l.b16 %v4158
    %v4475 = vunpack.c.h.b16 %v4158
    %v4476 = vunpack.c.l.b16 %v4159
    %v4477 = vunpack.c.h.b16 %v4159
    %v4478 = vunpack.c.l.b16 %v4160
    %v4479 = vunpack.c.h.b16 %v4160
    %v4480 = vunpack.c.l.b16 %v4161
    %v4481 = vunpack.c.h.b16 %v4161
    %v4482 = vunpack.c.l.b16 %v4162
    %v4483 = vunpack.c.h.b16 %v4162
    %v4484 = vunpack.c.l.b16 %v4163
    %v4485 = vunpack.c.h.b16 %v4163
    %v4486 = vunpack.c.l.b16 %v4164
    %v4487 = vunpack.c.h.b16 %v4164
    %v4488 = vunpack.c.l.b16 %v4165
    %v4489 = vunpack.c.h.b16 %v4165
    %v4490 = vunpack.c.l.b16 %v4166
    %v4491 = vunpack.c.h.b16 %v4166
    %v4492 = vunpack.c.l.b16 %v4167
    %v4493 = vunpack.c.h.b16 %v4167
    %v4494 = vunpack.c.l.b16 %v4168
    %v4495 = vunpack.c.h.b16 %v4168
    %v4496 = vunpack.c.l.b16 %v4169
    %v4497 = vunpack.c.h.b16 %v4169
    %v4498 = vunpack.c.l.b16 %v4170
    %v4499 = vunpack.c.h.b16 %v4170
    %v4500 = vunpack.c.l.b16 %v4171
    %v4501 = vunpack.c.h.b16 %v4171
    %v4502 = vunpack.c.l.b16 %v4172
    %v4503 = vunpack.c.h.b16 %v4172
    %v4504 = vunpack.c.l.b16 %v4173
    %v4505 = vunpack.c.h.b16 %v4173
    %v4506 = vunpack.c.l.b16 %v4174
    %v4507 = vunpack.c.h.b16 %v4174
    %v4508 = vunpack.c.l.b16 %v4175
    %v4509 = vunpack.c.h.b16 %v4175
    %v4510 = vunpack.c.l.b16 %v4176
    %v4511 = vunpack.c.h.b16 %v4176
    %v4512 = vunpack.c.l.b16 %v4177
    %v4513 = vunpack.c.h.b16 %v4177
    %v4514 = vunpack.c.l.b16 %v4178
    %v4515 = vunpack.c.h.b16 %v4178
    %v4516 = vunpack.c.l.b16 %v4179
    %v4517 = vunpack.c.h.b16 %v4179
    %v4518 = vunpack.c.l.b16 %v4180
    %v4519 = vunpack.c.h.b16 %v4180
    %v4520 = vunpack.c.l.b16 %v4181
    %v4521 = vunpack.c.h.b16 %v4181
    %v4522 = vunpack.c.l.b16 %v4182
    %v4523 = vunpack.c.h.b16 %v4182
    %v4524 = vunpack.c.l.b16 %v4183
    %v4525 = vunpack.c.h.b16 %v4183
    %v4526 = vunpack.c.l.b16 %v4184
    %v4527 = vunpack.c.h.b16 %v4184
    %v4528 = vunpack.c.l.b16 %v4185
    %v4529 = vunpack.c.h.b16 %v4185
    %v4530 = vunpack.c.l.b16 %v4186
    %v4531 = vunpack.c.h.b16 %v4186
    %v4532 = vunpack.c.l.b16 %v4187
    %v4533 = vunpack.c.h.b16 %v4187
    %v4534 = vunpack.c.l.b16 %v4188
    %v4535 = vunpack.c.h.b16 %v4188
    %v4536 = vunpack.c.l.b16 %v4189
    %v4537 = vunpack.c.h.b16 %v4189
    %v4538 = vunpack.c.l.b16 %v4190
    %v4539 = vunpack.c.h.b16 %v4190
    %v4540 = vunpack.c.l.b16 %v4191
    %v4541 = vunpack.c.h.b16 %v4191
    %v4542 = vunpack.c.l.b16 %v4192
    %v4543 = vunpack.c.h.b16 %v4192
    %v4544 = vunpack.c.l.b16 %v4193
    %v4545 = vunpack.c.h.b16 %v4193
    %v4546 = vunpack.c.l.b16 %v4194
    %v4547 = vunpack.c.h.b16 %v4194
    %v4548 = vunpack.c.l.b16 %v4195
    %v4549 = vunpack.c.h.b16 %v4195
    %v4550 = vunpack.c.l.b16 %v4196
    %v4551 = vunpack.c.h.b16 %v4196
    %v4552 = vunpack.c.l.b16 %v4197
    %v4553 = vunpack.c.h.b16 %v4197
    %v4554 = vunpack.c.l.b16 %v4198
    %v4555 = vunpack.c.h.b16 %v4198
    %v4556 = vunpack.c.l.b16 %v4199
    %v4557 = vunpack.c.h.b16 %v4199
    %v4558 = vunpack.c.l.b16 %v4200
    %v4559 = vunpack.c.h.b16 %v4200
    %v4560 = vunpack.c.l.b16 %v4201
    %v4561 = vunpack.c.h.b16 %v4201
    %v4562 = vunpack.c.l.b16 %v4202
    %v4563 = vunpack.c.h.b16 %v4202
    %v4564 = vunpack.c.l.b16 %v4203
    %v4565 = vunpack.c.h.b16 %v4203
    %v4566 = vunpack.c.l.b16 %v4204
    %v4567 = vunpack.c.h.b16 %v4204
    %v4568 = vunpack.c.l.b16 %v4205
    %v4569 = vunpack.c.h.b16 %v4205
    %v4570 = vunpack.c.l.b16 %v4206
    %v4571 = vunpack.c.h.b16 %v4206
    %v4572 = vunpack.c.l.b16 %v4207
    %v4573 = vunpack.c.h.b16 %v4207
    %v4574 = vunpack.c.l.b16 %v4208
    %v4575 = vunpack.c.h.b16 %v4208
    %v4576 = vunpack.c.l.b16 %v4209
    %v4577 = vunpack.c.h.b16 %v4209
    %v4578 = vunpack.c.l.b16 %v4210
    %v4579 = vunpack.c.h.b16 %v4210
    %v4580 = vunpack.c.l.b16 %v4211
    %v4581 = vunpack.c.h.b16 %v4211
    %v4582 = vunpack.c.l.b16 %v4212
    %v4583 = vunpack.c.h.b16 %v4212
    %v4584 = vunpack.c.l.b16 %v4213
    %v4585 = vunpack.c.h.b16 %v4213
    %v4586 = vunpack.c.l.b16 %v4214
    %v4587 = vunpack.c.h.b16 %v4214
    %v4588 = vunpack.c.l.b16 %v4215
    %v4589 = vunpack.c.h.b16 %v4215
    %v4590 = vunpack.c.l.b16 %v4216
    %v4591 = vunpack.c.h.b16 %v4216
    %v4592 = vunpack.c.l.b16 %v4217
    %v4593 = vunpack.c.h.b16 %v4217
    %v4594 = vunpack.c.l.b16 %v4218
    %v4595 = vunpack.c.h.b16 %v4218
    %v4596 = vunpack.c.l.b16 %v4219
    %v4597 = vunpack.c.h.b16 %v4219
    %v4598 = vunpack.c.l.b16 %v4220
    %v4599 = vunpack.c.h.b16 %v4220
    %v4600 = vunpack.c.l.b16 %v4221
    %v4601 = vunpack.c.h.b16 %v4221
    %v4602 = vunpack.c.l.b16 %v4222
    %v4603 = vunpack.c.h.b16 %v4222
    %v4604 = vunpack.c.l.b16 %v4223
    %v4605 = vunpack.c.h.b16 %v4223
    %v4606 = vunpack.c.l.b16 %v4224
    %v4607 = vunpack.c.h.b16 %v4224
    %v4608 = vunpack.c.l.b16 %v4225
    %v4609 = vunpack.c.h.b16 %v4225
    %v4610 = vpack.c.b16 %v4362, %v4354
    %v4611 = vpack.c.b16 %v4363, %v4355
    %v4612 = vpack.c.b16 %v4364, %v4356
    %v4613 = vpack.c.b16 %v4365, %v4357
    %v4614 = vpack.c.b16 %v4366, %v4358
    %v4615 = vpack.c.b16 %v4367, %v4359
    %v4616 = vpack.c.b16 %v4368, %v4360
    %v4617 = vpack.c.b16 %v4369, %v4361
    %v4618 = vpack.c.b16 %v4378, %v4370
    %v4619 = vpack.c.b16 %v4379, %v4371
    %v4620 = vpack.c.b16 %v4380, %v4372
    %v4621 = vpack.c.b16 %v4381, %v4373
    %v4622 = vpack.c.b16 %v4382, %v4374
    %v4623 = vpack.c.b16 %v4383, %v4375
    %v4624 = vpack.c.b16 %v4384, %v4376
    %v4625 = vpack.c.b16 %v4385, %v4377
    %v4626 = vpack.c.b16 %v4394, %v4386
    %v4627 = vpack.c.b16 %v4395, %v4387
    %v4628 = vpack.c.b16 %v4396, %v4388
    %v4629 = vpack.c.b16 %v4397, %v4389
    %v4630 = vpack.c.b16 %v4398, %v4390
    %v4631 = vpack.c.b16 %v4399, %v4391
    %v4632 = vpack.c.b16 %v4400, %v4392
    %v4633 = vpack.c.b16 %v4401, %v4393
    %v4634 = vpack.c.b16 %v4410, %v4402
    %v4635 = vpack.c.b16 %v4411, %v4403
    %v4636 = vpack.c.b16 %v4412, %v4404
    %v4637 = vpack.c.b16 %v4413, %v4405
    %v4638 = vpack.c.b16 %v4414, %v4406
    %v4639 = vpack.c.b16 %v4415, %v4407
    %v4640 = vpack.c.b16 %v4416, %v4408
    %v4641 = vpack.c.b16 %v4417, %v4409
    %v4642 = vpack.c.b16 %v4426, %v4418
    %v4643 = vpack.c.b16 %v4427, %v4419
    %v4644 = vpack.c.b16 %v4428, %v4420
    %v4645 = vpack.c.b16 %v4429, %v4421
    %v4646 = vpack.c.b16 %v4430, %v4422
    %v4647 = vpack.c.b16 %v4431, %v4423
    %v4648 = vpack.c.b16 %v4432, %v4424
    %v4649 = vpack.c.b16 %v4433, %v4425
    %v4650 = vpack.c.b16 %v4442, %v4434
    %v4651 = vpack.c.b16 %v4443, %v4435
    %v4652 = vpack.c.b16 %v4444, %v4436
    %v4653 = vpack.c.b16 %v4445, %v4437
    %v4654 = vpack.c.b16 %v4446, %v4438
    %v4655 = vpack.c.b16 %v4447, %v4439
    %v4656 = vpack.c.b16 %v4448, %v4440
    %v4657 = vpack.c.b16 %v4449, %v4441
    %v4658 = vpack.c.b16 %v4458, %v4450
    %v4659 = vpack.c.b16 %v4459, %v4451
    %v4660 = vpack.c.b16 %v4460, %v4452
    %v4661 = vpack.c.b16 %v4461, %v4453
    %v4662 = vpack.c.b16 %v4462, %v4454
    %v4663 = vpack.c.b16 %v4463, %v4455
    %v4664 = vpack.c.b16 %v4464, %v4456
    %v4665 = vpack.c.b16 %v4465, %v4457
    %v4666 = vpack.c.b16 %v4474, %v4466
    %v4667 = vpack.c.b16 %v4475, %v4467
    %v4668 = vpack.c.b16 %v4476, %v4468
    %v4669 = vpack.c.b16 %v4477, %v4469
    %v4670 = vpack.c.b16 %v4478, %v4470
    %v4671 = vpack.c.b16 %v4479, %v4471
    %v4672 = vpack.c.b16 %v4480, %v4472
    %v4673 = vpack.c.b16 %v4481, %v4473
    %v4674 = vpack.c.b16 %v4490, %v4482
    %v4675 = vpack.c.b16 %v4491, %v4483
    %v4676 = vpack.c.b16 %v4492, %v4484
    %v4677 = vpack.c.b16 %v4493, %v4485
    %v4678 = vpack.c.b16 %v4494, %v4486
    %v4679 = vpack.c.b16 %v4495, %v4487
    %v4680 = vpack.c.b16 %v4496, %v4488
    %v4681 = vpack.c.b16 %v4497, %v4489
    %v4682 = vpack.c.b16 %v4506, %v4498
    %v4683 = vpack.c.b16 %v4507, %v4499
    %v4684 = vpack.c.b16 %v4508, %v4500
    %v4685 = vpack.c.b16 %v4509, %v4501
    %v4686 = vpack.c.b16 %v4510, %v4502
    %v4687 = vpack.c.b16 %v4511, %v4503
    %v4688 = vpack.c.b16 %v4512, %v4504
    %v4689 = vpack.c.b16 %v4513, %v4505
    %v4690 = vpack.c.b16 %v4522, %v4514
    %v4691 = vpack.c.b16 %v4523, %v4515
    %v4692 = vpack.c.b16 %v4524, %v4516
    %v4693 = vpack.c.b16 %v4525, %v4517
    %v4694 = vpack.c.b16 %v4526, %v4518
    %v4695 = vpack.c.b16 %v4527, %v4519
    %v4696 = vpack.c.b16 %v4528, %v4520
    %v4697 = vpack.c.b16 %v4529, %v4521
    %v4698 = vpack.c.b16 %v4538, %v4530
    %v4699 = vpack.c.b16 %v4539, %v4531
    %v4700 = vpack.c.b16 %v4540, %v4532
    %v4701 = vpack.c.b16 %v4541, %v4533
    %v4702 = vpack.c.b16 %v4542, %v4534
    %v4703 = vpack.c.b16 %v4543, %v4535
    %v4704 = vpack.c.b16 %v4544, %v4536
    %v4705 = vpack.c.b16 %v4545, %v4537
    %v4706 = vpack.c.b16 %v4554, %v4546
    %v4707 = vpack.c.b16 %v4555, %v4547
    %v4708 = vpack.c.b16 %v4556, %v4548
    %v4709 = vpack.c.b16 %v4557, %v4549
    %v4710 = vpack.c.b16 %v4558, %v4550
    %v4711 = vpack.c.b16 %v4559, %v4551
    %v4712 = vpack.c.b16 %v4560, %v4552
    %v4713 = vpack.c.b16 %v4561, %v4553
    %v4714 = vpack.c.b16 %v4570, %v4562
    %v4715 = vpack.c.b16 %v4571, %v4563
    %v4716 = vpack.c.b16 %v4572, %v4564
    %v4717 = vpack.c.b16 %v4573, %v4565
    %v4718 = vpack.c.b16 %v4574, %v4566
    %v4719 = vpack.c.b16 %v4575, %v4567
    %v4720 = vpack.c.b16 %v4576, %v4568
    %v4721 = vpack.c.b16 %v4577, %v4569
    %v4722 = vpack.c.b16 %v4586, %v4578
    %v4723 = vpack.c.b16 %v4587, %v4579
    %v4724 = vpack.c.b16 %v4588, %v4580
    %v4725 = vpack.c.b16 %v4589, %v4581
    %v4726 = vpack.c.b16 %v4590, %v4582
    %v4727 = vpack.c.b16 %v4591, %v4583
    %v4728 = vpack.c.b16 %v4592, %v4584
    %v4729 = vpack.c.b16 %v4593, %v4585
    %v4730 = vpack.c.b16 %v4602, %v4594
    %v4731 = vpack.c.b16 %v4603, %v4595
    %v4732 = vpack.c.b16 %v4604, %v4596
    %v4733 = vpack.c.b16 %v4605, %v4597
    %v4734 = vpack.c.b16 %v4606, %v4598
    %v4735 = vpack.c.b16 %v4607, %v4599
    %v4736 = vpack.c.b16 %v4608, %v4600
    %v4737 = vpack.c.b16 %v4609, %v4601
    %4866 = vmatprep.subr.bf16.mxu0 %v4611
    %4867 = vmatpush1.bf16.msra.mxu0 %v4610
    %4868 = vmatprep.subr.bf16.mxu0 %v4619
    %4869 = vmatpush1.bf16.msra.mxu0 %v4618
    %4870 = vmatprep.subr.bf16.mxu0 %v4627
    %4871 = vmatpush1.bf16.msra.mxu0 %v4626
    %4872 = vmatprep.subr.bf16.mxu0 %v4635
    %4873 = vmatpush1.bf16.msra.mxu0 %v4634
    %4874 = vmatprep.subr.bf16.mxu0 %v4643
    %4875 = vmatpush1.bf16.msra.mxu0 %v4642
    %4876 = vmatprep.subr.bf16.mxu0 %v4651
    %4877 = vmatpush1.bf16.msra.mxu0 %v4650
    %4878 = vmatprep.subr.bf16.mxu0 %v4659
    %4879 = vmatpush1.bf16.msra.mxu0 %v4658
    %4880 = vmatprep.subr.bf16.mxu0 %v4667
    %4881 = vmatpush1.bf16.msra.mxu0 %v4666
    %4882 = vmatprep.subr.bf16.mxu0 %v4675
    %4883 = vmatpush1.bf16.msra.mxu0 %v4674
    %4884 = vmatprep.subr.bf16.mxu0 %v4683
    %4885 = vmatpush1.bf16.msra.mxu0 %v4682
    %4886 = vmatprep.subr.bf16.mxu0 %v4691
    %4887 = vmatpush1.bf16.msra.mxu0 %v4690
    %4888 = vmatprep.subr.bf16.mxu0 %v4699
    %4889 = vmatpush1.bf16.msra.mxu0 %v4698
    %4890 = vmatprep.subr.bf16.mxu0 %v4707
    %4891 = vmatpush1.bf16.msra.mxu0 %v4706
    %4892 = vmatprep.subr.bf16.mxu0 %v4715
    %4893 = vmatpush1.bf16.msra.mxu0 %v4714
    %4894 = vmatprep.subr.bf16.mxu0 %v4723
    %4895 = vmatpush1.bf16.msra.mxu0 %v4722
    %4896 = vmatprep.subr.bf16.mxu0 %v4731
    %4897 = vmatpush1.bf16.msra.mxu0 %v4730
    %4898 = vmatprep.mubr.bf16.mxu0 %v4067
    %4899 = vmatmul.mubr.bf16.gmra.mrb[0].mxu0 %v4066
    %v4900 = vpop.f32.mrb[0].mxu0
    %v4901 = vadd.f32 0.0, %v4900
    %v4902 = vpop.f32.mrb[0].mxu0
    %v4903 = vadd.f32 0.0, %v4902
    %v4904 = vpop.f32.mrb[0].mxu0
    %v4905 = vadd.f32 0.0, %v4904
    %v4906 = vpop.f32.mrb[0].mxu0
    %v4907 = vadd.f32 0.0, %v4906
    %4908 = vmatprep.mubr.bf16.mxu0 %v4069
    %4909 = vmatmul.mubr.bf16.gmra.mrb[0].mxu0 %v4068
    %v4910 = vpop.f32.mrb[0].mxu0
    %v4911 = vadd.f32 0.0, %v4910
    %v4912 = vpop.f32.mrb[0].mxu0
    %v4913 = vadd.f32 0.0, %v4912
    %v4914 = vpop.f32.mrb[0].mxu0
    %v4915 = vadd.f32 0.0, %v4914
    %v4916 = vpop.f32.mrb[0].mxu0
    %v4917 = vadd.f32 0.0, %v4916
    %4918 = vmatprep.mubr.bf16.mxu0 %v4071
    %4919 = vmatmul.mubr.bf16.gmra.mrb[0].mxu0 %v4070
    %v4920 = vpop.f32.mrb[0].mxu0
    %v4921 = vadd.f32 0.0, %v4920
    %v4922 = vpop.f32.mrb[0].mxu0
    %v4923 = vadd.f32 0.0, %v4922
    %v4924 = vpop.f32.mrb[0].mxu0
    %v4925 = vadd.f32 0.0, %v4924
    %v4926 = vpop.f32.mrb[0].mxu0
    %v4927 = vadd.f32 0.0, %v4926
    %4928 = vmatprep.mubr.bf16.mxu0 %v4073
    %4929 = vmatmul.mubr.bf16.gmra.mrb[0].mxu0 %v4072
    %v4930 = vpop.f32.mrb[0].mxu0
    %v4931 = vadd.f32 0.0, %v4930
    %v4932 = vpop.f32.mrb[0].mxu0
    %v4933 = vadd.f32 0.0, %v4932
    %v4934 = vpop.f32.mrb[0].mxu0
    %v4935 = vadd.f32 0.0, %v4934
    %v4936 = vpop.f32.mrb[0].mxu0
    %v4937 = vadd.f32 0.0, %v4936
    %4938 = vmatprep.mubr.bf16.mxu0 %v4075
    %4939 = vmatmul.mubr.bf16.gmra.mrb[0].mxu0 %v4074
    %v4940 = vpop.f32.mrb[0].mxu0
    %v4941 = vadd.f32 0.0, %v4940
    %v4942 = vpop.f32.mrb[0].mxu0
    %v4943 = vadd.f32 0.0, %v4942
    %v4944 = vpop.f32.mrb[0].mxu0
    %v4945 = vadd.f32 0.0, %v4944
    %v4946 = vpop.f32.mrb[0].mxu0
    %v4947 = vadd.f32 0.0, %v4946
    %4948 = vmatprep.mubr.bf16.mxu0 %v4077
    %4949 = vmatmul.mubr.bf16.gmra.mrb[0].mxu0 %v4076
    %v4950 = vpop.f32.mrb[0].mxu0
    %v4951 = vadd.f32 0.0, %v4950
    %v4952 = vpop.f32.mrb[0].mxu0
    %v4953 = vadd.f32 0.0, %v4952
    %v4954 = vpop.f32.mrb[0].mxu0
    %v4955 = vadd.f32 0.0, %v4954
    %v4956 = vpop.f32.mrb[0].mxu0
    %v4957 = vadd.f32 0.0, %v4956
    %4958 = vmatprep.mubr.bf16.mxu0 %v4079
    %4959 = vmatmul.mubr.bf16.gmra.mrb[0].mxu0 %v4078
    %v4960 = vpop.f32.mrb[0].mxu0
    %v4961 = vadd.f32 0.0, %v4960
    %v4962 = vpop.f32.mrb[0].mxu0
    %v4963 = vadd.f32 0.0, %v4962
    %v4964 = vpop.f32.mrb[0].mxu0
    %v4965 = vadd.f32 0.0, %v4964
    %v4966 = vpop.f32.mrb[0].mxu0
    %v4967 = vadd.f32 0.0, %v4966
    %4968 = vmatprep.mubr.bf16.mxu0 %v4081
    %4969 = vmatmul.mubr.bf16.gmra.mrb[0].mxu0 %v4080
    %v4970 = vpop.f32.mrb[0].mxu0
    %v4971 = vadd.f32 0.0, %v4970
    %v4972 = vpop.f32.mrb[0].mxu0
    %v4973 = vadd.f32 0.0, %v4972
    %v4974 = vpop.f32.mrb[0].mxu0
    %v4975 = vadd.f32 0.0, %v4974
    %v4976 = vpop.f32.mrb[0].mxu0
    %v4977 = vadd.f32 0.0, %v4976
    %4978 = vmatprep.mubr.bf16.mxu0 %v4083
    %4979 = vmatmul.mubr.bf16.gmra.mrb[0].mxu0 %v4082
    %v4980 = vpop.f32.mrb[0].mxu0
    %v4981 = vadd.f32 0.0, %v4980
    %v4982 = vpop.f32.mrb[0].mxu0
    %v4983 = vadd.f32 0.0, %v4982
    %v4984 = vpop.f32.mrb[0].mxu0
    %v4985 = vadd.f32 0.0, %v4984
    %v4986 = vpop.f32.mrb[0].mxu0
    %v4987 = vadd.f32 0.0, %v4986
    %4988 = vmatprep.mubr.bf16.mxu0 %v4085
    %4989 = vmatmul.mubr.bf16.gmra.mrb[0].mxu0 %v4084
    %v4990 = vpop.f32.mrb[0].mxu0
    %v4991 = vadd.f32 0.0, %v4990
    %v4992 = vpop.f32.mrb[0].mxu0
    %v4993 = vadd.f32 0.0, %v4992
    %v4994 = vpop.f32.mrb[0].mxu0
    %v4995 = vadd.f32 0.0, %v4994
    %v4996 = vpop.f32.mrb[0].mxu0
    %v4997 = vadd.f32 0.0, %v4996
    %4998 = vmatprep.mubr.bf16.mxu0 %v4087
    %4999 = vmatmul.mubr.bf16.gmra.mrb[0].mxu0 %v4086
    %v5000 = vpop.f32.mrb[0].mxu0
    %v5001 = vadd.f32 0.0, %v5000
    %v5002 = vpop.f32.mrb[0].mxu0
    %v5003 = vadd.f32 0.0, %v5002
    %v5004 = vpop.f32.mrb[0].mxu0
    %v5005 = vadd.f32 0.0, %v5004
    %v5006 = vpop.f32.mrb[0].mxu0
    %v5007 = vadd.f32 0.0, %v5006
    %5008 = vmatprep.mubr.bf16.mxu0 %v4089
    %5009 = vmatmul.mubr.bf16.gmra.mrb[0].mxu0 %v4088
    %v5010 = vpop.f32.mrb[0].mxu0
    %v5011 = vadd.f32 0.0, %v5010
    %v5012 = vpop.f32.mrb[0].mxu0
    %v5013 = vadd.f32 0.0, %v5012
    %v5014 = vpop.f32.mrb[0].mxu0
    %v5015 = vadd.f32 0.0, %v5014
    %v5016 = vpop.f32.mrb[0].mxu0
    %v5017 = vadd.f32 0.0, %v5016
    %5018 = vmatprep.mubr.bf16.mxu0 %v4091
    %5019 = vmatmul.mubr.bf16.gmra.mrb[0].mxu0 %v4090
    %v5020 = vpop.f32.mrb[0].mxu0
    %v5021 = vadd.f32 0.0, %v5020
    %v5022 = vpop.f32.mrb[0].mxu0
    %v5023 = vadd.f32 0.0, %v5022
    %v5024 = vpop.f32.mrb[0].mxu0
    %v5025 = vadd.f32 0.0, %v5024
    %v5026 = vpop.f32.mrb[0].mxu0
    %v5027 = vadd.f32 0.0, %v5026
    %5028 = vmatprep.mubr.bf16.mxu0 %v4093
    %5029 = vmatmul.mubr.bf16.gmra.mrb[0].mxu0 %v4092
    %v5030 = vpop.f32.mrb[0].mxu0
    %v5031 = vadd.f32 0.0, %v5030
    %v5032 = vpop.f32.mrb[0].mxu0
    %v5033 = vadd.f32 0.0, %v5032
    %v5034 = vpop.f32.mrb[0].mxu0
    %v5035 = vadd.f32 0.0, %v5034
    %v5036 = vpop.f32.mrb[0].mxu0
    %v5037 = vadd.f32 0.0, %v5036
    %5038 = vmatprep.mubr.bf16.mxu0 %v4095
    %5039 = vmatmul.mubr.bf16.gmra.mrb[0].mxu0 %v4094
    %v5040 = vpop.f32.mrb[0].mxu0
    %v5041 = vadd.f32 0.0, %v5040
    %v5042 = vpop.f32.mrb[0].mxu0
    %v5043 = vadd.f32 0.0, %v5042
    %v5044 = vpop.f32.mrb[0].mxu0
    %v5045 = vadd.f32 0.0, %v5044
    %v5046 = vpop.f32.mrb[0].mxu0
    %v5047 = vadd.f32 0.0, %v5046
    %5048 = vmatprep.mubr.bf16.mxu0 %v4097
    %5049 = vmatmul.mubr.bf16.gmra.mrb[0].mxu0 %v4096
    %v5050 = vpop.f32.mrb[0].mxu0
    %v5051 = vadd.f32 0.0, %v5050
    %v5052 = vpop.f32.mrb[0].mxu0
    %v5053 = vadd.f32 0.0, %v5052
    %v5054 = vpop.f32.mrb[0].mxu0
    %v5055 = vadd.f32 0.0, %v5054
    %v5056 = vpop.f32.mrb[0].mxu0
    %v5057 = vadd.f32 0.0, %v5056
    %5058 = vdwg.mxu0
    %5059 = vmatprep.subr.bf16.mxu0 %v4613
    %5060 = vmatpush1.bf16.msra.mxu0 %v4612
    %5061 = vmatprep.subr.bf16.mxu0 %v4621
    %5062 = vmatpush1.bf16.msra.mxu0 %v4620
    %5063 = vmatprep.subr.bf16.mxu0 %v4629
    %5064 = vmatpush1.bf16.msra.mxu0 %v4628
    %5065 = vmatprep.subr.bf16.mxu0 %v4637
    %5066 = vmatpush1.bf16.msra.mxu0 %v4636
    %5067 = vmatprep.subr.bf16.mxu0 %v4645
    %5068 = vmatpush1.bf16.msra.mxu0 %v4644
    %5069 = vmatprep.subr.bf16.mxu0 %v4653
    %5070 = vmatpush1.bf16.msra.mxu0 %v4652
    %5071 = vmatprep.subr.bf16.mxu0 %v4661
    %5072 = vmatpush1.bf16.msra.mxu0 %v4660
    %5073 = vmatprep.subr.bf16.mxu0 %v4669
    %5074 = vmatpush1.bf16.msra.mxu0 %v4668
    %5075 = vmatprep.subr.bf16.mxu0 %v4677
    %5076 = vmatpush1.bf16.msra.mxu0 %v4676
    %5077 = vmatprep.subr.bf16.mxu0 %v4685
    %5078 = vmatpush1.bf16.msra.mxu0 %v4684
    %5079 = vmatprep.subr.bf16.mxu0 %v4693
    %5080 = vmatpush1.bf16.msra.mxu0 %v4692
    %5081 = vmatprep.subr.bf16.mxu0 %v4701
    %5082 = vmatpush1.bf16.msra.mxu0 %v4700
    %5083 = vmatprep.subr.bf16.mxu0 %v4709
    %5084 = vmatpush1.bf16.msra.mxu0 %v4708
    %5085 = vmatprep.subr.bf16.mxu0 %v4717
    %5086 = vmatpush1.bf16.msra.mxu0 %v4716
    %5087 = vmatprep.subr.bf16.mxu0 %v4725
    %5088 = vmatpush1.bf16.msra.mxu0 %v4724
    %5089 = vmatprep.subr.bf16.mxu0 %v4733
    %5090 = vmatpush1.bf16.msra.mxu0 %v4732
    %5091 = vmatprep.mubr.bf16.mxu0 %v4067
    %5092 = vmatmul.mubr.bf16.gmra.mrb[0].mxu0 %v4066
    %v5093 = vpop.f32.mrb[0].mxu0
    %v5094 = vadd.f32 0.0, %v5093
    %v5095 = vpop.f32.mrb[0].mxu0
    %v5096 = vadd.f32 0.0, %v5095
    %v5097 = vpop.f32.mrb[0].mxu0
    %v5098 = vadd.f32 0.0, %v5097
    %v5099 = vpop.f32.mrb[0].mxu0
    %v5100 = vadd.f32 0.0, %v5099
    %5101 = vmatprep.mubr.bf16.mxu0 %v4069
    %5102 = vmatmul.mubr.bf16.gmra.mrb[0].mxu0 %v4068
    %v5103 = vpop.f32.mrb[0].mxu0
    %v5104 = vadd.f32 0.0, %v5103
    %v5105 = vpop.f32.mrb[0].mxu0
    %v5106 = vadd.f32 0.0, %v5105
    %v5107 = vpop.f32.mrb[0].mxu0
    %v5108 = vadd.f32 0.0, %v5107
    %v5109 = vpop.f32.mrb[0].mxu0
    %v5110 = vadd.f32 0.0, %v5109
    %5111 = vmatprep.mubr.bf16.mxu0 %v4071
    %5112 = vmatmul.mubr.bf16.gmra.mrb[0].mxu0 %v4070
    %v5113 = vpop.f32.mrb[0].mxu0
    %v5114 = vadd.f32 0.0, %v5113
    %v5115 = vpop.f32.mrb[0].mxu0
    %v5116 = vadd.f32 0.0, %v5115
    %v5117 = vpop.f32.mrb[0].mxu0
    %v5118 = vadd.f32 0.0, %v5117
    %v5119 = vpop.f32.mrb[0].mxu0
    %v5120 = vadd.f32 0.0, %v5119
    %5121 = vmatprep.mubr.bf16.mxu0 %v4073
    %5122 = vmatmul.mubr.bf16.gmra.mrb[0].mxu0 %v4072
    %v5123 = vpop.f32.mrb[0].mxu0
    %v5124 = vadd.f32 0.0, %v5123
    %v5125 = vpop.f32.mrb[0].mxu0
    %v5126 = vadd.f32 0.0, %v5125
    %v5127 = vpop.f32.mrb[0].mxu0
    %v5128 = vadd.f32 0.0, %v5127
    %v5129 = vpop.f32.mrb[0].mxu0
    %v5130 = vadd.f32 0.0, %v5129
    %5131 = vmatprep.mubr.bf16.mxu0 %v4075
    %5132 = vmatmul.mubr.bf16.gmra.mrb[0].mxu0 %v4074
    %v5133 = vpop.f32.mrb[0].mxu0
    %v5134 = vadd.f32 0.0, %v5133
    %v5135 = vpop.f32.mrb[0].mxu0
    %v5136 = vadd.f32 0.0, %v5135
    %v5137 = vpop.f32.mrb[0].mxu0
    %v5138 = vadd.f32 0.0, %v5137
    %v5139 = vpop.f32.mrb[0].mxu0
    %v5140 = vadd.f32 0.0, %v5139
    %5141 = vmatprep.mubr.bf16.mxu0 %v4077
    %5142 = vmatmul.mubr.bf16.gmra.mrb[0].mxu0 %v4076
    %v5143 = vpop.f32.mrb[0].mxu0
    %v5144 = vadd.f32 0.0, %v5143
    %v5145 = vpop.f32.mrb[0].mxu0
    %v5146 = vadd.f32 0.0, %v5145
    %v5147 = vpop.f32.mrb[0].mxu0
    %v5148 = vadd.f32 0.0, %v5147
    %v5149 = vpop.f32.mrb[0].mxu0
    %v5150 = vadd.f32 0.0, %v5149
    %5151 = vmatprep.mubr.bf16.mxu0 %v4079
    %5152 = vmatmul.mubr.bf16.gmra.mrb[0].mxu0 %v4078
    %v5153 = vpop.f32.mrb[0].mxu0
    %v5154 = vadd.f32 0.0, %v5153
    %v5155 = vpop.f32.mrb[0].mxu0
    %v5156 = vadd.f32 0.0, %v5155
    %v5157 = vpop.f32.mrb[0].mxu0
    %v5158 = vadd.f32 0.0, %v5157
    %v5159 = vpop.f32.mrb[0].mxu0
    %v5160 = vadd.f32 0.0, %v5159
    %5161 = vmatprep.mubr.bf16.mxu0 %v4081
    %5162 = vmatmul.mubr.bf16.gmra.mrb[0].mxu0 %v4080
    %v5163 = vpop.f32.mrb[0].mxu0
    %v5164 = vadd.f32 0.0, %v5163
    %v5165 = vpop.f32.mrb[0].mxu0
    %v5166 = vadd.f32 0.0, %v5165
    %v5167 = vpop.f32.mrb[0].mxu0
    %v5168 = vadd.f32 0.0, %v5167
    %v5169 = vpop.f32.mrb[0].mxu0
    %v5170 = vadd.f32 0.0, %v5169
    %5171 = vmatprep.mubr.bf16.mxu0 %v4083
    %5172 = vmatmul.mubr.bf16.gmra.mrb[0].mxu0 %v4082
    %v5173 = vpop.f32.mrb[0].mxu0
    %v5174 = vadd.f32 0.0, %v5173
    %v5175 = vpop.f32.mrb[0].mxu0
    %v5176 = vadd.f32 0.0, %v5175
    %v5177 = vpop.f32.mrb[0].mxu0
    %v5178 = vadd.f32 0.0, %v5177
    %v5179 = vpop.f32.mrb[0].mxu0
    %v5180 = vadd.f32 0.0, %v5179
    %5181 = vmatprep.mubr.bf16.mxu0 %v4085
    %5182 = vmatmul.mubr.bf16.gmra.mrb[0].mxu0 %v4084
    %v5183 = vpop.f32.mrb[0].mxu0
    %v5184 = vadd.f32 0.0, %v5183
    %v5185 = vpop.f32.mrb[0].mxu0
    %v5186 = vadd.f32 0.0, %v5185
    %v5187 = vpop.f32.mrb[0].mxu0
    %v5188 = vadd.f32 0.0, %v5187
    %v5189 = vpop.f32.mrb[0].mxu0
    %v5190 = vadd.f32 0.0, %v5189
    %5191 = vmatprep.mubr.bf16.mxu0 %v4087
    %5192 = vmatmul.mubr.bf16.gmra.mrb[0].mxu0 %v4086
    %v5193 = vpop.f32.mrb[0].mxu0
    %v5194 = vadd.f32 0.0, %v5193
    %v5195 = vpop.f32.mrb[0].mxu0
    %v5196 = vadd.f32 0.0, %v5195
    %v5197 = vpop.f32.mrb[0].mxu0
    %v5198 = vadd.f32 0.0, %v5197
    %v5199 = vpop.f32.mrb[0].mxu0
    %v5200 = vadd.f32 0.0, %v5199
    %5201 = vmatprep.mubr.bf16.mxu0 %v4089
    %5202 = vmatmul.mubr.bf16.gmra.mrb[0].mxu0 %v4088
    %v5203 = vpop.f32.mrb[0].mxu0
    %v5204 = vadd.f32 0.0, %v5203
    %v5205 = vpop.f32.mrb[0].mxu0
    %v5206 = vadd.f32 0.0, %v5205
    %v5207 = vpop.f32.mrb[0].mxu0
    %v5208 = vadd.f32 0.0, %v5207
    %v5209 = vpop.f32.mrb[0].mxu0
    %v5210 = vadd.f32 0.0, %v5209
    %5211 = vmatprep.mubr.bf16.mxu0 %v4091
    %5212 = vmatmul.mubr.bf16.gmra.mrb[0].mxu0 %v4090
    %v5213 = vpop.f32.mrb[0].mxu0
    %v5214 = vadd.f32 0.0, %v5213
    %v5215 = vpop.f32.mrb[0].mxu0
    %v5216 = vadd.f32 0.0, %v5215
    %v5217 = vpop.f32.mrb[0].mxu0
    %v5218 = vadd.f32 0.0, %v5217
    %v5219 = vpop.f32.mrb[0].mxu0
    %v5220 = vadd.f32 0.0, %v5219
    %5221 = vmatprep.mubr.bf16.mxu0 %v4093
    %5222 = vmatmul.mubr.bf16.gmra.mrb[0].mxu0 %v4092
    %v5223 = vpop.f32.mrb[0].mxu0
    %v5224 = vadd.f32 0.0, %v5223
    %v5225 = vpop.f32.mrb[0].mxu0
    %v5226 = vadd.f32 0.0, %v5225
    %v5227 = vpop.f32.mrb[0].mxu0
    %v5228 = vadd.f32 0.0, %v5227
    %v5229 = vpop.f32.mrb[0].mxu0
    %v5230 = vadd.f32 0.0, %v5229
    %5231 = vmatprep.mubr.bf16.mxu0 %v4095
    %5232 = vmatmul.mubr.bf16.gmra.mrb[0].mxu0 %v4094
    %v5233 = vpop.f32.mrb[0].mxu0
    %v5234 = vadd.f32 0.0, %v5233
    %v5235 = vpop.f32.mrb[0].mxu0
    %v5236 = vadd.f32 0.0, %v5235
    %v5237 = vpop.f32.mrb[0].mxu0
    %v5238 = vadd.f32 0.0, %v5237
    %v5239 = vpop.f32.mrb[0].mxu0
    %v5240 = vadd.f32 0.0, %v5239
    %5241 = vmatprep.mubr.bf16.mxu0 %v4097
    %5242 = vmatmul.mubr.bf16.gmra.mrb[0].mxu0 %v4096
    %v5243 = vpop.f32.mrb[0].mxu0
    %v5244 = vadd.f32 0.0, %v5243
    %v5245 = vpop.f32.mrb[0].mxu0
    %v5246 = vadd.f32 0.0, %v5245
    %v5247 = vpop.f32.mrb[0].mxu0
    %v5248 = vadd.f32 0.0, %v5247
    %v5249 = vpop.f32.mrb[0].mxu0
    %v5250 = vadd.f32 0.0, %v5249
    %5251 = vdwg.mxu0
    %5252 = vmatprep.subr.bf16.mxu0 %v4615
    %5253 = vmatpush1.bf16.msra.mxu0 %v4614
    %5254 = vmatprep.subr.bf16.mxu0 %v4623
    %5255 = vmatpush1.bf16.msra.mxu0 %v4622
    %5256 = vmatprep.subr.bf16.mxu0 %v4631
    %5257 = vmatpush1.bf16.msra.mxu0 %v4630
    %5258 = vmatprep.subr.bf16.mxu0 %v4639
    %5259 = vmatpush1.bf16.msra.mxu0 %v4638
    %5260 = vmatprep.subr.bf16.mxu0 %v4647
    %5261 = vmatpush1.bf16.msra.mxu0 %v4646
    %5262 = vmatprep.subr.bf16.mxu0 %v4655
    %5263 = vmatpush1.bf16.msra.mxu0 %v4654
    %5264 = vmatprep.subr.bf16.mxu0 %v4663
    %5265 = vmatpush1.bf16.msra.mxu0 %v4662
    %5266 = vmatprep.subr.bf16.mxu0 %v4671
    %5267 = vmatpush1.bf16.msra.mxu0 %v4670
    %5268 = vmatprep.subr.bf16.mxu0 %v4679
    %5269 = vmatpush1.bf16.msra.mxu0 %v4678
    %5270 = vmatprep.subr.bf16.mxu0 %v4687
    %5271 = vmatpush1.bf16.msra.mxu0 %v4686
    %5272 = vmatprep.subr.bf16.mxu0 %v4695
    %5273 = vmatpush1.bf16.msra.mxu0 %v4694
    %5274 = vmatprep.subr.bf16.mxu0 %v4703
    %5275 = vmatpush1.bf16.msra.mxu0 %v4702
    %5276 = vmatprep.subr.bf16.mxu0 %v4711
    %5277 = vmatpush1.bf16.msra.mxu0 %v4710
    %5278 = vmatprep.subr.bf16.mxu0 %v4719
    %5279 = vmatpush1.bf16.msra.mxu0 %v4718
    %5280 = vmatprep.subr.bf16.mxu0 %v4727
    %5281 = vmatpush1.bf16.msra.mxu0 %v4726
    %5282 = vmatprep.subr.bf16.mxu0 %v4735
    %5283 = vmatpush1.bf16.msra.mxu0 %v4734
    %5284 = vmatprep.mubr.bf16.mxu0 %v4067
    %5285 = vmatmul.mubr.bf16.gmra.mrb[0].mxu0 %v4066
    %v5286 = vpop.f32.mrb[0].mxu0
    %v5287 = vadd.f32 0.0, %v5286
    %v5288 = vpop.f32.mrb[0].mxu0
    %v5289 = vadd.f32 0.0, %v5288
    %v5290 = vpop.f32.mrb[0].mxu0
    %v5291 = vadd.f32 0.0, %v5290
    %v5292 = vpop.f32.mrb[0].mxu0
    %v5293 = vadd.f32 0.0, %v5292
    %5294 = vmatprep.mubr.bf16.mxu0 %v4069
    %5295 = vmatmul.mubr.bf16.gmra.mrb[0].mxu0 %v4068
    %v5296 = vpop.f32.mrb[0].mxu0
    %v5297 = vadd.f32 0.0, %v5296
    %v5298 = vpop.f32.mrb[0].mxu0
    %v5299 = vadd.f32 0.0, %v5298
    %v5300 = vpop.f32.mrb[0].mxu0
    %v5301 = vadd.f32 0.0, %v5300
    %v5302 = vpop.f32.mrb[0].mxu0
    %v5303 = vadd.f32 0.0, %v5302
    %5304 = vmatprep.mubr.bf16.mxu0 %v4071
    %5305 = vmatmul.mubr.bf16.gmra.mrb[0].mxu0 %v4070
    %v5306 = vpop.f32.mrb[0].mxu0
    %v5307 = vadd.f32 0.0, %v5306
    %v5308 = vpop.f32.mrb[0].mxu0
    %v5309 = vadd.f32 0.0, %v5308
    %v5310 = vpop.f32.mrb[0].mxu0
    %v5311 = vadd.f32 0.0, %v5310
    %v5312 = vpop.f32.mrb[0].mxu0
    %v5313 = vadd.f32 0.0, %v5312
    %5314 = vmatprep.mubr.bf16.mxu0 %v4073
    %5315 = vmatmul.mubr.bf16.gmra.mrb[0].mxu0 %v4072
    %v5316 = vpop.f32.mrb[0].mxu0
    %v5317 = vadd.f32 0.0, %v5316
    %v5318 = vpop.f32.mrb[0].mxu0
    %v5319 = vadd.f32 0.0, %v5318
    %v5320 = vpop.f32.mrb[0].mxu0
    %v5321 = vadd.f32 0.0, %v5320
    %v5322 = vpop.f32.mrb[0].mxu0
    %v5323 = vadd.f32 0.0, %v5322
    %5324 = vmatprep.mubr.bf16.mxu0 %v4075
    %5325 = vmatmul.mubr.bf16.gmra.mrb[0].mxu0 %v4074
    %v5326 = vpop.f32.mrb[0].mxu0
    %v5327 = vadd.f32 0.0, %v5326
    %v5328 = vpop.f32.mrb[0].mxu0
    %v5329 = vadd.f32 0.0, %v5328
    %v5330 = vpop.f32.mrb[0].mxu0
    %v5331 = vadd.f32 0.0, %v5330
    %v5332 = vpop.f32.mrb[0].mxu0
    %v5333 = vadd.f32 0.0, %v5332
    %5334 = vmatprep.mubr.bf16.mxu0 %v4077
    %5335 = vmatmul.mubr.bf16.gmra.mrb[0].mxu0 %v4076
    %v5336 = vpop.f32.mrb[0].mxu0
    %v5337 = vadd.f32 0.0, %v5336
    %v5338 = vpop.f32.mrb[0].mxu0
    %v5339 = vadd.f32 0.0, %v5338
    %v5340 = vpop.f32.mrb[0].mxu0
    %v5341 = vadd.f32 0.0, %v5340
    %v5342 = vpop.f32.mrb[0].mxu0
    %v5343 = vadd.f32 0.0, %v5342
    %5344 = vmatprep.mubr.bf16.mxu0 %v4079
    %5345 = vmatmul.mubr.bf16.gmra.mrb[0].mxu0 %v4078
    %v5346 = vpop.f32.mrb[0].mxu0
    %v5347 = vadd.f32 0.0, %v5346
    %v5348 = vpop.f32.mrb[0].mxu0
    %v5349 = vadd.f32 0.0, %v5348
    %v5350 = vpop.f32.mrb[0].mxu0
    %v5351 = vadd.f32 0.0, %v5350
    %v5352 = vpop.f32.mrb[0].mxu0
    %v5353 = vadd.f32 0.0, %v5352
    %5354 = vmatprep.mubr.bf16.mxu0 %v4081
    %5355 = vmatmul.mubr.bf16.gmra.mrb[0].mxu0 %v4080
    %v5356 = vpop.f32.mrb[0].mxu0
    %v5357 = vadd.f32 0.0, %v5356
    %v5358 = vpop.f32.mrb[0].mxu0
    %v5359 = vadd.f32 0.0, %v5358
    %v5360 = vpop.f32.mrb[0].mxu0
    %v5361 = vadd.f32 0.0, %v5360
    %v5362 = vpop.f32.mrb[0].mxu0
    %v5363 = vadd.f32 0.0, %v5362
    %5364 = vmatprep.mubr.bf16.mxu0 %v4083
    %5365 = vmatmul.mubr.bf16.gmra.mrb[0].mxu0 %v4082
    %v5366 = vpop.f32.mrb[0].mxu0
    %v5367 = vadd.f32 0.0, %v5366
    %v5368 = vpop.f32.mrb[0].mxu0
    %v5369 = vadd.f32 0.0, %v5368
    %v5370 = vpop.f32.mrb[0].mxu0
    %v5371 = vadd.f32 0.0, %v5370
    %v5372 = vpop.f32.mrb[0].mxu0
    %v5373 = vadd.f32 0.0, %v5372
    %5374 = vmatprep.mubr.bf16.mxu0 %v4085
    %5375 = vmatmul.mubr.bf16.gmra.mrb[0].mxu0 %v4084
    %v5376 = vpop.f32.mrb[0].mxu0
    %v5377 = vadd.f32 0.0, %v5376
    %v5378 = vpop.f32.mrb[0].mxu0
    %v5379 = vadd.f32 0.0, %v5378
    %v5380 = vpop.f32.mrb[0].mxu0
    %v5381 = vadd.f32 0.0, %v5380
    %v5382 = vpop.f32.mrb[0].mxu0
    %v5383 = vadd.f32 0.0, %v5382
    %5384 = vmatprep.mubr.bf16.mxu0 %v4087
    %5385 = vmatmul.mubr.bf16.gmra.mrb[0].mxu0 %v4086
    %v5386 = vpop.f32.mrb[0].mxu0
    %v5387 = vadd.f32 0.0, %v5386
    %v5388 = vpop.f32.mrb[0].mxu0
    %v5389 = vadd.f32 0.0, %v5388
    %v5390 = vpop.f32.mrb[0].mxu0
    %v5391 = vadd.f32 0.0, %v5390
    %v5392 = vpop.f32.mrb[0].mxu0
    %v5393 = vadd.f32 0.0, %v5392
    %5394 = vmatprep.mubr.bf16.mxu0 %v4089
    %5395 = vmatmul.mubr.bf16.gmra.mrb[0].mxu0 %v4088
    %v5396 = vpop.f32.mrb[0].mxu0
    %v5397 = vadd.f32 0.0, %v5396
    %v5398 = vpop.f32.mrb[0].mxu0
    %v5399 = vadd.f32 0.0, %v5398
    %v5400 = vpop.f32.mrb[0].mxu0
    %v5401 = vadd.f32 0.0, %v5400
    %v5402 = vpop.f32.mrb[0].mxu0
    %v5403 = vadd.f32 0.0, %v5402
    %5404 = vmatprep.mubr.bf16.mxu0 %v4091
    %5405 = vmatmul.mubr.bf16.gmra.mrb[0].mxu0 %v4090
    %v5406 = vpop.f32.mrb[0].mxu0
    %v5407 = vadd.f32 0.0, %v5406
    %v5408 = vpop.f32.mrb[0].mxu0
    %v5409 = vadd.f32 0.0, %v5408
    %v5410 = vpop.f32.mrb[0].mxu0
    %v5411 = vadd.f32 0.0, %v5410
    %v5412 = vpop.f32.mrb[0].mxu0
    %v5413 = vadd.f32 0.0, %v5412
    %5414 = vmatprep.mubr.bf16.mxu0 %v4093
    %5415 = vmatmul.mubr.bf16.gmra.mrb[0].mxu0 %v4092
    %v5416 = vpop.f32.mrb[0].mxu0
    %v5417 = vadd.f32 0.0, %v5416
    %v5418 = vpop.f32.mrb[0].mxu0
    %v5419 = vadd.f32 0.0, %v5418
    %v5420 = vpop.f32.mrb[0].mxu0
    %v5421 = vadd.f32 0.0, %v5420
    %v5422 = vpop.f32.mrb[0].mxu0
    %v5423 = vadd.f32 0.0, %v5422
    %5424 = vmatprep.mubr.bf16.mxu0 %v4095
    %5425 = vmatmul.mubr.bf16.gmra.mrb[0].mxu0 %v4094
    %v5426 = vpop.f32.mrb[0].mxu0
    %v5427 = vadd.f32 0.0, %v5426
    %v5428 = vpop.f32.mrb[0].mxu0
    %v5429 = vadd.f32 0.0, %v5428
    %v5430 = vpop.f32.mrb[0].mxu0
    %v5431 = vadd.f32 0.0, %v5430
    %v5432 = vpop.f32.mrb[0].mxu0
    %v5433 = vadd.f32 0.0, %v5432
    %5434 = vmatprep.mubr.bf16.mxu0 %v4097
    %5435 = vmatmul.mubr.bf16.gmra.mrb[0].mxu0 %v4096
    %v5436 = vpop.f32.mrb[0].mxu0
    %v5437 = vadd.f32 0.0, %v5436
    %v5438 = vpop.f32.mrb[0].mxu0
    %v5439 = vadd.f32 0.0, %v5438
    %v5440 = vpop.f32.mrb[0].mxu0
    %v5441 = vadd.f32 0.0, %v5440
    %v5442 = vpop.f32.mrb[0].mxu0
    %v5443 = vadd.f32 0.0, %v5442
    %5444 = vdwg.mxu0
    %5445 = vmatprep.subr.bf16.mxu0 %v4617
    %5446 = vmatpush1.bf16.msra.mxu0 %v4616
    %5447 = vmatprep.subr.bf16.mxu0 %v4625
    %5448 = vmatpush1.bf16.msra.mxu0 %v4624
    %5449 = vmatprep.subr.bf16.mxu0 %v4633
    %5450 = vmatpush1.bf16.msra.mxu0 %v4632
    %5451 = vmatprep.subr.bf16.mxu0 %v4641
    %5452 = vmatpush1.bf16.msra.mxu0 %v4640
    %5453 = vmatprep.subr.bf16.mxu0 %v4649
    %5454 = vmatpush1.bf16.msra.mxu0 %v4648
    %5455 = vmatprep.subr.bf16.mxu0 %v4657
    %5456 = vmatpush1.bf16.msra.mxu0 %v4656
    %5457 = vmatprep.subr.bf16.mxu0 %v4665
    %5458 = vmatpush1.bf16.msra.mxu0 %v4664
    %5459 = vmatprep.subr.bf16.mxu0 %v4673
    %5460 = vmatpush1.bf16.msra.mxu0 %v4672
    %5461 = vmatprep.subr.bf16.mxu0 %v4681
    %5462 = vmatpush1.bf16.msra.mxu0 %v4680
    %5463 = vmatprep.subr.bf16.mxu0 %v4689
    %5464 = vmatpush1.bf16.msra.mxu0 %v4688
    %5465 = vmatprep.subr.bf16.mxu0 %v4697
    %5466 = vmatpush1.bf16.msra.mxu0 %v4696
    %5467 = vmatprep.subr.bf16.mxu0 %v4705
    %5468 = vmatpush1.bf16.msra.mxu0 %v4704
    %5469 = vmatprep.subr.bf16.mxu0 %v4713
    %5470 = vmatpush1.bf16.msra.mxu0 %v4712
    %5471 = vmatprep.subr.bf16.mxu0 %v4721
    %5472 = vmatpush1.bf16.msra.mxu0 %v4720
    %5473 = vmatprep.subr.bf16.mxu0 %v4729
    %5474 = vmatpush1.bf16.msra.mxu0 %v4728
    %5475 = vmatprep.subr.bf16.mxu0 %v4737
    %5476 = vmatpush1.bf16.msra.mxu0 %v4736
    %5477 = vmatprep.mubr.bf16.mxu0 %v4067
    %5478 = vmatmul.mubr.bf16.gmra.mrb[0].mxu0 %v4066
    %v5479 = vpop.f32.mrb[0].mxu0
    %v5480 = vadd.f32 0.0, %v5479
    %v5481 = vpop.f32.mrb[0].mxu0
    %v5482 = vadd.f32 0.0, %v5481
    %v5483 = vpop.f32.mrb[0].mxu0
    %v5484 = vadd.f32 0.0, %v5483
    %v5485 = vpop.f32.mrb[0].mxu0
    %v5486 = vadd.f32 0.0, %v5485
    %5487 = vmatprep.mubr.bf16.mxu0 %v4069
    %5488 = vmatmul.mubr.bf16.gmra.mrb[0].mxu0 %v4068
    %v5489 = vpop.f32.mrb[0].mxu0
    %v5490 = vadd.f32 0.0, %v5489
    %v5491 = vpop.f32.mrb[0].mxu0
    %v5492 = vadd.f32 0.0, %v5491
    %v5493 = vpop.f32.mrb[0].mxu0
    %v5494 = vadd.f32 0.0, %v5493
    %v5495 = vpop.f32.mrb[0].mxu0
    %v5496 = vadd.f32 0.0, %v5495
    %5497 = vmatprep.mubr.bf16.mxu0 %v4071
    %5498 = vmatmul.mubr.bf16.gmra.mrb[0].mxu0 %v4070
    %v5499 = vpop.f32.mrb[0].mxu0
    %v5500 = vadd.f32 0.0, %v5499
    %v5501 = vpop.f32.mrb[0].mxu0
    %v5502 = vadd.f32 0.0, %v5501
    %v5503 = vpop.f32.mrb[0].mxu0
    %v5504 = vadd.f32 0.0, %v5503
    %v5505 = vpop.f32.mrb[0].mxu0
    %v5506 = vadd.f32 0.0, %v5505
    %5507 = vmatprep.mubr.bf16.mxu0 %v4073
    %5508 = vmatmul.mubr.bf16.gmra.mrb[0].mxu0 %v4072
    %v5509 = vpop.f32.mrb[0].mxu0
    %v5510 = vadd.f32 0.0, %v5509
    %v5511 = vpop.f32.mrb[0].mxu0
    %v5512 = vadd.f32 0.0, %v5511
    %v5513 = vpop.f32.mrb[0].mxu0
    %v5514 = vadd.f32 0.0, %v5513
    %v5515 = vpop.f32.mrb[0].mxu0
    %v5516 = vadd.f32 0.0, %v5515
    %5517 = vmatprep.mubr.bf16.mxu0 %v4075
    %5518 = vmatmul.mubr.bf16.gmra.mrb[0].mxu0 %v4074
    %v5519 = vpop.f32.mrb[0].mxu0
    %v5520 = vadd.f32 0.0, %v5519
    %v5521 = vpop.f32.mrb[0].mxu0
    %v5522 = vadd.f32 0.0, %v5521
    %v5523 = vpop.f32.mrb[0].mxu0
    %v5524 = vadd.f32 0.0, %v5523
    %v5525 = vpop.f32.mrb[0].mxu0
    %v5526 = vadd.f32 0.0, %v5525
    %5527 = vmatprep.mubr.bf16.mxu0 %v4077
    %5528 = vmatmul.mubr.bf16.gmra.mrb[0].mxu0 %v4076
    %v5529 = vpop.f32.mrb[0].mxu0
    %v5530 = vadd.f32 0.0, %v5529
    %v5531 = vpop.f32.mrb[0].mxu0
    %v5532 = vadd.f32 0.0, %v5531
    %v5533 = vpop.f32.mrb[0].mxu0
    %v5534 = vadd.f32 0.0, %v5533
    %v5535 = vpop.f32.mrb[0].mxu0
    %v5536 = vadd.f32 0.0, %v5535
    %5537 = vmatprep.mubr.bf16.mxu0 %v4079
    %5538 = vmatmul.mubr.bf16.gmra.mrb[0].mxu0 %v4078
    %v5539 = vpop.f32.mrb[0].mxu0
    %v5540 = vadd.f32 0.0, %v5539
    %v5541 = vpop.f32.mrb[0].mxu0
    %v5542 = vadd.f32 0.0, %v5541
    %v5543 = vpop.f32.mrb[0].mxu0
    %v5544 = vadd.f32 0.0, %v5543
    %v5545 = vpop.f32.mrb[0].mxu0
    %v5546 = vadd.f32 0.0, %v5545
    %5547 = vmatprep.mubr.bf16.mxu0 %v4081
    %5548 = vmatmul.mubr.bf16.gmra.mrb[0].mxu0 %v4080
    %v5549 = vpop.f32.mrb[0].mxu0
    %v5550 = vadd.f32 0.0, %v5549
    %v5551 = vpop.f32.mrb[0].mxu0
    %v5552 = vadd.f32 0.0, %v5551
    %v5553 = vpop.f32.mrb[0].mxu0
    %v5554 = vadd.f32 0.0, %v5553
    %v5555 = vpop.f32.mrb[0].mxu0
    %v5556 = vadd.f32 0.0, %v5555
    %5557 = vmatprep.mubr.bf16.mxu0 %v4083
    %5558 = vmatmul.mubr.bf16.gmra.mrb[0].mxu0 %v4082
    %v5559 = vpop.f32.mrb[0].mxu0
    %v5560 = vadd.f32 0.0, %v5559
    %v5561 = vpop.f32.mrb[0].mxu0
    %v5562 = vadd.f32 0.0, %v5561
    %v5563 = vpop.f32.mrb[0].mxu0
    %v5564 = vadd.f32 0.0, %v5563
    %v5565 = vpop.f32.mrb[0].mxu0
    %v5566 = vadd.f32 0.0, %v5565
    %5567 = vmatprep.mubr.bf16.mxu0 %v4085
    %5568 = vmatmul.mubr.bf16.gmra.mrb[0].mxu0 %v4084
    %v5569 = vpop.f32.mrb[0].mxu0
    %v5570 = vadd.f32 0.0, %v5569
    %v5571 = vpop.f32.mrb[0].mxu0
    %v5572 = vadd.f32 0.0, %v5571
    %v5573 = vpop.f32.mrb[0].mxu0
    %v5574 = vadd.f32 0.0, %v5573
    %v5575 = vpop.f32.mrb[0].mxu0
    %v5576 = vadd.f32 0.0, %v5575
    %5577 = vmatprep.mubr.bf16.mxu0 %v4087
    %5578 = vmatmul.mubr.bf16.gmra.mrb[0].mxu0 %v4086
    %v5579 = vpop.f32.mrb[0].mxu0
    %v5580 = vadd.f32 0.0, %v5579
    %v5581 = vpop.f32.mrb[0].mxu0
    %v5582 = vadd.f32 0.0, %v5581
    %v5583 = vpop.f32.mrb[0].mxu0
    %v5584 = vadd.f32 0.0, %v5583
    %v5585 = vpop.f32.mrb[0].mxu0
    %v5586 = vadd.f32 0.0, %v5585
    %5587 = vmatprep.mubr.bf16.mxu0 %v4089
    %5588 = vmatmul.mubr.bf16.gmra.mrb[0].mxu0 %v4088
    %v5589 = vpop.f32.mrb[0].mxu0
    %v5590 = vadd.f32 0.0, %v5589
    %v5591 = vpop.f32.mrb[0].mxu0
    %v5592 = vadd.f32 0.0, %v5591
    %v5593 = vpop.f32.mrb[0].mxu0
    %v5594 = vadd.f32 0.0, %v5593
    %v5595 = vpop.f32.mrb[0].mxu0
    %v5596 = vadd.f32 0.0, %v5595
    %5597 = vmatprep.mubr.bf16.mxu0 %v4091
    %5598 = vmatmul.mubr.bf16.gmra.mrb[0].mxu0 %v4090
    %v5599 = vpop.f32.mrb[0].mxu0
    %v5600 = vadd.f32 0.0, %v5599
    %v5601 = vpop.f32.mrb[0].mxu0
    %v5602 = vadd.f32 0.0, %v5601
    %v5603 = vpop.f32.mrb[0].mxu0
    %v5604 = vadd.f32 0.0, %v5603
    %v5605 = vpop.f32.mrb[0].mxu0
    %v5606 = vadd.f32 0.0, %v5605
    %5607 = vmatprep.mubr.bf16.mxu0 %v4093
    %5608 = vmatmul.mubr.bf16.gmra.mrb[0].mxu0 %v4092
    %v5609 = vpop.f32.mrb[0].mxu0
    %v5610 = vadd.f32 0.0, %v5609
    %v5611 = vpop.f32.mrb[0].mxu0
    %v5612 = vadd.f32 0.0, %v5611
    %v5613 = vpop.f32.mrb[0].mxu0
    %v5614 = vadd.f32 0.0, %v5613
    %v5615 = vpop.f32.mrb[0].mxu0
    %v5616 = vadd.f32 0.0, %v5615
    %5617 = vmatprep.mubr.bf16.mxu0 %v4095
    %5618 = vmatmul.mubr.bf16.gmra.mrb[0].mxu0 %v4094
    %v5619 = vpop.f32.mrb[0].mxu0
    %v5620 = vadd.f32 0.0, %v5619
    %v5621 = vpop.f32.mrb[0].mxu0
    %v5622 = vadd.f32 0.0, %v5621
    %v5623 = vpop.f32.mrb[0].mxu0
    %v5624 = vadd.f32 0.0, %v5623
    %v5625 = vpop.f32.mrb[0].mxu0
    %v5626 = vadd.f32 0.0, %v5625
    %5627 = vmatprep.mubr.bf16.mxu0 %v4097
    %5628 = vmatmul.mubr.bf16.gmra.mrb[0].mxu0 %v4096
    %v5629 = vpop.f32.mrb[0].mxu0
    %v5630 = vadd.f32 0.0, %v5629
    %v5631 = vpop.f32.mrb[0].mxu0
    %v5632 = vadd.f32 0.0, %v5631
    %v5633 = vpop.f32.mrb[0].mxu0
    %v5634 = vadd.f32 0.0, %v5633
    %v5635 = vpop.f32.mrb[0].mxu0
    %v5636 = vadd.f32 0.0, %v5635
    %5637 = vdwg.mxu0
    %v5638 = vadd.f32 %v3104, %v4901
    %v5639 = vadd.f32 %v3106, %v4903
    %v5640 = vadd.f32 %v3297, %v5094
    %v5641 = vadd.f32 %v3299, %v5096
    %v5642 = vadd.f32 %v3490, %v5287
    %v5643 = vadd.f32 %v3492, %v5289
    %v5644 = vadd.f32 %v3683, %v5480
    %v5645 = vadd.f32 %v3685, %v5482
    %v5646 = vadd.f32 %v3108, %v4905
    %v5647 = vadd.f32 %v3110, %v4907
    %v5648 = vadd.f32 %v3301, %v5098
    %v5649 = vadd.f32 %v3303, %v5100
    %v5650 = vadd.f32 %v3494, %v5291
    %v5651 = vadd.f32 %v3496, %v5293
    %v5652 = vadd.f32 %v3687, %v5484
    %v5653 = vadd.f32 %v3689, %v5486
    %v5654 = vadd.f32 %v3114, %v4911
    %v5655 = vadd.f32 %v3116, %v4913
    %v5656 = vadd.f32 %v3307, %v5104
    %v5657 = vadd.f32 %v3309, %v5106
    %v5658 = vadd.f32 %v3500, %v5297
    %v5659 = vadd.f32 %v3502, %v5299
    %v5660 = vadd.f32 %v3693, %v5490
    %v5661 = vadd.f32 %v3695, %v5492
    %v5662 = vadd.f32 %v3118, %v4915
    %v5663 = vadd.f32 %v3120, %v4917
    %v5664 = vadd.f32 %v3311, %v5108
    %v5665 = vadd.f32 %v3313, %v5110
    %v5666 = vadd.f32 %v3504, %v5301
    %v5667 = vadd.f32 %v3506, %v5303
    %v5668 = vadd.f32 %v3697, %v5494
    %v5669 = vadd.f32 %v3699, %v5496
    %v5670 = vadd.f32 %v3124, %v4921
    %v5671 = vadd.f32 %v3126, %v4923
    %v5672 = vadd.f32 %v3317, %v5114
    %v5673 = vadd.f32 %v3319, %v5116
    %v5674 = vadd.f32 %v3510, %v5307
    %v5675 = vadd.f32 %v3512, %v5309
    %v5676 = vadd.f32 %v3703, %v5500
    %v5677 = vadd.f32 %v3705, %v5502
    %v5678 = vadd.f32 %v3128, %v4925
    %v5679 = vadd.f32 %v3130, %v4927
    %v5680 = vadd.f32 %v3321, %v5118
    %v5681 = vadd.f32 %v3323, %v5120
    %v5682 = vadd.f32 %v3514, %v5311
    %v5683 = vadd.f32 %v3516, %v5313
    %v5684 = vadd.f32 %v3707, %v5504
    %v5685 = vadd.f32 %v3709, %v5506
    %v5686 = vadd.f32 %v3134, %v4931
    %v5687 = vadd.f32 %v3136, %v4933
    %v5688 = vadd.f32 %v3327, %v5124
    %v5689 = vadd.f32 %v3329, %v5126
    %v5690 = vadd.f32 %v3520, %v5317
    %v5691 = vadd.f32 %v3522, %v5319
    %v5692 = vadd.f32 %v3713, %v5510
    %v5693 = vadd.f32 %v3715, %v5512
    %v5694 = vadd.f32 %v3138, %v4935
    %v5695 = vadd.f32 %v3140, %v4937
    %v5696 = vadd.f32 %v3331, %v5128
    %v5697 = vadd.f32 %v3333, %v5130
    %v5698 = vadd.f32 %v3524, %v5321
    %v5699 = vadd.f32 %v3526, %v5323
    %v5700 = vadd.f32 %v3717, %v5514
    %v5701 = vadd.f32 %v3719, %v5516
    %v5702 = vadd.f32 %v3144, %v4941
    %v5703 = vadd.f32 %v3146, %v4943
    %v5704 = vadd.f32 %v3337, %v5134
    %v5705 = vadd.f32 %v3339, %v5136
    %v5706 = vadd.f32 %v3530, %v5327
    %v5707 = vadd.f32 %v3532, %v5329
    %v5708 = vadd.f32 %v3723, %v5520
    %v5709 = vadd.f32 %v3725, %v5522
    %v5710 = vadd.f32 %v3148, %v4945
    %v5711 = vadd.f32 %v3150, %v4947
    %v5712 = vadd.f32 %v3341, %v5138
    %v5713 = vadd.f32 %v3343, %v5140
    %v5714 = vadd.f32 %v3534, %v5331
    %v5715 = vadd.f32 %v3536, %v5333
    %v5716 = vadd.f32 %v3727, %v5524
    %v5717 = vadd.f32 %v3729, %v5526
    %v5718 = vadd.f32 %v3154, %v4951
    %v5719 = vadd.f32 %v3156, %v4953
    %v5720 = vadd.f32 %v3347, %v5144
    %v5721 = vadd.f32 %v3349, %v5146
    %v5722 = vadd.f32 %v3540, %v5337
    %v5723 = vadd.f32 %v3542, %v5339
    %v5724 = vadd.f32 %v3733, %v5530
    %v5725 = vadd.f32 %v3735, %v5532
    %v5726 = vadd.f32 %v3158, %v4955
    %v5727 = vadd.f32 %v3160, %v4957
    %v5728 = vadd.f32 %v3351, %v5148
    %v5729 = vadd.f32 %v3353, %v5150
    %v5730 = vadd.f32 %v3544, %v5341
    %v5731 = vadd.f32 %v3546, %v5343
    %v5732 = vadd.f32 %v3737, %v5534
    %v5733 = vadd.f32 %v3739, %v5536
    %v5734 = vadd.f32 %v3164, %v4961
    %v5735 = vadd.f32 %v3166, %v4963
    %v5736 = vadd.f32 %v3357, %v5154
    %v5737 = vadd.f32 %v3359, %v5156
    %v5738 = vadd.f32 %v3550, %v5347
    %v5739 = vadd.f32 %v3552, %v5349
    %v5740 = vadd.f32 %v3743, %v5540
    %v5741 = vadd.f32 %v3745, %v5542
    %v5742 = vadd.f32 %v3168, %v4965
    %v5743 = vadd.f32 %v3170, %v4967
    %v5744 = vadd.f32 %v3361, %v5158
    %v5745 = vadd.f32 %v3363, %v5160
    %v5746 = vadd.f32 %v3554, %v5351
    %v5747 = vadd.f32 %v3556, %v5353
    %v5748 = vadd.f32 %v3747, %v5544
    %v5749 = vadd.f32 %v3749, %v5546
    %v5750 = vadd.f32 %v3174, %v4971
    %v5751 = vadd.f32 %v3176, %v4973
    %v5752 = vadd.f32 %v3367, %v5164
    %v5753 = vadd.f32 %v3369, %v5166
    %v5754 = vadd.f32 %v3560, %v5357
    %v5755 = vadd.f32 %v3562, %v5359
    %v5756 = vadd.f32 %v3753, %v5550
    %v5757 = vadd.f32 %v3755, %v5552
    %v5758 = vadd.f32 %v3178, %v4975
    %v5759 = vadd.f32 %v3180, %v4977
    %v5760 = vadd.f32 %v3371, %v5168
    %v5761 = vadd.f32 %v3373, %v5170
    %v5762 = vadd.f32 %v3564, %v5361
    %v5763 = vadd.f32 %v3566, %v5363
    %v5764 = vadd.f32 %v3757, %v5554
    %v5765 = vadd.f32 %v3759, %v5556
    %v5766 = vadd.f32 %v3184, %v4981
    %v5767 = vadd.f32 %v3186, %v4983
    %v5768 = vadd.f32 %v3377, %v5174
    %v5769 = vadd.f32 %v3379, %v5176
    %v5770 = vadd.f32 %v3570, %v5367
    %v5771 = vadd.f32 %v3572, %v5369
    %v5772 = vadd.f32 %v3763, %v5560
    %v5773 = vadd.f32 %v3765, %v5562
    %v5774 = vadd.f32 %v3188, %v4985
    %v5775 = vadd.f32 %v3190, %v4987
    %v5776 = vadd.f32 %v3381, %v5178
    %v5777 = vadd.f32 %v3383, %v5180
    %v5778 = vadd.f32 %v3574, %v5371
    %v5779 = vadd.f32 %v3576, %v5373
    %v5780 = vadd.f32 %v3767, %v5564
    %v5781 = vadd.f32 %v3769, %v5566
    %v5782 = vadd.f32 %v3194, %v4991
    %v5783 = vadd.f32 %v3196, %v4993
    %v5784 = vadd.f32 %v3387, %v5184
    %v5785 = vadd.f32 %v3389, %v5186
    %v5786 = vadd.f32 %v3580, %v5377
    %v5787 = vadd.f32 %v3582, %v5379
    %v5788 = vadd.f32 %v3773, %v5570
    %v5789 = vadd.f32 %v3775, %v5572
    %v5790 = vadd.f32 %v3198, %v4995
    %v5791 = vadd.f32 %v3200, %v4997
    %v5792 = vadd.f32 %v3391, %v5188
    %v5793 = vadd.f32 %v3393, %v5190
    %v5794 = vadd.f32 %v3584, %v5381
    %v5795 = vadd.f32 %v3586, %v5383
    %v5796 = vadd.f32 %v3777, %v5574
    %v5797 = vadd.f32 %v3779, %v5576
    %v5798 = vadd.f32 %v3204, %v5001
    %v5799 = vadd.f32 %v3206, %v5003
    %v5800 = vadd.f32 %v3397, %v5194
    %v5801 = vadd.f32 %v3399, %v5196
    %v5802 = vadd.f32 %v3590, %v5387
    %v5803 = vadd.f32 %v3592, %v5389
    %v5804 = vadd.f32 %v3783, %v5580
    %v5805 = vadd.f32 %v3785, %v5582
    %v5806 = vadd.f32 %v3208, %v5005
    %v5807 = vadd.f32 %v3210, %v5007
    %v5808 = vadd.f32 %v3401, %v5198
    %v5809 = vadd.f32 %v3403, %v5200
    %v5810 = vadd.f32 %v3594, %v5391
    %v5811 = vadd.f32 %v3596, %v5393
    %v5812 = vadd.f32 %v3787, %v5584
    %v5813 = vadd.f32 %v3789, %v5586
    %v5814 = vadd.f32 %v3214, %v5011
    %v5815 = vadd.f32 %v3216, %v5013
    %v5816 = vadd.f32 %v3407, %v5204
    %v5817 = vadd.f32 %v3409, %v5206
    %v5818 = vadd.f32 %v3600, %v5397
    %v5819 = vadd.f32 %v3602, %v5399
    %v5820 = vadd.f32 %v3793, %v5590
    %v5821 = vadd.f32 %v3795, %v5592
    %v5822 = vadd.f32 %v3218, %v5015
    %v5823 = vadd.f32 %v3220, %v5017
    %v5824 = vadd.f32 %v3411, %v5208
    %v5825 = vadd.f32 %v3413, %v5210
    %v5826 = vadd.f32 %v3604, %v5401
    %v5827 = vadd.f32 %v3606, %v5403
    %v5828 = vadd.f32 %v3797, %v5594
    %v5829 = vadd.f32 %v3799, %v5596
    %v5830 = vadd.f32 %v3224, %v5021
    %v5831 = vadd.f32 %v3226, %v5023
    %v5832 = vadd.f32 %v3417, %v5214
    %v5833 = vadd.f32 %v3419, %v5216
    %v5834 = vadd.f32 %v3610, %v5407
    %v5835 = vadd.f32 %v3612, %v5409
    %v5836 = vadd.f32 %v3803, %v5600
    %v5837 = vadd.f32 %v3805, %v5602
    %v5838 = vadd.f32 %v3228, %v5025
    %v5839 = vadd.f32 %v3230, %v5027
    %v5840 = vadd.f32 %v3421, %v5218
    %v5841 = vadd.f32 %v3423, %v5220
    %v5842 = vadd.f32 %v3614, %v5411
    %v5843 = vadd.f32 %v3616, %v5413
    %v5844 = vadd.f32 %v3807, %v5604
    %v5845 = vadd.f32 %v3809, %v5606
    %v5846 = vadd.f32 %v3234, %v5031
    %v5847 = vadd.f32 %v3236, %v5033
    %v5848 = vadd.f32 %v3427, %v5224
    %v5849 = vadd.f32 %v3429, %v5226
    %v5850 = vadd.f32 %v3620, %v5417
    %v5851 = vadd.f32 %v3622, %v5419
    %v5852 = vadd.f32 %v3813, %v5610
    %v5853 = vadd.f32 %v3815, %v5612
    %v5854 = vadd.f32 %v3238, %v5035
    %v5855 = vadd.f32 %v3240, %v5037
    %v5856 = vadd.f32 %v3431, %v5228
    %v5857 = vadd.f32 %v3433, %v5230
    %v5858 = vadd.f32 %v3624, %v5421
    %v5859 = vadd.f32 %v3626, %v5423
    %v5860 = vadd.f32 %v3817, %v5614
    %v5861 = vadd.f32 %v3819, %v5616
    %v5862 = vadd.f32 %v3244, %v5041
    %v5863 = vadd.f32 %v3246, %v5043
    %v5864 = vadd.f32 %v3437, %v5234
    %v5865 = vadd.f32 %v3439, %v5236
    %v5866 = vadd.f32 %v3630, %v5427
    %v5867 = vadd.f32 %v3632, %v5429
    %v5868 = vadd.f32 %v3823, %v5620
    %v5869 = vadd.f32 %v3825, %v5622
    %v5870 = vadd.f32 %v3248, %v5045
    %v5871 = vadd.f32 %v3250, %v5047
    %v5872 = vadd.f32 %v3441, %v5238
    %v5873 = vadd.f32 %v3443, %v5240
    %v5874 = vadd.f32 %v3634, %v5431
    %v5875 = vadd.f32 %v3636, %v5433
    %v5876 = vadd.f32 %v3827, %v5624
    %v5877 = vadd.f32 %v3829, %v5626
    %v5878 = vadd.f32 %v3254, %v5051
    %v5879 = vadd.f32 %v3256, %v5053
    %v5880 = vadd.f32 %v3447, %v5244
    %v5881 = vadd.f32 %v3449, %v5246
    %v5882 = vadd.f32 %v3640, %v5437
    %v5883 = vadd.f32 %v3642, %v5439
    %v5884 = vadd.f32 %v3833, %v5630
    %v5885 = vadd.f32 %v3835, %v5632
    %v5886 = vadd.f32 %v3258, %v5055
    %v5887 = vadd.f32 %v3260, %v5057
    %v5888 = vadd.f32 %v3451, %v5248
    %v5889 = vadd.f32 %v3453, %v5250
    %v5890 = vadd.f32 %v3644, %v5441
    %v5891 = vadd.f32 %v3646, %v5443
    %v5892 = vadd.f32 %v3837, %v5634
    %v5893 = vadd.f32 %v3839, %v5636
    %v5894 = vld [vmem:[#allocation6 + $0x6] sm:$0x3]
    %v5895 = vunpack.c.l.bf16 %v5894
    %v5897 = vlaneseq
    %v5898 = vshrl.u32 %v5897, 7
    %v5899 = vsub.s32 0, %v5898
    %v5900 = vrot.slane %v5895, %v5899
    %v5901 = vlaneseq
    %v5902 = vshrl.u32 %v5901, 7
    %v5903 = vsub.s32 2, %v5902
    %v5904 = vrot.slane %v5895, %v5903
    %v5907 = vlaneseq
    %v5908 = vshrl.u32 %v5907, 7
    %v5909 = vsub.s32 0, %v5908
    %v5910 = vrot.slane %v5900, %v5909
    %v5911 = vlaneseq
    %v5912 = vshrl.u32 %v5911, 7
    %v5913 = vsub.s32 0, %v5912
    %v5914 = vrot.slane %v5904, %v5913
    %v5915 = vmul.f32 %v119, %v5910
    %v5916 = vmul.f32 %v119, %v5914
    %v5917 = vmul.f32 %v123, %v5910
    %v5918 = vmul.f32 %v123, %v5914
    %v5919 = vmul.f32 %v127, %v5910
    %v5920 = vmul.f32 %v127, %v5914
    %v5921 = vmul.f32 %v131, %v5910
    %v5922 = vmul.f32 %v131, %v5914
    %v5923 = vmul.f32 %v135, %v5910
    %v5924 = vmul.f32 %v135, %v5914
    %v5925 = vmul.f32 %v139, %v5910
    %v5926 = vmul.f32 %v139, %v5914
    %v5927 = vmul.f32 %v143, %v5910
    %v5928 = vmul.f32 %v143, %v5914
    %v5929 = vmul.f32 %v147, %v5910
    %v5930 = vmul.f32 %v147, %v5914
    %v5931 = vmul.f32 %v151, %v5910
    %v5932 = vmul.f32 %v151, %v5914
    %v5933 = vmul.f32 %v155, %v5910
    %v5934 = vmul.f32 %v155, %v5914
    %v5935 = vmul.f32 %v159, %v5910
    %v5936 = vmul.f32 %v159, %v5914
    %v5937 = vmul.f32 %v163, %v5910
    %v5938 = vmul.f32 %v163, %v5914
    %v5939 = vmul.f32 %v167, %v5910
    %v5940 = vmul.f32 %v167, %v5914
    %v5941 = vmul.f32 %v171, %v5910
    %v5942 = vmul.f32 %v171, %v5914
    %v5943 = vmul.f32 %v175, %v5910
    %v5944 = vmul.f32 %v175, %v5914
    %v5945 = vmul.f32 %v179, %v5910
    %v5946 = vmul.f32 %v179, %v5914
    %v5947 = vmul.f32 %v186, %v5910
    %v5948 = vmul.f32 %v186, %v5914
    %v5949 = vmul.f32 %v190, %v5910
    %v5950 = vmul.f32 %v190, %v5914
    %v5951 = vmul.f32 %v194, %v5910
    %v5952 = vmul.f32 %v194, %v5914
    %v5953 = vmul.f32 %v198, %v5910
    %v5954 = vmul.f32 %v198, %v5914
    %v5955 = vmul.f32 %v202, %v5910
    %v5956 = vmul.f32 %v202, %v5914
    %v5957 = vmul.f32 %v206, %v5910
    %v5958 = vmul.f32 %v206, %v5914
    %v5959 = vmul.f32 %v210, %v5910
    %v5960 = vmul.f32 %v210, %v5914
    %v5961 = vmul.f32 %v214, %v5910
    %v5962 = vmul.f32 %v214, %v5914
    %v5963 = vmul.f32 %v218, %v5910
    %v5964 = vmul.f32 %v218, %v5914
    %v5965 = vmul.f32 %v222, %v5910
    %v5966 = vmul.f32 %v222, %v5914
    %v5967 = vmul.f32 %v226, %v5910
    %v5968 = vmul.f32 %v226, %v5914
    %v5969 = vmul.f32 %v230, %v5910
    %v5970 = vmul.f32 %v230, %v5914
    %v5971 = vmul.f32 %v234, %v5910
    %v5972 = vmul.f32 %v234, %v5914
    %v5973 = vmul.f32 %v238, %v5910
    %v5974 = vmul.f32 %v238, %v5914
    %v5975 = vmul.f32 %v242, %v5910
    %v5976 = vmul.f32 %v242, %v5914
    %v5977 = vmul.f32 %v246, %v5910
    %v5978 = vmul.f32 %v246, %v5914
    %v5979 = vld [vmem:[#allocation8 + $0x6] sm:$0x3]
    %v5981 = vlaneseq
    %v5982 = vshrl.u32 %v5981, 7
    %v5983 = vsub.s32 0, %v5982
    %v5984 = vrot.slane %v5979, %v5983
    %v5985 = vlaneseq
    %v5986 = vshrl.u32 %v5985, 7
    %v5987 = vsub.s32 1, %v5986
    %v5988 = vrot.slane %v5979, %v5987
    %v5991 = vadd.f32 %v5915, %v5984
    %v5992 = vadd.f32 %v5916, %v5988
    %v5993 = vadd.f32 %v5917, %v5984
    %v5994 = vadd.f32 %v5918, %v5988
    %v5995 = vadd.f32 %v5919, %v5984
    %v5996 = vadd.f32 %v5920, %v5988
    %v5997 = vadd.f32 %v5921, %v5984
    %v5998 = vadd.f32 %v5922, %v5988
    %v5999 = vadd.f32 %v5923, %v5984
    %v6000 = vadd.f32 %v5924, %v5988
    %v6001 = vadd.f32 %v5925, %v5984
    %v6002 = vadd.f32 %v5926, %v5988
    %v6003 = vadd.f32 %v5927, %v5984
    %v6004 = vadd.f32 %v5928, %v5988
    %v6005 = vadd.f32 %v5929, %v5984
    %v6006 = vadd.f32 %v5930, %v5988
    %v6007 = vadd.f32 %v5931, %v5984
    %v6008 = vadd.f32 %v5932, %v5988
    %v6009 = vadd.f32 %v5933, %v5984
    %v6010 = vadd.f32 %v5934, %v5988
    %v6011 = vadd.f32 %v5935, %v5984
    %v6012 = vadd.f32 %v5936, %v5988
    %v6013 = vadd.f32 %v5937, %v5984
    %v6014 = vadd.f32 %v5938, %v5988
    %v6015 = vadd.f32 %v5939, %v5984
    %v6016 = vadd.f32 %v5940, %v5988
    %v6017 = vadd.f32 %v5941, %v5984
    %v6018 = vadd.f32 %v5942, %v5988
    %v6019 = vadd.f32 %v5943, %v5984
    %v6020 = vadd.f32 %v5944, %v5988
    %v6021 = vadd.f32 %v5945, %v5984
    %v6022 = vadd.f32 %v5946, %v5988
    %v6023 = vadd.f32 %v5947, %v5984
    %v6024 = vadd.f32 %v5948, %v5988
    %v6025 = vadd.f32 %v5949, %v5984
    %v6026 = vadd.f32 %v5950, %v5988
    %v6027 = vadd.f32 %v5951, %v5984
    %v6028 = vadd.f32 %v5952, %v5988
    %v6029 = vadd.f32 %v5953, %v5984
    %v6030 = vadd.f32 %v5954, %v5988
    %v6031 = vadd.f32 %v5955, %v5984
    %v6032 = vadd.f32 %v5956, %v5988
    %v6033 = vadd.f32 %v5957, %v5984
    %v6034 = vadd.f32 %v5958, %v5988
    %v6035 = vadd.f32 %v5959, %v5984
    %v6036 = vadd.f32 %v5960, %v5988
    %v6037 = vadd.f32 %v5961, %v5984
    %v6038 = vadd.f32 %v5962, %v5988
    %v6039 = vadd.f32 %v5963, %v5984
    %v6040 = vadd.f32 %v5964, %v5988
    %v6041 = vadd.f32 %v5965, %v5984
    %v6042 = vadd.f32 %v5966, %v5988
    %v6043 = vadd.f32 %v5967, %v5984
    %v6044 = vadd.f32 %v5968, %v5988
    %v6045 = vadd.f32 %v5969, %v5984
    %v6046 = vadd.f32 %v5970, %v5988
    %v6047 = vadd.f32 %v5971, %v5984
    %v6048 = vadd.f32 %v5972, %v5988
    %v6049 = vadd.f32 %v5973, %v5984
    %v6050 = vadd.f32 %v5974, %v5988
    %v6051 = vadd.f32 %v5975, %v5984
    %v6052 = vadd.f32 %v5976, %v5988
    %v6053 = vadd.f32 %v5977, %v5984
    %v6054 = vadd.f32 %v5978, %v5988
    %v6055 = vmax.f32 %v5991, 0.0
    %v6056 = vmax.f32 %v5992, 0.0
    %v6057 = vmax.f32 %v5993, 0.0
    %v6058 = vmax.f32 %v5994, 0.0
    %v6059 = vmax.f32 %v5995, 0.0
    %v6060 = vmax.f32 %v5996, 0.0
    %v6061 = vmax.f32 %v5997, 0.0
    %v6062 = vmax.f32 %v5998, 0.0
    %v6063 = vmax.f32 %v5999, 0.0
    %v6064 = vmax.f32 %v6000, 0.0
    %v6065 = vmax.f32 %v6001, 0.0
    %v6066 = vmax.f32 %v6002, 0.0
    %v6067 = vmax.f32 %v6003, 0.0
    %v6068 = vmax.f32 %v6004, 0.0
    %v6069 = vmax.f32 %v6005, 0.0
    %v6070 = vmax.f32 %v6006, 0.0
    %v6071 = vmax.f32 %v6007, 0.0
    %v6072 = vmax.f32 %v6008, 0.0
    %v6073 = vmax.f32 %v6009, 0.0
    %v6074 = vmax.f32 %v6010, 0.0
    %v6075 = vmax.f32 %v6011, 0.0
    %v6076 = vmax.f32 %v6012, 0.0
    %v6077 = vmax.f32 %v6013, 0.0
    %v6078 = vmax.f32 %v6014, 0.0
    %v6079 = vmax.f32 %v6015, 0.0
    %v6080 = vmax.f32 %v6016, 0.0
    %v6081 = vmax.f32 %v6017, 0.0
    %v6082 = vmax.f32 %v6018, 0.0
    %v6083 = vmax.f32 %v6019, 0.0
    %v6084 = vmax.f32 %v6020, 0.0
    %v6085 = vmax.f32 %v6021, 0.0
    %v6086 = vmax.f32 %v6022, 0.0
    %v6087 = vmax.f32 %v6023, 0.0
    %v6088 = vmax.f32 %v6024, 0.0
    %v6089 = vmax.f32 %v6025, 0.0
    %v6090 = vmax.f32 %v6026, 0.0
    %v6091 = vmax.f32 %v6027, 0.0
    %v6092 = vmax.f32 %v6028, 0.0
    %v6093 = vmax.f32 %v6029, 0.0
    %v6094 = vmax.f32 %v6030, 0.0
    %v6095 = vmax.f32 %v6031, 0.0
    %v6096 = vmax.f32 %v6032, 0.0
    %v6097 = vmax.f32 %v6033, 0.0
    %v6098 = vmax.f32 %v6034, 0.0
    %v6099 = vmax.f32 %v6035, 0.0
    %v6100 = vmax.f32 %v6036, 0.0
    %v6101 = vmax.f32 %v6037, 0.0
    %v6102 = vmax.f32 %v6038, 0.0
    %v6103 = vmax.f32 %v6039, 0.0
    %v6104 = vmax.f32 %v6040, 0.0
    %v6105 = vmax.f32 %v6041, 0.0
    %v6106 = vmax.f32 %v6042, 0.0
    %v6107 = vmax.f32 %v6043, 0.0
    %v6108 = vmax.f32 %v6044, 0.0
    %v6109 = vmax.f32 %v6045, 0.0
    %v6110 = vmax.f32 %v6046, 0.0
    %v6111 = vmax.f32 %v6047, 0.0
    %v6112 = vmax.f32 %v6048, 0.0
    %v6113 = vmax.f32 %v6049, 0.0
    %v6114 = vmax.f32 %v6050, 0.0
    %v6115 = vmax.f32 %v6051, 0.0
    %v6116 = vmax.f32 %v6052, 0.0
    %v6117 = vmax.f32 %v6053, 0.0
    %v6118 = vmax.f32 %v6054, 0.0
    %v6119 = vpack.c.bf16 %v6057, %v6055
    %v6120 = vpack.c.bf16 %v6058, %v6056
    %v6121 = vpack.c.bf16 %v6061, %v6059
    %v6122 = vpack.c.bf16 %v6062, %v6060
    %v6123 = vpack.c.bf16 %v6065, %v6063
    %v6124 = vpack.c.bf16 %v6066, %v6064
    %v6125 = vpack.c.bf16 %v6069, %v6067
    %v6126 = vpack.c.bf16 %v6070, %v6068
    %v6127 = vpack.c.bf16 %v6073, %v6071
    %v6128 = vpack.c.bf16 %v6074, %v6072
    %v6129 = vpack.c.bf16 %v6077, %v6075
    %v6130 = vpack.c.bf16 %v6078, %v6076
    %v6131 = vpack.c.bf16 %v6081, %v6079
    %v6132 = vpack.c.bf16 %v6082, %v6080
    %v6133 = vpack.c.bf16 %v6085, %v6083
    %v6134 = vpack.c.bf16 %v6086, %v6084
    %v6135 = vpack.c.bf16 %v6089, %v6087
    %v6136 = vpack.c.bf16 %v6090, %v6088
    %v6137 = vpack.c.bf16 %v6093, %v6091
    %v6138 = vpack.c.bf16 %v6094, %v6092
    %v6139 = vpack.c.bf16 %v6097, %v6095
    %v6140 = vpack.c.bf16 %v6098, %v6096
    %v6141 = vpack.c.bf16 %v6101, %v6099
    %v6142 = vpack.c.bf16 %v6102, %v6100
    %v6143 = vpack.c.bf16 %v6105, %v6103
    %v6144 = vpack.c.bf16 %v6106, %v6104
    %v6145 = vpack.c.bf16 %v6109, %v6107
    %v6146 = vpack.c.bf16 %v6110, %v6108
    %v6147 = vpack.c.bf16 %v6113, %v6111
    %v6148 = vpack.c.bf16 %v6114, %v6112
    %v6149 = vpack.c.bf16 %v6117, %v6115
    %v6150 = vpack.c.bf16 %v6118, %v6116
    %v6151 = vld [vmem:[#allocation9 + $0xc00] sm:$0xff]
    %v6152 = vld [vmem:[#allocation9 + $0xc08] sm:$0xff]
    %v6153 = vld [vmem:[#allocation9 + $0xc10] sm:$0xff]
    %v6154 = vld [vmem:[#allocation9 + $0xc18] sm:$0xff]
    %v6155 = vld [vmem:[#allocation9 + $0xc20] sm:$0xff]
    %v6156 = vld [vmem:[#allocation9 + $0xc28] sm:$0xff]
    %v6157 = vld [vmem:[#allocation9 + $0xc30] sm:$0xff]
    %v6158 = vld [vmem:[#allocation9 + $0xc38] sm:$0xff]
    %v6159 = vld [vmem:[#allocation9 + $0xc40] sm:$0xff]
    %v6160 = vld [vmem:[#allocation9 + $0xc48] sm:$0xff]
    %v6161 = vld [vmem:[#allocation9 + $0xc50] sm:$0xff]
    %v6162 = vld [vmem:[#allocation9 + $0xc58] sm:$0xff]
    %v6163 = vld [vmem:[#allocation9 + $0xc60] sm:$0xff]
    %v6164 = vld [vmem:[#allocation9 + $0xc68] sm:$0xff]
    %v6165 = vld [vmem:[#allocation9 + $0xc70] sm:$0xff]
    %v6166 = vld [vmem:[#allocation9 + $0xc78] sm:$0xff]
    %v6167 = vld [vmem:[#allocation9 + $0xc80] sm:$0xff]
    %v6168 = vld [vmem:[#allocation9 + $0xc88] sm:$0xff]
    %v6169 = vld [vmem:[#allocation9 + $0xc90] sm:$0xff]
    %v6170 = vld [vmem:[#allocation9 + $0xc98] sm:$0xff]
    %v6171 = vld [vmem:[#allocation9 + $0xca0] sm:$0xff]
    %v6172 = vld [vmem:[#allocation9 + $0xca8] sm:$0xff]
    %v6173 = vld [vmem:[#allocation9 + $0xcb0] sm:$0xff]
    %v6174 = vld [vmem:[#allocation9 + $0xcb8] sm:$0xff]
    %v6175 = vld [vmem:[#allocation9 + $0xcc0] sm:$0xff]
    %v6176 = vld [vmem:[#allocation9 + $0xcc8] sm:$0xff]
    %v6177 = vld [vmem:[#allocation9 + $0xcd0] sm:$0xff]
    %v6178 = vld [vmem:[#allocation9 + $0xcd8] sm:$0xff]
    %v6179 = vld [vmem:[#allocation9 + $0xce0] sm:$0xff]
    %v6180 = vld [vmem:[#allocation9 + $0xce8] sm:$0xff]
    %v6181 = vld [vmem:[#allocation9 + $0xcf0] sm:$0xff]
    %v6182 = vld [vmem:[#allocation9 + $0xcf8] sm:$0xff]
    %v6183 = vld [vmem:[#allocation9 + $0xd00] sm:$0xff]
    %v6184 = vld [vmem:[#allocation9 + $0xd08] sm:$0xff]
    %v6185 = vld [vmem:[#allocation9 + $0xd10] sm:$0xff]
    %v6186 = vld [vmem:[#allocation9 + $0xd18] sm:$0xff]
    %v6187 = vld [vmem:[#allocation9 + $0xd20] sm:$0xff]
    %v6188 = vld [vmem:[#allocation9 + $0xd28] sm:$0xff]
    %v6189 = vld [vmem:[#allocation9 + $0xd30] sm:$0xff]
    %v6190 = vld [vmem:[#allocation9 + $0xd38] sm:$0xff]
    %v6191 = vld [vmem:[#allocation9 + $0xd40] sm:$0xff]
    %v6192 = vld [vmem:[#allocation9 + $0xd48] sm:$0xff]
    %v6193 = vld [vmem:[#allocation9 + $0xd50] sm:$0xff]
    %v6194 = vld [vmem:[#allocation9 + $0xd58] sm:$0xff]
    %v6195 = vld [vmem:[#allocation9 + $0xd60] sm:$0xff]
    %v6196 = vld [vmem:[#allocation9 + $0xd68] sm:$0xff]
    %v6197 = vld [vmem:[#allocation9 + $0xd70] sm:$0xff]
    %v6198 = vld [vmem:[#allocation9 + $0xd78] sm:$0xff]
    %v6199 = vld [vmem:[#allocation9 + $0xd80] sm:$0xff]
    %v6200 = vld [vmem:[#allocation9 + $0xd88] sm:$0xff]
    %v6201 = vld [vmem:[#allocation9 + $0xd90] sm:$0xff]
    %v6202 = vld [vmem:[#allocation9 + $0xd98] sm:$0xff]
    %v6203 = vld [vmem:[#allocation9 + $0xda0] sm:$0xff]
    %v6204 = vld [vmem:[#allocation9 + $0xda8] sm:$0xff]
    %v6205 = vld [vmem:[#allocation9 + $0xdb0] sm:$0xff]
    %v6206 = vld [vmem:[#allocation9 + $0xdb8] sm:$0xff]
    %v6207 = vld [vmem:[#allocation9 + $0xdc0] sm:$0xff]
    %v6208 = vld [vmem:[#allocation9 + $0xdc8] sm:$0xff]
    %v6209 = vld [vmem:[#allocation9 + $0xdd0] sm:$0xff]
    %v6210 = vld [vmem:[#allocation9 + $0xdd8] sm:$0xff]
    %v6211 = vld [vmem:[#allocation9 + $0xde0] sm:$0xff]
    %v6212 = vld [vmem:[#allocation9 + $0xde8] sm:$0xff]
    %v6213 = vld [vmem:[#allocation9 + $0xdf0] sm:$0xff]
    %v6214 = vld [vmem:[#allocation9 + $0xdf8] sm:$0xff]
    %v6215 = vld [vmem:[#allocation9 + $0xe00] sm:$0xff]
    %v6216 = vld [vmem:[#allocation9 + $0xe08] sm:$0xff]
    %v6217 = vld [vmem:[#allocation9 + $0xe10] sm:$0xff]
    %v6218 = vld [vmem:[#allocation9 + $0xe18] sm:$0xff]
    %v6219 = vld [vmem:[#allocation9 + $0xe20] sm:$0xff]
    %v6220 = vld [vmem:[#allocation9 + $0xe28] sm:$0xff]
    %v6221 = vld [vmem:[#allocation9 + $0xe30] sm:$0xff]
    %v6222 = vld [vmem:[#allocation9 + $0xe38] sm:$0xff]
    %v6223 = vld [vmem:[#allocation9 + $0xe40] sm:$0xff]
    %v6224 = vld [vmem:[#allocation9 + $0xe48] sm:$0xff]
    %v6225 = vld [vmem:[#allocation9 + $0xe50] sm:$0xff]
    %v6226 = vld [vmem:[#allocation9 + $0xe58] sm:$0xff]
    %v6227 = vld [vmem:[#allocation9 + $0xe60] sm:$0xff]
    %v6228 = vld [vmem:[#allocation9 + $0xe68] sm:$0xff]
    %v6229 = vld [vmem:[#allocation9 + $0xe70] sm:$0xff]
    %v6230 = vld [vmem:[#allocation9 + $0xe78] sm:$0xff]
    %v6231 = vld [vmem:[#allocation9 + $0xe80] sm:$0xff]
    %v6232 = vld [vmem:[#allocation9 + $0xe88] sm:$0xff]
    %v6233 = vld [vmem:[#allocation9 + $0xe90] sm:$0xff]
    %v6234 = vld [vmem:[#allocation9 + $0xe98] sm:$0xff]
    %v6235 = vld [vmem:[#allocation9 + $0xea0] sm:$0xff]
    %v6236 = vld [vmem:[#allocation9 + $0xea8] sm:$0xff]
    %v6237 = vld [vmem:[#allocation9 + $0xeb0] sm:$0xff]
    %v6238 = vld [vmem:[#allocation9 + $0xeb8] sm:$0xff]
    %v6239 = vld [vmem:[#allocation9 + $0xec0] sm:$0xff]
    %v6240 = vld [vmem:[#allocation9 + $0xec8] sm:$0xff]
    %v6241 = vld [vmem:[#allocation9 + $0xed0] sm:$0xff]
    %v6242 = vld [vmem:[#allocation9 + $0xed8] sm:$0xff]
    %v6243 = vld [vmem:[#allocation9 + $0xee0] sm:$0xff]
    %v6244 = vld [vmem:[#allocation9 + $0xee8] sm:$0xff]
    %v6245 = vld [vmem:[#allocation9 + $0xef0] sm:$0xff]
    %v6246 = vld [vmem:[#allocation9 + $0xef8] sm:$0xff]
    %v6247 = vld [vmem:[#allocation9 + $0xf00] sm:$0xff]
    %v6248 = vld [vmem:[#allocation9 + $0xf08] sm:$0xff]
    %v6249 = vld [vmem:[#allocation9 + $0xf10] sm:$0xff]
    %v6250 = vld [vmem:[#allocation9 + $0xf18] sm:$0xff]
    %v6251 = vld [vmem:[#allocation9 + $0xf20] sm:$0xff]
    %v6252 = vld [vmem:[#allocation9 + $0xf28] sm:$0xff]
    %v6253 = vld [vmem:[#allocation9 + $0xf30] sm:$0xff]
    %v6254 = vld [vmem:[#allocation9 + $0xf38] sm:$0xff]
    %v6255 = vld [vmem:[#allocation9 + $0xf40] sm:$0xff]
    %v6256 = vld [vmem:[#allocation9 + $0xf48] sm:$0xff]
    %v6257 = vld [vmem:[#allocation9 + $0xf50] sm:$0xff]
    %v6258 = vld [vmem:[#allocation9 + $0xf58] sm:$0xff]
    %v6259 = vld [vmem:[#allocation9 + $0xf60] sm:$0xff]
    %v6260 = vld [vmem:[#allocation9 + $0xf68] sm:$0xff]
    %v6261 = vld [vmem:[#allocation9 + $0xf70] sm:$0xff]
    %v6262 = vld [vmem:[#allocation9 + $0xf78] sm:$0xff]
    %v6263 = vld [vmem:[#allocation9 + $0xf80] sm:$0xff]
    %v6264 = vld [vmem:[#allocation9 + $0xf88] sm:$0xff]
    %v6265 = vld [vmem:[#allocation9 + $0xf90] sm:$0xff]
    %v6266 = vld [vmem:[#allocation9 + $0xf98] sm:$0xff]
    %v6267 = vld [vmem:[#allocation9 + $0xfa0] sm:$0xff]
    %v6268 = vld [vmem:[#allocation9 + $0xfa8] sm:$0xff]
    %v6269 = vld [vmem:[#allocation9 + $0xfb0] sm:$0xff]
    %v6270 = vld [vmem:[#allocation9 + $0xfb8] sm:$0xff]
    %v6271 = vld [vmem:[#allocation9 + $0xfc0] sm:$0xff]
    %v6272 = vld [vmem:[#allocation9 + $0xfc8] sm:$0xff]
    %v6273 = vld [vmem:[#allocation9 + $0xfd0] sm:$0xff]
    %v6274 = vld [vmem:[#allocation9 + $0xfd8] sm:$0xff]
    %v6275 = vld [vmem:[#allocation9 + $0xfe0] sm:$0xff]
    %v6276 = vld [vmem:[#allocation9 + $0xfe8] sm:$0xff]
    %v6277 = vld [vmem:[#allocation9 + $0xff0] sm:$0xff]
    %v6278 = vld [vmem:[#allocation9 + $0xff8] sm:$0xff]
    %v6407 = vunpack.c.l.b16 %v6151
    %v6408 = vunpack.c.h.b16 %v6151
    %v6409 = vunpack.c.l.b16 %v6152
    %v6410 = vunpack.c.h.b16 %v6152
    %v6411 = vunpack.c.l.b16 %v6153
    %v6412 = vunpack.c.h.b16 %v6153
    %v6413 = vunpack.c.l.b16 %v6154
    %v6414 = vunpack.c.h.b16 %v6154
    %v6415 = vunpack.c.l.b16 %v6155
    %v6416 = vunpack.c.h.b16 %v6155
    %v6417 = vunpack.c.l.b16 %v6156
    %v6418 = vunpack.c.h.b16 %v6156
    %v6419 = vunpack.c.l.b16 %v6157
    %v6420 = vunpack.c.h.b16 %v6157
    %v6421 = vunpack.c.l.b16 %v6158
    %v6422 = vunpack.c.h.b16 %v6158
    %v6423 = vunpack.c.l.b16 %v6159
    %v6424 = vunpack.c.h.b16 %v6159
    %v6425 = vunpack.c.l.b16 %v6160
    %v6426 = vunpack.c.h.b16 %v6160
    %v6427 = vunpack.c.l.b16 %v6161
    %v6428 = vunpack.c.h.b16 %v6161
    %v6429 = vunpack.c.l.b16 %v6162
    %v6430 = vunpack.c.h.b16 %v6162
    %v6431 = vunpack.c.l.b16 %v6163
    %v6432 = vunpack.c.h.b16 %v6163
    %v6433 = vunpack.c.l.b16 %v6164
    %v6434 = vunpack.c.h.b16 %v6164
    %v6435 = vunpack.c.l.b16 %v6165
    %v6436 = vunpack.c.h.b16 %v6165
    %v6437 = vunpack.c.l.b16 %v6166
    %v6438 = vunpack.c.h.b16 %v6166
    %v6439 = vunpack.c.l.b16 %v6167
    %v6440 = vunpack.c.h.b16 %v6167
    %v6441 = vunpack.c.l.b16 %v6168
    %v6442 = vunpack.c.h.b16 %v6168
    %v6443 = vunpack.c.l.b16 %v6169
    %v6444 = vunpack.c.h.b16 %v6169
    %v6445 = vunpack.c.l.b16 %v6170
    %v6446 = vunpack.c.h.b16 %v6170
    %v6447 = vunpack.c.l.b16 %v6171
    %v6448 = vunpack.c.h.b16 %v6171
    %v6449 = vunpack.c.l.b16 %v6172
    %v6450 = vunpack.c.h.b16 %v6172
    %v6451 = vunpack.c.l.b16 %v6173
    %v6452 = vunpack.c.h.b16 %v6173
    %v6453 = vunpack.c.l.b16 %v6174
    %v6454 = vunpack.c.h.b16 %v6174
    %v6455 = vunpack.c.l.b16 %v6175
    %v6456 = vunpack.c.h.b16 %v6175
    %v6457 = vunpack.c.l.b16 %v6176
    %v6458 = vunpack.c.h.b16 %v6176
    %v6459 = vunpack.c.l.b16 %v6177
    %v6460 = vunpack.c.h.b16 %v6177
    %v6461 = vunpack.c.l.b16 %v6178
    %v6462 = vunpack.c.h.b16 %v6178
    %v6463 = vunpack.c.l.b16 %v6179
    %v6464 = vunpack.c.h.b16 %v6179
    %v6465 = vunpack.c.l.b16 %v6180
    %v6466 = vunpack.c.h.b16 %v6180
    %v6467 = vunpack.c.l.b16 %v6181
    %v6468 = vunpack.c.h.b16 %v6181
    %v6469 = vunpack.c.l.b16 %v6182
    %v6470 = vunpack.c.h.b16 %v6182
    %v6471 = vunpack.c.l.b16 %v6183
    %v6472 = vunpack.c.h.b16 %v6183
    %v6473 = vunpack.c.l.b16 %v6184
    %v6474 = vunpack.c.h.b16 %v6184
    %v6475 = vunpack.c.l.b16 %v6185
    %v6476 = vunpack.c.h.b16 %v6185
    %v6477 = vunpack.c.l.b16 %v6186
    %v6478 = vunpack.c.h.b16 %v6186
    %v6479 = vunpack.c.l.b16 %v6187
    %v6480 = vunpack.c.h.b16 %v6187
    %v6481 = vunpack.c.l.b16 %v6188
    %v6482 = vunpack.c.h.b16 %v6188
    %v6483 = vunpack.c.l.b16 %v6189
    %v6484 = vunpack.c.h.b16 %v6189
    %v6485 = vunpack.c.l.b16 %v6190
    %v6486 = vunpack.c.h.b16 %v6190
    %v6487 = vunpack.c.l.b16 %v6191
    %v6488 = vunpack.c.h.b16 %v6191
    %v6489 = vunpack.c.l.b16 %v6192
    %v6490 = vunpack.c.h.b16 %v6192
    %v6491 = vunpack.c.l.b16 %v6193
    %v6492 = vunpack.c.h.b16 %v6193
    %v6493 = vunpack.c.l.b16 %v6194
    %v6494 = vunpack.c.h.b16 %v6194
    %v6495 = vunpack.c.l.b16 %v6195
    %v6496 = vunpack.c.h.b16 %v6195
    %v6497 = vunpack.c.l.b16 %v6196
    %v6498 = vunpack.c.h.b16 %v6196
    %v6499 = vunpack.c.l.b16 %v6197
    %v6500 = vunpack.c.h.b16 %v6197
    %v6501 = vunpack.c.l.b16 %v6198
    %v6502 = vunpack.c.h.b16 %v6198
    %v6503 = vunpack.c.l.b16 %v6199
    %v6504 = vunpack.c.h.b16 %v6199
    %v6505 = vunpack.c.l.b16 %v6200
    %v6506 = vunpack.c.h.b16 %v6200
    %v6507 = vunpack.c.l.b16 %v6201
    %v6508 = vunpack.c.h.b16 %v6201
    %v6509 = vunpack.c.l.b16 %v6202
    %v6510 = vunpack.c.h.b16 %v6202
    %v6511 = vunpack.c.l.b16 %v6203
    %v6512 = vunpack.c.h.b16 %v6203
    %v6513 = vunpack.c.l.b16 %v6204
    %v6514 = vunpack.c.h.b16 %v6204
    %v6515 = vunpack.c.l.b16 %v6205
    %v6516 = vunpack.c.h.b16 %v6205
    %v6517 = vunpack.c.l.b16 %v6206
    %v6518 = vunpack.c.h.b16 %v6206
    %v6519 = vunpack.c.l.b16 %v6207
    %v6520 = vunpack.c.h.b16 %v6207
    %v6521 = vunpack.c.l.b16 %v6208
    %v6522 = vunpack.c.h.b16 %v6208
    %v6523 = vunpack.c.l.b16 %v6209
    %v6524 = vunpack.c.h.b16 %v6209
    %v6525 = vunpack.c.l.b16 %v6210
    %v6526 = vunpack.c.h.b16 %v6210
    %v6527 = vunpack.c.l.b16 %v6211
    %v6528 = vunpack.c.h.b16 %v6211
    %v6529 = vunpack.c.l.b16 %v6212
    %v6530 = vunpack.c.h.b16 %v6212
    %v6531 = vunpack.c.l.b16 %v6213
    %v6532 = vunpack.c.h.b16 %v6213
    %v6533 = vunpack.c.l.b16 %v6214
    %v6534 = vunpack.c.h.b16 %v6214
    %v6535 = vunpack.c.l.b16 %v6215
    %v6536 = vunpack.c.h.b16 %v6215
    %v6537 = vunpack.c.l.b16 %v6216
    %v6538 = vunpack.c.h.b16 %v6216
    %v6539 = vunpack.c.l.b16 %v6217
    %v6540 = vunpack.c.h.b16 %v6217
    %v6541 = vunpack.c.l.b16 %v6218
    %v6542 = vunpack.c.h.b16 %v6218
    %v6543 = vunpack.c.l.b16 %v6219
    %v6544 = vunpack.c.h.b16 %v6219
    %v6545 = vunpack.c.l.b16 %v6220
    %v6546 = vunpack.c.h.b16 %v6220
    %v6547 = vunpack.c.l.b16 %v6221
    %v6548 = vunpack.c.h.b16 %v6221
    %v6549 = vunpack.c.l.b16 %v6222
    %v6550 = vunpack.c.h.b16 %v6222
    %v6551 = vunpack.c.l.b16 %v6223
    %v6552 = vunpack.c.h.b16 %v6223
    %v6553 = vunpack.c.l.b16 %v6224
    %v6554 = vunpack.c.h.b16 %v6224
    %v6555 = vunpack.c.l.b16 %v6225
    %v6556 = vunpack.c.h.b16 %v6225
    %v6557 = vunpack.c.l.b16 %v6226
    %v6558 = vunpack.c.h.b16 %v6226
    %v6559 = vunpack.c.l.b16 %v6227
    %v6560 = vunpack.c.h.b16 %v6227
    %v6561 = vunpack.c.l.b16 %v6228
    %v6562 = vunpack.c.h.b16 %v6228
    %v6563 = vunpack.c.l.b16 %v6229
    %v6564 = vunpack.c.h.b16 %v6229
    %v6565 = vunpack.c.l.b16 %v6230
    %v6566 = vunpack.c.h.b16 %v6230
    %v6567 = vunpack.c.l.b16 %v6231
    %v6568 = vunpack.c.h.b16 %v6231
    %v6569 = vunpack.c.l.b16 %v6232
    %v6570 = vunpack.c.h.b16 %v6232
    %v6571 = vunpack.c.l.b16 %v6233
    %v6572 = vunpack.c.h.b16 %v6233
    %v6573 = vunpack.c.l.b16 %v6234
    %v6574 = vunpack.c.h.b16 %v6234
    %v6575 = vunpack.c.l.b16 %v6235
    %v6576 = vunpack.c.h.b16 %v6235
    %v6577 = vunpack.c.l.b16 %v6236
    %v6578 = vunpack.c.h.b16 %v6236
    %v6579 = vunpack.c.l.b16 %v6237
    %v6580 = vunpack.c.h.b16 %v6237
    %v6581 = vunpack.c.l.b16 %v6238
    %v6582 = vunpack.c.h.b16 %v6238
    %v6583 = vunpack.c.l.b16 %v6239
    %v6584 = vunpack.c.h.b16 %v6239
    %v6585 = vunpack.c.l.b16 %v6240
    %v6586 = vunpack.c.h.b16 %v6240
    %v6587 = vunpack.c.l.b16 %v6241
    %v6588 = vunpack.c.h.b16 %v6241
    %v6589 = vunpack.c.l.b16 %v6242
    %v6590 = vunpack.c.h.b16 %v6242
    %v6591 = vunpack.c.l.b16 %v6243
    %v6592 = vunpack.c.h.b16 %v6243
    %v6593 = vunpack.c.l.b16 %v6244
    %v6594 = vunpack.c.h.b16 %v6244
    %v6595 = vunpack.c.l.b16 %v6245
    %v6596 = vunpack.c.h.b16 %v6245
    %v6597 = vunpack.c.l.b16 %v6246
    %v6598 = vunpack.c.h.b16 %v6246
    %v6599 = vunpack.c.l.b16 %v6247
    %v6600 = vunpack.c.h.b16 %v6247
    %v6601 = vunpack.c.l.b16 %v6248
    %v6602 = vunpack.c.h.b16 %v6248
    %v6603 = vunpack.c.l.b16 %v6249
    %v6604 = vunpack.c.h.b16 %v6249
    %v6605 = vunpack.c.l.b16 %v6250
    %v6606 = vunpack.c.h.b16 %v6250
    %v6607 = vunpack.c.l.b16 %v6251
    %v6608 = vunpack.c.h.b16 %v6251
    %v6609 = vunpack.c.l.b16 %v6252
    %v6610 = vunpack.c.h.b16 %v6252
    %v6611 = vunpack.c.l.b16 %v6253
    %v6612 = vunpack.c.h.b16 %v6253
    %v6613 = vunpack.c.l.b16 %v6254
    %v6614 = vunpack.c.h.b16 %v6254
    %v6615 = vunpack.c.l.b16 %v6255
    %v6616 = vunpack.c.h.b16 %v6255
    %v6617 = vunpack.c.l.b16 %v6256
    %v6618 = vunpack.c.h.b16 %v6256
    %v6619 = vunpack.c.l.b16 %v6257
    %v6620 = vunpack.c.h.b16 %v6257
    %v6621 = vunpack.c.l.b16 %v6258
    %v6622 = vunpack.c.h.b16 %v6258
    %v6623 = vunpack.c.l.b16 %v6259
    %v6624 = vunpack.c.h.b16 %v6259
    %v6625 = vunpack.c.l.b16 %v6260
    %v6626 = vunpack.c.h.b16 %v6260
    %v6627 = vunpack.c.l.b16 %v6261
    %v6628 = vunpack.c.h.b16 %v6261
    %v6629 = vunpack.c.l.b16 %v6262
    %v6630 = vunpack.c.h.b16 %v6262
    %v6631 = vunpack.c.l.b16 %v6263
    %v6632 = vunpack.c.h.b16 %v6263
    %v6633 = vunpack.c.l.b16 %v6264
    %v6634 = vunpack.c.h.b16 %v6264
    %v6635 = vunpack.c.l.b16 %v6265
    %v6636 = vunpack.c.h.b16 %v6265
    %v6637 = vunpack.c.l.b16 %v6266
    %v6638 = vunpack.c.h.b16 %v6266
    %v6639 = vunpack.c.l.b16 %v6267
    %v6640 = vunpack.c.h.b16 %v6267
    %v6641 = vunpack.c.l.b16 %v6268
    %v6642 = vunpack.c.h.b16 %v6268
    %v6643 = vunpack.c.l.b16 %v6269
    %v6644 = vunpack.c.h.b16 %v6269
    %v6645 = vunpack.c.l.b16 %v6270
    %v6646 = vunpack.c.h.b16 %v6270
    %v6647 = vunpack.c.l.b16 %v6271
    %v6648 = vunpack.c.h.b16 %v6271
    %v6649 = vunpack.c.l.b16 %v6272
    %v6650 = vunpack.c.h.b16 %v6272
    %v6651 = vunpack.c.l.b16 %v6273
    %v6652 = vunpack.c.h.b16 %v6273
    %v6653 = vunpack.c.l.b16 %v6274
    %v6654 = vunpack.c.h.b16 %v6274
    %v6655 = vunpack.c.l.b16 %v6275
    %v6656 = vunpack.c.h.b16 %v6275
    %v6657 = vunpack.c.l.b16 %v6276
    %v6658 = vunpack.c.h.b16 %v6276
    %v6659 = vunpack.c.l.b16 %v6277
    %v6660 = vunpack.c.h.b16 %v6277
    %v6661 = vunpack.c.l.b16 %v6278
    %v6662 = vunpack.c.h.b16 %v6278
    %v6663 = vpack.c.b16 %v6415, %v6407
    %v6664 = vpack.c.b16 %v6416, %v6408
    %v6665 = vpack.c.b16 %v6417, %v6409
    %v6666 = vpack.c.b16 %v6418, %v6410
    %v6667 = vpack.c.b16 %v6419, %v6411
    %v6668 = vpack.c.b16 %v6420, %v6412
    %v6669 = vpack.c.b16 %v6421, %v6413
    %v6670 = vpack.c.b16 %v6422, %v6414
    %v6671 = vpack.c.b16 %v6431, %v6423
    %v6672 = vpack.c.b16 %v6432, %v6424
    %v6673 = vpack.c.b16 %v6433, %v6425
    %v6674 = vpack.c.b16 %v6434, %v6426
    %v6675 = vpack.c.b16 %v6435, %v6427
    %v6676 = vpack.c.b16 %v6436, %v6428
    %v6677 = vpack.c.b16 %v6437, %v6429
    %v6678 = vpack.c.b16 %v6438, %v6430
    %v6679 = vpack.c.b16 %v6447, %v6439
    %v6680 = vpack.c.b16 %v6448, %v6440
    %v6681 = vpack.c.b16 %v6449, %v6441
    %v6682 = vpack.c.b16 %v6450, %v6442
    %v6683 = vpack.c.b16 %v6451, %v6443
    %v6684 = vpack.c.b16 %v6452, %v6444
    %v6685 = vpack.c.b16 %v6453, %v6445
    %v6686 = vpack.c.b16 %v6454, %v6446
    %v6687 = vpack.c.b16 %v6463, %v6455
    %v6688 = vpack.c.b16 %v6464, %v6456
    %v6689 = vpack.c.b16 %v6465, %v6457
    %v6690 = vpack.c.b16 %v6466, %v6458
    %v6691 = vpack.c.b16 %v6467, %v6459
    %v6692 = vpack.c.b16 %v6468, %v6460
    %v6693 = vpack.c.b16 %v6469, %v6461
    %v6694 = vpack.c.b16 %v6470, %v6462
    %v6695 = vpack.c.b16 %v6479, %v6471
    %v6696 = vpack.c.b16 %v6480, %v6472
    %v6697 = vpack.c.b16 %v6481, %v6473
    %v6698 = vpack.c.b16 %v6482, %v6474
    %v6699 = vpack.c.b16 %v6483, %v6475
    %v6700 = vpack.c.b16 %v6484, %v6476
    %v6701 = vpack.c.b16 %v6485, %v6477
    %v6702 = vpack.c.b16 %v6486, %v6478
    %v6703 = vpack.c.b16 %v6495, %v6487
    %v6704 = vpack.c.b16 %v6496, %v6488
    %v6705 = vpack.c.b16 %v6497, %v6489
    %v6706 = vpack.c.b16 %v6498, %v6490
    %v6707 = vpack.c.b16 %v6499, %v6491
    %v6708 = vpack.c.b16 %v6500, %v6492
    %v6709 = vpack.c.b16 %v6501, %v6493
    %v6710 = vpack.c.b16 %v6502, %v6494
    %v6711 = vpack.c.b16 %v6511, %v6503
    %v6712 = vpack.c.b16 %v6512, %v6504
    %v6713 = vpack.c.b16 %v6513, %v6505
    %v6714 = vpack.c.b16 %v6514, %v6506
    %v6715 = vpack.c.b16 %v6515, %v6507
    %v6716 = vpack.c.b16 %v6516, %v6508
    %v6717 = vpack.c.b16 %v6517, %v6509
    %v6718 = vpack.c.b16 %v6518, %v6510
    %v6719 = vpack.c.b16 %v6527, %v6519
    %v6720 = vpack.c.b16 %v6528, %v6520
    %v6721 = vpack.c.b16 %v6529, %v6521
    %v6722 = vpack.c.b16 %v6530, %v6522
    %v6723 = vpack.c.b16 %v6531, %v6523
    %v6724 = vpack.c.b16 %v6532, %v6524
    %v6725 = vpack.c.b16 %v6533, %v6525
    %v6726 = vpack.c.b16 %v6534, %v6526
    %v6727 = vpack.c.b16 %v6543, %v6535
    %v6728 = vpack.c.b16 %v6544, %v6536
    %v6729 = vpack.c.b16 %v6545, %v6537
    %v6730 = vpack.c.b16 %v6546, %v6538
    %v6731 = vpack.c.b16 %v6547, %v6539
    %v6732 = vpack.c.b16 %v6548, %v6540
    %v6733 = vpack.c.b16 %v6549, %v6541
    %v6734 = vpack.c.b16 %v6550, %v6542
    %v6735 = vpack.c.b16 %v6559, %v6551
    %v6736 = vpack.c.b16 %v6560, %v6552
    %v6737 = vpack.c.b16 %v6561, %v6553
    %v6738 = vpack.c.b16 %v6562, %v6554
    %v6739 = vpack.c.b16 %v6563, %v6555
    %v6740 = vpack.c.b16 %v6564, %v6556
    %v6741 = vpack.c.b16 %v6565, %v6557
    %v6742 = vpack.c.b16 %v6566, %v6558
    %v6743 = vpack.c.b16 %v6575, %v6567
    %v6744 = vpack.c.b16 %v6576, %v6568
    %v6745 = vpack.c.b16 %v6577, %v6569
    %v6746 = vpack.c.b16 %v6578, %v6570
    %v6747 = vpack.c.b16 %v6579, %v6571
    %v6748 = vpack.c.b16 %v6580, %v6572
    %v6749 = vpack.c.b16 %v6581, %v6573
    %v6750 = vpack.c.b16 %v6582, %v6574
    %v6751 = vpack.c.b16 %v6591, %v6583
    %v6752 = vpack.c.b16 %v6592, %v6584
    %v6753 = vpack.c.b16 %v6593, %v6585
    %v6754 = vpack.c.b16 %v6594, %v6586
    %v6755 = vpack.c.b16 %v6595, %v6587
    %v6756 = vpack.c.b16 %v6596, %v6588
    %v6757 = vpack.c.b16 %v6597, %v6589
    %v6758 = vpack.c.b16 %v6598, %v6590
    %v6759 = vpack.c.b16 %v6607, %v6599
    %v6760 = vpack.c.b16 %v6608, %v6600
    %v6761 = vpack.c.b16 %v6609, %v6601
    %v6762 = vpack.c.b16 %v6610, %v6602
    %v6763 = vpack.c.b16 %v6611, %v6603
    %v6764 = vpack.c.b16 %v6612, %v6604
    %v6765 = vpack.c.b16 %v6613, %v6605
    %v6766 = vpack.c.b16 %v6614, %v6606
    %v6767 = vpack.c.b16 %v6623, %v6615
    %v6768 = vpack.c.b16 %v6624, %v6616
    %v6769 = vpack.c.b16 %v6625, %v6617
    %v6770 = vpack.c.b16 %v6626, %v6618
    %v6771 = vpack.c.b16 %v6627, %v6619
    %v6772 = vpack.c.b16 %v6628, %v6620
    %v6773 = vpack.c.b16 %v6629, %v6621
    %v6774 = vpack.c.b16 %v6630, %v6622
    %v6775 = vpack.c.b16 %v6639, %v6631
    %v6776 = vpack.c.b16 %v6640, %v6632
    %v6777 = vpack.c.b16 %v6641, %v6633
    %v6778 = vpack.c.b16 %v6642, %v6634
    %v6779 = vpack.c.b16 %v6643, %v6635
    %v6780 = vpack.c.b16 %v6644, %v6636
    %v6781 = vpack.c.b16 %v6645, %v6637
    %v6782 = vpack.c.b16 %v6646, %v6638
    %v6783 = vpack.c.b16 %v6655, %v6647
    %v6784 = vpack.c.b16 %v6656, %v6648
    %v6785 = vpack.c.b16 %v6657, %v6649
    %v6786 = vpack.c.b16 %v6658, %v6650
    %v6787 = vpack.c.b16 %v6659, %v6651
    %v6788 = vpack.c.b16 %v6660, %v6652
    %v6789 = vpack.c.b16 %v6661, %v6653
    %v6790 = vpack.c.b16 %v6662, %v6654
    %6919 = vmatprep.subr.bf16.mxu0 %v6664
    %6920 = vmatpush1.bf16.msra.mxu0 %v6663
    %6921 = vmatprep.subr.bf16.mxu0 %v6672
    %6922 = vmatpush1.bf16.msra.mxu0 %v6671
    %6923 = vmatprep.subr.bf16.mxu0 %v6680
    %6924 = vmatpush1.bf16.msra.mxu0 %v6679
    %6925 = vmatprep.subr.bf16.mxu0 %v6688
    %6926 = vmatpush1.bf16.msra.mxu0 %v6687
    %6927 = vmatprep.subr.bf16.mxu0 %v6696
    %6928 = vmatpush1.bf16.msra.mxu0 %v6695
    %6929 = vmatprep.subr.bf16.mxu0 %v6704
    %6930 = vmatpush1.bf16.msra.mxu0 %v6703
    %6931 = vmatprep.subr.bf16.mxu0 %v6712
    %6932 = vmatpush1.bf16.msra.mxu0 %v6711
    %6933 = vmatprep.subr.bf16.mxu0 %v6720
    %6934 = vmatpush1.bf16.msra.mxu0 %v6719
    %6935 = vmatprep.subr.bf16.mxu0 %v6728
    %6936 = vmatpush1.bf16.msra.mxu0 %v6727
    %6937 = vmatprep.subr.bf16.mxu0 %v6736
    %6938 = vmatpush1.bf16.msra.mxu0 %v6735
    %6939 = vmatprep.subr.bf16.mxu0 %v6744
    %6940 = vmatpush1.bf16.msra.mxu0 %v6743
    %6941 = vmatprep.subr.bf16.mxu0 %v6752
    %6942 = vmatpush1.bf16.msra.mxu0 %v6751
    %6943 = vmatprep.subr.bf16.mxu0 %v6760
    %6944 = vmatpush1.bf16.msra.mxu0 %v6759
    %6945 = vmatprep.subr.bf16.mxu0 %v6768
    %6946 = vmatpush1.bf16.msra.mxu0 %v6767
    %6947 = vmatprep.subr.bf16.mxu0 %v6776
    %6948 = vmatpush1.bf16.msra.mxu0 %v6775
    %6949 = vmatprep.subr.bf16.mxu0 %v6784
    %6950 = vmatpush1.bf16.msra.mxu0 %v6783
    %6951 = vmatprep.mubr.bf16.mxu0 %v6120
    %6952 = vmatmul.mubr.bf16.gmra.mrb[0].mxu0 %v6119
    %v6953 = vpop.f32.mrb[0].mxu0
    %v6954 = vadd.f32 0.0, %v6953
    %v6955 = vpop.f32.mrb[0].mxu0
    %v6956 = vadd.f32 0.0, %v6955
    %v6957 = vpop.f32.mrb[0].mxu0
    %v6958 = vadd.f32 0.0, %v6957
    %v6959 = vpop.f32.mrb[0].mxu0
    %v6960 = vadd.f32 0.0, %v6959
    %6961 = vmatprep.mubr.bf16.mxu0 %v6122
    %6962 = vmatmul.mubr.bf16.gmra.mrb[0].mxu0 %v6121
    %v6963 = vpop.f32.mrb[0].mxu0
    %v6964 = vadd.f32 0.0, %v6963
    %v6965 = vpop.f32.mrb[0].mxu0
    %v6966 = vadd.f32 0.0, %v6965
    %v6967 = vpop.f32.mrb[0].mxu0
    %v6968 = vadd.f32 0.0, %v6967
    %v6969 = vpop.f32.mrb[0].mxu0
    %v6970 = vadd.f32 0.0, %v6969
    %6971 = vmatprep.mubr.bf16.mxu0 %v6124
    %6972 = vmatmul.mubr.bf16.gmra.mrb[0].mxu0 %v6123
    %v6973 = vpop.f32.mrb[0].mxu0
    %v6974 = vadd.f32 0.0, %v6973
    %v6975 = vpop.f32.mrb[0].mxu0
    %v6976 = vadd.f32 0.0, %v6975
    %v6977 = vpop.f32.mrb[0].mxu0
    %v6978 = vadd.f32 0.0, %v6977
    %v6979 = vpop.f32.mrb[0].mxu0
    %v6980 = vadd.f32 0.0, %v6979
    %6981 = vmatprep.mubr.bf16.mxu0 %v6126
    %6982 = vmatmul.mubr.bf16.gmra.mrb[0].mxu0 %v6125
    %v6983 = vpop.f32.mrb[0].mxu0
    %v6984 = vadd.f32 0.0, %v6983
    %v6985 = vpop.f32.mrb[0].mxu0
    %v6986 = vadd.f32 0.0, %v6985
    %v6987 = vpop.f32.mrb[0].mxu0
    %v6988 = vadd.f32 0.0, %v6987
    %v6989 = vpop.f32.mrb[0].mxu0
    %v6990 = vadd.f32 0.0, %v6989
    %6991 = vmatprep.mubr.bf16.mxu0 %v6128
    %6992 = vmatmul.mubr.bf16.gmra.mrb[0].mxu0 %v6127
    %v6993 = vpop.f32.mrb[0].mxu0
    %v6994 = vadd.f32 0.0, %v6993
    %v6995 = vpop.f32.mrb[0].mxu0
    %v6996 = vadd.f32 0.0, %v6995
    %v6997 = vpop.f32.mrb[0].mxu0
    %v6998 = vadd.f32 0.0, %v6997
    %v6999 = vpop.f32.mrb[0].mxu0
    %v7000 = vadd.f32 0.0, %v6999
    %7001 = vmatprep.mubr.bf16.mxu0 %v6130
    %7002 = vmatmul.mubr.bf16.gmra.mrb[0].mxu0 %v6129
    %v7003 = vpop.f32.mrb[0].mxu0
    %v7004 = vadd.f32 0.0, %v7003
    %v7005 = vpop.f32.mrb[0].mxu0
    %v7006 = vadd.f32 0.0, %v7005
    %v7007 = vpop.f32.mrb[0].mxu0
    %v7008 = vadd.f32 0.0, %v7007
    %v7009 = vpop.f32.mrb[0].mxu0
    %v7010 = vadd.f32 0.0, %v7009
    %7011 = vmatprep.mubr.bf16.mxu0 %v6132
    %7012 = vmatmul.mubr.bf16.gmra.mrb[0].mxu0 %v6131
    %v7013 = vpop.f32.mrb[0].mxu0
    %v7014 = vadd.f32 0.0, %v7013
    %v7015 = vpop.f32.mrb[0].mxu0
    %v7016 = vadd.f32 0.0, %v7015
    %v7017 = vpop.f32.mrb[0].mxu0
    %v7018 = vadd.f32 0.0, %v7017
    %v7019 = vpop.f32.mrb[0].mxu0
    %v7020 = vadd.f32 0.0, %v7019
    %7021 = vmatprep.mubr.bf16.mxu0 %v6134
    %7022 = vmatmul.mubr.bf16.gmra.mrb[0].mxu0 %v6133
    %v7023 = vpop.f32.mrb[0].mxu0
    %v7024 = vadd.f32 0.0, %v7023
    %v7025 = vpop.f32.mrb[0].mxu0
    %v7026 = vadd.f32 0.0, %v7025
    %v7027 = vpop.f32.mrb[0].mxu0
    %v7028 = vadd.f32 0.0, %v7027
    %v7029 = vpop.f32.mrb[0].mxu0
    %v7030 = vadd.f32 0.0, %v7029
    %7031 = vmatprep.mubr.bf16.mxu0 %v6136
    %7032 = vmatmul.mubr.bf16.gmra.mrb[0].mxu0 %v6135
    %v7033 = vpop.f32.mrb[0].mxu0
    %v7034 = vadd.f32 0.0, %v7033
    %v7035 = vpop.f32.mrb[0].mxu0
    %v7036 = vadd.f32 0.0, %v7035
    %v7037 = vpop.f32.mrb[0].mxu0
    %v7038 = vadd.f32 0.0, %v7037
    %v7039 = vpop.f32.mrb[0].mxu0
    %v7040 = vadd.f32 0.0, %v7039
    %7041 = vmatprep.mubr.bf16.mxu0 %v6138
    %7042 = vmatmul.mubr.bf16.gmra.mrb[0].mxu0 %v6137
    %v7043 = vpop.f32.mrb[0].mxu0
    %v7044 = vadd.f32 0.0, %v7043
    %v7045 = vpop.f32.mrb[0].mxu0
    %v7046 = vadd.f32 0.0, %v7045
    %v7047 = vpop.f32.mrb[0].mxu0
    %v7048 = vadd.f32 0.0, %v7047
    %v7049 = vpop.f32.mrb[0].mxu0
    %v7050 = vadd.f32 0.0, %v7049
    %7051 = vmatprep.mubr.bf16.mxu0 %v6140
    %7052 = vmatmul.mubr.bf16.gmra.mrb[0].mxu0 %v6139
    %v7053 = vpop.f32.mrb[0].mxu0
    %v7054 = vadd.f32 0.0, %v7053
    %v7055 = vpop.f32.mrb[0].mxu0
    %v7056 = vadd.f32 0.0, %v7055
    %v7057 = vpop.f32.mrb[0].mxu0
    %v7058 = vadd.f32 0.0, %v7057
    %v7059 = vpop.f32.mrb[0].mxu0
    %v7060 = vadd.f32 0.0, %v7059
    %7061 = vmatprep.mubr.bf16.mxu0 %v6142
    %7062 = vmatmul.mubr.bf16.gmra.mrb[0].mxu0 %v6141
    %v7063 = vpop.f32.mrb[0].mxu0
    %v7064 = vadd.f32 0.0, %v7063
    %v7065 = vpop.f32.mrb[0].mxu0
    %v7066 = vadd.f32 0.0, %v7065
    %v7067 = vpop.f32.mrb[0].mxu0
    %v7068 = vadd.f32 0.0, %v7067
    %v7069 = vpop.f32.mrb[0].mxu0
    %v7070 = vadd.f32 0.0, %v7069
    %7071 = vmatprep.mubr.bf16.mxu0 %v6144
    %7072 = vmatmul.mubr.bf16.gmra.mrb[0].mxu0 %v6143
    %v7073 = vpop.f32.mrb[0].mxu0
    %v7074 = vadd.f32 0.0, %v7073
    %v7075 = vpop.f32.mrb[0].mxu0
    %v7076 = vadd.f32 0.0, %v7075
    %v7077 = vpop.f32.mrb[0].mxu0
    %v7078 = vadd.f32 0.0, %v7077
    %v7079 = vpop.f32.mrb[0].mxu0
    %v7080 = vadd.f32 0.0, %v7079
    %7081 = vmatprep.mubr.bf16.mxu0 %v6146
    %7082 = vmatmul.mubr.bf16.gmra.mrb[0].mxu0 %v6145
    %v7083 = vpop.f32.mrb[0].mxu0
    %v7084 = vadd.f32 0.0, %v7083
    %v7085 = vpop.f32.mrb[0].mxu0
    %v7086 = vadd.f32 0.0, %v7085
    %v7087 = vpop.f32.mrb[0].mxu0
    %v7088 = vadd.f32 0.0, %v7087
    %v7089 = vpop.f32.mrb[0].mxu0
    %v7090 = vadd.f32 0.0, %v7089
    %7091 = vmatprep.mubr.bf16.mxu0 %v6148
    %7092 = vmatmul.mubr.bf16.gmra.mrb[0].mxu0 %v6147
    %v7093 = vpop.f32.mrb[0].mxu0
    %v7094 = vadd.f32 0.0, %v7093
    %v7095 = vpop.f32.mrb[0].mxu0
    %v7096 = vadd.f32 0.0, %v7095
    %v7097 = vpop.f32.mrb[0].mxu0
    %v7098 = vadd.f32 0.0, %v7097
    %v7099 = vpop.f32.mrb[0].mxu0
    %v7100 = vadd.f32 0.0, %v7099
    %7101 = vmatprep.mubr.bf16.mxu0 %v6150
    %7102 = vmatmul.mubr.bf16.gmra.mrb[0].mxu0 %v6149
    %v7103 = vpop.f32.mrb[0].mxu0
    %v7104 = vadd.f32 0.0, %v7103
    %v7105 = vpop.f32.mrb[0].mxu0
    %v7106 = vadd.f32 0.0, %v7105
    %v7107 = vpop.f32.mrb[0].mxu0
    %v7108 = vadd.f32 0.0, %v7107
    %v7109 = vpop.f32.mrb[0].mxu0
    %v7110 = vadd.f32 0.0, %v7109
    %7111 = vdwg.mxu0
    %7112 = vmatprep.subr.bf16.mxu0 %v6666
    %7113 = vmatpush1.bf16.msra.mxu0 %v6665
    %7114 = vmatprep.subr.bf16.mxu0 %v6674
    %7115 = vmatpush1.bf16.msra.mxu0 %v6673
    %7116 = vmatprep.subr.bf16.mxu0 %v6682
    %7117 = vmatpush1.bf16.msra.mxu0 %v6681
    %7118 = vmatprep.subr.bf16.mxu0 %v6690
    %7119 = vmatpush1.bf16.msra.mxu0 %v6689
    %7120 = vmatprep.subr.bf16.mxu0 %v6698
    %7121 = vmatpush1.bf16.msra.mxu0 %v6697
    %7122 = vmatprep.subr.bf16.mxu0 %v6706
    %7123 = vmatpush1.bf16.msra.mxu0 %v6705
    %7124 = vmatprep.subr.bf16.mxu0 %v6714
    %7125 = vmatpush1.bf16.msra.mxu0 %v6713
    %7126 = vmatprep.subr.bf16.mxu0 %v6722
    %7127 = vmatpush1.bf16.msra.mxu0 %v6721
    %7128 = vmatprep.subr.bf16.mxu0 %v6730
    %7129 = vmatpush1.bf16.msra.mxu0 %v6729
    %7130 = vmatprep.subr.bf16.mxu0 %v6738
    %7131 = vmatpush1.bf16.msra.mxu0 %v6737
    %7132 = vmatprep.subr.bf16.mxu0 %v6746
    %7133 = vmatpush1.bf16.msra.mxu0 %v6745
    %7134 = vmatprep.subr.bf16.mxu0 %v6754
    %7135 = vmatpush1.bf16.msra.mxu0 %v6753
    %7136 = vmatprep.subr.bf16.mxu0 %v6762
    %7137 = vmatpush1.bf16.msra.mxu0 %v6761
    %7138 = vmatprep.subr.bf16.mxu0 %v6770
    %7139 = vmatpush1.bf16.msra.mxu0 %v6769
    %7140 = vmatprep.subr.bf16.mxu0 %v6778
    %7141 = vmatpush1.bf16.msra.mxu0 %v6777
    %7142 = vmatprep.subr.bf16.mxu0 %v6786
    %7143 = vmatpush1.bf16.msra.mxu0 %v6785
    %7144 = vmatprep.mubr.bf16.mxu0 %v6120
    %7145 = vmatmul.mubr.bf16.gmra.mrb[0].mxu0 %v6119
    %v7146 = vpop.f32.mrb[0].mxu0
    %v7147 = vadd.f32 0.0, %v7146
    %v7148 = vpop.f32.mrb[0].mxu0
    %v7149 = vadd.f32 0.0, %v7148
    %v7150 = vpop.f32.mrb[0].mxu0
    %v7151 = vadd.f32 0.0, %v7150
    %v7152 = vpop.f32.mrb[0].mxu0
    %v7153 = vadd.f32 0.0, %v7152
    %7154 = vmatprep.mubr.bf16.mxu0 %v6122
    %7155 = vmatmul.mubr.bf16.gmra.mrb[0].mxu0 %v6121
    %v7156 = vpop.f32.mrb[0].mxu0
    %v7157 = vadd.f32 0.0, %v7156
    %v7158 = vpop.f32.mrb[0].mxu0
    %v7159 = vadd.f32 0.0, %v7158
    %v7160 = vpop.f32.mrb[0].mxu0
    %v7161 = vadd.f32 0.0, %v7160
    %v7162 = vpop.f32.mrb[0].mxu0
    %v7163 = vadd.f32 0.0, %v7162
    %7164 = vmatprep.mubr.bf16.mxu0 %v6124
    %7165 = vmatmul.mubr.bf16.gmra.mrb[0].mxu0 %v6123
    %v7166 = vpop.f32.mrb[0].mxu0
    %v7167 = vadd.f32 0.0, %v7166
    %v7168 = vpop.f32.mrb[0].mxu0
    %v7169 = vadd.f32 0.0, %v7168
    %v7170 = vpop.f32.mrb[0].mxu0
    %v7171 = vadd.f32 0.0, %v7170
    %v7172 = vpop.f32.mrb[0].mxu0
    %v7173 = vadd.f32 0.0, %v7172
    %7174 = vmatprep.mubr.bf16.mxu0 %v6126
    %7175 = vmatmul.mubr.bf16.gmra.mrb[0].mxu0 %v6125
    %v7176 = vpop.f32.mrb[0].mxu0
    %v7177 = vadd.f32 0.0, %v7176
    %v7178 = vpop.f32.mrb[0].mxu0
    %v7179 = vadd.f32 0.0, %v7178
    %v7180 = vpop.f32.mrb[0].mxu0
    %v7181 = vadd.f32 0.0, %v7180
    %v7182 = vpop.f32.mrb[0].mxu0
    %v7183 = vadd.f32 0.0, %v7182
    %7184 = vmatprep.mubr.bf16.mxu0 %v6128
    %7185 = vmatmul.mubr.bf16.gmra.mrb[0].mxu0 %v6127
    %v7186 = vpop.f32.mrb[0].mxu0
    %v7187 = vadd.f32 0.0, %v7186
    %v7188 = vpop.f32.mrb[0].mxu0
    %v7189 = vadd.f32 0.0, %v7188
    %v7190 = vpop.f32.mrb[0].mxu0
    %v7191 = vadd.f32 0.0, %v7190
    %v7192 = vpop.f32.mrb[0].mxu0
    %v7193 = vadd.f32 0.0, %v7192
    %7194 = vmatprep.mubr.bf16.mxu0 %v6130
    %7195 = vmatmul.mubr.bf16.gmra.mrb[0].mxu0 %v6129
    %v7196 = vpop.f32.mrb[0].mxu0
    %v7197 = vadd.f32 0.0, %v7196
    %v7198 = vpop.f32.mrb[0].mxu0
    %v7199 = vadd.f32 0.0, %v7198
    %v7200 = vpop.f32.mrb[0].mxu0
    %v7201 = vadd.f32 0.0, %v7200
    %v7202 = vpop.f32.mrb[0].mxu0
    %v7203 = vadd.f32 0.0, %v7202
    %7204 = vmatprep.mubr.bf16.mxu0 %v6132
    %7205 = vmatmul.mubr.bf16.gmra.mrb[0].mxu0 %v6131
    %v7206 = vpop.f32.mrb[0].mxu0
    %v7207 = vadd.f32 0.0, %v7206
    %v7208 = vpop.f32.mrb[0].mxu0
    %v7209 = vadd.f32 0.0, %v7208
    %v7210 = vpop.f32.mrb[0].mxu0
    %v7211 = vadd.f32 0.0, %v7210
    %v7212 = vpop.f32.mrb[0].mxu0
    %v7213 = vadd.f32 0.0, %v7212
    %7214 = vmatprep.mubr.bf16.mxu0 %v6134
    %7215 = vmatmul.mubr.bf16.gmra.mrb[0].mxu0 %v6133
    %v7216 = vpop.f32.mrb[0].mxu0
    %v7217 = vadd.f32 0.0, %v7216
    %v7218 = vpop.f32.mrb[0].mxu0
    %v7219 = vadd.f32 0.0, %v7218
    %v7220 = vpop.f32.mrb[0].mxu0
    %v7221 = vadd.f32 0.0, %v7220
    %v7222 = vpop.f32.mrb[0].mxu0
    %v7223 = vadd.f32 0.0, %v7222
    %7224 = vmatprep.mubr.bf16.mxu0 %v6136
    %7225 = vmatmul.mubr.bf16.gmra.mrb[0].mxu0 %v6135
    %v7226 = vpop.f32.mrb[0].mxu0
    %v7227 = vadd.f32 0.0, %v7226
    %v7228 = vpop.f32.mrb[0].mxu0
    %v7229 = vadd.f32 0.0, %v7228
    %v7230 = vpop.f32.mrb[0].mxu0
    %v7231 = vadd.f32 0.0, %v7230
    %v7232 = vpop.f32.mrb[0].mxu0
    %v7233 = vadd.f32 0.0, %v7232
    %7234 = vmatprep.mubr.bf16.mxu0 %v6138
    %7235 = vmatmul.mubr.bf16.gmra.mrb[0].mxu0 %v6137
    %v7236 = vpop.f32.mrb[0].mxu0
    %v7237 = vadd.f32 0.0, %v7236
    %v7238 = vpop.f32.mrb[0].mxu0
    %v7239 = vadd.f32 0.0, %v7238
    %v7240 = vpop.f32.mrb[0].mxu0
    %v7241 = vadd.f32 0.0, %v7240
    %v7242 = vpop.f32.mrb[0].mxu0
    %v7243 = vadd.f32 0.0, %v7242
    %7244 = vmatprep.mubr.bf16.mxu0 %v6140
    %7245 = vmatmul.mubr.bf16.gmra.mrb[0].mxu0 %v6139
    %v7246 = vpop.f32.mrb[0].mxu0
    %v7247 = vadd.f32 0.0, %v7246
    %v7248 = vpop.f32.mrb[0].mxu0
    %v7249 = vadd.f32 0.0, %v7248
    %v7250 = vpop.f32.mrb[0].mxu0
    %v7251 = vadd.f32 0.0, %v7250
    %v7252 = vpop.f32.mrb[0].mxu0
    %v7253 = vadd.f32 0.0, %v7252
    %7254 = vmatprep.mubr.bf16.mxu0 %v6142
    %7255 = vmatmul.mubr.bf16.gmra.mrb[0].mxu0 %v6141
    %v7256 = vpop.f32.mrb[0].mxu0
    %v7257 = vadd.f32 0.0, %v7256
    %v7258 = vpop.f32.mrb[0].mxu0
    %v7259 = vadd.f32 0.0, %v7258
    %v7260 = vpop.f32.mrb[0].mxu0
    %v7261 = vadd.f32 0.0, %v7260
    %v7262 = vpop.f32.mrb[0].mxu0
    %v7263 = vadd.f32 0.0, %v7262
    %7264 = vmatprep.mubr.bf16.mxu0 %v6144
    %7265 = vmatmul.mubr.bf16.gmra.mrb[0].mxu0 %v6143
    %v7266 = vpop.f32.mrb[0].mxu0
    %v7267 = vadd.f32 0.0, %v7266
    %v7268 = vpop.f32.mrb[0].mxu0
    %v7269 = vadd.f32 0.0, %v7268
    %v7270 = vpop.f32.mrb[0].mxu0
    %v7271 = vadd.f32 0.0, %v7270
    %v7272 = vpop.f32.mrb[0].mxu0
    %v7273 = vadd.f32 0.0, %v7272
    %7274 = vmatprep.mubr.bf16.mxu0 %v6146
    %7275 = vmatmul.mubr.bf16.gmra.mrb[0].mxu0 %v6145
    %v7276 = vpop.f32.mrb[0].mxu0
    %v7277 = vadd.f32 0.0, %v7276
    %v7278 = vpop.f32.mrb[0].mxu0
    %v7279 = vadd.f32 0.0, %v7278
    %v7280 = vpop.f32.mrb[0].mxu0
    %v7281 = vadd.f32 0.0, %v7280
    %v7282 = vpop.f32.mrb[0].mxu0
    %v7283 = vadd.f32 0.0, %v7282
    %7284 = vmatprep.mubr.bf16.mxu0 %v6148
    %7285 = vmatmul.mubr.bf16.gmra.mrb[0].mxu0 %v6147
    %v7286 = vpop.f32.mrb[0].mxu0
    %v7287 = vadd.f32 0.0, %v7286
    %v7288 = vpop.f32.mrb[0].mxu0
    %v7289 = vadd.f32 0.0, %v7288
    %v7290 = vpop.f32.mrb[0].mxu0
    %v7291 = vadd.f32 0.0, %v7290
    %v7292 = vpop.f32.mrb[0].mxu0
    %v7293 = vadd.f32 0.0, %v7292
    %7294 = vmatprep.mubr.bf16.mxu0 %v6150
    %7295 = vmatmul.mubr.bf16.gmra.mrb[0].mxu0 %v6149
    %v7296 = vpop.f32.mrb[0].mxu0
    %v7297 = vadd.f32 0.0, %v7296
    %v7298 = vpop.f32.mrb[0].mxu0
    %v7299 = vadd.f32 0.0, %v7298
    %v7300 = vpop.f32.mrb[0].mxu0
    %v7301 = vadd.f32 0.0, %v7300
    %v7302 = vpop.f32.mrb[0].mxu0
    %v7303 = vadd.f32 0.0, %v7302
    %7304 = vdwg.mxu0
    %7305 = vmatprep.subr.bf16.mxu0 %v6668
    %7306 = vmatpush1.bf16.msra.mxu0 %v6667
    %7307 = vmatprep.subr.bf16.mxu0 %v6676
    %7308 = vmatpush1.bf16.msra.mxu0 %v6675
    %7309 = vmatprep.subr.bf16.mxu0 %v6684
    %7310 = vmatpush1.bf16.msra.mxu0 %v6683
    %7311 = vmatprep.subr.bf16.mxu0 %v6692
    %7312 = vmatpush1.bf16.msra.mxu0 %v6691
    %7313 = vmatprep.subr.bf16.mxu0 %v6700
    %7314 = vmatpush1.bf16.msra.mxu0 %v6699
    %7315 = vmatprep.subr.bf16.mxu0 %v6708
    %7316 = vmatpush1.bf16.msra.mxu0 %v6707
    %7317 = vmatprep.subr.bf16.mxu0 %v6716
    %7318 = vmatpush1.bf16.msra.mxu0 %v6715
    %7319 = vmatprep.subr.bf16.mxu0 %v6724
    %7320 = vmatpush1.bf16.msra.mxu0 %v6723
    %7321 = vmatprep.subr.bf16.mxu0 %v6732
    %7322 = vmatpush1.bf16.msra.mxu0 %v6731
    %7323 = vmatprep.subr.bf16.mxu0 %v6740
    %7324 = vmatpush1.bf16.msra.mxu0 %v6739
    %7325 = vmatprep.subr.bf16.mxu0 %v6748
    %7326 = vmatpush1.bf16.msra.mxu0 %v6747
    %7327 = vmatprep.subr.bf16.mxu0 %v6756
    %7328 = vmatpush1.bf16.msra.mxu0 %v6755
    %7329 = vmatprep.subr.bf16.mxu0 %v6764
    %7330 = vmatpush1.bf16.msra.mxu0 %v6763
    %7331 = vmatprep.subr.bf16.mxu0 %v6772
    %7332 = vmatpush1.bf16.msra.mxu0 %v6771
    %7333 = vmatprep.subr.bf16.mxu0 %v6780
    %7334 = vmatpush1.bf16.msra.mxu0 %v6779
    %7335 = vmatprep.subr.bf16.mxu0 %v6788
    %7336 = vmatpush1.bf16.msra.mxu0 %v6787
    %7337 = vmatprep.mubr.bf16.mxu0 %v6120
    %7338 = vmatmul.mubr.bf16.gmra.mrb[0].mxu0 %v6119
    %v7339 = vpop.f32.mrb[0].mxu0
    %v7340 = vadd.f32 0.0, %v7339
    %v7341 = vpop.f32.mrb[0].mxu0
    %v7342 = vadd.f32 0.0, %v7341
    %v7343 = vpop.f32.mrb[0].mxu0
    %v7344 = vadd.f32 0.0, %v7343
    %v7345 = vpop.f32.mrb[0].mxu0
    %v7346 = vadd.f32 0.0, %v7345
    %7347 = vmatprep.mubr.bf16.mxu0 %v6122
    %7348 = vmatmul.mubr.bf16.gmra.mrb[0].mxu0 %v6121
    %v7349 = vpop.f32.mrb[0].mxu0
    %v7350 = vadd.f32 0.0, %v7349
    %v7351 = vpop.f32.mrb[0].mxu0
    %v7352 = vadd.f32 0.0, %v7351
    %v7353 = vpop.f32.mrb[0].mxu0
    %v7354 = vadd.f32 0.0, %v7353
    %v7355 = vpop.f32.mrb[0].mxu0
    %v7356 = vadd.f32 0.0, %v7355
    %7357 = vmatprep.mubr.bf16.mxu0 %v6124
    %7358 = vmatmul.mubr.bf16.gmra.mrb[0].mxu0 %v6123
    %v7359 = vpop.f32.mrb[0].mxu0
    %v7360 = vadd.f32 0.0, %v7359
    %v7361 = vpop.f32.mrb[0].mxu0
    %v7362 = vadd.f32 0.0, %v7361
    %v7363 = vpop.f32.mrb[0].mxu0
    %v7364 = vadd.f32 0.0, %v7363
    %v7365 = vpop.f32.mrb[0].mxu0
    %v7366 = vadd.f32 0.0, %v7365
    %7367 = vmatprep.mubr.bf16.mxu0 %v6126
    %7368 = vmatmul.mubr.bf16.gmra.mrb[0].mxu0 %v6125
    %v7369 = vpop.f32.mrb[0].mxu0
    %v7370 = vadd.f32 0.0, %v7369
    %v7371 = vpop.f32.mrb[0].mxu0
    %v7372 = vadd.f32 0.0, %v7371
    %v7373 = vpop.f32.mrb[0].mxu0
    %v7374 = vadd.f32 0.0, %v7373
    %v7375 = vpop.f32.mrb[0].mxu0
    %v7376 = vadd.f32 0.0, %v7375
    %7377 = vmatprep.mubr.bf16.mxu0 %v6128
    %7378 = vmatmul.mubr.bf16.gmra.mrb[0].mxu0 %v6127
    %v7379 = vpop.f32.mrb[0].mxu0
    %v7380 = vadd.f32 0.0, %v7379
    %v7381 = vpop.f32.mrb[0].mxu0
    %v7382 = vadd.f32 0.0, %v7381
    %v7383 = vpop.f32.mrb[0].mxu0
    %v7384 = vadd.f32 0.0, %v7383
    %v7385 = vpop.f32.mrb[0].mxu0
    %v7386 = vadd.f32 0.0, %v7385
    %7387 = vmatprep.mubr.bf16.mxu0 %v6130
    %7388 = vmatmul.mubr.bf16.gmra.mrb[0].mxu0 %v6129
    %v7389 = vpop.f32.mrb[0].mxu0
    %v7390 = vadd.f32 0.0, %v7389
    %v7391 = vpop.f32.mrb[0].mxu0
    %v7392 = vadd.f32 0.0, %v7391
    %v7393 = vpop.f32.mrb[0].mxu0
    %v7394 = vadd.f32 0.0, %v7393
    %v7395 = vpop.f32.mrb[0].mxu0
    %v7396 = vadd.f32 0.0, %v7395
    %7397 = vmatprep.mubr.bf16.mxu0 %v6132
    %7398 = vmatmul.mubr.bf16.gmra.mrb[0].mxu0 %v6131
    %v7399 = vpop.f32.mrb[0].mxu0
    %v7400 = vadd.f32 0.0, %v7399
    %v7401 = vpop.f32.mrb[0].mxu0
    %v7402 = vadd.f32 0.0, %v7401
    %v7403 = vpop.f32.mrb[0].mxu0
    %v7404 = vadd.f32 0.0, %v7403
    %v7405 = vpop.f32.mrb[0].mxu0
    %v7406 = vadd.f32 0.0, %v7405
    %7407 = vmatprep.mubr.bf16.mxu0 %v6134
    %7408 = vmatmul.mubr.bf16.gmra.mrb[0].mxu0 %v6133
    %v7409 = vpop.f32.mrb[0].mxu0
    %v7410 = vadd.f32 0.0, %v7409
    %v7411 = vpop.f32.mrb[0].mxu0
    %v7412 = vadd.f32 0.0, %v7411
    %v7413 = vpop.f32.mrb[0].mxu0
    %v7414 = vadd.f32 0.0, %v7413
    %v7415 = vpop.f32.mrb[0].mxu0
    %v7416 = vadd.f32 0.0, %v7415
    %7417 = vmatprep.mubr.bf16.mxu0 %v6136
    %7418 = vmatmul.mubr.bf16.gmra.mrb[0].mxu0 %v6135
    %v7419 = vpop.f32.mrb[0].mxu0
    %v7420 = vadd.f32 0.0, %v7419
    %v7421 = vpop.f32.mrb[0].mxu0
    %v7422 = vadd.f32 0.0, %v7421
    %v7423 = vpop.f32.mrb[0].mxu0
    %v7424 = vadd.f32 0.0, %v7423
    %v7425 = vpop.f32.mrb[0].mxu0
    %v7426 = vadd.f32 0.0, %v7425
    %7427 = vmatprep.mubr.bf16.mxu0 %v6138
    %7428 = vmatmul.mubr.bf16.gmra.mrb[0].mxu0 %v6137
    %v7429 = vpop.f32.mrb[0].mxu0
    %v7430 = vadd.f32 0.0, %v7429
    %v7431 = vpop.f32.mrb[0].mxu0
    %v7432 = vadd.f32 0.0, %v7431
    %v7433 = vpop.f32.mrb[0].mxu0
    %v7434 = vadd.f32 0.0, %v7433
    %v7435 = vpop.f32.mrb[0].mxu0
    %v7436 = vadd.f32 0.0, %v7435
    %7437 = vmatprep.mubr.bf16.mxu0 %v6140
    %7438 = vmatmul.mubr.bf16.gmra.mrb[0].mxu0 %v6139
    %v7439 = vpop.f32.mrb[0].mxu0
    %v7440 = vadd.f32 0.0, %v7439
    %v7441 = vpop.f32.mrb[0].mxu0
    %v7442 = vadd.f32 0.0, %v7441
    %v7443 = vpop.f32.mrb[0].mxu0
    %v7444 = vadd.f32 0.0, %v7443
    %v7445 = vpop.f32.mrb[0].mxu0
    %v7446 = vadd.f32 0.0, %v7445
    %7447 = vmatprep.mubr.bf16.mxu0 %v6142
    %7448 = vmatmul.mubr.bf16.gmra.mrb[0].mxu0 %v6141
    %v7449 = vpop.f32.mrb[0].mxu0
    %v7450 = vadd.f32 0.0, %v7449
    %v7451 = vpop.f32.mrb[0].mxu0
    %v7452 = vadd.f32 0.0, %v7451
    %v7453 = vpop.f32.mrb[0].mxu0
    %v7454 = vadd.f32 0.0, %v7453
    %v7455 = vpop.f32.mrb[0].mxu0
    %v7456 = vadd.f32 0.0, %v7455
    %7457 = vmatprep.mubr.bf16.mxu0 %v6144
    %7458 = vmatmul.mubr.bf16.gmra.mrb[0].mxu0 %v6143
    %v7459 = vpop.f32.mrb[0].mxu0
    %v7460 = vadd.f32 0.0, %v7459
    %v7461 = vpop.f32.mrb[0].mxu0
    %v7462 = vadd.f32 0.0, %v7461
    %v7463 = vpop.f32.mrb[0].mxu0
    %v7464 = vadd.f32 0.0, %v7463
    %v7465 = vpop.f32.mrb[0].mxu0
    %v7466 = vadd.f32 0.0, %v7465
    %7467 = vmatprep.mubr.bf16.mxu0 %v6146
    %7468 = vmatmul.mubr.bf16.gmra.mrb[0].mxu0 %v6145
    %v7469 = vpop.f32.mrb[0].mxu0
    %v7470 = vadd.f32 0.0, %v7469
    %v7471 = vpop.f32.mrb[0].mxu0
    %v7472 = vadd.f32 0.0, %v7471
    %v7473 = vpop.f32.mrb[0].mxu0
    %v7474 = vadd.f32 0.0, %v7473
    %v7475 = vpop.f32.mrb[0].mxu0
    %v7476 = vadd.f32 0.0, %v7475
    %7477 = vmatprep.mubr.bf16.mxu0 %v6148
    %7478 = vmatmul.mubr.bf16.gmra.mrb[0].mxu0 %v6147
    %v7479 = vpop.f32.mrb[0].mxu0
    %v7480 = vadd.f32 0.0, %v7479
    %v7481 = vpop.f32.mrb[0].mxu0
    %v7482 = vadd.f32 0.0, %v7481
    %v7483 = vpop.f32.mrb[0].mxu0
    %v7484 = vadd.f32 0.0, %v7483
    %v7485 = vpop.f32.mrb[0].mxu0
    %v7486 = vadd.f32 0.0, %v7485
    %7487 = vmatprep.mubr.bf16.mxu0 %v6150
    %7488 = vmatmul.mubr.bf16.gmra.mrb[0].mxu0 %v6149
    %v7489 = vpop.f32.mrb[0].mxu0
    %v7490 = vadd.f32 0.0, %v7489
    %v7491 = vpop.f32.mrb[0].mxu0
    %v7492 = vadd.f32 0.0, %v7491
    %v7493 = vpop.f32.mrb[0].mxu0
    %v7494 = vadd.f32 0.0, %v7493
    %v7495 = vpop.f32.mrb[0].mxu0
    %v7496 = vadd.f32 0.0, %v7495
    %7497 = vdwg.mxu0
    %7498 = vmatprep.subr.bf16.mxu0 %v6670
    %7499 = vmatpush1.bf16.msra.mxu0 %v6669
    %7500 = vmatprep.subr.bf16.mxu0 %v6678
    %7501 = vmatpush1.bf16.msra.mxu0 %v6677
    %7502 = vmatprep.subr.bf16.mxu0 %v6686
    %7503 = vmatpush1.bf16.msra.mxu0 %v6685
    %7504 = vmatprep.subr.bf16.mxu0 %v6694
    %7505 = vmatpush1.bf16.msra.mxu0 %v6693
    %7506 = vmatprep.subr.bf16.mxu0 %v6702
    %7507 = vmatpush1.bf16.msra.mxu0 %v6701
    %7508 = vmatprep.subr.bf16.mxu0 %v6710
    %7509 = vmatpush1.bf16.msra.mxu0 %v6709
    %7510 = vmatprep.subr.bf16.mxu0 %v6718
    %7511 = vmatpush1.bf16.msra.mxu0 %v6717
    %7512 = vmatprep.subr.bf16.mxu0 %v6726
    %7513 = vmatpush1.bf16.msra.mxu0 %v6725
    %7514 = vmatprep.subr.bf16.mxu0 %v6734
    %7515 = vmatpush1.bf16.msra.mxu0 %v6733
    %7516 = vmatprep.subr.bf16.mxu0 %v6742
    %7517 = vmatpush1.bf16.msra.mxu0 %v6741
    %7518 = vmatprep.subr.bf16.mxu0 %v6750
    %7519 = vmatpush1.bf16.msra.mxu0 %v6749
    %7520 = vmatprep.subr.bf16.mxu0 %v6758
    %7521 = vmatpush1.bf16.msra.mxu0 %v6757
    %7522 = vmatprep.subr.bf16.mxu0 %v6766
    %7523 = vmatpush1.bf16.msra.mxu0 %v6765
    %7524 = vmatprep.subr.bf16.mxu0 %v6774
    %7525 = vmatpush1.bf16.msra.mxu0 %v6773
    %7526 = vmatprep.subr.bf16.mxu0 %v6782
    %7527 = vmatpush1.bf16.msra.mxu0 %v6781
    %7528 = vmatprep.subr.bf16.mxu0 %v6790
    %7529 = vmatpush1.bf16.msra.mxu0 %v6789
    %7530 = vmatprep.mubr.bf16.mxu0 %v6120
    %7531 = vmatmul.mubr.bf16.gmra.mrb[0].mxu0 %v6119
    %v7532 = vpop.f32.mrb[0].mxu0
    %v7533 = vadd.f32 0.0, %v7532
    %v7534 = vpop.f32.mrb[0].mxu0
    %v7535 = vadd.f32 0.0, %v7534
    %v7536 = vpop.f32.mrb[0].mxu0
    %v7537 = vadd.f32 0.0, %v7536
    %v7538 = vpop.f32.mrb[0].mxu0
    %v7539 = vadd.f32 0.0, %v7538
    %7540 = vmatprep.mubr.bf16.mxu0 %v6122
    %7541 = vmatmul.mubr.bf16.gmra.mrb[0].mxu0 %v6121
    %v7542 = vpop.f32.mrb[0].mxu0
    %v7543 = vadd.f32 0.0, %v7542
    %v7544 = vpop.f32.mrb[0].mxu0
    %v7545 = vadd.f32 0.0, %v7544
    %v7546 = vpop.f32.mrb[0].mxu0
    %v7547 = vadd.f32 0.0, %v7546
    %v7548 = vpop.f32.mrb[0].mxu0
    %v7549 = vadd.f32 0.0, %v7548
    %7550 = vmatprep.mubr.bf16.mxu0 %v6124
    %7551 = vmatmul.mubr.bf16.gmra.mrb[0].mxu0 %v6123
    %v7552 = vpop.f32.mrb[0].mxu0
    %v7553 = vadd.f32 0.0, %v7552
    %v7554 = vpop.f32.mrb[0].mxu0
    %v7555 = vadd.f32 0.0, %v7554
    %v7556 = vpop.f32.mrb[0].mxu0
    %v7557 = vadd.f32 0.0, %v7556
    %v7558 = vpop.f32.mrb[0].mxu0
    %v7559 = vadd.f32 0.0, %v7558
    %7560 = vmatprep.mubr.bf16.mxu0 %v6126
    %7561 = vmatmul.mubr.bf16.gmra.mrb[0].mxu0 %v6125
    %v7562 = vpop.f32.mrb[0].mxu0
    %v7563 = vadd.f32 0.0, %v7562
    %v7564 = vpop.f32.mrb[0].mxu0
    %v7565 = vadd.f32 0.0, %v7564
    %v7566 = vpop.f32.mrb[0].mxu0
    %v7567 = vadd.f32 0.0, %v7566
    %v7568 = vpop.f32.mrb[0].mxu0
    %v7569 = vadd.f32 0.0, %v7568
    %7570 = vmatprep.mubr.bf16.mxu0 %v6128
    %7571 = vmatmul.mubr.bf16.gmra.mrb[0].mxu0 %v6127
    %v7572 = vpop.f32.mrb[0].mxu0
    %v7573 = vadd.f32 0.0, %v7572
    %v7574 = vpop.f32.mrb[0].mxu0
    %v7575 = vadd.f32 0.0, %v7574
    %v7576 = vpop.f32.mrb[0].mxu0
    %v7577 = vadd.f32 0.0, %v7576
    %v7578 = vpop.f32.mrb[0].mxu0
    %v7579 = vadd.f32 0.0, %v7578
    %7580 = vmatprep.mubr.bf16.mxu0 %v6130
    %7581 = vmatmul.mubr.bf16.gmra.mrb[0].mxu0 %v6129
    %v7582 = vpop.f32.mrb[0].mxu0
    %v7583 = vadd.f32 0.0, %v7582
    %v7584 = vpop.f32.mrb[0].mxu0
    %v7585 = vadd.f32 0.0, %v7584
    %v7586 = vpop.f32.mrb[0].mxu0
    %v7587 = vadd.f32 0.0, %v7586
    %v7588 = vpop.f32.mrb[0].mxu0
    %v7589 = vadd.f32 0.0, %v7588
    %7590 = vmatprep.mubr.bf16.mxu0 %v6132
    %7591 = vmatmul.mubr.bf16.gmra.mrb[0].mxu0 %v6131
    %v7592 = vpop.f32.mrb[0].mxu0
    %v7593 = vadd.f32 0.0, %v7592
    %v7594 = vpop.f32.mrb[0].mxu0
    %v7595 = vadd.f32 0.0, %v7594
    %v7596 = vpop.f32.mrb[0].mxu0
    %v7597 = vadd.f32 0.0, %v7596
    %v7598 = vpop.f32.mrb[0].mxu0
    %v7599 = vadd.f32 0.0, %v7598
    %7600 = vmatprep.mubr.bf16.mxu0 %v6134
    %7601 = vmatmul.mubr.bf16.gmra.mrb[0].mxu0 %v6133
    %v7602 = vpop.f32.mrb[0].mxu0
    %v7603 = vadd.f32 0.0, %v7602
    %v7604 = vpop.f32.mrb[0].mxu0
    %v7605 = vadd.f32 0.0, %v7604
    %v7606 = vpop.f32.mrb[0].mxu0
    %v7607 = vadd.f32 0.0, %v7606
    %v7608 = vpop.f32.mrb[0].mxu0
    %v7609 = vadd.f32 0.0, %v7608
    %7610 = vmatprep.mubr.bf16.mxu0 %v6136
    %7611 = vmatmul.mubr.bf16.gmra.mrb[0].mxu0 %v6135
    %v7612 = vpop.f32.mrb[0].mxu0
    %v7613 = vadd.f32 0.0, %v7612
    %v7614 = vpop.f32.mrb[0].mxu0
    %v7615 = vadd.f32 0.0, %v7614
    %v7616 = vpop.f32.mrb[0].mxu0
    %v7617 = vadd.f32 0.0, %v7616
    %v7618 = vpop.f32.mrb[0].mxu0
    %v7619 = vadd.f32 0.0, %v7618
    %7620 = vmatprep.mubr.bf16.mxu0 %v6138
    %7621 = vmatmul.mubr.bf16.gmra.mrb[0].mxu0 %v6137
    %v7622 = vpop.f32.mrb[0].mxu0
    %v7623 = vadd.f32 0.0, %v7622
    %v7624 = vpop.f32.mrb[0].mxu0
    %v7625 = vadd.f32 0.0, %v7624
    %v7626 = vpop.f32.mrb[0].mxu0
    %v7627 = vadd.f32 0.0, %v7626
    %v7628 = vpop.f32.mrb[0].mxu0
    %v7629 = vadd.f32 0.0, %v7628
    %7630 = vmatprep.mubr.bf16.mxu0 %v6140
    %7631 = vmatmul.mubr.bf16.gmra.mrb[0].mxu0 %v6139
    %v7632 = vpop.f32.mrb[0].mxu0
    %v7633 = vadd.f32 0.0, %v7632
    %v7634 = vpop.f32.mrb[0].mxu0
    %v7635 = vadd.f32 0.0, %v7634
    %v7636 = vpop.f32.mrb[0].mxu0
    %v7637 = vadd.f32 0.0, %v7636
    %v7638 = vpop.f32.mrb[0].mxu0
    %v7639 = vadd.f32 0.0, %v7638
    %7640 = vmatprep.mubr.bf16.mxu0 %v6142
    %7641 = vmatmul.mubr.bf16.gmra.mrb[0].mxu0 %v6141
    %v7642 = vpop.f32.mrb[0].mxu0
    %v7643 = vadd.f32 0.0, %v7642
    %v7644 = vpop.f32.mrb[0].mxu0
    %v7645 = vadd.f32 0.0, %v7644
    %v7646 = vpop.f32.mrb[0].mxu0
    %v7647 = vadd.f32 0.0, %v7646
    %v7648 = vpop.f32.mrb[0].mxu0
    %v7649 = vadd.f32 0.0, %v7648
    %7650 = vmatprep.mubr.bf16.mxu0 %v6144
    %7651 = vmatmul.mubr.bf16.gmra.mrb[0].mxu0 %v6143
    %v7652 = vpop.f32.mrb[0].mxu0
    %v7653 = vadd.f32 0.0, %v7652
    %v7654 = vpop.f32.mrb[0].mxu0
    %v7655 = vadd.f32 0.0, %v7654
    %v7656 = vpop.f32.mrb[0].mxu0
    %v7657 = vadd.f32 0.0, %v7656
    %v7658 = vpop.f32.mrb[0].mxu0
    %v7659 = vadd.f32 0.0, %v7658
    %7660 = vmatprep.mubr.bf16.mxu0 %v6146
    %7661 = vmatmul.mubr.bf16.gmra.mrb[0].mxu0 %v6145
    %v7662 = vpop.f32.mrb[0].mxu0
    %v7663 = vadd.f32 0.0, %v7662
    %v7664 = vpop.f32.mrb[0].mxu0
    %v7665 = vadd.f32 0.0, %v7664
    %v7666 = vpop.f32.mrb[0].mxu0
    %v7667 = vadd.f32 0.0, %v7666
    %v7668 = vpop.f32.mrb[0].mxu0
    %v7669 = vadd.f32 0.0, %v7668
    %7670 = vmatprep.mubr.bf16.mxu0 %v6148
    %7671 = vmatmul.mubr.bf16.gmra.mrb[0].mxu0 %v6147
    %v7672 = vpop.f32.mrb[0].mxu0
    %v7673 = vadd.f32 0.0, %v7672
    %v7674 = vpop.f32.mrb[0].mxu0
    %v7675 = vadd.f32 0.0, %v7674
    %v7676 = vpop.f32.mrb[0].mxu0
    %v7677 = vadd.f32 0.0, %v7676
    %v7678 = vpop.f32.mrb[0].mxu0
    %v7679 = vadd.f32 0.0, %v7678
    %7680 = vmatprep.mubr.bf16.mxu0 %v6150
    %7681 = vmatmul.mubr.bf16.gmra.mrb[0].mxu0 %v6149
    %v7682 = vpop.f32.mrb[0].mxu0
    %v7683 = vadd.f32 0.0, %v7682
    %v7684 = vpop.f32.mrb[0].mxu0
    %v7685 = vadd.f32 0.0, %v7684
    %v7686 = vpop.f32.mrb[0].mxu0
    %v7687 = vadd.f32 0.0, %v7686
    %v7688 = vpop.f32.mrb[0].mxu0
    %v7689 = vadd.f32 0.0, %v7688
    %7690 = vdwg.mxu0
    %v7691 = vadd.f32 %v5638, %v6954
    %v7692 = vadd.f32 %v5639, %v6956
    %v7693 = vadd.f32 %v5640, %v7147
    %v7694 = vadd.f32 %v5641, %v7149
    %v7695 = vadd.f32 %v5642, %v7340
    %v7696 = vadd.f32 %v5643, %v7342
    %v7697 = vadd.f32 %v5644, %v7533
    %v7698 = vadd.f32 %v5645, %v7535
    %v7699 = vadd.f32 %v5646, %v6958
    %v7700 = vadd.f32 %v5647, %v6960
    %v7701 = vadd.f32 %v5648, %v7151
    %v7702 = vadd.f32 %v5649, %v7153
    %v7703 = vadd.f32 %v5650, %v7344
    %v7704 = vadd.f32 %v5651, %v7346
    %v7705 = vadd.f32 %v5652, %v7537
    %v7706 = vadd.f32 %v5653, %v7539
    %v7707 = vadd.f32 %v5654, %v6964
    %v7708 = vadd.f32 %v5655, %v6966
    %v7709 = vadd.f32 %v5656, %v7157
    %v7710 = vadd.f32 %v5657, %v7159
    %v7711 = vadd.f32 %v5658, %v7350
    %v7712 = vadd.f32 %v5659, %v7352
    %v7713 = vadd.f32 %v5660, %v7543
    %v7714 = vadd.f32 %v5661, %v7545
    %v7715 = vadd.f32 %v5662, %v6968
    %v7716 = vadd.f32 %v5663, %v6970
    %v7717 = vadd.f32 %v5664, %v7161
    %v7718 = vadd.f32 %v5665, %v7163
    %v7719 = vadd.f32 %v5666, %v7354
    %v7720 = vadd.f32 %v5667, %v7356
    %v7721 = vadd.f32 %v5668, %v7547
    %v7722 = vadd.f32 %v5669, %v7549
    %v7723 = vadd.f32 %v5670, %v6974
    %v7724 = vadd.f32 %v5671, %v6976
    %v7725 = vadd.f32 %v5672, %v7167
    %v7726 = vadd.f32 %v5673, %v7169
    %v7727 = vadd.f32 %v5674, %v7360
    %v7728 = vadd.f32 %v5675, %v7362
    %v7729 = vadd.f32 %v5676, %v7553
    %v7730 = vadd.f32 %v5677, %v7555
    %v7731 = vadd.f32 %v5678, %v6978
    %v7732 = vadd.f32 %v5679, %v6980
    %v7733 = vadd.f32 %v5680, %v7171
    %v7734 = vadd.f32 %v5681, %v7173
    %v7735 = vadd.f32 %v5682, %v7364
    %v7736 = vadd.f32 %v5683, %v7366
    %v7737 = vadd.f32 %v5684, %v7557
    %v7738 = vadd.f32 %v5685, %v7559
    %v7739 = vadd.f32 %v5686, %v6984
    %v7740 = vadd.f32 %v5687, %v6986
    %v7741 = vadd.f32 %v5688, %v7177
    %v7742 = vadd.f32 %v5689, %v7179
    %v7743 = vadd.f32 %v5690, %v7370
    %v7744 = vadd.f32 %v5691, %v7372
    %v7745 = vadd.f32 %v5692, %v7563
    %v7746 = vadd.f32 %v5693, %v7565
    %v7747 = vadd.f32 %v5694, %v6988
    %v7748 = vadd.f32 %v5695, %v6990
    %v7749 = vadd.f32 %v5696, %v7181
    %v7750 = vadd.f32 %v5697, %v7183
    %v7751 = vadd.f32 %v5698, %v7374
    %v7752 = vadd.f32 %v5699, %v7376
    %v7753 = vadd.f32 %v5700, %v7567
    %v7754 = vadd.f32 %v5701, %v7569
    %v7755 = vadd.f32 %v5702, %v6994
    %v7756 = vadd.f32 %v5703, %v6996
    %v7757 = vadd.f32 %v5704, %v7187
    %v7758 = vadd.f32 %v5705, %v7189
    %v7759 = vadd.f32 %v5706, %v7380
    %v7760 = vadd.f32 %v5707, %v7382
    %v7761 = vadd.f32 %v5708, %v7573
    %v7762 = vadd.f32 %v5709, %v7575
    %v7763 = vadd.f32 %v5710, %v6998
    %v7764 = vadd.f32 %v5711, %v7000
    %v7765 = vadd.f32 %v5712, %v7191
    %v7766 = vadd.f32 %v5713, %v7193
    %v7767 = vadd.f32 %v5714, %v7384
    %v7768 = vadd.f32 %v5715, %v7386
    %v7769 = vadd.f32 %v5716, %v7577
    %v7770 = vadd.f32 %v5717, %v7579
    %v7771 = vadd.f32 %v5718, %v7004
    %v7772 = vadd.f32 %v5719, %v7006
    %v7773 = vadd.f32 %v5720, %v7197
    %v7774 = vadd.f32 %v5721, %v7199
    %v7775 = vadd.f32 %v5722, %v7390
    %v7776 = vadd.f32 %v5723, %v7392
    %v7777 = vadd.f32 %v5724, %v7583
    %v7778 = vadd.f32 %v5725, %v7585
    %v7779 = vadd.f32 %v5726, %v7008
    %v7780 = vadd.f32 %v5727, %v7010
    %v7781 = vadd.f32 %v5728, %v7201
    %v7782 = vadd.f32 %v5729, %v7203
    %v7783 = vadd.f32 %v5730, %v7394
    %v7784 = vadd.f32 %v5731, %v7396
    %v7785 = vadd.f32 %v5732, %v7587
    %v7786 = vadd.f32 %v5733, %v7589
    %v7787 = vadd.f32 %v5734, %v7014
    %v7788 = vadd.f32 %v5735, %v7016
    %v7789 = vadd.f32 %v5736, %v7207
    %v7790 = vadd.f32 %v5737, %v7209
    %v7791 = vadd.f32 %v5738, %v7400
    %v7792 = vadd.f32 %v5739, %v7402
    %v7793 = vadd.f32 %v5740, %v7593
    %v7794 = vadd.f32 %v5741, %v7595
    %v7795 = vadd.f32 %v5742, %v7018
    %v7796 = vadd.f32 %v5743, %v7020
    %v7797 = vadd.f32 %v5744, %v7211
    %v7798 = vadd.f32 %v5745, %v7213
    %v7799 = vadd.f32 %v5746, %v7404
    %v7800 = vadd.f32 %v5747, %v7406
    %v7801 = vadd.f32 %v5748, %v7597
    %v7802 = vadd.f32 %v5749, %v7599
    %v7803 = vadd.f32 %v5750, %v7024
    %v7804 = vadd.f32 %v5751, %v7026
    %v7805 = vadd.f32 %v5752, %v7217
    %v7806 = vadd.f32 %v5753, %v7219
    %v7807 = vadd.f32 %v5754, %v7410
    %v7808 = vadd.f32 %v5755, %v7412
    %v7809 = vadd.f32 %v5756, %v7603
    %v7810 = vadd.f32 %v5757, %v7605
    %v7811 = vadd.f32 %v5758, %v7028
    %v7812 = vadd.f32 %v5759, %v7030
    %v7813 = vadd.f32 %v5760, %v7221
    %v7814 = vadd.f32 %v5761, %v7223
    %v7815 = vadd.f32 %v5762, %v7414
    %v7816 = vadd.f32 %v5763, %v7416
    %v7817 = vadd.f32 %v5764, %v7607
    %v7818 = vadd.f32 %v5765, %v7609
    %v7819 = vadd.f32 %v5766, %v7034
    %v7820 = vadd.f32 %v5767, %v7036
    %v7821 = vadd.f32 %v5768, %v7227
    %v7822 = vadd.f32 %v5769, %v7229
    %v7823 = vadd.f32 %v5770, %v7420
    %v7824 = vadd.f32 %v5771, %v7422
    %v7825 = vadd.f32 %v5772, %v7613
    %v7826 = vadd.f32 %v5773, %v7615
    %v7827 = vadd.f32 %v5774, %v7038
    %v7828 = vadd.f32 %v5775, %v7040
    %v7829 = vadd.f32 %v5776, %v7231
    %v7830 = vadd.f32 %v5777, %v7233
    %v7831 = vadd.f32 %v5778, %v7424
    %v7832 = vadd.f32 %v5779, %v7426
    %v7833 = vadd.f32 %v5780, %v7617
    %v7834 = vadd.f32 %v5781, %v7619
    %v7835 = vadd.f32 %v5782, %v7044
    %v7836 = vadd.f32 %v5783, %v7046
    %v7837 = vadd.f32 %v5784, %v7237
    %v7838 = vadd.f32 %v5785, %v7239
    %v7839 = vadd.f32 %v5786, %v7430
    %v7840 = vadd.f32 %v5787, %v7432
    %v7841 = vadd.f32 %v5788, %v7623
    %v7842 = vadd.f32 %v5789, %v7625
    %v7843 = vadd.f32 %v5790, %v7048
    %v7844 = vadd.f32 %v5791, %v7050
    %v7845 = vadd.f32 %v5792, %v7241
    %v7846 = vadd.f32 %v5793, %v7243
    %v7847 = vadd.f32 %v5794, %v7434
    %v7848 = vadd.f32 %v5795, %v7436
    %v7849 = vadd.f32 %v5796, %v7627
    %v7850 = vadd.f32 %v5797, %v7629
    %v7851 = vadd.f32 %v5798, %v7054
    %v7852 = vadd.f32 %v5799, %v7056
    %v7853 = vadd.f32 %v5800, %v7247
    %v7854 = vadd.f32 %v5801, %v7249
    %v7855 = vadd.f32 %v5802, %v7440
    %v7856 = vadd.f32 %v5803, %v7442
    %v7857 = vadd.f32 %v5804, %v7633
    %v7858 = vadd.f32 %v5805, %v7635
    %v7859 = vadd.f32 %v5806, %v7058
    %v7860 = vadd.f32 %v5807, %v7060
    %v7861 = vadd.f32 %v5808, %v7251
    %v7862 = vadd.f32 %v5809, %v7253
    %v7863 = vadd.f32 %v5810, %v7444
    %v7864 = vadd.f32 %v5811, %v7446
    %v7865 = vadd.f32 %v5812, %v7637
    %v7866 = vadd.f32 %v5813, %v7639
    %v7867 = vadd.f32 %v5814, %v7064
    %v7868 = vadd.f32 %v5815, %v7066
    %v7869 = vadd.f32 %v5816, %v7257
    %v7870 = vadd.f32 %v5817, %v7259
    %v7871 = vadd.f32 %v5818, %v7450
    %v7872 = vadd.f32 %v5819, %v7452
    %v7873 = vadd.f32 %v5820, %v7643
    %v7874 = vadd.f32 %v5821, %v7645
    %v7875 = vadd.f32 %v5822, %v7068
    %v7876 = vadd.f32 %v5823, %v7070
    %v7877 = vadd.f32 %v5824, %v7261
    %v7878 = vadd.f32 %v5825, %v7263
    %v7879 = vadd.f32 %v5826, %v7454
    %v7880 = vadd.f32 %v5827, %v7456
    %v7881 = vadd.f32 %v5828, %v7647
    %v7882 = vadd.f32 %v5829, %v7649
    %v7883 = vadd.f32 %v5830, %v7074
    %v7884 = vadd.f32 %v5831, %v7076
    %v7885 = vadd.f32 %v5832, %v7267
    %v7886 = vadd.f32 %v5833, %v7269
    %v7887 = vadd.f32 %v5834, %v7460
    %v7888 = vadd.f32 %v5835, %v7462
    %v7889 = vadd.f32 %v5836, %v7653
    %v7890 = vadd.f32 %v5837, %v7655
    %v7891 = vadd.f32 %v5838, %v7078
    %v7892 = vadd.f32 %v5839, %v7080
    %v7893 = vadd.f32 %v5840, %v7271
    %v7894 = vadd.f32 %v5841, %v7273
    %v7895 = vadd.f32 %v5842, %v7464
    %v7896 = vadd.f32 %v5843, %v7466
    %v7897 = vadd.f32 %v5844, %v7657
    %v7898 = vadd.f32 %v5845, %v7659
    %v7899 = vadd.f32 %v5846, %v7084
    %v7900 = vadd.f32 %v5847, %v7086
    %v7901 = vadd.f32 %v5848, %v7277
    %v7902 = vadd.f32 %v5849, %v7279
    %v7903 = vadd.f32 %v5850, %v7470
    %v7904 = vadd.f32 %v5851, %v7472
    %v7905 = vadd.f32 %v5852, %v7663
    %v7906 = vadd.f32 %v5853, %v7665
    %v7907 = vadd.f32 %v5854, %v7088
    %v7908 = vadd.f32 %v5855, %v7090
    %v7909 = vadd.f32 %v5856, %v7281
    %v7910 = vadd.f32 %v5857, %v7283
    %v7911 = vadd.f32 %v5858, %v7474
    %v7912 = vadd.f32 %v5859, %v7476
    %v7913 = vadd.f32 %v5860, %v7667
    %v7914 = vadd.f32 %v5861, %v7669
    %v7915 = vadd.f32 %v5862, %v7094
    %v7916 = vadd.f32 %v5863, %v7096
    %v7917 = vadd.f32 %v5864, %v7287
    %v7918 = vadd.f32 %v5865, %v7289
    %v7919 = vadd.f32 %v5866, %v7480
    %v7920 = vadd.f32 %v5867, %v7482
    %v7921 = vadd.f32 %v5868, %v7673
    %v7922 = vadd.f32 %v5869, %v7675
    %v7923 = vadd.f32 %v5870, %v7098
    %v7924 = vadd.f32 %v5871, %v7100
    %v7925 = vadd.f32 %v5872, %v7291
    %v7926 = vadd.f32 %v5873, %v7293
    %v7927 = vadd.f32 %v5874, %v7484
    %v7928 = vadd.f32 %v5875, %v7486
    %v7929 = vadd.f32 %v5876, %v7677
    %v7930 = vadd.f32 %v5877, %v7679
    %v7931 = vadd.f32 %v5878, %v7104
    %v7932 = vadd.f32 %v5879, %v7106
    %v7933 = vadd.f32 %v5880, %v7297
    %v7934 = vadd.f32 %v5881, %v7299
    %v7935 = vadd.f32 %v5882, %v7490
    %v7936 = vadd.f32 %v5883, %v7492
    %v7937 = vadd.f32 %v5884, %v7683
    %v7938 = vadd.f32 %v5885, %v7685
    %v7939 = vadd.f32 %v5886, %v7108
    %v7940 = vadd.f32 %v5887, %v7110
    %v7941 = vadd.f32 %v5888, %v7301
    %v7942 = vadd.f32 %v5889, %v7303
    %v7943 = vadd.f32 %v5890, %v7494
    %v7944 = vadd.f32 %v5891, %v7496
    %v7945 = vadd.f32 %v5892, %v7687
    %v7946 = vadd.f32 %v5893, %v7689
    %v7947 = vld [vmem:[#allocation11] sm:$0xff]
    %v7949 = vlaneseq
    %v7950 = vshrl.u32 %v7949, 7
    %v7951 = vsub.s32 0, %v7950
    %v7952 = vrot.slane %v7947, %v7951
    %v7953 = vlaneseq
    %v7954 = vshrl.u32 %v7953, 7
    %v7955 = vsub.s32 1, %v7954
    %v7956 = vrot.slane %v7947, %v7955
    %v7957 = vlaneseq
    %v7958 = vshrl.u32 %v7957, 7
    %v7959 = vsub.s32 2, %v7958
    %v7960 = vrot.slane %v7947, %v7959
    %v7961 = vlaneseq
    %v7962 = vshrl.u32 %v7961, 7
    %v7963 = vsub.s32 3, %v7962
    %v7964 = vrot.slane %v7947, %v7963
    %v7965 = vlaneseq
    %v7966 = vshrl.u32 %v7965, 7
    %v7967 = vsub.s32 4, %v7966
    %v7968 = vrot.slane %v7947, %v7967
    %v7969 = vlaneseq
    %v7970 = vshrl.u32 %v7969, 7
    %v7971 = vsub.s32 5, %v7970
    %v7972 = vrot.slane %v7947, %v7971
    %v7973 = vlaneseq
    %v7974 = vshrl.u32 %v7973, 7
    %v7975 = vsub.s32 6, %v7974
    %v7976 = vrot.slane %v7947, %v7975
    %v7977 = vlaneseq
    %v7978 = vshrl.u32 %v7977, 7
    %v7979 = vsub.s32 7, %v7978
    %v7980 = vrot.slane %v7947, %v7979
    %v7989 = vadd.f32 %v7691, %v7952
    %v7990 = vadd.f32 %v7692, %v7956
    %v7991 = vadd.f32 %v7693, %v7960
    %v7992 = vadd.f32 %v7694, %v7964
    %v7993 = vadd.f32 %v7695, %v7968
    %v7994 = vadd.f32 %v7696, %v7972
    %v7995 = vadd.f32 %v7697, %v7976
    %v7996 = vadd.f32 %v7698, %v7980
    %v7997 = vadd.f32 %v7699, %v7952
    %v7998 = vadd.f32 %v7700, %v7956
    %v7999 = vadd.f32 %v7701, %v7960
    %v8000 = vadd.f32 %v7702, %v7964
    %v8001 = vadd.f32 %v7703, %v7968
    %v8002 = vadd.f32 %v7704, %v7972
    %v8003 = vadd.f32 %v7705, %v7976
    %v8004 = vadd.f32 %v7706, %v7980
    %v8005 = vadd.f32 %v7707, %v7952
    %v8006 = vadd.f32 %v7708, %v7956
    %v8007 = vadd.f32 %v7709, %v7960
    %v8008 = vadd.f32 %v7710, %v7964
    %v8009 = vadd.f32 %v7711, %v7968
    %v8010 = vadd.f32 %v7712, %v7972
    %v8011 = vadd.f32 %v7713, %v7976
    %v8012 = vadd.f32 %v7714, %v7980
    %v8013 = vadd.f32 %v7715, %v7952
    %v8014 = vadd.f32 %v7716, %v7956
    %v8015 = vadd.f32 %v7717, %v7960
    %v8016 = vadd.f32 %v7718, %v7964
    %v8017 = vadd.f32 %v7719, %v7968
    %v8018 = vadd.f32 %v7720, %v7972
    %v8019 = vadd.f32 %v7721, %v7976
    %v8020 = vadd.f32 %v7722, %v7980
    %v8021 = vadd.f32 %v7723, %v7952
    %v8022 = vadd.f32 %v7724, %v7956
    %v8023 = vadd.f32 %v7725, %v7960
    %v8024 = vadd.f32 %v7726, %v7964
    %v8025 = vadd.f32 %v7727, %v7968
    %v8026 = vadd.f32 %v7728, %v7972
    %v8027 = vadd.f32 %v7729, %v7976
    %v8028 = vadd.f32 %v7730, %v7980
    %v8029 = vadd.f32 %v7731, %v7952
    %v8030 = vadd.f32 %v7732, %v7956
    %v8031 = vadd.f32 %v7733, %v7960
    %v8032 = vadd.f32 %v7734, %v7964
    %v8033 = vadd.f32 %v7735, %v7968
    %v8034 = vadd.f32 %v7736, %v7972
    %v8035 = vadd.f32 %v7737, %v7976
    %v8036 = vadd.f32 %v7738, %v7980
    %v8037 = vadd.f32 %v7739, %v7952
    %v8038 = vadd.f32 %v7740, %v7956
    %v8039 = vadd.f32 %v7741, %v7960
    %v8040 = vadd.f32 %v7742, %v7964
    %v8041 = vadd.f32 %v7743, %v7968
    %v8042 = vadd.f32 %v7744, %v7972
    %v8043 = vadd.f32 %v7745, %v7976
    %v8044 = vadd.f32 %v7746, %v7980
    %v8045 = vadd.f32 %v7747, %v7952
    %v8046 = vadd.f32 %v7748, %v7956
    %v8047 = vadd.f32 %v7749, %v7960
    %v8048 = vadd.f32 %v7750, %v7964
    %v8049 = vadd.f32 %v7751, %v7968
    %v8050 = vadd.f32 %v7752, %v7972
    %v8051 = vadd.f32 %v7753, %v7976
    %v8052 = vadd.f32 %v7754, %v7980
    %v8053 = vadd.f32 %v7755, %v7952
    %v8054 = vadd.f32 %v7756, %v7956
    %v8055 = vadd.f32 %v7757, %v7960
    %v8056 = vadd.f32 %v7758, %v7964
    %v8057 = vadd.f32 %v7759, %v7968
    %v8058 = vadd.f32 %v7760, %v7972
    %v8059 = vadd.f32 %v7761, %v7976
    %v8060 = vadd.f32 %v7762, %v7980
    %v8061 = vadd.f32 %v7763, %v7952
    %v8062 = vadd.f32 %v7764, %v7956
    %v8063 = vadd.f32 %v7765, %v7960
    %v8064 = vadd.f32 %v7766, %v7964
    %v8065 = vadd.f32 %v7767, %v7968
    %v8066 = vadd.f32 %v7768, %v7972
    %v8067 = vadd.f32 %v7769, %v7976
    %v8068 = vadd.f32 %v7770, %v7980
    %v8069 = vadd.f32 %v7771, %v7952
    %v8070 = vadd.f32 %v7772, %v7956
    %v8071 = vadd.f32 %v7773, %v7960
    %v8072 = vadd.f32 %v7774, %v7964
    %v8073 = vadd.f32 %v7775, %v7968
    %v8074 = vadd.f32 %v7776, %v7972
    %v8075 = vadd.f32 %v7777, %v7976
    %v8076 = vadd.f32 %v7778, %v7980
    %v8077 = vadd.f32 %v7779, %v7952
    %v8078 = vadd.f32 %v7780, %v7956
    %v8079 = vadd.f32 %v7781, %v7960
    %v8080 = vadd.f32 %v7782, %v7964
    %v8081 = vadd.f32 %v7783, %v7968
    %v8082 = vadd.f32 %v7784, %v7972
    %v8083 = vadd.f32 %v7785, %v7976
    %v8084 = vadd.f32 %v7786, %v7980
    %v8085 = vadd.f32 %v7787, %v7952
    %v8086 = vadd.f32 %v7788, %v7956
    %v8087 = vadd.f32 %v7789, %v7960
    %v8088 = vadd.f32 %v7790, %v7964
    %v8089 = vadd.f32 %v7791, %v7968
    %v8090 = vadd.f32 %v7792, %v7972
    %v8091 = vadd.f32 %v7793, %v7976
    %v8092 = vadd.f32 %v7794, %v7980
    %v8093 = vadd.f32 %v7795, %v7952
    %v8094 = vadd.f32 %v7796, %v7956
    %v8095 = vadd.f32 %v7797, %v7960
    %v8096 = vadd.f32 %v7798, %v7964
    %v8097 = vadd.f32 %v7799, %v7968
    %v8098 = vadd.f32 %v7800, %v7972
    %v8099 = vadd.f32 %v7801, %v7976
    %v8100 = vadd.f32 %v7802, %v7980
    %v8101 = vadd.f32 %v7803, %v7952
    %v8102 = vadd.f32 %v7804, %v7956
    %v8103 = vadd.f32 %v7805, %v7960
    %v8104 = vadd.f32 %v7806, %v7964
    %v8105 = vadd.f32 %v7807, %v7968
    %v8106 = vadd.f32 %v7808, %v7972
    %v8107 = vadd.f32 %v7809, %v7976
    %v8108 = vadd.f32 %v7810, %v7980
    %v8109 = vadd.f32 %v7811, %v7952
    %v8110 = vadd.f32 %v7812, %v7956
    %v8111 = vadd.f32 %v7813, %v7960
    %v8112 = vadd.f32 %v7814, %v7964
    %v8113 = vadd.f32 %v7815, %v7968
    %v8114 = vadd.f32 %v7816, %v7972
    %v8115 = vadd.f32 %v7817, %v7976
    %v8116 = vadd.f32 %v7818, %v7980
    %v8117 = vadd.f32 %v7819, %v7952
    %v8118 = vadd.f32 %v7820, %v7956
    %v8119 = vadd.f32 %v7821, %v7960
    %v8120 = vadd.f32 %v7822, %v7964
    %v8121 = vadd.f32 %v7823, %v7968
    %v8122 = vadd.f32 %v7824, %v7972
    %v8123 = vadd.f32 %v7825, %v7976
    %v8124 = vadd.f32 %v7826, %v7980
    %v8125 = vadd.f32 %v7827, %v7952
    %v8126 = vadd.f32 %v7828, %v7956
    %v8127 = vadd.f32 %v7829, %v7960
    %v8128 = vadd.f32 %v7830, %v7964
    %v8129 = vadd.f32 %v7831, %v7968
    %v8130 = vadd.f32 %v7832, %v7972
    %v8131 = vadd.f32 %v7833, %v7976
    %v8132 = vadd.f32 %v7834, %v7980
    %v8133 = vadd.f32 %v7835, %v7952
    %v8134 = vadd.f32 %v7836, %v7956
    %v8135 = vadd.f32 %v7837, %v7960
    %v8136 = vadd.f32 %v7838, %v7964
    %v8137 = vadd.f32 %v7839, %v7968
    %v8138 = vadd.f32 %v7840, %v7972
    %v8139 = vadd.f32 %v7841, %v7976
    %v8140 = vadd.f32 %v7842, %v7980
    %v8141 = vadd.f32 %v7843, %v7952
    %v8142 = vadd.f32 %v7844, %v7956
    %v8143 = vadd.f32 %v7845, %v7960
    %v8144 = vadd.f32 %v7846, %v7964
    %v8145 = vadd.f32 %v7847, %v7968
    %v8146 = vadd.f32 %v7848, %v7972
    %v8147 = vadd.f32 %v7849, %v7976
    %v8148 = vadd.f32 %v7850, %v7980
    %v8149 = vadd.f32 %v7851, %v7952
    %v8150 = vadd.f32 %v7852, %v7956
    %v8151 = vadd.f32 %v7853, %v7960
    %v8152 = vadd.f32 %v7854, %v7964
    %v8153 = vadd.f32 %v7855, %v7968
    %v8154 = vadd.f32 %v7856, %v7972
    %v8155 = vadd.f32 %v7857, %v7976
    %v8156 = vadd.f32 %v7858, %v7980
    %v8157 = vadd.f32 %v7859, %v7952
    %v8158 = vadd.f32 %v7860, %v7956
    %v8159 = vadd.f32 %v7861, %v7960
    %v8160 = vadd.f32 %v7862, %v7964
    %v8161 = vadd.f32 %v7863, %v7968
    %v8162 = vadd.f32 %v7864, %v7972
    %v8163 = vadd.f32 %v7865, %v7976
    %v8164 = vadd.f32 %v7866, %v7980
    %v8165 = vadd.f32 %v7867, %v7952
    %v8166 = vadd.f32 %v7868, %v7956
    %v8167 = vadd.f32 %v7869, %v7960
    %v8168 = vadd.f32 %v7870, %v7964
    %v8169 = vadd.f32 %v7871, %v7968
    %v8170 = vadd.f32 %v7872, %v7972
    %v8171 = vadd.f32 %v7873, %v7976
    %v8172 = vadd.f32 %v7874, %v7980
    %v8173 = vadd.f32 %v7875, %v7952
    %v8174 = vadd.f32 %v7876, %v7956
    %v8175 = vadd.f32 %v7877, %v7960
    %v8176 = vadd.f32 %v7878, %v7964
    %v8177 = vadd.f32 %v7879, %v7968
    %v8178 = vadd.f32 %v7880, %v7972
    %v8179 = vadd.f32 %v7881, %v7976
    %v8180 = vadd.f32 %v7882, %v7980
    %v8181 = vadd.f32 %v7883, %v7952
    %v8182 = vadd.f32 %v7884, %v7956
    %v8183 = vadd.f32 %v7885, %v7960
    %v8184 = vadd.f32 %v7886, %v7964
    %v8185 = vadd.f32 %v7887, %v7968
    %v8186 = vadd.f32 %v7888, %v7972
    %v8187 = vadd.f32 %v7889, %v7976
    %v8188 = vadd.f32 %v7890, %v7980
    %v8189 = vadd.f32 %v7891, %v7952
    %v8190 = vadd.f32 %v7892, %v7956
    %v8191 = vadd.f32 %v7893, %v7960
    %v8192 = vadd.f32 %v7894, %v7964
    %v8193 = vadd.f32 %v7895, %v7968
    %v8194 = vadd.f32 %v7896, %v7972
    %v8195 = vadd.f32 %v7897, %v7976
    %v8196 = vadd.f32 %v7898, %v7980
    %v8197 = vadd.f32 %v7899, %v7952
    %v8198 = vadd.f32 %v7900, %v7956
    %v8199 = vadd.f32 %v7901, %v7960
    %v8200 = vadd.f32 %v7902, %v7964
    %v8201 = vadd.f32 %v7903, %v7968
    %v8202 = vadd.f32 %v7904, %v7972
    %v8203 = vadd.f32 %v7905, %v7976
    %v8204 = vadd.f32 %v7906, %v7980
    %v8205 = vadd.f32 %v7907, %v7952
    %v8206 = vadd.f32 %v7908, %v7956
    %v8207 = vadd.f32 %v7909, %v7960
    %v8208 = vadd.f32 %v7910, %v7964
    %v8209 = vadd.f32 %v7911, %v7968
    %v8210 = vadd.f32 %v7912, %v7972
    %v8211 = vadd.f32 %v7913, %v7976
    %v8212 = vadd.f32 %v7914, %v7980
    %v8213 = vadd.f32 %v7915, %v7952
    %v8214 = vadd.f32 %v7916, %v7956
    %v8215 = vadd.f32 %v7917, %v7960
    %v8216 = vadd.f32 %v7918, %v7964
    %v8217 = vadd.f32 %v7919, %v7968
    %v8218 = vadd.f32 %v7920, %v7972
    %v8219 = vadd.f32 %v7921, %v7976
    %v8220 = vadd.f32 %v7922, %v7980
    %v8221 = vadd.f32 %v7923, %v7952
    %v8222 = vadd.f32 %v7924, %v7956
    %v8223 = vadd.f32 %v7925, %v7960
    %v8224 = vadd.f32 %v7926, %v7964
    %v8225 = vadd.f32 %v7927, %v7968
    %v8226 = vadd.f32 %v7928, %v7972
    %v8227 = vadd.f32 %v7929, %v7976
    %v8228 = vadd.f32 %v7930, %v7980
    %v8229 = vadd.f32 %v7931, %v7952
    %v8230 = vadd.f32 %v7932, %v7956
    %v8231 = vadd.f32 %v7933, %v7960
    %v8232 = vadd.f32 %v7934, %v7964
    %v8233 = vadd.f32 %v7935, %v7968
    %v8234 = vadd.f32 %v7936, %v7972
    %v8235 = vadd.f32 %v7937, %v7976
    %v8236 = vadd.f32 %v7938, %v7980
    %v8237 = vadd.f32 %v7939, %v7952
    %v8238 = vadd.f32 %v7940, %v7956
    %v8239 = vadd.f32 %v7941, %v7960
    %v8240 = vadd.f32 %v7942, %v7964
    %v8241 = vadd.f32 %v7943, %v7968
    %v8242 = vadd.f32 %v7944, %v7972
    %v8243 = vadd.f32 %v7945, %v7976
    %v8244 = vadd.f32 %v7946, %v7980
    %v8245 = vmax.f32 %v7989, 0.0
    %v8246 = vmax.f32 %v7990, 0.0
    %v8247 = vmax.f32 %v7991, 0.0
    %v8248 = vmax.f32 %v7992, 0.0
    %v8249 = vmax.f32 %v7993, 0.0
    %v8250 = vmax.f32 %v7994, 0.0
    %v8251 = vmax.f32 %v7995, 0.0
    %v8252 = vmax.f32 %v7996, 0.0
    %v8253 = vmax.f32 %v7997, 0.0
    %v8254 = vmax.f32 %v7998, 0.0
    %v8255 = vmax.f32 %v7999, 0.0
    %v8256 = vmax.f32 %v8000, 0.0
    %v8257 = vmax.f32 %v8001, 0.0
    %v8258 = vmax.f32 %v8002, 0.0
    %v8259 = vmax.f32 %v8003, 0.0
    %v8260 = vmax.f32 %v8004, 0.0
    %v8261 = vmax.f32 %v8005, 0.0
    %v8262 = vmax.f32 %v8006, 0.0
    %v8263 = vmax.f32 %v8007, 0.0
    %v8264 = vmax.f32 %v8008, 0.0
    %v8265 = vmax.f32 %v8009, 0.0
    %v8266 = vmax.f32 %v8010, 0.0
    %v8267 = vmax.f32 %v8011, 0.0
    %v8268 = vmax.f32 %v8012, 0.0
    %v8269 = vmax.f32 %v8013, 0.0
    %v8270 = vmax.f32 %v8014, 0.0
    %v8271 = vmax.f32 %v8015, 0.0
    %v8272 = vmax.f32 %v8016, 0.0
    %v8273 = vmax.f32 %v8017, 0.0
    %v8274 = vmax.f32 %v8018, 0.0
    %v8275 = vmax.f32 %v8019, 0.0
    %v8276 = vmax.f32 %v8020, 0.0
    %v8277 = vmax.f32 %v8021, 0.0
    %v8278 = vmax.f32 %v8022, 0.0
    %v8279 = vmax.f32 %v8023, 0.0
    %v8280 = vmax.f32 %v8024, 0.0
    %v8281 = vmax.f32 %v8025, 0.0
    %v8282 = vmax.f32 %v8026, 0.0
    %v8283 = vmax.f32 %v8027, 0.0
    %v8284 = vmax.f32 %v8028, 0.0
    %v8285 = vmax.f32 %v8029, 0.0
    %v8286 = vmax.f32 %v8030, 0.0
    %v8287 = vmax.f32 %v8031, 0.0
    %v8288 = vmax.f32 %v8032, 0.0
    %v8289 = vmax.f32 %v8033, 0.0
    %v8290 = vmax.f32 %v8034, 0.0
    %v8291 = vmax.f32 %v8035, 0.0
    %v8292 = vmax.f32 %v8036, 0.0
    %v8293 = vmax.f32 %v8037, 0.0
    %v8294 = vmax.f32 %v8038, 0.0
    %v8295 = vmax.f32 %v8039, 0.0
    %v8296 = vmax.f32 %v8040, 0.0
    %v8297 = vmax.f32 %v8041, 0.0
    %v8298 = vmax.f32 %v8042, 0.0
    %v8299 = vmax.f32 %v8043, 0.0
    %v8300 = vmax.f32 %v8044, 0.0
    %v8301 = vmax.f32 %v8045, 0.0
    %v8302 = vmax.f32 %v8046, 0.0
    %v8303 = vmax.f32 %v8047, 0.0
    %v8304 = vmax.f32 %v8048, 0.0
    %v8305 = vmax.f32 %v8049, 0.0
    %v8306 = vmax.f32 %v8050, 0.0
    %v8307 = vmax.f32 %v8051, 0.0
    %v8308 = vmax.f32 %v8052, 0.0
    %v8309 = vmax.f32 %v8053, 0.0
    %v8310 = vmax.f32 %v8054, 0.0
    %v8311 = vmax.f32 %v8055, 0.0
    %v8312 = vmax.f32 %v8056, 0.0
    %v8313 = vmax.f32 %v8057, 0.0
    %v8314 = vmax.f32 %v8058, 0.0
    %v8315 = vmax.f32 %v8059, 0.0
    %v8316 = vmax.f32 %v8060, 0.0
    %v8317 = vmax.f32 %v8061, 0.0
    %v8318 = vmax.f32 %v8062, 0.0
    %v8319 = vmax.f32 %v8063, 0.0
    %v8320 = vmax.f32 %v8064, 0.0
    %v8321 = vmax.f32 %v8065, 0.0
    %v8322 = vmax.f32 %v8066, 0.0
    %v8323 = vmax.f32 %v8067, 0.0
    %v8324 = vmax.f32 %v8068, 0.0
    %v8325 = vmax.f32 %v8069, 0.0
    %v8326 = vmax.f32 %v8070, 0.0
    %v8327 = vmax.f32 %v8071, 0.0
    %v8328 = vmax.f32 %v8072, 0.0
    %v8329 = vmax.f32 %v8073, 0.0
    %v8330 = vmax.f32 %v8074, 0.0
    %v8331 = vmax.f32 %v8075, 0.0
    %v8332 = vmax.f32 %v8076, 0.0
    %v8333 = vmax.f32 %v8077, 0.0
    %v8334 = vmax.f32 %v8078, 0.0
    %v8335 = vmax.f32 %v8079, 0.0
    %v8336 = vmax.f32 %v8080, 0.0
    %v8337 = vmax.f32 %v8081, 0.0
    %v8338 = vmax.f32 %v8082, 0.0
    %v8339 = vmax.f32 %v8083, 0.0
    %v8340 = vmax.f32 %v8084, 0.0
    %v8341 = vmax.f32 %v8085, 0.0
    %v8342 = vmax.f32 %v8086, 0.0
    %v8343 = vmax.f32 %v8087, 0.0
    %v8344 = vmax.f32 %v8088, 0.0
    %v8345 = vmax.f32 %v8089, 0.0
    %v8346 = vmax.f32 %v8090, 0.0
    %v8347 = vmax.f32 %v8091, 0.0
    %v8348 = vmax.f32 %v8092, 0.0
    %v8349 = vmax.f32 %v8093, 0.0
    %v8350 = vmax.f32 %v8094, 0.0
    %v8351 = vmax.f32 %v8095, 0.0
    %v8352 = vmax.f32 %v8096, 0.0
    %v8353 = vmax.f32 %v8097, 0.0
    %v8354 = vmax.f32 %v8098, 0.0
    %v8355 = vmax.f32 %v8099, 0.0
    %v8356 = vmax.f32 %v8100, 0.0
    %v8357 = vmax.f32 %v8101, 0.0
    %v8358 = vmax.f32 %v8102, 0.0
    %v8359 = vmax.f32 %v8103, 0.0
    %v8360 = vmax.f32 %v8104, 0.0
    %v8361 = vmax.f32 %v8105, 0.0
    %v8362 = vmax.f32 %v8106, 0.0
    %v8363 = vmax.f32 %v8107, 0.0
    %v8364 = vmax.f32 %v8108, 0.0
    %v8365 = vmax.f32 %v8109, 0.0
    %v8366 = vmax.f32 %v8110, 0.0
    %v8367 = vmax.f32 %v8111, 0.0
    %v8368 = vmax.f32 %v8112, 0.0
    %v8369 = vmax.f32 %v8113, 0.0
    %v8370 = vmax.f32 %v8114, 0.0
    %v8371 = vmax.f32 %v8115, 0.0
    %v8372 = vmax.f32 %v8116, 0.0
    %v8373 = vmax.f32 %v8117, 0.0
    %v8374 = vmax.f32 %v8118, 0.0
    %v8375 = vmax.f32 %v8119, 0.0
    %v8376 = vmax.f32 %v8120, 0.0
    %v8377 = vmax.f32 %v8121, 0.0
    %v8378 = vmax.f32 %v8122, 0.0
    %v8379 = vmax.f32 %v8123, 0.0
    %v8380 = vmax.f32 %v8124, 0.0
    %v8381 = vmax.f32 %v8125, 0.0
    %v8382 = vmax.f32 %v8126, 0.0
    %v8383 = vmax.f32 %v8127, 0.0
    %v8384 = vmax.f32 %v8128, 0.0
    %v8385 = vmax.f32 %v8129, 0.0
    %v8386 = vmax.f32 %v8130, 0.0
    %v8387 = vmax.f32 %v8131, 0.0
    %v8388 = vmax.f32 %v8132, 0.0
    %v8389 = vmax.f32 %v8133, 0.0
    %v8390 = vmax.f32 %v8134, 0.0
    %v8391 = vmax.f32 %v8135, 0.0
    %v8392 = vmax.f32 %v8136, 0.0
    %v8393 = vmax.f32 %v8137, 0.0
    %v8394 = vmax.f32 %v8138, 0.0
    %v8395 = vmax.f32 %v8139, 0.0
    %v8396 = vmax.f32 %v8140, 0.0
    %v8397 = vmax.f32 %v8141, 0.0
    %v8398 = vmax.f32 %v8142, 0.0
    %v8399 = vmax.f32 %v8143, 0.0
    %v8400 = vmax.f32 %v8144, 0.0
    %v8401 = vmax.f32 %v8145, 0.0
    %v8402 = vmax.f32 %v8146, 0.0
    %v8403 = vmax.f32 %v8147, 0.0
    %v8404 = vmax.f32 %v8148, 0.0
    %v8405 = vmax.f32 %v8149, 0.0
    %v8406 = vmax.f32 %v8150, 0.0
    %v8407 = vmax.f32 %v8151, 0.0
    %v8408 = vmax.f32 %v8152, 0.0
    %v8409 = vmax.f32 %v8153, 0.0
    %v8410 = vmax.f32 %v8154, 0.0
    %v8411 = vmax.f32 %v8155, 0.0
    %v8412 = vmax.f32 %v8156, 0.0
    %v8413 = vmax.f32 %v8157, 0.0
    %v8414 = vmax.f32 %v8158, 0.0
    %v8415 = vmax.f32 %v8159, 0.0
    %v8416 = vmax.f32 %v8160, 0.0
    %v8417 = vmax.f32 %v8161, 0.0
    %v8418 = vmax.f32 %v8162, 0.0
    %v8419 = vmax.f32 %v8163, 0.0
    %v8420 = vmax.f32 %v8164, 0.0
    %v8421 = vmax.f32 %v8165, 0.0
    %v8422 = vmax.f32 %v8166, 0.0
    %v8423 = vmax.f32 %v8167, 0.0
    %v8424 = vmax.f32 %v8168, 0.0
    %v8425 = vmax.f32 %v8169, 0.0
    %v8426 = vmax.f32 %v8170, 0.0
    %v8427 = vmax.f32 %v8171, 0.0
    %v8428 = vmax.f32 %v8172, 0.0
    %v8429 = vmax.f32 %v8173, 0.0
    %v8430 = vmax.f32 %v8174, 0.0
    %v8431 = vmax.f32 %v8175, 0.0
    %v8432 = vmax.f32 %v8176, 0.0
    %v8433 = vmax.f32 %v8177, 0.0
    %v8434 = vmax.f32 %v8178, 0.0
    %v8435 = vmax.f32 %v8179, 0.0
    %v8436 = vmax.f32 %v8180, 0.0
    %v8437 = vmax.f32 %v8181, 0.0
    %v8438 = vmax.f32 %v8182, 0.0
    %v8439 = vmax.f32 %v8183, 0.0
    %v8440 = vmax.f32 %v8184, 0.0
    %v8441 = vmax.f32 %v8185, 0.0
    %v8442 = vmax.f32 %v8186, 0.0
    %v8443 = vmax.f32 %v8187, 0.0
    %v8444 = vmax.f32 %v8188, 0.0
    %v8445 = vmax.f32 %v8189, 0.0
    %v8446 = vmax.f32 %v8190, 0.0
    %v8447 = vmax.f32 %v8191, 0.0
    %v8448 = vmax.f32 %v8192, 0.0
    %v8449 = vmax.f32 %v8193, 0.0
    %v8450 = vmax.f32 %v8194, 0.0
    %v8451 = vmax.f32 %v8195, 0.0
    %v8452 = vmax.f32 %v8196, 0.0
    %v8453 = vmax.f32 %v8197, 0.0
    %v8454 = vmax.f32 %v8198, 0.0
    %v8455 = vmax.f32 %v8199, 0.0
    %v8456 = vmax.f32 %v8200, 0.0
    %v8457 = vmax.f32 %v8201, 0.0
    %v8458 = vmax.f32 %v8202, 0.0
    %v8459 = vmax.f32 %v8203, 0.0
    %v8460 = vmax.f32 %v8204, 0.0
    %v8461 = vmax.f32 %v8205, 0.0
    %v8462 = vmax.f32 %v8206, 0.0
    %v8463 = vmax.f32 %v8207, 0.0
    %v8464 = vmax.f32 %v8208, 0.0
    %v8465 = vmax.f32 %v8209, 0.0
    %v8466 = vmax.f32 %v8210, 0.0
    %v8467 = vmax.f32 %v8211, 0.0
    %v8468 = vmax.f32 %v8212, 0.0
    %v8469 = vmax.f32 %v8213, 0.0
    %v8470 = vmax.f32 %v8214, 0.0
    %v8471 = vmax.f32 %v8215, 0.0
    %v8472 = vmax.f32 %v8216, 0.0
    %v8473 = vmax.f32 %v8217, 0.0
    %v8474 = vmax.f32 %v8218, 0.0
    %v8475 = vmax.f32 %v8219, 0.0
    %v8476 = vmax.f32 %v8220, 0.0
    %v8477 = vmax.f32 %v8221, 0.0
    %v8478 = vmax.f32 %v8222, 0.0
    %v8479 = vmax.f32 %v8223, 0.0
    %v8480 = vmax.f32 %v8224, 0.0
    %v8481 = vmax.f32 %v8225, 0.0
    %v8482 = vmax.f32 %v8226, 0.0
    %v8483 = vmax.f32 %v8227, 0.0
    %v8484 = vmax.f32 %v8228, 0.0
    %v8485 = vmax.f32 %v8229, 0.0
    %v8486 = vmax.f32 %v8230, 0.0
    %v8487 = vmax.f32 %v8231, 0.0
    %v8488 = vmax.f32 %v8232, 0.0
    %v8489 = vmax.f32 %v8233, 0.0
    %v8490 = vmax.f32 %v8234, 0.0
    %v8491 = vmax.f32 %v8235, 0.0
    %v8492 = vmax.f32 %v8236, 0.0
    %v8493 = vmax.f32 %v8237, 0.0
    %v8494 = vmax.f32 %v8238, 0.0
    %v8495 = vmax.f32 %v8239, 0.0
    %v8496 = vmax.f32 %v8240, 0.0
    %v8497 = vmax.f32 %v8241, 0.0
    %v8498 = vmax.f32 %v8242, 0.0
    %v8499 = vmax.f32 %v8243, 0.0
    %v8500 = vmax.f32 %v8244, 0.0
    %v8501 = vld [vmem:[#allocation12] sm:$0xff]
    %v8502 = vunpack.c.l.bf16 %v8501
    %v8503 = vunpack.c.h.bf16 %v8501
    %v8506 = vlaneseq
    %v8507 = vshrl.u32 %v8506, 7
    %v8508 = vsub.s32 0, %v8507
    %v8509 = vrot.slane %v8502, %v8508
    %v8510 = vlaneseq
    %v8511 = vshrl.u32 %v8510, 7
    %v8512 = vsub.s32 2, %v8511
    %v8513 = vrot.slane %v8502, %v8512
    %v8514 = vlaneseq
    %v8515 = vshrl.u32 %v8514, 7
    %v8516 = vsub.s32 4, %v8515
    %v8517 = vrot.slane %v8502, %v8516
    %v8518 = vlaneseq
    %v8519 = vshrl.u32 %v8518, 7
    %v8520 = vsub.s32 6, %v8519
    %v8521 = vrot.slane %v8502, %v8520
    %v8522 = vlaneseq
    %v8523 = vshrl.u32 %v8522, 7
    %v8524 = vsub.s32 0, %v8523
    %v8525 = vrot.slane %v8503, %v8524
    %v8526 = vlaneseq
    %v8527 = vshrl.u32 %v8526, 7
    %v8528 = vsub.s32 2, %v8527
    %v8529 = vrot.slane %v8503, %v8528
    %v8530 = vlaneseq
    %v8531 = vshrl.u32 %v8530, 7
    %v8532 = vsub.s32 4, %v8531
    %v8533 = vrot.slane %v8503, %v8532
    %v8534 = vlaneseq
    %v8535 = vshrl.u32 %v8534, 7
    %v8536 = vsub.s32 6, %v8535
    %v8537 = vrot.slane %v8503, %v8536
    %v8546 = vlaneseq
    %v8547 = vshrl.u32 %v8546, 7
    %v8548 = vsub.s32 0, %v8547
    %v8549 = vrot.slane %v8509, %v8548
    %v8550 = vlaneseq
    %v8551 = vshrl.u32 %v8550, 7
    %v8552 = vsub.s32 0, %v8551
    %v8553 = vrot.slane %v8513, %v8552
    %v8554 = vlaneseq
    %v8555 = vshrl.u32 %v8554, 7
    %v8556 = vsub.s32 0, %v8555
    %v8557 = vrot.slane %v8517, %v8556
    %v8558 = vlaneseq
    %v8559 = vshrl.u32 %v8558, 7
    %v8560 = vsub.s32 0, %v8559
    %v8561 = vrot.slane %v8521, %v8560
    %v8562 = vlaneseq
    %v8563 = vshrl.u32 %v8562, 7
    %v8564 = vsub.s32 0, %v8563
    %v8565 = vrot.slane %v8525, %v8564
    %v8566 = vlaneseq
    %v8567 = vshrl.u32 %v8566, 7
    %v8568 = vsub.s32 0, %v8567
    %v8569 = vrot.slane %v8529, %v8568
    %v8570 = vlaneseq
    %v8571 = vshrl.u32 %v8570, 7
    %v8572 = vsub.s32 0, %v8571
    %v8573 = vrot.slane %v8533, %v8572
    %v8574 = vlaneseq
    %v8575 = vshrl.u32 %v8574, 7
    %v8576 = vsub.s32 0, %v8575
    %v8577 = vrot.slane %v8537, %v8576
    %v8578 = vmul.f32 %v8245, %v8549
    %v8579 = vmul.f32 %v8246, %v8553
    %v8580 = vmul.f32 %v8247, %v8557
    %v8581 = vmul.f32 %v8248, %v8561
    %v8582 = vmul.f32 %v8249, %v8565
    %v8583 = vmul.f32 %v8250, %v8569
    %v8584 = vmul.f32 %v8251, %v8573
    %v8585 = vmul.f32 %v8252, %v8577
    %v8586 = vmul.f32 %v8253, %v8549
    %v8587 = vmul.f32 %v8254, %v8553
    %v8588 = vmul.f32 %v8255, %v8557
    %v8589 = vmul.f32 %v8256, %v8561
    %v8590 = vmul.f32 %v8257, %v8565
    %v8591 = vmul.f32 %v8258, %v8569
    %v8592 = vmul.f32 %v8259, %v8573
    %v8593 = vmul.f32 %v8260, %v8577
    %v8594 = vmul.f32 %v8261, %v8549
    %v8595 = vmul.f32 %v8262, %v8553
    %v8596 = vmul.f32 %v8263, %v8557
    %v8597 = vmul.f32 %v8264, %v8561
    %v8598 = vmul.f32 %v8265, %v8565
    %v8599 = vmul.f32 %v8266, %v8569
    %v8600 = vmul.f32 %v8267, %v8573
    %v8601 = vmul.f32 %v8268, %v8577
    %v8602 = vmul.f32 %v8269, %v8549
    %v8603 = vmul.f32 %v8270, %v8553
    %v8604 = vmul.f32 %v8271, %v8557
    %v8605 = vmul.f32 %v8272, %v8561
    %v8606 = vmul.f32 %v8273, %v8565
    %v8607 = vmul.f32 %v8274, %v8569
    %v8608 = vmul.f32 %v8275, %v8573
    %v8609 = vmul.f32 %v8276, %v8577
    %v8610 = vmul.f32 %v8277, %v8549
    %v8611 = vmul.f32 %v8278, %v8553
    %v8612 = vmul.f32 %v8279, %v8557
    %v8613 = vmul.f32 %v8280, %v8561
    %v8614 = vmul.f32 %v8281, %v8565
    %v8615 = vmul.f32 %v8282, %v8569
    %v8616 = vmul.f32 %v8283, %v8573
    %v8617 = vmul.f32 %v8284, %v8577
    %v8618 = vmul.f32 %v8285, %v8549
    %v8619 = vmul.f32 %v8286, %v8553
    %v8620 = vmul.f32 %v8287, %v8557
    %v8621 = vmul.f32 %v8288, %v8561
    %v8622 = vmul.f32 %v8289, %v8565
    %v8623 = vmul.f32 %v8290, %v8569
    %v8624 = vmul.f32 %v8291, %v8573
    %v8625 = vmul.f32 %v8292, %v8577
    %v8626 = vmul.f32 %v8293, %v8549
    %v8627 = vmul.f32 %v8294, %v8553
    %v8628 = vmul.f32 %v8295, %v8557
    %v8629 = vmul.f32 %v8296, %v8561
    %v8630 = vmul.f32 %v8297, %v8565
    %v8631 = vmul.f32 %v8298, %v8569
    %v8632 = vmul.f32 %v8299, %v8573
    %v8633 = vmul.f32 %v8300, %v8577
    %v8634 = vmul.f32 %v8301, %v8549
    %v8635 = vmul.f32 %v8302, %v8553
    %v8636 = vmul.f32 %v8303, %v8557
    %v8637 = vmul.f32 %v8304, %v8561
    %v8638 = vmul.f32 %v8305, %v8565
    %v8639 = vmul.f32 %v8306, %v8569
    %v8640 = vmul.f32 %v8307, %v8573
    %v8641 = vmul.f32 %v8308, %v8577
    %v8642 = vmul.f32 %v8309, %v8549
    %v8643 = vmul.f32 %v8310, %v8553
    %v8644 = vmul.f32 %v8311, %v8557
    %v8645 = vmul.f32 %v8312, %v8561
    %v8646 = vmul.f32 %v8313, %v8565
    %v8647 = vmul.f32 %v8314, %v8569
    %v8648 = vmul.f32 %v8315, %v8573
    %v8649 = vmul.f32 %v8316, %v8577
    %v8650 = vmul.f32 %v8317, %v8549
    %v8651 = vmul.f32 %v8318, %v8553
    %v8652 = vmul.f32 %v8319, %v8557
    %v8653 = vmul.f32 %v8320, %v8561
    %v8654 = vmul.f32 %v8321, %v8565
    %v8655 = vmul.f32 %v8322, %v8569
    %v8656 = vmul.f32 %v8323, %v8573
    %v8657 = vmul.f32 %v8324, %v8577
    %v8658 = vmul.f32 %v8325, %v8549
    %v8659 = vmul.f32 %v8326, %v8553
    %v8660 = vmul.f32 %v8327, %v8557
    %v8661 = vmul.f32 %v8328, %v8561
    %v8662 = vmul.f32 %v8329, %v8565
    %v8663 = vmul.f32 %v8330, %v8569
    %v8664 = vmul.f32 %v8331, %v8573
    %v8665 = vmul.f32 %v8332, %v8577
    %v8666 = vmul.f32 %v8333, %v8549
    %v8667 = vmul.f32 %v8334, %v8553
    %v8668 = vmul.f32 %v8335, %v8557
    %v8669 = vmul.f32 %v8336, %v8561
    %v8670 = vmul.f32 %v8337, %v8565
    %v8671 = vmul.f32 %v8338, %v8569
    %v8672 = vmul.f32 %v8339, %v8573
    %v8673 = vmul.f32 %v8340, %v8577
    %v8674 = vmul.f32 %v8341, %v8549
    %v8675 = vmul.f32 %v8342, %v8553
    %v8676 = vmul.f32 %v8343, %v8557
    %v8677 = vmul.f32 %v8344, %v8561
    %v8678 = vmul.f32 %v8345, %v8565
    %v8679 = vmul.f32 %v8346, %v8569
    %v8680 = vmul.f32 %v8347, %v8573
    %v8681 = vmul.f32 %v8348, %v8577
    %v8682 = vmul.f32 %v8349, %v8549
    %v8683 = vmul.f32 %v8350, %v8553
    %v8684 = vmul.f32 %v8351, %v8557
    %v8685 = vmul.f32 %v8352, %v8561
    %v8686 = vmul.f32 %v8353, %v8565
    %v8687 = vmul.f32 %v8354, %v8569
    %v8688 = vmul.f32 %v8355, %v8573
    %v8689 = vmul.f32 %v8356, %v8577
    %v8690 = vmul.f32 %v8357, %v8549
    %v8691 = vmul.f32 %v8358, %v8553
    %v8692 = vmul.f32 %v8359, %v8557
    %v8693 = vmul.f32 %v8360, %v8561
    %v8694 = vmul.f32 %v8361, %v8565
    %v8695 = vmul.f32 %v8362, %v8569
    %v8696 = vmul.f32 %v8363, %v8573
    %v8697 = vmul.f32 %v8364, %v8577
    %v8698 = vmul.f32 %v8365, %v8549
    %v8699 = vmul.f32 %v8366, %v8553
    %v8700 = vmul.f32 %v8367, %v8557
    %v8701 = vmul.f32 %v8368, %v8561
    %v8702 = vmul.f32 %v8369, %v8565
    %v8703 = vmul.f32 %v8370, %v8569
    %v8704 = vmul.f32 %v8371, %v8573
    %v8705 = vmul.f32 %v8372, %v8577
    %v8706 = vmul.f32 %v8373, %v8549
    %v8707 = vmul.f32 %v8374, %v8553
    %v8708 = vmul.f32 %v8375, %v8557
    %v8709 = vmul.f32 %v8376, %v8561
    %v8710 = vmul.f32 %v8377, %v8565
    %v8711 = vmul.f32 %v8378, %v8569
    %v8712 = vmul.f32 %v8379, %v8573
    %v8713 = vmul.f32 %v8380, %v8577
    %v8714 = vmul.f32 %v8381, %v8549
    %v8715 = vmul.f32 %v8382, %v8553
    %v8716 = vmul.f32 %v8383, %v8557
    %v8717 = vmul.f32 %v8384, %v8561
    %v8718 = vmul.f32 %v8385, %v8565
    %v8719 = vmul.f32 %v8386, %v8569
    %v8720 = vmul.f32 %v8387, %v8573
    %v8721 = vmul.f32 %v8388, %v8577
    %v8722 = vmul.f32 %v8389, %v8549
    %v8723 = vmul.f32 %v8390, %v8553
    %v8724 = vmul.f32 %v8391, %v8557
    %v8725 = vmul.f32 %v8392, %v8561
    %v8726 = vmul.f32 %v8393, %v8565
    %v8727 = vmul.f32 %v8394, %v8569
    %v8728 = vmul.f32 %v8395, %v8573
    %v8729 = vmul.f32 %v8396, %v8577
    %v8730 = vmul.f32 %v8397, %v8549
    %v8731 = vmul.f32 %v8398, %v8553
    %v8732 = vmul.f32 %v8399, %v8557
    %v8733 = vmul.f32 %v8400, %v8561
    %v8734 = vmul.f32 %v8401, %v8565
    %v8735 = vmul.f32 %v8402, %v8569
    %v8736 = vmul.f32 %v8403, %v8573
    %v8737 = vmul.f32 %v8404, %v8577
    %v8738 = vmul.f32 %v8405, %v8549
    %v8739 = vmul.f32 %v8406, %v8553
    %v8740 = vmul.f32 %v8407, %v8557
    %v8741 = vmul.f32 %v8408, %v8561
    %v8742 = vmul.f32 %v8409, %v8565
    %v8743 = vmul.f32 %v8410, %v8569
    %v8744 = vmul.f32 %v8411, %v8573
    %v8745 = vmul.f32 %v8412, %v8577
    %v8746 = vmul.f32 %v8413, %v8549
    %v8747 = vmul.f32 %v8414, %v8553
    %v8748 = vmul.f32 %v8415, %v8557
    %v8749 = vmul.f32 %v8416, %v8561
    %v8750 = vmul.f32 %v8417, %v8565
    %v8751 = vmul.f32 %v8418, %v8569
    %v8752 = vmul.f32 %v8419, %v8573
    %v8753 = vmul.f32 %v8420, %v8577
    %v8754 = vmul.f32 %v8421, %v8549
    %v8755 = vmul.f32 %v8422, %v8553
    %v8756 = vmul.f32 %v8423, %v8557
    %v8757 = vmul.f32 %v8424, %v8561
    %v8758 = vmul.f32 %v8425, %v8565
    %v8759 = vmul.f32 %v8426, %v8569
    %v8760 = vmul.f32 %v8427, %v8573
    %v8761 = vmul.f32 %v8428, %v8577
    %v8762 = vmul.f32 %v8429, %v8549
    %v8763 = vmul.f32 %v8430, %v8553
    %v8764 = vmul.f32 %v8431, %v8557
    %v8765 = vmul.f32 %v8432, %v8561
    %v8766 = vmul.f32 %v8433, %v8565
    %v8767 = vmul.f32 %v8434, %v8569
    %v8768 = vmul.f32 %v8435, %v8573
    %v8769 = vmul.f32 %v8436, %v8577
    %v8770 = vmul.f32 %v8437, %v8549
    %v8771 = vmul.f32 %v8438, %v8553
    %v8772 = vmul.f32 %v8439, %v8557
    %v8773 = vmul.f32 %v8440, %v8561
    %v8774 = vmul.f32 %v8441, %v8565
    %v8775 = vmul.f32 %v8442, %v8569
    %v8776 = vmul.f32 %v8443, %v8573
    %v8777 = vmul.f32 %v8444, %v8577
    %v8778 = vmul.f32 %v8445, %v8549
    %v8779 = vmul.f32 %v8446, %v8553
    %v8780 = vmul.f32 %v8447, %v8557
    %v8781 = vmul.f32 %v8448, %v8561
    %v8782 = vmul.f32 %v8449, %v8565
    %v8783 = vmul.f32 %v8450, %v8569
    %v8784 = vmul.f32 %v8451, %v8573
    %v8785 = vmul.f32 %v8452, %v8577
    %v8786 = vmul.f32 %v8453, %v8549
    %v8787 = vmul.f32 %v8454, %v8553
    %v8788 = vmul.f32 %v8455, %v8557
    %v8789 = vmul.f32 %v8456, %v8561
    %v8790 = vmul.f32 %v8457, %v8565
    %v8791 = vmul.f32 %v8458, %v8569
    %v8792 = vmul.f32 %v8459, %v8573
    %v8793 = vmul.f32 %v8460, %v8577
    %v8794 = vmul.f32 %v8461, %v8549
    %v8795 = vmul.f32 %v8462, %v8553
    %v8796 = vmul.f32 %v8463, %v8557
    %v8797 = vmul.f32 %v8464, %v8561
    %v8798 = vmul.f32 %v8465, %v8565
    %v8799 = vmul.f32 %v8466, %v8569
    %v8800 = vmul.f32 %v8467, %v8573
    %v8801 = vmul.f32 %v8468, %v8577
    %v8802 = vmul.f32 %v8469, %v8549
    %v8803 = vmul.f32 %v8470, %v8553
    %v8804 = vmul.f32 %v8471, %v8557
    %v8805 = vmul.f32 %v8472, %v8561
    %v8806 = vmul.f32 %v8473, %v8565
    %v8807 = vmul.f32 %v8474, %v8569
    %v8808 = vmul.f32 %v8475, %v8573
    %v8809 = vmul.f32 %v8476, %v8577
    %v8810 = vmul.f32 %v8477, %v8549
    %v8811 = vmul.f32 %v8478, %v8553
    %v8812 = vmul.f32 %v8479, %v8557
    %v8813 = vmul.f32 %v8480, %v8561
    %v8814 = vmul.f32 %v8481, %v8565
    %v8815 = vmul.f32 %v8482, %v8569
    %v8816 = vmul.f32 %v8483, %v8573
    %v8817 = vmul.f32 %v8484, %v8577
    %v8818 = vmul.f32 %v8485, %v8549
    %v8819 = vmul.f32 %v8486, %v8553
    %v8820 = vmul.f32 %v8487, %v8557
    %v8821 = vmul.f32 %v8488, %v8561
    %v8822 = vmul.f32 %v8489, %v8565
    %v8823 = vmul.f32 %v8490, %v8569
    %v8824 = vmul.f32 %v8491, %v8573
    %v8825 = vmul.f32 %v8492, %v8577
    %v8826 = vmul.f32 %v8493, %v8549
    %v8827 = vmul.f32 %v8494, %v8553
    %v8828 = vmul.f32 %v8495, %v8557
    %v8829 = vmul.f32 %v8496, %v8561
    %v8830 = vmul.f32 %v8497, %v8565
    %v8831 = vmul.f32 %v8498, %v8569
    %v8832 = vmul.f32 %v8499, %v8573
    %v8833 = vmul.f32 %v8500, %v8577
    %v8834 = vadd.f32 %v8578, %v8579
    %v8835 = vadd.f32 %v8834, %v8580
    %v8836 = vadd.f32 %v8835, %v8581
    %v8837 = vadd.f32 %v8836, %v8582
    %v8838 = vadd.f32 %v8837, %v8583
    %v8839 = vadd.f32 %v8838, %v8584
    %v8840 = vadd.f32 %v8839, %v8585
    %8841 = vadd.xlane.f32.xlu0 %v8840
    %v8842 = vpop.xlane.xlu0 %8841
    %v8843 = vadd.f32 %v8586, %v8587
    %v8844 = vadd.f32 %v8843, %v8588
    %v8845 = vadd.f32 %v8844, %v8589
    %v8846 = vadd.f32 %v8845, %v8590
    %v8847 = vadd.f32 %v8846, %v8591
    %v8848 = vadd.f32 %v8847, %v8592
    %v8849 = vadd.f32 %v8848, %v8593
    %8850 = vadd.xlane.f32.xlu0 %v8849
    %v8851 = vpop.xlane.xlu0 %8850
    %v8852 = vadd.f32 %v8594, %v8595
    %v8853 = vadd.f32 %v8852, %v8596
    %v8854 = vadd.f32 %v8853, %v8597
    %v8855 = vadd.f32 %v8854, %v8598
    %v8856 = vadd.f32 %v8855, %v8599
    %v8857 = vadd.f32 %v8856, %v8600
    %v8858 = vadd.f32 %v8857, %v8601
    %8859 = vadd.xlane.f32.xlu0 %v8858
    %v8860 = vpop.xlane.xlu0 %8859
    %v8861 = vadd.f32 %v8602, %v8603
    %v8862 = vadd.f32 %v8861, %v8604
    %v8863 = vadd.f32 %v8862, %v8605
    %v8864 = vadd.f32 %v8863, %v8606
    %v8865 = vadd.f32 %v8864, %v8607
    %v8866 = vadd.f32 %v8865, %v8608
    %v8867 = vadd.f32 %v8866, %v8609
    %8868 = vadd.xlane.f32.xlu0 %v8867
    %v8869 = vpop.xlane.xlu0 %8868
    %v8870 = vadd.f32 %v8610, %v8611
    %v8871 = vadd.f32 %v8870, %v8612
    %v8872 = vadd.f32 %v8871, %v8613
    %v8873 = vadd.f32 %v8872, %v8614
    %v8874 = vadd.f32 %v8873, %v8615
    %v8875 = vadd.f32 %v8874, %v8616
    %v8876 = vadd.f32 %v8875, %v8617
    %8877 = vadd.xlane.f32.xlu0 %v8876
    %v8878 = vpop.xlane.xlu0 %8877
    %v8879 = vadd.f32 %v8618, %v8619
    %v8880 = vadd.f32 %v8879, %v8620
    %v8881 = vadd.f32 %v8880, %v8621
    %v8882 = vadd.f32 %v8881, %v8622
    %v8883 = vadd.f32 %v8882, %v8623
    %v8884 = vadd.f32 %v8883, %v8624
    %v8885 = vadd.f32 %v8884, %v8625
    %8886 = vadd.xlane.f32.xlu0 %v8885
    %v8887 = vpop.xlane.xlu0 %8886
    %v8888 = vadd.f32 %v8626, %v8627
    %v8889 = vadd.f32 %v8888, %v8628
    %v8890 = vadd.f32 %v8889, %v8629
    %v8891 = vadd.f32 %v8890, %v8630
    %v8892 = vadd.f32 %v8891, %v8631
    %v8893 = vadd.f32 %v8892, %v8632
    %v8894 = vadd.f32 %v8893, %v8633
    %8895 = vadd.xlane.f32.xlu0 %v8894
    %v8896 = vpop.xlane.xlu0 %8895
    %v8897 = vadd.f32 %v8634, %v8635
    %v8898 = vadd.f32 %v8897, %v8636
    %v8899 = vadd.f32 %v8898, %v8637
    %v8900 = vadd.f32 %v8899, %v8638
    %v8901 = vadd.f32 %v8900, %v8639
    %v8902 = vadd.f32 %v8901, %v8640
    %v8903 = vadd.f32 %v8902, %v8641
    %8904 = vadd.xlane.f32.xlu0 %v8903
    %v8905 = vpop.xlane.xlu0 %8904
    %v8906 = vadd.f32 %v8642, %v8643
    %v8907 = vadd.f32 %v8906, %v8644
    %v8908 = vadd.f32 %v8907, %v8645
    %v8909 = vadd.f32 %v8908, %v8646
    %v8910 = vadd.f32 %v8909, %v8647
    %v8911 = vadd.f32 %v8910, %v8648
    %v8912 = vadd.f32 %v8911, %v8649
    %8913 = vadd.xlane.f32.xlu0 %v8912
    %v8914 = vpop.xlane.xlu0 %8913
    %v8915 = vadd.f32 %v8650, %v8651
    %v8916 = vadd.f32 %v8915, %v8652
    %v8917 = vadd.f32 %v8916, %v8653
    %v8918 = vadd.f32 %v8917, %v8654
    %v8919 = vadd.f32 %v8918, %v8655
    %v8920 = vadd.f32 %v8919, %v8656
    %v8921 = vadd.f32 %v8920, %v8657
    %8922 = vadd.xlane.f32.xlu0 %v8921
    %v8923 = vpop.xlane.xlu0 %8922
    %v8924 = vadd.f32 %v8658, %v8659
    %v8925 = vadd.f32 %v8924, %v8660
    %v8926 = vadd.f32 %v8925, %v8661
    %v8927 = vadd.f32 %v8926, %v8662
    %v8928 = vadd.f32 %v8927, %v8663
    %v8929 = vadd.f32 %v8928, %v8664
    %v8930 = vadd.f32 %v8929, %v8665
    %8931 = vadd.xlane.f32.xlu0 %v8930
    %v8932 = vpop.xlane.xlu0 %8931
    %v8933 = vadd.f32 %v8666, %v8667
    %v8934 = vadd.f32 %v8933, %v8668
    %v8935 = vadd.f32 %v8934, %v8669
    %v8936 = vadd.f32 %v8935, %v8670
    %v8937 = vadd.f32 %v8936, %v8671
    %v8938 = vadd.f32 %v8937, %v8672
    %v8939 = vadd.f32 %v8938, %v8673
    %8940 = vadd.xlane.f32.xlu0 %v8939
    %v8941 = vpop.xlane.xlu0 %8940
    %v8942 = vadd.f32 %v8674, %v8675
    %v8943 = vadd.f32 %v8942, %v8676
    %v8944 = vadd.f32 %v8943, %v8677
    %v8945 = vadd.f32 %v8944, %v8678
    %v8946 = vadd.f32 %v8945, %v8679
    %v8947 = vadd.f32 %v8946, %v8680
    %v8948 = vadd.f32 %v8947, %v8681
    %8949 = vadd.xlane.f32.xlu0 %v8948
    %v8950 = vpop.xlane.xlu0 %8949
    %v8951 = vadd.f32 %v8682, %v8683
    %v8952 = vadd.f32 %v8951, %v8684
    %v8953 = vadd.f32 %v8952, %v8685
    %v8954 = vadd.f32 %v8953, %v8686
    %v8955 = vadd.f32 %v8954, %v8687
    %v8956 = vadd.f32 %v8955, %v8688
    %v8957 = vadd.f32 %v8956, %v8689
    %8958 = vadd.xlane.f32.xlu0 %v8957
    %v8959 = vpop.xlane.xlu0 %8958
    %v8960 = vadd.f32 %v8690, %v8691
    %v8961 = vadd.f32 %v8960, %v8692
    %v8962 = vadd.f32 %v8961, %v8693
    %v8963 = vadd.f32 %v8962, %v8694
    %v8964 = vadd.f32 %v8963, %v8695
    %v8965 = vadd.f32 %v8964, %v8696
    %v8966 = vadd.f32 %v8965, %v8697
    %8967 = vadd.xlane.f32.xlu0 %v8966
    %v8968 = vpop.xlane.xlu0 %8967
    %v8969 = vadd.f32 %v8698, %v8699
    %v8970 = vadd.f32 %v8969, %v8700
    %v8971 = vadd.f32 %v8970, %v8701
    %v8972 = vadd.f32 %v8971, %v8702
    %v8973 = vadd.f32 %v8972, %v8703
    %v8974 = vadd.f32 %v8973, %v8704
    %v8975 = vadd.f32 %v8974, %v8705
    %8976 = vadd.xlane.f32.xlu0 %v8975
    %v8977 = vpop.xlane.xlu0 %8976
    %v8978 = vadd.f32 %v8706, %v8707
    %v8979 = vadd.f32 %v8978, %v8708
    %v8980 = vadd.f32 %v8979, %v8709
    %v8981 = vadd.f32 %v8980, %v8710
    %v8982 = vadd.f32 %v8981, %v8711
    %v8983 = vadd.f32 %v8982, %v8712
    %v8984 = vadd.f32 %v8983, %v8713
    %8985 = vadd.xlane.f32.xlu0 %v8984
    %v8986 = vpop.xlane.xlu0 %8985
    %v8987 = vadd.f32 %v8714, %v8715
    %v8988 = vadd.f32 %v8987, %v8716
    %v8989 = vadd.f32 %v8988, %v8717
    %v8990 = vadd.f32 %v8989, %v8718
    %v8991 = vadd.f32 %v8990, %v8719
    %v8992 = vadd.f32 %v8991, %v8720
    %v8993 = vadd.f32 %v8992, %v8721
    %8994 = vadd.xlane.f32.xlu0 %v8993
    %v8995 = vpop.xlane.xlu0 %8994
    %v8996 = vadd.f32 %v8722, %v8723
    %v8997 = vadd.f32 %v8996, %v8724
    %v8998 = vadd.f32 %v8997, %v8725
    %v8999 = vadd.f32 %v8998, %v8726
    %v9000 = vadd.f32 %v8999, %v8727
    %v9001 = vadd.f32 %v9000, %v8728
    %v9002 = vadd.f32 %v9001, %v8729
    %9003 = vadd.xlane.f32.xlu0 %v9002
    %v9004 = vpop.xlane.xlu0 %9003
    %v9005 = vadd.f32 %v8730, %v8731
    %v9006 = vadd.f32 %v9005, %v8732
    %v9007 = vadd.f32 %v9006, %v8733
    %v9008 = vadd.f32 %v9007, %v8734
    %v9009 = vadd.f32 %v9008, %v8735
    %v9010 = vadd.f32 %v9009, %v8736
    %v9011 = vadd.f32 %v9010, %v8737
    %9012 = vadd.xlane.f32.xlu0 %v9011
    %v9013 = vpop.xlane.xlu0 %9012
    %v9014 = vadd.f32 %v8738, %v8739
    %v9015 = vadd.f32 %v9014, %v8740
    %v9016 = vadd.f32 %v9015, %v8741
    %v9017 = vadd.f32 %v9016, %v8742
    %v9018 = vadd.f32 %v9017, %v8743
    %v9019 = vadd.f32 %v9018, %v8744
    %v9020 = vadd.f32 %v9019, %v8745
    %9021 = vadd.xlane.f32.xlu0 %v9020
    %v9022 = vpop.xlane.xlu0 %9021
    %v9023 = vadd.f32 %v8746, %v8747
    %v9024 = vadd.f32 %v9023, %v8748
    %v9025 = vadd.f32 %v9024, %v8749
    %v9026 = vadd.f32 %v9025, %v8750
    %v9027 = vadd.f32 %v9026, %v8751
    %v9028 = vadd.f32 %v9027, %v8752
    %v9029 = vadd.f32 %v9028, %v8753
    %9030 = vadd.xlane.f32.xlu0 %v9029
    %v9031 = vpop.xlane.xlu0 %9030
    %v9032 = vadd.f32 %v8754, %v8755
    %v9033 = vadd.f32 %v9032, %v8756
    %v9034 = vadd.f32 %v9033, %v8757
    %v9035 = vadd.f32 %v9034, %v8758
    %v9036 = vadd.f32 %v9035, %v8759
    %v9037 = vadd.f32 %v9036, %v8760
    %v9038 = vadd.f32 %v9037, %v8761
    %9039 = vadd.xlane.f32.xlu0 %v9038
    %v9040 = vpop.xlane.xlu0 %9039
    %v9041 = vadd.f32 %v8762, %v8763
    %v9042 = vadd.f32 %v9041, %v8764
    %v9043 = vadd.f32 %v9042, %v8765
    %v9044 = vadd.f32 %v9043, %v8766
    %v9045 = vadd.f32 %v9044, %v8767
    %v9046 = vadd.f32 %v9045, %v8768
    %v9047 = vadd.f32 %v9046, %v8769
    %9048 = vadd.xlane.f32.xlu0 %v9047
    %v9049 = vpop.xlane.xlu0 %9048
    %v9050 = vadd.f32 %v8770, %v8771
    %v9051 = vadd.f32 %v9050, %v8772
    %v9052 = vadd.f32 %v9051, %v8773
    %v9053 = vadd.f32 %v9052, %v8774
    %v9054 = vadd.f32 %v9053, %v8775
    %v9055 = vadd.f32 %v9054, %v8776
    %v9056 = vadd.f32 %v9055, %v8777
    %9057 = vadd.xlane.f32.xlu0 %v9056
    %v9058 = vpop.xlane.xlu0 %9057
    %v9059 = vadd.f32 %v8778, %v8779
    %v9060 = vadd.f32 %v9059, %v8780
    %v9061 = vadd.f32 %v9060, %v8781
    %v9062 = vadd.f32 %v9061, %v8782
    %v9063 = vadd.f32 %v9062, %v8783
    %v9064 = vadd.f32 %v9063, %v8784
    %v9065 = vadd.f32 %v9064, %v8785
    %9066 = vadd.xlane.f32.xlu0 %v9065
    %v9067 = vpop.xlane.xlu0 %9066
    %v9068 = vadd.f32 %v8786, %v8787
    %v9069 = vadd.f32 %v9068, %v8788
    %v9070 = vadd.f32 %v9069, %v8789
    %v9071 = vadd.f32 %v9070, %v8790
    %v9072 = vadd.f32 %v9071, %v8791
    %v9073 = vadd.f32 %v9072, %v8792
    %v9074 = vadd.f32 %v9073, %v8793
    %9075 = vadd.xlane.f32.xlu0 %v9074
    %v9076 = vpop.xlane.xlu0 %9075
    %v9077 = vadd.f32 %v8794, %v8795
    %v9078 = vadd.f32 %v9077, %v8796
    %v9079 = vadd.f32 %v9078, %v8797
    %v9080 = vadd.f32 %v9079, %v8798
    %v9081 = vadd.f32 %v9080, %v8799
    %v9082 = vadd.f32 %v9081, %v8800
    %v9083 = vadd.f32 %v9082, %v8801
    %9084 = vadd.xlane.f32.xlu0 %v9083
    %v9085 = vpop.xlane.xlu0 %9084
    %v9086 = vadd.f32 %v8802, %v8803
    %v9087 = vadd.f32 %v9086, %v8804
    %v9088 = vadd.f32 %v9087, %v8805
    %v9089 = vadd.f32 %v9088, %v8806
    %v9090 = vadd.f32 %v9089, %v8807
    %v9091 = vadd.f32 %v9090, %v8808
    %v9092 = vadd.f32 %v9091, %v8809
    %9093 = vadd.xlane.f32.xlu0 %v9092
    %v9094 = vpop.xlane.xlu0 %9093
    %v9095 = vadd.f32 %v8810, %v8811
    %v9096 = vadd.f32 %v9095, %v8812
    %v9097 = vadd.f32 %v9096, %v8813
    %v9098 = vadd.f32 %v9097, %v8814
    %v9099 = vadd.f32 %v9098, %v8815
    %v9100 = vadd.f32 %v9099, %v8816
    %v9101 = vadd.f32 %v9100, %v8817
    %9102 = vadd.xlane.f32.xlu0 %v9101
    %v9103 = vpop.xlane.xlu0 %9102
    %v9104 = vadd.f32 %v8818, %v8819
    %v9105 = vadd.f32 %v9104, %v8820
    %v9106 = vadd.f32 %v9105, %v8821
    %v9107 = vadd.f32 %v9106, %v8822
    %v9108 = vadd.f32 %v9107, %v8823
    %v9109 = vadd.f32 %v9108, %v8824
    %v9110 = vadd.f32 %v9109, %v8825
    %9111 = vadd.xlane.f32.xlu0 %v9110
    %v9112 = vpop.xlane.xlu0 %9111
    %v9113 = vadd.f32 %v8826, %v8827
    %v9114 = vadd.f32 %v9113, %v8828
    %v9115 = vadd.f32 %v9114, %v8829
    %v9116 = vadd.f32 %v9115, %v8830
    %v9117 = vadd.f32 %v9116, %v8831
    %v9118 = vadd.f32 %v9117, %v8832
    %v9119 = vadd.f32 %v9118, %v8833
    %9120 = vadd.xlane.f32.xlu0 %v9119
    %v9121 = vpop.xlane.xlu0 %9120
    %v9122 = vld [vmem:[#allocation2] sm:$0x1]
    %v9124 = vlaneseq
    %v9125 = vshrl.u32 %v9124, 7
    %v9126 = vsub.s32 0, %v9125
    %v9127 = vrot.slane %v9122, %v9126
    %v9129 = vadd.f32 %v8842, %v9127
    %v9130 = vadd.f32 %v8851, %v9127
    %v9131 = vadd.f32 %v8860, %v9127
    %v9132 = vadd.f32 %v8869, %v9127
    %v9133 = vadd.f32 %v8878, %v9127
    %v9134 = vadd.f32 %v8887, %v9127
    %v9135 = vadd.f32 %v8896, %v9127
    %v9136 = vadd.f32 %v8905, %v9127
    %v9137 = vadd.f32 %v8914, %v9127
    %v9138 = vadd.f32 %v8923, %v9127
    %v9139 = vadd.f32 %v8932, %v9127
    %v9140 = vadd.f32 %v8941, %v9127
    %v9141 = vadd.f32 %v8950, %v9127
    %v9142 = vadd.f32 %v8959, %v9127
    %v9143 = vadd.f32 %v8968, %v9127
    %v9144 = vadd.f32 %v8977, %v9127
    %v9145 = vadd.f32 %v8986, %v9127
    %v9146 = vadd.f32 %v8995, %v9127
    %v9147 = vadd.f32 %v9004, %v9127
    %v9148 = vadd.f32 %v9013, %v9127
    %v9149 = vadd.f32 %v9022, %v9127
    %v9150 = vadd.f32 %v9031, %v9127
    %v9151 = vadd.f32 %v9040, %v9127
    %v9152 = vadd.f32 %v9049, %v9127
    %v9153 = vadd.f32 %v9058, %v9127
    %v9154 = vadd.f32 %v9067, %v9127
    %v9155 = vadd.f32 %v9076, %v9127
    %v9156 = vadd.f32 %v9085, %v9127
    %v9157 = vadd.f32 %v9094, %v9127
    %v9158 = vadd.f32 %v9103, %v9127
    %v9159 = vadd.f32 %v9112, %v9127
    %v9160 = vadd.f32 %v9121, %v9127
    %v9193 = vcombine.high %v9129, %v9129
    %v9195 = vunpack.c.l.s4 1966171168
    %v9196 = vunpack.c.0.s8 %v9195
    %v9197 = vlaneseq
    %v9198 = vshrl.u32 %v9197, 7
    %v9199 = vsub.s32 %v9196, %v9198
    %v9200 = vrot.slane %v9129, %v9199
    %v9202 = vunpack.c.l.s4 1966171168
    %v9203 = vunpack.c.0.s8 %v9202
    %v9204 = vlaneseq
    %v9205 = vshrl.u32 %v9204, 7
    %v9206 = vsub.s32 %v9203, %v9205
    %v9207 = vrot.slane %v9193, %v9206
    %v9208 = vcombine.high %v9200, %v9200
    %v9209 = vcombine.high %v9207, %v9207
    %v9211 = vunpack.c.l.s4 1966171168
    %v9212 = vunpack.c.0.s8 %v9211
    %v9213 = vlaneseq
    %v9214 = vshrl.u32 %v9213, 7
    %v9215 = vsub.s32 %v9212, %v9214
    %v9216 = vrot.slane %v9200, %v9215
    %v9218 = vunpack.c.l.s4 1966171168
    %v9219 = vunpack.c.0.s8 %v9218
    %v9220 = vlaneseq
    %v9221 = vshrl.u32 %v9220, 7
    %v9222 = vsub.s32 %v9219, %v9221
    %v9223 = vrot.slane %v9207, %v9222
    %v9225 = vunpack.c.l.s4 1966171168
    %v9226 = vunpack.c.0.s8 %v9225
    %v9227 = vlaneseq
    %v9228 = vshrl.u32 %v9227, 7
    %v9229 = vsub.s32 %v9226, %v9228
    %v9230 = vrot.slane %v9208, %v9229
    %v9232 = vunpack.c.l.s4 1966171168
    %v9233 = vunpack.c.0.s8 %v9232
    %v9234 = vlaneseq
    %v9235 = vshrl.u32 %v9234, 7
    %v9236 = vsub.s32 %v9233, %v9235
    %v9237 = vrot.slane %v9209, %v9236
    %v9238 = vcombine.high %v9216, %v9216
    %v9239 = vcombine.high %v9223, %v9223
    %v9240 = vcombine.high %v9230, %v9230
    %v9241 = vcombine.high %v9237, %v9237
    %v9242 = vcombine.high %v9130, %v9130
    %v9244 = vunpack.c.l.s4 1966171168
    %v9245 = vunpack.c.0.s8 %v9244
    %v9246 = vlaneseq
    %v9247 = vshrl.u32 %v9246, 7
    %v9248 = vsub.s32 %v9245, %v9247
    %v9249 = vrot.slane %v9130, %v9248
    %v9251 = vunpack.c.l.s4 1966171168
    %v9252 = vunpack.c.0.s8 %v9251
    %v9253 = vlaneseq
    %v9254 = vshrl.u32 %v9253, 7
    %v9255 = vsub.s32 %v9252, %v9254
    %v9256 = vrot.slane %v9242, %v9255
    %v9257 = vcombine.high %v9249, %v9249
    %v9258 = vcombine.high %v9256, %v9256
    %v9260 = vunpack.c.l.s4 1966171168
    %v9261 = vunpack.c.0.s8 %v9260
    %v9262 = vlaneseq
    %v9263 = vshrl.u32 %v9262, 7
    %v9264 = vsub.s32 %v9261, %v9263
    %v9265 = vrot.slane %v9249, %v9264
    %v9267 = vunpack.c.l.s4 1966171168
    %v9268 = vunpack.c.0.s8 %v9267
    %v9269 = vlaneseq
    %v9270 = vshrl.u32 %v9269, 7
    %v9271 = vsub.s32 %v9268, %v9270
    %v9272 = vrot.slane %v9256, %v9271
    %v9274 = vunpack.c.l.s4 1966171168
    %v9275 = vunpack.c.0.s8 %v9274
    %v9276 = vlaneseq
    %v9277 = vshrl.u32 %v9276, 7
    %v9278 = vsub.s32 %v9275, %v9277
    %v9279 = vrot.slane %v9257, %v9278
    %v9281 = vunpack.c.l.s4 1966171168
    %v9282 = vunpack.c.0.s8 %v9281
    %v9283 = vlaneseq
    %v9284 = vshrl.u32 %v9283, 7
    %v9285 = vsub.s32 %v9282, %v9284
    %v9286 = vrot.slane %v9258, %v9285
    %v9287 = vcombine.high %v9265, %v9265
    %v9288 = vcombine.high %v9272, %v9272
    %v9289 = vcombine.high %v9279, %v9279
    %v9290 = vcombine.high %v9286, %v9286
    %v9291 = vcombine.high %v9131, %v9131
    %v9293 = vunpack.c.l.s4 1966171168
    %v9294 = vunpack.c.0.s8 %v9293
    %v9295 = vlaneseq
    %v9296 = vshrl.u32 %v9295, 7
    %v9297 = vsub.s32 %v9294, %v9296
    %v9298 = vrot.slane %v9131, %v9297
    %v9300 = vunpack.c.l.s4 1966171168
    %v9301 = vunpack.c.0.s8 %v9300
    %v9302 = vlaneseq
    %v9303 = vshrl.u32 %v9302, 7
    %v9304 = vsub.s32 %v9301, %v9303
    %v9305 = vrot.slane %v9291, %v9304
    %v9306 = vcombine.high %v9298, %v9298
    %v9307 = vcombine.high %v9305, %v9305
    %v9309 = vunpack.c.l.s4 1966171168
    %v9310 = vunpack.c.0.s8 %v9309
    %v9311 = vlaneseq
    %v9312 = vshrl.u32 %v9311, 7
    %v9313 = vsub.s32 %v9310, %v9312
    %v9314 = vrot.slane %v9298, %v9313
    %v9316 = vunpack.c.l.s4 1966171168
    %v9317 = vunpack.c.0.s8 %v9316
    %v9318 = vlaneseq
    %v9319 = vshrl.u32 %v9318, 7
    %v9320 = vsub.s32 %v9317, %v9319
    %v9321 = vrot.slane %v9305, %v9320
    %v9323 = vunpack.c.l.s4 1966171168
    %v9324 = vunpack.c.0.s8 %v9323
    %v9325 = vlaneseq
    %v9326 = vshrl.u32 %v9325, 7
    %v9327 = vsub.s32 %v9324, %v9326
    %v9328 = vrot.slane %v9306, %v9327
    %v9330 = vunpack.c.l.s4 1966171168
    %v9331 = vunpack.c.0.s8 %v9330
    %v9332 = vlaneseq
    %v9333 = vshrl.u32 %v9332, 7
    %v9334 = vsub.s32 %v9331, %v9333
    %v9335 = vrot.slane %v9307, %v9334
    %v9336 = vcombine.high %v9314, %v9314
    %v9337 = vcombine.high %v9321, %v9321
    %v9338 = vcombine.high %v9328, %v9328
    %v9339 = vcombine.high %v9335, %v9335
    %v9340 = vcombine.high %v9132, %v9132
    %v9342 = vunpack.c.l.s4 1966171168
    %v9343 = vunpack.c.0.s8 %v9342
    %v9344 = vlaneseq
    %v9345 = vshrl.u32 %v9344, 7
    %v9346 = vsub.s32 %v9343, %v9345
    %v9347 = vrot.slane %v9132, %v9346
    %v9349 = vunpack.c.l.s4 1966171168
    %v9350 = vunpack.c.0.s8 %v9349
    %v9351 = vlaneseq
    %v9352 = vshrl.u32 %v9351, 7
    %v9353 = vsub.s32 %v9350, %v9352
    %v9354 = vrot.slane %v9340, %v9353
    %v9355 = vcombine.high %v9347, %v9347
    %v9356 = vcombine.high %v9354, %v9354
    %v9358 = vunpack.c.l.s4 1966171168
    %v9359 = vunpack.c.0.s8 %v9358
    %v9360 = vlaneseq
    %v9361 = vshrl.u32 %v9360, 7
    %v9362 = vsub.s32 %v9359, %v9361
    %v9363 = vrot.slane %v9347, %v9362
    %v9365 = vunpack.c.l.s4 1966171168
    %v9366 = vunpack.c.0.s8 %v9365
    %v9367 = vlaneseq
    %v9368 = vshrl.u32 %v9367, 7
    %v9369 = vsub.s32 %v9366, %v9368
    %v9370 = vrot.slane %v9354, %v9369
    %v9372 = vunpack.c.l.s4 1966171168
    %v9373 = vunpack.c.0.s8 %v9372
    %v9374 = vlaneseq
    %v9375 = vshrl.u32 %v9374, 7
    %v9376 = vsub.s32 %v9373, %v9375
    %v9377 = vrot.slane %v9355, %v9376
    %v9379 = vunpack.c.l.s4 1966171168
    %v9380 = vunpack.c.0.s8 %v9379
    %v9381 = vlaneseq
    %v9382 = vshrl.u32 %v9381, 7
    %v9383 = vsub.s32 %v9380, %v9382
    %v9384 = vrot.slane %v9356, %v9383
    %v9385 = vcombine.high %v9363, %v9363
    %v9386 = vcombine.high %v9370, %v9370
    %v9387 = vcombine.high %v9377, %v9377
    %v9388 = vcombine.high %v9384, %v9384
    %v9389 = vcombine.high %v9133, %v9133
    %v9391 = vunpack.c.l.s4 1966171168
    %v9392 = vunpack.c.0.s8 %v9391
    %v9393 = vlaneseq
    %v9394 = vshrl.u32 %v9393, 7
    %v9395 = vsub.s32 %v9392, %v9394
    %v9396 = vrot.slane %v9133, %v9395
    %v9398 = vunpack.c.l.s4 1966171168
    %v9399 = vunpack.c.0.s8 %v9398
    %v9400 = vlaneseq
    %v9401 = vshrl.u32 %v9400, 7
    %v9402 = vsub.s32 %v9399, %v9401
    %v9403 = vrot.slane %v9389, %v9402
    %v9404 = vcombine.high %v9396, %v9396
    %v9405 = vcombine.high %v9403, %v9403
    %v9407 = vunpack.c.l.s4 1966171168
    %v9408 = vunpack.c.0.s8 %v9407
    %v9409 = vlaneseq
    %v9410 = vshrl.u32 %v9409, 7
    %v9411 = vsub.s32 %v9408, %v9410
    %v9412 = vrot.slane %v9396, %v9411
    %v9414 = vunpack.c.l.s4 1966171168
    %v9415 = vunpack.c.0.s8 %v9414
    %v9416 = vlaneseq
    %v9417 = vshrl.u32 %v9416, 7
    %v9418 = vsub.s32 %v9415, %v9417
    %v9419 = vrot.slane %v9403, %v9418
    %v9421 = vunpack.c.l.s4 1966171168
    %v9422 = vunpack.c.0.s8 %v9421
    %v9423 = vlaneseq
    %v9424 = vshrl.u32 %v9423, 7
    %v9425 = vsub.s32 %v9422, %v9424
    %v9426 = vrot.slane %v9404, %v9425
    %v9428 = vunpack.c.l.s4 1966171168
    %v9429 = vunpack.c.0.s8 %v9428
    %v9430 = vlaneseq
    %v9431 = vshrl.u32 %v9430, 7
    %v9432 = vsub.s32 %v9429, %v9431
    %v9433 = vrot.slane %v9405, %v9432
    %v9434 = vcombine.high %v9412, %v9412
    %v9435 = vcombine.high %v9419, %v9419
    %v9436 = vcombine.high %v9426, %v9426
    %v9437 = vcombine.high %v9433, %v9433
    %v9438 = vcombine.high %v9134, %v9134
    %v9440 = vunpack.c.l.s4 1966171168
    %v9441 = vunpack.c.0.s8 %v9440
    %v9442 = vlaneseq
    %v9443 = vshrl.u32 %v9442, 7
    %v9444 = vsub.s32 %v9441, %v9443
    %v9445 = vrot.slane %v9134, %v9444
    %v9447 = vunpack.c.l.s4 1966171168
    %v9448 = vunpack.c.0.s8 %v9447
    %v9449 = vlaneseq
    %v9450 = vshrl.u32 %v9449, 7
    %v9451 = vsub.s32 %v9448, %v9450
    %v9452 = vrot.slane %v9438, %v9451
    %v9453 = vcombine.high %v9445, %v9445
    %v9454 = vcombine.high %v9452, %v9452
    %v9456 = vunpack.c.l.s4 1966171168
    %v9457 = vunpack.c.0.s8 %v9456
    %v9458 = vlaneseq
    %v9459 = vshrl.u32 %v9458, 7
    %v9460 = vsub.s32 %v9457, %v9459
    %v9461 = vrot.slane %v9445, %v9460
    %v9463 = vunpack.c.l.s4 1966171168
    %v9464 = vunpack.c.0.s8 %v9463
    %v9465 = vlaneseq
    %v9466 = vshrl.u32 %v9465, 7
    %v9467 = vsub.s32 %v9464, %v9466
    %v9468 = vrot.slane %v9452, %v9467
    %v9470 = vunpack.c.l.s4 1966171168
    %v9471 = vunpack.c.0.s8 %v9470
    %v9472 = vlaneseq
    %v9473 = vshrl.u32 %v9472, 7
    %v9474 = vsub.s32 %v9471, %v9473
    %v9475 = vrot.slane %v9453, %v9474
    %v9477 = vunpack.c.l.s4 1966171168
    %v9478 = vunpack.c.0.s8 %v9477
    %v9479 = vlaneseq
    %v9480 = vshrl.u32 %v9479, 7
    %v9481 = vsub.s32 %v9478, %v9480
    %v9482 = vrot.slane %v9454, %v9481
    %v9483 = vcombine.high %v9461, %v9461
    %v9484 = vcombine.high %v9468, %v9468
    %v9485 = vcombine.high %v9475, %v9475
    %v9486 = vcombine.high %v9482, %v9482
    %v9487 = vcombine.high %v9135, %v9135
    %v9489 = vunpack.c.l.s4 1966171168
    %v9490 = vunpack.c.0.s8 %v9489
    %v9491 = vlaneseq
    %v9492 = vshrl.u32 %v9491, 7
    %v9493 = vsub.s32 %v9490, %v9492
    %v9494 = vrot.slane %v9135, %v9493
    %v9496 = vunpack.c.l.s4 1966171168
    %v9497 = vunpack.c.0.s8 %v9496
    %v9498 = vlaneseq
    %v9499 = vshrl.u32 %v9498, 7
    %v9500 = vsub.s32 %v9497, %v9499
    %v9501 = vrot.slane %v9487, %v9500
    %v9502 = vcombine.high %v9494, %v9494
    %v9503 = vcombine.high %v9501, %v9501
    %v9505 = vunpack.c.l.s4 1966171168
    %v9506 = vunpack.c.0.s8 %v9505
    %v9507 = vlaneseq
    %v9508 = vshrl.u32 %v9507, 7
    %v9509 = vsub.s32 %v9506, %v9508
    %v9510 = vrot.slane %v9494, %v9509
    %v9512 = vunpack.c.l.s4 1966171168
    %v9513 = vunpack.c.0.s8 %v9512
    %v9514 = vlaneseq
    %v9515 = vshrl.u32 %v9514, 7
    %v9516 = vsub.s32 %v9513, %v9515
    %v9517 = vrot.slane %v9501, %v9516
    %v9519 = vunpack.c.l.s4 1966171168
    %v9520 = vunpack.c.0.s8 %v9519
    %v9521 = vlaneseq
    %v9522 = vshrl.u32 %v9521, 7
    %v9523 = vsub.s32 %v9520, %v9522
    %v9524 = vrot.slane %v9502, %v9523
    %v9526 = vunpack.c.l.s4 1966171168
    %v9527 = vunpack.c.0.s8 %v9526
    %v9528 = vlaneseq
    %v9529 = vshrl.u32 %v9528, 7
    %v9530 = vsub.s32 %v9527, %v9529
    %v9531 = vrot.slane %v9503, %v9530
    %v9532 = vcombine.high %v9510, %v9510
    %v9533 = vcombine.high %v9517, %v9517
    %v9534 = vcombine.high %v9524, %v9524
    %v9535 = vcombine.high %v9531, %v9531
    %v9536 = vcombine.high %v9136, %v9136
    %v9538 = vunpack.c.l.s4 1966171168
    %v9539 = vunpack.c.0.s8 %v9538
    %v9540 = vlaneseq
    %v9541 = vshrl.u32 %v9540, 7
    %v9542 = vsub.s32 %v9539, %v9541
    %v9543 = vrot.slane %v9136, %v9542
    %v9545 = vunpack.c.l.s4 1966171168
    %v9546 = vunpack.c.0.s8 %v9545
    %v9547 = vlaneseq
    %v9548 = vshrl.u32 %v9547, 7
    %v9549 = vsub.s32 %v9546, %v9548
    %v9550 = vrot.slane %v9536, %v9549
    %v9551 = vcombine.high %v9543, %v9543
    %v9552 = vcombine.high %v9550, %v9550
    %v9554 = vunpack.c.l.s4 1966171168
    %v9555 = vunpack.c.0.s8 %v9554
    %v9556 = vlaneseq
    %v9557 = vshrl.u32 %v9556, 7
    %v9558 = vsub.s32 %v9555, %v9557
    %v9559 = vrot.slane %v9543, %v9558
    %v9561 = vunpack.c.l.s4 1966171168
    %v9562 = vunpack.c.0.s8 %v9561
    %v9563 = vlaneseq
    %v9564 = vshrl.u32 %v9563, 7
    %v9565 = vsub.s32 %v9562, %v9564
    %v9566 = vrot.slane %v9550, %v9565
    %v9568 = vunpack.c.l.s4 1966171168
    %v9569 = vunpack.c.0.s8 %v9568
    %v9570 = vlaneseq
    %v9571 = vshrl.u32 %v9570, 7
    %v9572 = vsub.s32 %v9569, %v9571
    %v9573 = vrot.slane %v9551, %v9572
    %v9575 = vunpack.c.l.s4 1966171168
    %v9576 = vunpack.c.0.s8 %v9575
    %v9577 = vlaneseq
    %v9578 = vshrl.u32 %v9577, 7
    %v9579 = vsub.s32 %v9576, %v9578
    %v9580 = vrot.slane %v9552, %v9579
    %v9581 = vcombine.high %v9559, %v9559
    %v9582 = vcombine.high %v9566, %v9566
    %v9583 = vcombine.high %v9573, %v9573
    %v9584 = vcombine.high %v9580, %v9580
    %v9585 = vcombine.high %v9137, %v9137
    %v9587 = vunpack.c.l.s4 1966171168
    %v9588 = vunpack.c.0.s8 %v9587
    %v9589 = vlaneseq
    %v9590 = vshrl.u32 %v9589, 7
    %v9591 = vsub.s32 %v9588, %v9590
    %v9592 = vrot.slane %v9137, %v9591
    %v9594 = vunpack.c.l.s4 1966171168
    %v9595 = vunpack.c.0.s8 %v9594
    %v9596 = vlaneseq
    %v9597 = vshrl.u32 %v9596, 7
    %v9598 = vsub.s32 %v9595, %v9597
    %v9599 = vrot.slane %v9585, %v9598
    %v9600 = vcombine.high %v9592, %v9592
    %v9601 = vcombine.high %v9599, %v9599
    %v9603 = vunpack.c.l.s4 1966171168
    %v9604 = vunpack.c.0.s8 %v9603
    %v9605 = vlaneseq
    %v9606 = vshrl.u32 %v9605, 7
    %v9607 = vsub.s32 %v9604, %v9606
    %v9608 = vrot.slane %v9592, %v9607
    %v9610 = vunpack.c.l.s4 1966171168
    %v9611 = vunpack.c.0.s8 %v9610
    %v9612 = vlaneseq
    %v9613 = vshrl.u32 %v9612, 7
    %v9614 = vsub.s32 %v9611, %v9613
    %v9615 = vrot.slane %v9599, %v9614
    %v9617 = vunpack.c.l.s4 1966171168
    %v9618 = vunpack.c.0.s8 %v9617
    %v9619 = vlaneseq
    %v9620 = vshrl.u32 %v9619, 7
    %v9621 = vsub.s32 %v9618, %v9620
    %v9622 = vrot.slane %v9600, %v9621
    %v9624 = vunpack.c.l.s4 1966171168
    %v9625 = vunpack.c.0.s8 %v9624
    %v9626 = vlaneseq
    %v9627 = vshrl.u32 %v9626, 7
    %v9628 = vsub.s32 %v9625, %v9627
    %v9629 = vrot.slane %v9601, %v9628
    %v9630 = vcombine.high %v9608, %v9608
    %v9631 = vcombine.high %v9615, %v9615
    %v9632 = vcombine.high %v9622, %v9622
    %v9633 = vcombine.high %v9629, %v9629
    %v9634 = vcombine.high %v9138, %v9138
    %v9636 = vunpack.c.l.s4 1966171168
    %v9637 = vunpack.c.0.s8 %v9636
    %v9638 = vlaneseq
    %v9639 = vshrl.u32 %v9638, 7
    %v9640 = vsub.s32 %v9637, %v9639
    %v9641 = vrot.slane %v9138, %v9640
    %v9643 = vunpack.c.l.s4 1966171168
    %v9644 = vunpack.c.0.s8 %v9643
    %v9645 = vlaneseq
    %v9646 = vshrl.u32 %v9645, 7
    %v9647 = vsub.s32 %v9644, %v9646
    %v9648 = vrot.slane %v9634, %v9647
    %v9649 = vcombine.high %v9641, %v9641
    %v9650 = vcombine.high %v9648, %v9648
    %v9652 = vunpack.c.l.s4 1966171168
    %v9653 = vunpack.c.0.s8 %v9652
    %v9654 = vlaneseq
    %v9655 = vshrl.u32 %v9654, 7
    %v9656 = vsub.s32 %v9653, %v9655
    %v9657 = vrot.slane %v9641, %v9656
    %v9659 = vunpack.c.l.s4 1966171168
    %v9660 = vunpack.c.0.s8 %v9659
    %v9661 = vlaneseq
    %v9662 = vshrl.u32 %v9661, 7
    %v9663 = vsub.s32 %v9660, %v9662
    %v9664 = vrot.slane %v9648, %v9663
    %v9666 = vunpack.c.l.s4 1966171168
    %v9667 = vunpack.c.0.s8 %v9666
    %v9668 = vlaneseq
    %v9669 = vshrl.u32 %v9668, 7
    %v9670 = vsub.s32 %v9667, %v9669
    %v9671 = vrot.slane %v9649, %v9670
    %v9673 = vunpack.c.l.s4 1966171168
    %v9674 = vunpack.c.0.s8 %v9673
    %v9675 = vlaneseq
    %v9676 = vshrl.u32 %v9675, 7
    %v9677 = vsub.s32 %v9674, %v9676
    %v9678 = vrot.slane %v9650, %v9677
    %v9679 = vcombine.high %v9657, %v9657
    %v9680 = vcombine.high %v9664, %v9664
    %v9681 = vcombine.high %v9671, %v9671
    %v9682 = vcombine.high %v9678, %v9678
    %v9683 = vcombine.high %v9139, %v9139
    %v9685 = vunpack.c.l.s4 1966171168
    %v9686 = vunpack.c.0.s8 %v9685
    %v9687 = vlaneseq
    %v9688 = vshrl.u32 %v9687, 7
    %v9689 = vsub.s32 %v9686, %v9688
    %v9690 = vrot.slane %v9139, %v9689
    %v9692 = vunpack.c.l.s4 1966171168
    %v9693 = vunpack.c.0.s8 %v9692
    %v9694 = vlaneseq
    %v9695 = vshrl.u32 %v9694, 7
    %v9696 = vsub.s32 %v9693, %v9695
    %v9697 = vrot.slane %v9683, %v9696
    %v9698 = vcombine.high %v9690, %v9690
    %v9699 = vcombine.high %v9697, %v9697
    %v9701 = vunpack.c.l.s4 1966171168
    %v9702 = vunpack.c.0.s8 %v9701
    %v9703 = vlaneseq
    %v9704 = vshrl.u32 %v9703, 7
    %v9705 = vsub.s32 %v9702, %v9704
    %v9706 = vrot.slane %v9690, %v9705
    %v9708 = vunpack.c.l.s4 1966171168
    %v9709 = vunpack.c.0.s8 %v9708
    %v9710 = vlaneseq
    %v9711 = vshrl.u32 %v9710, 7
    %v9712 = vsub.s32 %v9709, %v9711
    %v9713 = vrot.slane %v9697, %v9712
    %v9715 = vunpack.c.l.s4 1966171168
    %v9716 = vunpack.c.0.s8 %v9715
    %v9717 = vlaneseq
    %v9718 = vshrl.u32 %v9717, 7
    %v9719 = vsub.s32 %v9716, %v9718
    %v9720 = vrot.slane %v9698, %v9719
    %v9722 = vunpack.c.l.s4 1966171168
    %v9723 = vunpack.c.0.s8 %v9722
    %v9724 = vlaneseq
    %v9725 = vshrl.u32 %v9724, 7
    %v9726 = vsub.s32 %v9723, %v9725
    %v9727 = vrot.slane %v9699, %v9726
    %v9728 = vcombine.high %v9706, %v9706
    %v9729 = vcombine.high %v9713, %v9713
    %v9730 = vcombine.high %v9720, %v9720
    %v9731 = vcombine.high %v9727, %v9727
    %v9732 = vcombine.high %v9140, %v9140
    %v9734 = vunpack.c.l.s4 1966171168
    %v9735 = vunpack.c.0.s8 %v9734
    %v9736 = vlaneseq
    %v9737 = vshrl.u32 %v9736, 7
    %v9738 = vsub.s32 %v9735, %v9737
    %v9739 = vrot.slane %v9140, %v9738
    %v9741 = vunpack.c.l.s4 1966171168
    %v9742 = vunpack.c.0.s8 %v9741
    %v9743 = vlaneseq
    %v9744 = vshrl.u32 %v9743, 7
    %v9745 = vsub.s32 %v9742, %v9744
    %v9746 = vrot.slane %v9732, %v9745
    %v9747 = vcombine.high %v9739, %v9739
    %v9748 = vcombine.high %v9746, %v9746
    %v9750 = vunpack.c.l.s4 1966171168
    %v9751 = vunpack.c.0.s8 %v9750
    %v9752 = vlaneseq
    %v9753 = vshrl.u32 %v9752, 7
    %v9754 = vsub.s32 %v9751, %v9753
    %v9755 = vrot.slane %v9739, %v9754
    %v9757 = vunpack.c.l.s4 1966171168
    %v9758 = vunpack.c.0.s8 %v9757
    %v9759 = vlaneseq
    %v9760 = vshrl.u32 %v9759, 7
    %v9761 = vsub.s32 %v9758, %v9760
    %v9762 = vrot.slane %v9746, %v9761
    %v9764 = vunpack.c.l.s4 1966171168
    %v9765 = vunpack.c.0.s8 %v9764
    %v9766 = vlaneseq
    %v9767 = vshrl.u32 %v9766, 7
    %v9768 = vsub.s32 %v9765, %v9767
    %v9769 = vrot.slane %v9747, %v9768
    %v9771 = vunpack.c.l.s4 1966171168
    %v9772 = vunpack.c.0.s8 %v9771
    %v9773 = vlaneseq
    %v9774 = vshrl.u32 %v9773, 7
    %v9775 = vsub.s32 %v9772, %v9774
    %v9776 = vrot.slane %v9748, %v9775
    %v9777 = vcombine.high %v9755, %v9755
    %v9778 = vcombine.high %v9762, %v9762
    %v9779 = vcombine.high %v9769, %v9769
    %v9780 = vcombine.high %v9776, %v9776
    %v9781 = vcombine.high %v9141, %v9141
    %v9783 = vunpack.c.l.s4 1966171168
    %v9784 = vunpack.c.0.s8 %v9783
    %v9785 = vlaneseq
    %v9786 = vshrl.u32 %v9785, 7
    %v9787 = vsub.s32 %v9784, %v9786
    %v9788 = vrot.slane %v9141, %v9787
    %v9790 = vunpack.c.l.s4 1966171168
    %v9791 = vunpack.c.0.s8 %v9790
    %v9792 = vlaneseq
    %v9793 = vshrl.u32 %v9792, 7
    %v9794 = vsub.s32 %v9791, %v9793
    %v9795 = vrot.slane %v9781, %v9794
    %v9796 = vcombine.high %v9788, %v9788
    %v9797 = vcombine.high %v9795, %v9795
    %v9799 = vunpack.c.l.s4 1966171168
    %v9800 = vunpack.c.0.s8 %v9799
    %v9801 = vlaneseq
    %v9802 = vshrl.u32 %v9801, 7
    %v9803 = vsub.s32 %v9800, %v9802
    %v9804 = vrot.slane %v9788, %v9803
    %v9806 = vunpack.c.l.s4 1966171168
    %v9807 = vunpack.c.0.s8 %v9806
    %v9808 = vlaneseq
    %v9809 = vshrl.u32 %v9808, 7
    %v9810 = vsub.s32 %v9807, %v9809
    %v9811 = vrot.slane %v9795, %v9810
    %v9813 = vunpack.c.l.s4 1966171168
    %v9814 = vunpack.c.0.s8 %v9813
    %v9815 = vlaneseq
    %v9816 = vshrl.u32 %v9815, 7
    %v9817 = vsub.s32 %v9814, %v9816
    %v9818 = vrot.slane %v9796, %v9817
    %v9820 = vunpack.c.l.s4 1966171168
    %v9821 = vunpack.c.0.s8 %v9820
    %v9822 = vlaneseq
    %v9823 = vshrl.u32 %v9822, 7
    %v9824 = vsub.s32 %v9821, %v9823
    %v9825 = vrot.slane %v9797, %v9824
    %v9826 = vcombine.high %v9804, %v9804
    %v9827 = vcombine.high %v9811, %v9811
    %v9828 = vcombine.high %v9818, %v9818
    %v9829 = vcombine.high %v9825, %v9825
    %v9830 = vcombine.high %v9142, %v9142
    %v9832 = vunpack.c.l.s4 1966171168
    %v9833 = vunpack.c.0.s8 %v9832
    %v9834 = vlaneseq
    %v9835 = vshrl.u32 %v9834, 7
    %v9836 = vsub.s32 %v9833, %v9835
    %v9837 = vrot.slane %v9142, %v9836
    %v9839 = vunpack.c.l.s4 1966171168
    %v9840 = vunpack.c.0.s8 %v9839
    %v9841 = vlaneseq
    %v9842 = vshrl.u32 %v9841, 7
    %v9843 = vsub.s32 %v9840, %v9842
    %v9844 = vrot.slane %v9830, %v9843
    %v9845 = vcombine.high %v9837, %v9837
    %v9846 = vcombine.high %v9844, %v9844
    %v9848 = vunpack.c.l.s4 1966171168
    %v9849 = vunpack.c.0.s8 %v9848
    %v9850 = vlaneseq
    %v9851 = vshrl.u32 %v9850, 7
    %v9852 = vsub.s32 %v9849, %v9851
    %v9853 = vrot.slane %v9837, %v9852
    %v9855 = vunpack.c.l.s4 1966171168
    %v9856 = vunpack.c.0.s8 %v9855
    %v9857 = vlaneseq
    %v9858 = vshrl.u32 %v9857, 7
    %v9859 = vsub.s32 %v9856, %v9858
    %v9860 = vrot.slane %v9844, %v9859
    %v9862 = vunpack.c.l.s4 1966171168
    %v9863 = vunpack.c.0.s8 %v9862
    %v9864 = vlaneseq
    %v9865 = vshrl.u32 %v9864, 7
    %v9866 = vsub.s32 %v9863, %v9865
    %v9867 = vrot.slane %v9845, %v9866
    %v9869 = vunpack.c.l.s4 1966171168
    %v9870 = vunpack.c.0.s8 %v9869
    %v9871 = vlaneseq
    %v9872 = vshrl.u32 %v9871, 7
    %v9873 = vsub.s32 %v9870, %v9872
    %v9874 = vrot.slane %v9846, %v9873
    %v9875 = vcombine.high %v9853, %v9853
    %v9876 = vcombine.high %v9860, %v9860
    %v9877 = vcombine.high %v9867, %v9867
    %v9878 = vcombine.high %v9874, %v9874
    %v9879 = vcombine.high %v9143, %v9143
    %v9881 = vunpack.c.l.s4 1966171168
    %v9882 = vunpack.c.0.s8 %v9881
    %v9883 = vlaneseq
    %v9884 = vshrl.u32 %v9883, 7
    %v9885 = vsub.s32 %v9882, %v9884
    %v9886 = vrot.slane %v9143, %v9885
    %v9888 = vunpack.c.l.s4 1966171168
    %v9889 = vunpack.c.0.s8 %v9888
    %v9890 = vlaneseq
    %v9891 = vshrl.u32 %v9890, 7
    %v9892 = vsub.s32 %v9889, %v9891
    %v9893 = vrot.slane %v9879, %v9892
    %v9894 = vcombine.high %v9886, %v9886
    %v9895 = vcombine.high %v9893, %v9893
    %v9897 = vunpack.c.l.s4 1966171168
    %v9898 = vunpack.c.0.s8 %v9897
    %v9899 = vlaneseq
    %v9900 = vshrl.u32 %v9899, 7
    %v9901 = vsub.s32 %v9898, %v9900
    %v9902 = vrot.slane %v9886, %v9901
    %v9904 = vunpack.c.l.s4 1966171168
    %v9905 = vunpack.c.0.s8 %v9904
    %v9906 = vlaneseq
    %v9907 = vshrl.u32 %v9906, 7
    %v9908 = vsub.s32 %v9905, %v9907
    %v9909 = vrot.slane %v9893, %v9908
    %v9911 = vunpack.c.l.s4 1966171168
    %v9912 = vunpack.c.0.s8 %v9911
    %v9913 = vlaneseq
    %v9914 = vshrl.u32 %v9913, 7
    %v9915 = vsub.s32 %v9912, %v9914
    %v9916 = vrot.slane %v9894, %v9915
    %v9918 = vunpack.c.l.s4 1966171168
    %v9919 = vunpack.c.0.s8 %v9918
    %v9920 = vlaneseq
    %v9921 = vshrl.u32 %v9920, 7
    %v9922 = vsub.s32 %v9919, %v9921
    %v9923 = vrot.slane %v9895, %v9922
    %v9924 = vcombine.high %v9902, %v9902
    %v9925 = vcombine.high %v9909, %v9909
    %v9926 = vcombine.high %v9916, %v9916
    %v9927 = vcombine.high %v9923, %v9923
    %v9928 = vcombine.high %v9144, %v9144
    %v9930 = vunpack.c.l.s4 1966171168
    %v9931 = vunpack.c.0.s8 %v9930
    %v9932 = vlaneseq
    %v9933 = vshrl.u32 %v9932, 7
    %v9934 = vsub.s32 %v9931, %v9933
    %v9935 = vrot.slane %v9144, %v9934
    %v9937 = vunpack.c.l.s4 1966171168
    %v9938 = vunpack.c.0.s8 %v9937
    %v9939 = vlaneseq
    %v9940 = vshrl.u32 %v9939, 7
    %v9941 = vsub.s32 %v9938, %v9940
    %v9942 = vrot.slane %v9928, %v9941
    %v9943 = vcombine.high %v9935, %v9935
    %v9944 = vcombine.high %v9942, %v9942
    %v9946 = vunpack.c.l.s4 1966171168
    %v9947 = vunpack.c.0.s8 %v9946
    %v9948 = vlaneseq
    %v9949 = vshrl.u32 %v9948, 7
    %v9950 = vsub.s32 %v9947, %v9949
    %v9951 = vrot.slane %v9935, %v9950
    %v9953 = vunpack.c.l.s4 1966171168
    %v9954 = vunpack.c.0.s8 %v9953
    %v9955 = vlaneseq
    %v9956 = vshrl.u32 %v9955, 7
    %v9957 = vsub.s32 %v9954, %v9956
    %v9958 = vrot.slane %v9942, %v9957
    %v9960 = vunpack.c.l.s4 1966171168
    %v9961 = vunpack.c.0.s8 %v9960
    %v9962 = vlaneseq
    %v9963 = vshrl.u32 %v9962, 7
    %v9964 = vsub.s32 %v9961, %v9963
    %v9965 = vrot.slane %v9943, %v9964
    %v9967 = vunpack.c.l.s4 1966171168
    %v9968 = vunpack.c.0.s8 %v9967
    %v9969 = vlaneseq
    %v9970 = vshrl.u32 %v9969, 7
    %v9971 = vsub.s32 %v9968, %v9970
    %v9972 = vrot.slane %v9944, %v9971
    %v9973 = vcombine.high %v9951, %v9951
    %v9974 = vcombine.high %v9958, %v9958
    %v9975 = vcombine.high %v9965, %v9965
    %v9976 = vcombine.high %v9972, %v9972
    %v9977 = vcombine.high %v9145, %v9145
    %v9979 = vunpack.c.l.s4 1966171168
    %v9980 = vunpack.c.0.s8 %v9979
    %v9981 = vlaneseq
    %v9982 = vshrl.u32 %v9981, 7
    %v9983 = vsub.s32 %v9980, %v9982
    %v9984 = vrot.slane %v9145, %v9983
    %v9986 = vunpack.c.l.s4 1966171168
    %v9987 = vunpack.c.0.s8 %v9986
    %v9988 = vlaneseq
    %v9989 = vshrl.u32 %v9988, 7
    %v9990 = vsub.s32 %v9987, %v9989
    %v9991 = vrot.slane %v9977, %v9990
    %v9992 = vcombine.high %v9984, %v9984
    %v9993 = vcombine.high %v9991, %v9991
    %v9995 = vunpack.c.l.s4 1966171168
    %v9996 = vunpack.c.0.s8 %v9995
    %v9997 = vlaneseq
    %v9998 = vshrl.u32 %v9997, 7
    %v9999 = vsub.s32 %v9996, %v9998
    %v10000 = vrot.slane %v9984, %v9999
    %v10002 = vunpack.c.l.s4 1966171168
    %v10003 = vunpack.c.0.s8 %v10002
    %v10004 = vlaneseq
    %v10005 = vshrl.u32 %v10004, 7
    %v10006 = vsub.s32 %v10003, %v10005
    %v10007 = vrot.slane %v9991, %v10006
    %v10009 = vunpack.c.l.s4 1966171168
    %v10010 = vunpack.c.0.s8 %v10009
    %v10011 = vlaneseq
    %v10012 = vshrl.u32 %v10011, 7
    %v10013 = vsub.s32 %v10010, %v10012
    %v10014 = vrot.slane %v9992, %v10013
    %v10016 = vunpack.c.l.s4 1966171168
    %v10017 = vunpack.c.0.s8 %v10016
    %v10018 = vlaneseq
    %v10019 = vshrl.u32 %v10018, 7
    %v10020 = vsub.s32 %v10017, %v10019
    %v10021 = vrot.slane %v9993, %v10020
    %v10022 = vcombine.high %v10000, %v10000
    %v10023 = vcombine.high %v10007, %v10007
    %v10024 = vcombine.high %v10014, %v10014
    %v10025 = vcombine.high %v10021, %v10021
    %v10026 = vcombine.high %v9146, %v9146
    %v10028 = vunpack.c.l.s4 1966171168
    %v10029 = vunpack.c.0.s8 %v10028
    %v10030 = vlaneseq
    %v10031 = vshrl.u32 %v10030, 7
    %v10032 = vsub.s32 %v10029, %v10031
    %v10033 = vrot.slane %v9146, %v10032
    %v10035 = vunpack.c.l.s4 1966171168
    %v10036 = vunpack.c.0.s8 %v10035
    %v10037 = vlaneseq
    %v10038 = vshrl.u32 %v10037, 7
    %v10039 = vsub.s32 %v10036, %v10038
    %v10040 = vrot.slane %v10026, %v10039
    %v10041 = vcombine.high %v10033, %v10033
    %v10042 = vcombine.high %v10040, %v10040
    %v10044 = vunpack.c.l.s4 1966171168
    %v10045 = vunpack.c.0.s8 %v10044
    %v10046 = vlaneseq
    %v10047 = vshrl.u32 %v10046, 7
    %v10048 = vsub.s32 %v10045, %v10047
    %v10049 = vrot.slane %v10033, %v10048
    %v10051 = vunpack.c.l.s4 1966171168
    %v10052 = vunpack.c.0.s8 %v10051
    %v10053 = vlaneseq
    %v10054 = vshrl.u32 %v10053, 7
    %v10055 = vsub.s32 %v10052, %v10054
    %v10056 = vrot.slane %v10040, %v10055
    %v10058 = vunpack.c.l.s4 1966171168
    %v10059 = vunpack.c.0.s8 %v10058
    %v10060 = vlaneseq
    %v10061 = vshrl.u32 %v10060, 7
    %v10062 = vsub.s32 %v10059, %v10061
    %v10063 = vrot.slane %v10041, %v10062
    %v10065 = vunpack.c.l.s4 1966171168
    %v10066 = vunpack.c.0.s8 %v10065
    %v10067 = vlaneseq
    %v10068 = vshrl.u32 %v10067, 7
    %v10069 = vsub.s32 %v10066, %v10068
    %v10070 = vrot.slane %v10042, %v10069
    %v10071 = vcombine.high %v10049, %v10049
    %v10072 = vcombine.high %v10056, %v10056
    %v10073 = vcombine.high %v10063, %v10063
    %v10074 = vcombine.high %v10070, %v10070
    %v10075 = vcombine.high %v9147, %v9147
    %v10077 = vunpack.c.l.s4 1966171168
    %v10078 = vunpack.c.0.s8 %v10077
    %v10079 = vlaneseq
    %v10080 = vshrl.u32 %v10079, 7
    %v10081 = vsub.s32 %v10078, %v10080
    %v10082 = vrot.slane %v9147, %v10081
    %v10084 = vunpack.c.l.s4 1966171168
    %v10085 = vunpack.c.0.s8 %v10084
    %v10086 = vlaneseq
    %v10087 = vshrl.u32 %v10086, 7
    %v10088 = vsub.s32 %v10085, %v10087
    %v10089 = vrot.slane %v10075, %v10088
    %v10090 = vcombine.high %v10082, %v10082
    %v10091 = vcombine.high %v10089, %v10089
    %v10093 = vunpack.c.l.s4 1966171168
    %v10094 = vunpack.c.0.s8 %v10093
    %v10095 = vlaneseq
    %v10096 = vshrl.u32 %v10095, 7
    %v10097 = vsub.s32 %v10094, %v10096
    %v10098 = vrot.slane %v10082, %v10097
    %v10100 = vunpack.c.l.s4 1966171168
    %v10101 = vunpack.c.0.s8 %v10100
    %v10102 = vlaneseq
    %v10103 = vshrl.u32 %v10102, 7
    %v10104 = vsub.s32 %v10101, %v10103
    %v10105 = vrot.slane %v10089, %v10104
    %v10107 = vunpack.c.l.s4 1966171168
    %v10108 = vunpack.c.0.s8 %v10107
    %v10109 = vlaneseq
    %v10110 = vshrl.u32 %v10109, 7
    %v10111 = vsub.s32 %v10108, %v10110
    %v10112 = vrot.slane %v10090, %v10111
    %v10114 = vunpack.c.l.s4 1966171168
    %v10115 = vunpack.c.0.s8 %v10114
    %v10116 = vlaneseq
    %v10117 = vshrl.u32 %v10116, 7
    %v10118 = vsub.s32 %v10115, %v10117
    %v10119 = vrot.slane %v10091, %v10118
    %v10120 = vcombine.high %v10098, %v10098
    %v10121 = vcombine.high %v10105, %v10105
    %v10122 = vcombine.high %v10112, %v10112
    %v10123 = vcombine.high %v10119, %v10119
    %v10124 = vcombine.high %v9148, %v9148
    %v10126 = vunpack.c.l.s4 1966171168
    %v10127 = vunpack.c.0.s8 %v10126
    %v10128 = vlaneseq
    %v10129 = vshrl.u32 %v10128, 7
    %v10130 = vsub.s32 %v10127, %v10129
    %v10131 = vrot.slane %v9148, %v10130
    %v10133 = vunpack.c.l.s4 1966171168
    %v10134 = vunpack.c.0.s8 %v10133
    %v10135 = vlaneseq
    %v10136 = vshrl.u32 %v10135, 7
    %v10137 = vsub.s32 %v10134, %v10136
    %v10138 = vrot.slane %v10124, %v10137
    %v10139 = vcombine.high %v10131, %v10131
    %v10140 = vcombine.high %v10138, %v10138
    %v10142 = vunpack.c.l.s4 1966171168
    %v10143 = vunpack.c.0.s8 %v10142
    %v10144 = vlaneseq
    %v10145 = vshrl.u32 %v10144, 7
    %v10146 = vsub.s32 %v10143, %v10145
    %v10147 = vrot.slane %v10131, %v10146
    %v10149 = vunpack.c.l.s4 1966171168
    %v10150 = vunpack.c.0.s8 %v10149
    %v10151 = vlaneseq
    %v10152 = vshrl.u32 %v10151, 7
    %v10153 = vsub.s32 %v10150, %v10152
    %v10154 = vrot.slane %v10138, %v10153
    %v10156 = vunpack.c.l.s4 1966171168
    %v10157 = vunpack.c.0.s8 %v10156
    %v10158 = vlaneseq
    %v10159 = vshrl.u32 %v10158, 7
    %v10160 = vsub.s32 %v10157, %v10159
    %v10161 = vrot.slane %v10139, %v10160
    %v10163 = vunpack.c.l.s4 1966171168
    %v10164 = vunpack.c.0.s8 %v10163
    %v10165 = vlaneseq
    %v10166 = vshrl.u32 %v10165, 7
    %v10167 = vsub.s32 %v10164, %v10166
    %v10168 = vrot.slane %v10140, %v10167
    %v10169 = vcombine.high %v10147, %v10147
    %v10170 = vcombine.high %v10154, %v10154
    %v10171 = vcombine.high %v10161, %v10161
    %v10172 = vcombine.high %v10168, %v10168
    %v10173 = vcombine.high %v9149, %v9149
    %v10175 = vunpack.c.l.s4 1966171168
    %v10176 = vunpack.c.0.s8 %v10175
    %v10177 = vlaneseq
    %v10178 = vshrl.u32 %v10177, 7
    %v10179 = vsub.s32 %v10176, %v10178
    %v10180 = vrot.slane %v9149, %v10179
    %v10182 = vunpack.c.l.s4 1966171168
    %v10183 = vunpack.c.0.s8 %v10182
    %v10184 = vlaneseq
    %v10185 = vshrl.u32 %v10184, 7
    %v10186 = vsub.s32 %v10183, %v10185
    %v10187 = vrot.slane %v10173, %v10186
    %v10188 = vcombine.high %v10180, %v10180
    %v10189 = vcombine.high %v10187, %v10187
    %v10191 = vunpack.c.l.s4 1966171168
    %v10192 = vunpack.c.0.s8 %v10191
    %v10193 = vlaneseq
    %v10194 = vshrl.u32 %v10193, 7
    %v10195 = vsub.s32 %v10192, %v10194
    %v10196 = vrot.slane %v10180, %v10195
    %v10198 = vunpack.c.l.s4 1966171168
    %v10199 = vunpack.c.0.s8 %v10198
    %v10200 = vlaneseq
    %v10201 = vshrl.u32 %v10200, 7
    %v10202 = vsub.s32 %v10199, %v10201
    %v10203 = vrot.slane %v10187, %v10202
    %v10205 = vunpack.c.l.s4 1966171168
    %v10206 = vunpack.c.0.s8 %v10205
    %v10207 = vlaneseq
    %v10208 = vshrl.u32 %v10207, 7
    %v10209 = vsub.s32 %v10206, %v10208
    %v10210 = vrot.slane %v10188, %v10209
    %v10212 = vunpack.c.l.s4 1966171168
    %v10213 = vunpack.c.0.s8 %v10212
    %v10214 = vlaneseq
    %v10215 = vshrl.u32 %v10214, 7
    %v10216 = vsub.s32 %v10213, %v10215
    %v10217 = vrot.slane %v10189, %v10216
    %v10218 = vcombine.high %v10196, %v10196
    %v10219 = vcombine.high %v10203, %v10203
    %v10220 = vcombine.high %v10210, %v10210
    %v10221 = vcombine.high %v10217, %v10217
    %v10222 = vcombine.high %v9150, %v9150
    %v10224 = vunpack.c.l.s4 1966171168
    %v10225 = vunpack.c.0.s8 %v10224
    %v10226 = vlaneseq
    %v10227 = vshrl.u32 %v10226, 7
    %v10228 = vsub.s32 %v10225, %v10227
    %v10229 = vrot.slane %v9150, %v10228
    %v10231 = vunpack.c.l.s4 1966171168
    %v10232 = vunpack.c.0.s8 %v10231
    %v10233 = vlaneseq
    %v10234 = vshrl.u32 %v10233, 7
    %v10235 = vsub.s32 %v10232, %v10234
    %v10236 = vrot.slane %v10222, %v10235
    %v10237 = vcombine.high %v10229, %v10229
    %v10238 = vcombine.high %v10236, %v10236
    %v10240 = vunpack.c.l.s4 1966171168
    %v10241 = vunpack.c.0.s8 %v10240
    %v10242 = vlaneseq
    %v10243 = vshrl.u32 %v10242, 7
    %v10244 = vsub.s32 %v10241, %v10243
    %v10245 = vrot.slane %v10229, %v10244
    %v10247 = vunpack.c.l.s4 1966171168
    %v10248 = vunpack.c.0.s8 %v10247
    %v10249 = vlaneseq
    %v10250 = vshrl.u32 %v10249, 7
    %v10251 = vsub.s32 %v10248, %v10250
    %v10252 = vrot.slane %v10236, %v10251
    %v10254 = vunpack.c.l.s4 1966171168
    %v10255 = vunpack.c.0.s8 %v10254
    %v10256 = vlaneseq
    %v10257 = vshrl.u32 %v10256, 7
    %v10258 = vsub.s32 %v10255, %v10257
    %v10259 = vrot.slane %v10237, %v10258
    %v10261 = vunpack.c.l.s4 1966171168
    %v10262 = vunpack.c.0.s8 %v10261
    %v10263 = vlaneseq
    %v10264 = vshrl.u32 %v10263, 7
    %v10265 = vsub.s32 %v10262, %v10264
    %v10266 = vrot.slane %v10238, %v10265
    %v10267 = vcombine.high %v10245, %v10245
    %v10268 = vcombine.high %v10252, %v10252
    %v10269 = vcombine.high %v10259, %v10259
    %v10270 = vcombine.high %v10266, %v10266
    %v10271 = vcombine.high %v9151, %v9151
    %v10273 = vunpack.c.l.s4 1966171168
    %v10274 = vunpack.c.0.s8 %v10273
    %v10275 = vlaneseq
    %v10276 = vshrl.u32 %v10275, 7
    %v10277 = vsub.s32 %v10274, %v10276
    %v10278 = vrot.slane %v9151, %v10277
    %v10280 = vunpack.c.l.s4 1966171168
    %v10281 = vunpack.c.0.s8 %v10280
    %v10282 = vlaneseq
    %v10283 = vshrl.u32 %v10282, 7
    %v10284 = vsub.s32 %v10281, %v10283
    %v10285 = vrot.slane %v10271, %v10284
    %v10286 = vcombine.high %v10278, %v10278
    %v10287 = vcombine.high %v10285, %v10285
    %v10289 = vunpack.c.l.s4 1966171168
    %v10290 = vunpack.c.0.s8 %v10289
    %v10291 = vlaneseq
    %v10292 = vshrl.u32 %v10291, 7
    %v10293 = vsub.s32 %v10290, %v10292
    %v10294 = vrot.slane %v10278, %v10293
    %v10296 = vunpack.c.l.s4 1966171168
    %v10297 = vunpack.c.0.s8 %v10296
    %v10298 = vlaneseq
    %v10299 = vshrl.u32 %v10298, 7
    %v10300 = vsub.s32 %v10297, %v10299
    %v10301 = vrot.slane %v10285, %v10300
    %v10303 = vunpack.c.l.s4 1966171168
    %v10304 = vunpack.c.0.s8 %v10303
    %v10305 = vlaneseq
    %v10306 = vshrl.u32 %v10305, 7
    %v10307 = vsub.s32 %v10304, %v10306
    %v10308 = vrot.slane %v10286, %v10307
    %v10310 = vunpack.c.l.s4 1966171168
    %v10311 = vunpack.c.0.s8 %v10310
    %v10312 = vlaneseq
    %v10313 = vshrl.u32 %v10312, 7
    %v10314 = vsub.s32 %v10311, %v10313
    %v10315 = vrot.slane %v10287, %v10314
    %v10316 = vcombine.high %v10294, %v10294
    %v10317 = vcombine.high %v10301, %v10301
    %v10318 = vcombine.high %v10308, %v10308
    %v10319 = vcombine.high %v10315, %v10315
    %v10320 = vcombine.high %v9152, %v9152
    %v10322 = vunpack.c.l.s4 1966171168
    %v10323 = vunpack.c.0.s8 %v10322
    %v10324 = vlaneseq
    %v10325 = vshrl.u32 %v10324, 7
    %v10326 = vsub.s32 %v10323, %v10325
    %v10327 = vrot.slane %v9152, %v10326
    %v10329 = vunpack.c.l.s4 1966171168
    %v10330 = vunpack.c.0.s8 %v10329
    %v10331 = vlaneseq
    %v10332 = vshrl.u32 %v10331, 7
    %v10333 = vsub.s32 %v10330, %v10332
    %v10334 = vrot.slane %v10320, %v10333
    %v10335 = vcombine.high %v10327, %v10327
    %v10336 = vcombine.high %v10334, %v10334
    %v10338 = vunpack.c.l.s4 1966171168
    %v10339 = vunpack.c.0.s8 %v10338
    %v10340 = vlaneseq
    %v10341 = vshrl.u32 %v10340, 7
    %v10342 = vsub.s32 %v10339, %v10341
    %v10343 = vrot.slane %v10327, %v10342
    %v10345 = vunpack.c.l.s4 1966171168
    %v10346 = vunpack.c.0.s8 %v10345
    %v10347 = vlaneseq
    %v10348 = vshrl.u32 %v10347, 7
    %v10349 = vsub.s32 %v10346, %v10348
    %v10350 = vrot.slane %v10334, %v10349
    %v10352 = vunpack.c.l.s4 1966171168
    %v10353 = vunpack.c.0.s8 %v10352
    %v10354 = vlaneseq
    %v10355 = vshrl.u32 %v10354, 7
    %v10356 = vsub.s32 %v10353, %v10355
    %v10357 = vrot.slane %v10335, %v10356
    %v10359 = vunpack.c.l.s4 1966171168
    %v10360 = vunpack.c.0.s8 %v10359
    %v10361 = vlaneseq
    %v10362 = vshrl.u32 %v10361, 7
    %v10363 = vsub.s32 %v10360, %v10362
    %v10364 = vrot.slane %v10336, %v10363
    %v10365 = vcombine.high %v10343, %v10343
    %v10366 = vcombine.high %v10350, %v10350
    %v10367 = vcombine.high %v10357, %v10357
    %v10368 = vcombine.high %v10364, %v10364
    %v10369 = vcombine.high %v9153, %v9153
    %v10371 = vunpack.c.l.s4 1966171168
    %v10372 = vunpack.c.0.s8 %v10371
    %v10373 = vlaneseq
    %v10374 = vshrl.u32 %v10373, 7
    %v10375 = vsub.s32 %v10372, %v10374
    %v10376 = vrot.slane %v9153, %v10375
    %v10378 = vunpack.c.l.s4 1966171168
    %v10379 = vunpack.c.0.s8 %v10378
    %v10380 = vlaneseq
    %v10381 = vshrl.u32 %v10380, 7
    %v10382 = vsub.s32 %v10379, %v10381
    %v10383 = vrot.slane %v10369, %v10382
    %v10384 = vcombine.high %v10376, %v10376
    %v10385 = vcombine.high %v10383, %v10383
    %v10387 = vunpack.c.l.s4 1966171168
    %v10388 = vunpack.c.0.s8 %v10387
    %v10389 = vlaneseq
    %v10390 = vshrl.u32 %v10389, 7
    %v10391 = vsub.s32 %v10388, %v10390
    %v10392 = vrot.slane %v10376, %v10391
    %v10394 = vunpack.c.l.s4 1966171168
    %v10395 = vunpack.c.0.s8 %v10394
    %v10396 = vlaneseq
    %v10397 = vshrl.u32 %v10396, 7
    %v10398 = vsub.s32 %v10395, %v10397
    %v10399 = vrot.slane %v10383, %v10398
    %v10401 = vunpack.c.l.s4 1966171168
    %v10402 = vunpack.c.0.s8 %v10401
    %v10403 = vlaneseq
    %v10404 = vshrl.u32 %v10403, 7
    %v10405 = vsub.s32 %v10402, %v10404
    %v10406 = vrot.slane %v10384, %v10405
    %v10408 = vunpack.c.l.s4 1966171168
    %v10409 = vunpack.c.0.s8 %v10408
    %v10410 = vlaneseq
    %v10411 = vshrl.u32 %v10410, 7
    %v10412 = vsub.s32 %v10409, %v10411
    %v10413 = vrot.slane %v10385, %v10412
    %v10414 = vcombine.high %v10392, %v10392
    %v10415 = vcombine.high %v10399, %v10399
    %v10416 = vcombine.high %v10406, %v10406
    %v10417 = vcombine.high %v10413, %v10413
    %v10418 = vcombine.high %v9154, %v9154
    %v10420 = vunpack.c.l.s4 1966171168
    %v10421 = vunpack.c.0.s8 %v10420
    %v10422 = vlaneseq
    %v10423 = vshrl.u32 %v10422, 7
    %v10424 = vsub.s32 %v10421, %v10423
    %v10425 = vrot.slane %v9154, %v10424
    %v10427 = vunpack.c.l.s4 1966171168
    %v10428 = vunpack.c.0.s8 %v10427
    %v10429 = vlaneseq
    %v10430 = vshrl.u32 %v10429, 7
    %v10431 = vsub.s32 %v10428, %v10430
    %v10432 = vrot.slane %v10418, %v10431
    %v10433 = vcombine.high %v10425, %v10425
    %v10434 = vcombine.high %v10432, %v10432
    %v10436 = vunpack.c.l.s4 1966171168
    %v10437 = vunpack.c.0.s8 %v10436
    %v10438 = vlaneseq
    %v10439 = vshrl.u32 %v10438, 7
    %v10440 = vsub.s32 %v10437, %v10439
    %v10441 = vrot.slane %v10425, %v10440
    %v10443 = vunpack.c.l.s4 1966171168
    %v10444 = vunpack.c.0.s8 %v10443
    %v10445 = vlaneseq
    %v10446 = vshrl.u32 %v10445, 7
    %v10447 = vsub.s32 %v10444, %v10446
    %v10448 = vrot.slane %v10432, %v10447
    %v10450 = vunpack.c.l.s4 1966171168
    %v10451 = vunpack.c.0.s8 %v10450
    %v10452 = vlaneseq
    %v10453 = vshrl.u32 %v10452, 7
    %v10454 = vsub.s32 %v10451, %v10453
    %v10455 = vrot.slane %v10433, %v10454
    %v10457 = vunpack.c.l.s4 1966171168
    %v10458 = vunpack.c.0.s8 %v10457
    %v10459 = vlaneseq
    %v10460 = vshrl.u32 %v10459, 7
    %v10461 = vsub.s32 %v10458, %v10460
    %v10462 = vrot.slane %v10434, %v10461
    %v10463 = vcombine.high %v10441, %v10441
    %v10464 = vcombine.high %v10448, %v10448
    %v10465 = vcombine.high %v10455, %v10455
    %v10466 = vcombine.high %v10462, %v10462
    %v10467 = vcombine.high %v9155, %v9155
    %v10469 = vunpack.c.l.s4 1966171168
    %v10470 = vunpack.c.0.s8 %v10469
    %v10471 = vlaneseq
    %v10472 = vshrl.u32 %v10471, 7
    %v10473 = vsub.s32 %v10470, %v10472
    %v10474 = vrot.slane %v9155, %v10473
    %v10476 = vunpack.c.l.s4 1966171168
    %v10477 = vunpack.c.0.s8 %v10476
    %v10478 = vlaneseq
    %v10479 = vshrl.u32 %v10478, 7
    %v10480 = vsub.s32 %v10477, %v10479
    %v10481 = vrot.slane %v10467, %v10480
    %v10482 = vcombine.high %v10474, %v10474
    %v10483 = vcombine.high %v10481, %v10481
    %v10485 = vunpack.c.l.s4 1966171168
    %v10486 = vunpack.c.0.s8 %v10485
    %v10487 = vlaneseq
    %v10488 = vshrl.u32 %v10487, 7
    %v10489 = vsub.s32 %v10486, %v10488
    %v10490 = vrot.slane %v10474, %v10489
    %v10492 = vunpack.c.l.s4 1966171168
    %v10493 = vunpack.c.0.s8 %v10492
    %v10494 = vlaneseq
    %v10495 = vshrl.u32 %v10494, 7
    %v10496 = vsub.s32 %v10493, %v10495
    %v10497 = vrot.slane %v10481, %v10496
    %v10499 = vunpack.c.l.s4 1966171168
    %v10500 = vunpack.c.0.s8 %v10499
    %v10501 = vlaneseq
    %v10502 = vshrl.u32 %v10501, 7
    %v10503 = vsub.s32 %v10500, %v10502
    %v10504 = vrot.slane %v10482, %v10503
    %v10506 = vunpack.c.l.s4 1966171168
    %v10507 = vunpack.c.0.s8 %v10506
    %v10508 = vlaneseq
    %v10509 = vshrl.u32 %v10508, 7
    %v10510 = vsub.s32 %v10507, %v10509
    %v10511 = vrot.slane %v10483, %v10510
    %v10512 = vcombine.high %v10490, %v10490
    %v10513 = vcombine.high %v10497, %v10497
    %v10514 = vcombine.high %v10504, %v10504
    %v10515 = vcombine.high %v10511, %v10511
    %v10516 = vcombine.high %v9156, %v9156
    %v10518 = vunpack.c.l.s4 1966171168
    %v10519 = vunpack.c.0.s8 %v10518
    %v10520 = vlaneseq
    %v10521 = vshrl.u32 %v10520, 7
    %v10522 = vsub.s32 %v10519, %v10521
    %v10523 = vrot.slane %v9156, %v10522
    %v10525 = vunpack.c.l.s4 1966171168
    %v10526 = vunpack.c.0.s8 %v10525
    %v10527 = vlaneseq
    %v10528 = vshrl.u32 %v10527, 7
    %v10529 = vsub.s32 %v10526, %v10528
    %v10530 = vrot.slane %v10516, %v10529
    %v10531 = vcombine.high %v10523, %v10523
    %v10532 = vcombine.high %v10530, %v10530
    %v10534 = vunpack.c.l.s4 1966171168
    %v10535 = vunpack.c.0.s8 %v10534
    %v10536 = vlaneseq
    %v10537 = vshrl.u32 %v10536, 7
    %v10538 = vsub.s32 %v10535, %v10537
    %v10539 = vrot.slane %v10523, %v10538
    %v10541 = vunpack.c.l.s4 1966171168
    %v10542 = vunpack.c.0.s8 %v10541
    %v10543 = vlaneseq
    %v10544 = vshrl.u32 %v10543, 7
    %v10545 = vsub.s32 %v10542, %v10544
    %v10546 = vrot.slane %v10530, %v10545
    %v10548 = vunpack.c.l.s4 1966171168
    %v10549 = vunpack.c.0.s8 %v10548
    %v10550 = vlaneseq
    %v10551 = vshrl.u32 %v10550, 7
    %v10552 = vsub.s32 %v10549, %v10551
    %v10553 = vrot.slane %v10531, %v10552
    %v10555 = vunpack.c.l.s4 1966171168
    %v10556 = vunpack.c.0.s8 %v10555
    %v10557 = vlaneseq
    %v10558 = vshrl.u32 %v10557, 7
    %v10559 = vsub.s32 %v10556, %v10558
    %v10560 = vrot.slane %v10532, %v10559
    %v10561 = vcombine.high %v10539, %v10539
    %v10562 = vcombine.high %v10546, %v10546
    %v10563 = vcombine.high %v10553, %v10553
    %v10564 = vcombine.high %v10560, %v10560
    %v10565 = vcombine.high %v9157, %v9157
    %v10567 = vunpack.c.l.s4 1966171168
    %v10568 = vunpack.c.0.s8 %v10567
    %v10569 = vlaneseq
    %v10570 = vshrl.u32 %v10569, 7
    %v10571 = vsub.s32 %v10568, %v10570
    %v10572 = vrot.slane %v9157, %v10571
    %v10574 = vunpack.c.l.s4 1966171168
    %v10575 = vunpack.c.0.s8 %v10574
    %v10576 = vlaneseq
    %v10577 = vshrl.u32 %v10576, 7
    %v10578 = vsub.s32 %v10575, %v10577
    %v10579 = vrot.slane %v10565, %v10578
    %v10580 = vcombine.high %v10572, %v10572
    %v10581 = vcombine.high %v10579, %v10579
    %v10583 = vunpack.c.l.s4 1966171168
    %v10584 = vunpack.c.0.s8 %v10583
    %v10585 = vlaneseq
    %v10586 = vshrl.u32 %v10585, 7
    %v10587 = vsub.s32 %v10584, %v10586
    %v10588 = vrot.slane %v10572, %v10587
    %v10590 = vunpack.c.l.s4 1966171168
    %v10591 = vunpack.c.0.s8 %v10590
    %v10592 = vlaneseq
    %v10593 = vshrl.u32 %v10592, 7
    %v10594 = vsub.s32 %v10591, %v10593
    %v10595 = vrot.slane %v10579, %v10594
    %v10597 = vunpack.c.l.s4 1966171168
    %v10598 = vunpack.c.0.s8 %v10597
    %v10599 = vlaneseq
    %v10600 = vshrl.u32 %v10599, 7
    %v10601 = vsub.s32 %v10598, %v10600
    %v10602 = vrot.slane %v10580, %v10601
    %v10604 = vunpack.c.l.s4 1966171168
    %v10605 = vunpack.c.0.s8 %v10604
    %v10606 = vlaneseq
    %v10607 = vshrl.u32 %v10606, 7
    %v10608 = vsub.s32 %v10605, %v10607
    %v10609 = vrot.slane %v10581, %v10608
    %v10610 = vcombine.high %v10588, %v10588
    %v10611 = vcombine.high %v10595, %v10595
    %v10612 = vcombine.high %v10602, %v10602
    %v10613 = vcombine.high %v10609, %v10609
    %v10614 = vcombine.high %v9158, %v9158
    %v10616 = vunpack.c.l.s4 1966171168
    %v10617 = vunpack.c.0.s8 %v10616
    %v10618 = vlaneseq
    %v10619 = vshrl.u32 %v10618, 7
    %v10620 = vsub.s32 %v10617, %v10619
    %v10621 = vrot.slane %v9158, %v10620
    %v10623 = vunpack.c.l.s4 1966171168
    %v10624 = vunpack.c.0.s8 %v10623
    %v10625 = vlaneseq
    %v10626 = vshrl.u32 %v10625, 7
    %v10627 = vsub.s32 %v10624, %v10626
    %v10628 = vrot.slane %v10614, %v10627
    %v10629 = vcombine.high %v10621, %v10621
    %v10630 = vcombine.high %v10628, %v10628
    %v10632 = vunpack.c.l.s4 1966171168
    %v10633 = vunpack.c.0.s8 %v10632
    %v10634 = vlaneseq
    %v10635 = vshrl.u32 %v10634, 7
    %v10636 = vsub.s32 %v10633, %v10635
    %v10637 = vrot.slane %v10621, %v10636
    %v10639 = vunpack.c.l.s4 1966171168
    %v10640 = vunpack.c.0.s8 %v10639
    %v10641 = vlaneseq
    %v10642 = vshrl.u32 %v10641, 7
    %v10643 = vsub.s32 %v10640, %v10642
    %v10644 = vrot.slane %v10628, %v10643
    %v10646 = vunpack.c.l.s4 1966171168
    %v10647 = vunpack.c.0.s8 %v10646
    %v10648 = vlaneseq
    %v10649 = vshrl.u32 %v10648, 7
    %v10650 = vsub.s32 %v10647, %v10649
    %v10651 = vrot.slane %v10629, %v10650
    %v10653 = vunpack.c.l.s4 1966171168
    %v10654 = vunpack.c.0.s8 %v10653
    %v10655 = vlaneseq
    %v10656 = vshrl.u32 %v10655, 7
    %v10657 = vsub.s32 %v10654, %v10656
    %v10658 = vrot.slane %v10630, %v10657
    %v10659 = vcombine.high %v10637, %v10637
    %v10660 = vcombine.high %v10644, %v10644
    %v10661 = vcombine.high %v10651, %v10651
    %v10662 = vcombine.high %v10658, %v10658
    %v10663 = vcombine.high %v9159, %v9159
    %v10665 = vunpack.c.l.s4 1966171168
    %v10666 = vunpack.c.0.s8 %v10665
    %v10667 = vlaneseq
    %v10668 = vshrl.u32 %v10667, 7
    %v10669 = vsub.s32 %v10666, %v10668
    %v10670 = vrot.slane %v9159, %v10669
    %v10672 = vunpack.c.l.s4 1966171168
    %v10673 = vunpack.c.0.s8 %v10672
    %v10674 = vlaneseq
    %v10675 = vshrl.u32 %v10674, 7
    %v10676 = vsub.s32 %v10673, %v10675
    %v10677 = vrot.slane %v10663, %v10676
    %v10678 = vcombine.high %v10670, %v10670
    %v10679 = vcombine.high %v10677, %v10677
    %v10681 = vunpack.c.l.s4 1966171168
    %v10682 = vunpack.c.0.s8 %v10681
    %v10683 = vlaneseq
    %v10684 = vshrl.u32 %v10683, 7
    %v10685 = vsub.s32 %v10682, %v10684
    %v10686 = vrot.slane %v10670, %v10685
    %v10688 = vunpack.c.l.s4 1966171168
    %v10689 = vunpack.c.0.s8 %v10688
    %v10690 = vlaneseq
    %v10691 = vshrl.u32 %v10690, 7
    %v10692 = vsub.s32 %v10689, %v10691
    %v10693 = vrot.slane %v10677, %v10692
    %v10695 = vunpack.c.l.s4 1966171168
    %v10696 = vunpack.c.0.s8 %v10695
    %v10697 = vlaneseq
    %v10698 = vshrl.u32 %v10697, 7
    %v10699 = vsub.s32 %v10696, %v10698
    %v10700 = vrot.slane %v10678, %v10699
    %v10702 = vunpack.c.l.s4 1966171168
    %v10703 = vunpack.c.0.s8 %v10702
    %v10704 = vlaneseq
    %v10705 = vshrl.u32 %v10704, 7
    %v10706 = vsub.s32 %v10703, %v10705
    %v10707 = vrot.slane %v10679, %v10706
    %v10708 = vcombine.high %v10686, %v10686
    %v10709 = vcombine.high %v10693, %v10693
    %v10710 = vcombine.high %v10700, %v10700
    %v10711 = vcombine.high %v10707, %v10707
    %v10712 = vcombine.high %v9160, %v9160
    %v10714 = vunpack.c.l.s4 1966171168
    %v10715 = vunpack.c.0.s8 %v10714
    %v10716 = vlaneseq
    %v10717 = vshrl.u32 %v10716, 7
    %v10718 = vsub.s32 %v10715, %v10717
    %v10719 = vrot.slane %v9160, %v10718
    %v10721 = vunpack.c.l.s4 1966171168
    %v10722 = vunpack.c.0.s8 %v10721
    %v10723 = vlaneseq
    %v10724 = vshrl.u32 %v10723, 7
    %v10725 = vsub.s32 %v10722, %v10724
    %v10726 = vrot.slane %v10712, %v10725
    %v10727 = vcombine.high %v10719, %v10719
    %v10728 = vcombine.high %v10726, %v10726
    %v10730 = vunpack.c.l.s4 1966171168
    %v10731 = vunpack.c.0.s8 %v10730
    %v10732 = vlaneseq
    %v10733 = vshrl.u32 %v10732, 7
    %v10734 = vsub.s32 %v10731, %v10733
    %v10735 = vrot.slane %v10719, %v10734
    %v10737 = vunpack.c.l.s4 1966171168
    %v10738 = vunpack.c.0.s8 %v10737
    %v10739 = vlaneseq
    %v10740 = vshrl.u32 %v10739, 7
    %v10741 = vsub.s32 %v10738, %v10740
    %v10742 = vrot.slane %v10726, %v10741
    %v10744 = vunpack.c.l.s4 1966171168
    %v10745 = vunpack.c.0.s8 %v10744
    %v10746 = vlaneseq
    %v10747 = vshrl.u32 %v10746, 7
    %v10748 = vsub.s32 %v10745, %v10747
    %v10749 = vrot.slane %v10727, %v10748
    %v10751 = vunpack.c.l.s4 1966171168
    %v10752 = vunpack.c.0.s8 %v10751
    %v10753 = vlaneseq
    %v10754 = vshrl.u32 %v10753, 7
    %v10755 = vsub.s32 %v10752, %v10754
    %v10756 = vrot.slane %v10728, %v10755
    %v10757 = vcombine.high %v10735, %v10735
    %v10758 = vcombine.high %v10742, %v10742
    %v10759 = vcombine.high %v10749, %v10749
    %v10760 = vcombine.high %v10756, %v10756
    %v10761 = vcombine.low %v9216, %v9230
    %v10762 = vcombine.low %v9238, %v9240
    %v10763 = vcombine.low %v9223, %v9237
    %v10764 = vcombine.low %v9239, %v9241
    %v10766 = vunpack.c.l.s4 1966171168
    %v10767 = vunpack.c.0.s8 %v10766
    %v10768 = vlaneseq
    %v10769 = vshrl.u32 %v10768, 7
    %v10770 = vsub.s32 %v10767, %v10769
    %v10771 = vrot.slane %v10761, %v10770
    %v10773 = vunpack.c.l.s4 1966171168
    %v10774 = vunpack.c.0.s8 %v10773
    %v10775 = vlaneseq
    %v10776 = vshrl.u32 %v10775, 7
    %v10777 = vsub.s32 %v10774, %v10776
    %v10778 = vrot.slane %v10762, %v10777
    %v10780 = vunpack.c.l.s4 1966171168
    %v10781 = vunpack.c.0.s8 %v10780
    %v10782 = vlaneseq
    %v10783 = vshrl.u32 %v10782, 7
    %v10784 = vsub.s32 %v10781, %v10783
    %v10785 = vrot.slane %v10763, %v10784
    %v10787 = vunpack.c.l.s4 1966171168
    %v10788 = vunpack.c.0.s8 %v10787
    %v10789 = vlaneseq
    %v10790 = vshrl.u32 %v10789, 7
    %v10791 = vsub.s32 %v10788, %v10790
    %v10792 = vrot.slane %v10764, %v10791
    %v10793 = vcombine.low %v10771, %v10778
    %v10794 = vcombine.low %v10785, %v10792
    %v10796 = vunpack.c.l.s4 1966171168
    %v10797 = vunpack.c.0.s8 %v10796
    %v10798 = vlaneseq
    %v10799 = vshrl.u32 %v10798, 7
    %v10800 = vsub.s32 %v10797, %v10799
    %v10801 = vrot.slane %v10793, %v10800
    %v10803 = vunpack.c.l.s4 1966171168
    %v10804 = vunpack.c.0.s8 %v10803
    %v10805 = vlaneseq
    %v10806 = vshrl.u32 %v10805, 7
    %v10807 = vsub.s32 %v10804, %v10806
    %v10808 = vrot.slane %v10794, %v10807
    %v10809 = vcombine.low %v10801, %v10808
    %v10810 = vcombine.low %v9265, %v9279
    %v10811 = vcombine.low %v9287, %v9289
    %v10812 = vcombine.low %v9272, %v9286
    %v10813 = vcombine.low %v9288, %v9290
    %v10815 = vunpack.c.l.s4 1966171168
    %v10816 = vunpack.c.0.s8 %v10815
    %v10817 = vlaneseq
    %v10818 = vshrl.u32 %v10817, 7
    %v10819 = vsub.s32 %v10816, %v10818
    %v10820 = vrot.slane %v10810, %v10819
    %v10822 = vunpack.c.l.s4 1966171168
    %v10823 = vunpack.c.0.s8 %v10822
    %v10824 = vlaneseq
    %v10825 = vshrl.u32 %v10824, 7
    %v10826 = vsub.s32 %v10823, %v10825
    %v10827 = vrot.slane %v10811, %v10826
    %v10829 = vunpack.c.l.s4 1966171168
    %v10830 = vunpack.c.0.s8 %v10829
    %v10831 = vlaneseq
    %v10832 = vshrl.u32 %v10831, 7
    %v10833 = vsub.s32 %v10830, %v10832
    %v10834 = vrot.slane %v10812, %v10833
    %v10836 = vunpack.c.l.s4 1966171168
    %v10837 = vunpack.c.0.s8 %v10836
    %v10838 = vlaneseq
    %v10839 = vshrl.u32 %v10838, 7
    %v10840 = vsub.s32 %v10837, %v10839
    %v10841 = vrot.slane %v10813, %v10840
    %v10842 = vcombine.low %v10820, %v10827
    %v10843 = vcombine.low %v10834, %v10841
    %v10845 = vunpack.c.l.s4 1966171168
    %v10846 = vunpack.c.0.s8 %v10845
    %v10847 = vlaneseq
    %v10848 = vshrl.u32 %v10847, 7
    %v10849 = vsub.s32 %v10846, %v10848
    %v10850 = vrot.slane %v10842, %v10849
    %v10852 = vunpack.c.l.s4 1966171168
    %v10853 = vunpack.c.0.s8 %v10852
    %v10854 = vlaneseq
    %v10855 = vshrl.u32 %v10854, 7
    %v10856 = vsub.s32 %v10853, %v10855
    %v10857 = vrot.slane %v10843, %v10856
    %v10858 = vcombine.low %v10850, %v10857
    %v10859 = vcombine.low %v9314, %v9328
    %v10860 = vcombine.low %v9336, %v9338
    %v10861 = vcombine.low %v9321, %v9335
    %v10862 = vcombine.low %v9337, %v9339
    %v10864 = vunpack.c.l.s4 1966171168
    %v10865 = vunpack.c.0.s8 %v10864
    %v10866 = vlaneseq
    %v10867 = vshrl.u32 %v10866, 7
    %v10868 = vsub.s32 %v10865, %v10867
    %v10869 = vrot.slane %v10859, %v10868
    %v10871 = vunpack.c.l.s4 1966171168
    %v10872 = vunpack.c.0.s8 %v10871
    %v10873 = vlaneseq
    %v10874 = vshrl.u32 %v10873, 7
    %v10875 = vsub.s32 %v10872, %v10874
    %v10876 = vrot.slane %v10860, %v10875
    %v10878 = vunpack.c.l.s4 1966171168
    %v10879 = vunpack.c.0.s8 %v10878
    %v10880 = vlaneseq
    %v10881 = vshrl.u32 %v10880, 7
    %v10882 = vsub.s32 %v10879, %v10881
    %v10883 = vrot.slane %v10861, %v10882
    %v10885 = vunpack.c.l.s4 1966171168
    %v10886 = vunpack.c.0.s8 %v10885
    %v10887 = vlaneseq
    %v10888 = vshrl.u32 %v10887, 7
    %v10889 = vsub.s32 %v10886, %v10888
    %v10890 = vrot.slane %v10862, %v10889
    %v10891 = vcombine.low %v10869, %v10876
    %v10892 = vcombine.low %v10883, %v10890
    %v10894 = vunpack.c.l.s4 1966171168
    %v10895 = vunpack.c.0.s8 %v10894
    %v10896 = vlaneseq
    %v10897 = vshrl.u32 %v10896, 7
    %v10898 = vsub.s32 %v10895, %v10897
    %v10899 = vrot.slane %v10891, %v10898
    %v10901 = vunpack.c.l.s4 1966171168
    %v10902 = vunpack.c.0.s8 %v10901
    %v10903 = vlaneseq
    %v10904 = vshrl.u32 %v10903, 7
    %v10905 = vsub.s32 %v10902, %v10904
    %v10906 = vrot.slane %v10892, %v10905
    %v10907 = vcombine.low %v10899, %v10906
    %v10908 = vcombine.low %v9363, %v9377
    %v10909 = vcombine.low %v9385, %v9387
    %v10910 = vcombine.low %v9370, %v9384
    %v10911 = vcombine.low %v9386, %v9388
    %v10913 = vunpack.c.l.s4 1966171168
    %v10914 = vunpack.c.0.s8 %v10913
    %v10915 = vlaneseq
    %v10916 = vshrl.u32 %v10915, 7
    %v10917 = vsub.s32 %v10914, %v10916
    %v10918 = vrot.slane %v10908, %v10917
    %v10920 = vunpack.c.l.s4 1966171168
    %v10921 = vunpack.c.0.s8 %v10920
    %v10922 = vlaneseq
    %v10923 = vshrl.u32 %v10922, 7
    %v10924 = vsub.s32 %v10921, %v10923
    %v10925 = vrot.slane %v10909, %v10924
    %v10927 = vunpack.c.l.s4 1966171168
    %v10928 = vunpack.c.0.s8 %v10927
    %v10929 = vlaneseq
    %v10930 = vshrl.u32 %v10929, 7
    %v10931 = vsub.s32 %v10928, %v10930
    %v10932 = vrot.slane %v10910, %v10931
    %v10934 = vunpack.c.l.s4 1966171168
    %v10935 = vunpack.c.0.s8 %v10934
    %v10936 = vlaneseq
    %v10937 = vshrl.u32 %v10936, 7
    %v10938 = vsub.s32 %v10935, %v10937
    %v10939 = vrot.slane %v10911, %v10938
    %v10940 = vcombine.low %v10918, %v10925
    %v10941 = vcombine.low %v10932, %v10939
    %v10943 = vunpack.c.l.s4 1966171168
    %v10944 = vunpack.c.0.s8 %v10943
    %v10945 = vlaneseq
    %v10946 = vshrl.u32 %v10945, 7
    %v10947 = vsub.s32 %v10944, %v10946
    %v10948 = vrot.slane %v10940, %v10947
    %v10950 = vunpack.c.l.s4 1966171168
    %v10951 = vunpack.c.0.s8 %v10950
    %v10952 = vlaneseq
    %v10953 = vshrl.u32 %v10952, 7
    %v10954 = vsub.s32 %v10951, %v10953
    %v10955 = vrot.slane %v10941, %v10954
    %v10956 = vcombine.low %v10948, %v10955
    %v10957 = vcombine.low %v9412, %v9426
    %v10958 = vcombine.low %v9434, %v9436
    %v10959 = vcombine.low %v9419, %v9433
    %v10960 = vcombine.low %v9435, %v9437
    %v10962 = vunpack.c.l.s4 1966171168
    %v10963 = vunpack.c.0.s8 %v10962
    %v10964 = vlaneseq
    %v10965 = vshrl.u32 %v10964, 7
    %v10966 = vsub.s32 %v10963, %v10965
    %v10967 = vrot.slane %v10957, %v10966
    %v10969 = vunpack.c.l.s4 1966171168
    %v10970 = vunpack.c.0.s8 %v10969
    %v10971 = vlaneseq
    %v10972 = vshrl.u32 %v10971, 7
    %v10973 = vsub.s32 %v10970, %v10972
    %v10974 = vrot.slane %v10958, %v10973
    %v10976 = vunpack.c.l.s4 1966171168
    %v10977 = vunpack.c.0.s8 %v10976
    %v10978 = vlaneseq
    %v10979 = vshrl.u32 %v10978, 7
    %v10980 = vsub.s32 %v10977, %v10979
    %v10981 = vrot.slane %v10959, %v10980
    %v10983 = vunpack.c.l.s4 1966171168
    %v10984 = vunpack.c.0.s8 %v10983
    %v10985 = vlaneseq
    %v10986 = vshrl.u32 %v10985, 7
    %v10987 = vsub.s32 %v10984, %v10986
    %v10988 = vrot.slane %v10960, %v10987
    %v10989 = vcombine.low %v10967, %v10974
    %v10990 = vcombine.low %v10981, %v10988
    %v10992 = vunpack.c.l.s4 1966171168
    %v10993 = vunpack.c.0.s8 %v10992
    %v10994 = vlaneseq
    %v10995 = vshrl.u32 %v10994, 7
    %v10996 = vsub.s32 %v10993, %v10995
    %v10997 = vrot.slane %v10989, %v10996
    %v10999 = vunpack.c.l.s4 1966171168
    %v11000 = vunpack.c.0.s8 %v10999
    %v11001 = vlaneseq
    %v11002 = vshrl.u32 %v11001, 7
    %v11003 = vsub.s32 %v11000, %v11002
    %v11004 = vrot.slane %v10990, %v11003
    %v11005 = vcombine.low %v10997, %v11004
    %v11006 = vcombine.low %v9461, %v9475
    %v11007 = vcombine.low %v9483, %v9485
    %v11008 = vcombine.low %v9468, %v9482
    %v11009 = vcombine.low %v9484, %v9486
    %v11011 = vunpack.c.l.s4 1966171168
    %v11012 = vunpack.c.0.s8 %v11011
    %v11013 = vlaneseq
    %v11014 = vshrl.u32 %v11013, 7
    %v11015 = vsub.s32 %v11012, %v11014
    %v11016 = vrot.slane %v11006, %v11015
    %v11018 = vunpack.c.l.s4 1966171168
    %v11019 = vunpack.c.0.s8 %v11018
    %v11020 = vlaneseq
    %v11021 = vshrl.u32 %v11020, 7
    %v11022 = vsub.s32 %v11019, %v11021
    %v11023 = vrot.slane %v11007, %v11022
    %v11025 = vunpack.c.l.s4 1966171168
    %v11026 = vunpack.c.0.s8 %v11025
    %v11027 = vlaneseq
    %v11028 = vshrl.u32 %v11027, 7
    %v11029 = vsub.s32 %v11026, %v11028
    %v11030 = vrot.slane %v11008, %v11029
    %v11032 = vunpack.c.l.s4 1966171168
    %v11033 = vunpack.c.0.s8 %v11032
    %v11034 = vlaneseq
    %v11035 = vshrl.u32 %v11034, 7
    %v11036 = vsub.s32 %v11033, %v11035
    %v11037 = vrot.slane %v11009, %v11036
    %v11038 = vcombine.low %v11016, %v11023
    %v11039 = vcombine.low %v11030, %v11037
    %v11041 = vunpack.c.l.s4 1966171168
    %v11042 = vunpack.c.0.s8 %v11041
    %v11043 = vlaneseq
    %v11044 = vshrl.u32 %v11043, 7
    %v11045 = vsub.s32 %v11042, %v11044
    %v11046 = vrot.slane %v11038, %v11045
    %v11048 = vunpack.c.l.s4 1966171168
    %v11049 = vunpack.c.0.s8 %v11048
    %v11050 = vlaneseq
    %v11051 = vshrl.u32 %v11050, 7
    %v11052 = vsub.s32 %v11049, %v11051
    %v11053 = vrot.slane %v11039, %v11052
    %v11054 = vcombine.low %v11046, %v11053
    %v11055 = vcombine.low %v9510, %v9524
    %v11056 = vcombine.low %v9532, %v9534
    %v11057 = vcombine.low %v9517, %v9531
    %v11058 = vcombine.low %v9533, %v9535
    %v11060 = vunpack.c.l.s4 1966171168
    %v11061 = vunpack.c.0.s8 %v11060
    %v11062 = vlaneseq
    %v11063 = vshrl.u32 %v11062, 7
    %v11064 = vsub.s32 %v11061, %v11063
    %v11065 = vrot.slane %v11055, %v11064
    %v11067 = vunpack.c.l.s4 1966171168
    %v11068 = vunpack.c.0.s8 %v11067
    %v11069 = vlaneseq
    %v11070 = vshrl.u32 %v11069, 7
    %v11071 = vsub.s32 %v11068, %v11070
    %v11072 = vrot.slane %v11056, %v11071
    %v11074 = vunpack.c.l.s4 1966171168
    %v11075 = vunpack.c.0.s8 %v11074
    %v11076 = vlaneseq
    %v11077 = vshrl.u32 %v11076, 7
    %v11078 = vsub.s32 %v11075, %v11077
    %v11079 = vrot.slane %v11057, %v11078
    %v11081 = vunpack.c.l.s4 1966171168
    %v11082 = vunpack.c.0.s8 %v11081
    %v11083 = vlaneseq
    %v11084 = vshrl.u32 %v11083, 7
    %v11085 = vsub.s32 %v11082, %v11084
    %v11086 = vrot.slane %v11058, %v11085
    %v11087 = vcombine.low %v11065, %v11072
    %v11088 = vcombine.low %v11079, %v11086
    %v11090 = vunpack.c.l.s4 1966171168
    %v11091 = vunpack.c.0.s8 %v11090
    %v11092 = vlaneseq
    %v11093 = vshrl.u32 %v11092, 7
    %v11094 = vsub.s32 %v11091, %v11093
    %v11095 = vrot.slane %v11087, %v11094
    %v11097 = vunpack.c.l.s4 1966171168
    %v11098 = vunpack.c.0.s8 %v11097
    %v11099 = vlaneseq
    %v11100 = vshrl.u32 %v11099, 7
    %v11101 = vsub.s32 %v11098, %v11100
    %v11102 = vrot.slane %v11088, %v11101
    %v11103 = vcombine.low %v11095, %v11102
    %v11104 = vcombine.low %v9559, %v9573
    %v11105 = vcombine.low %v9581, %v9583
    %v11106 = vcombine.low %v9566, %v9580
    %v11107 = vcombine.low %v9582, %v9584
    %v11109 = vunpack.c.l.s4 1966171168
    %v11110 = vunpack.c.0.s8 %v11109
    %v11111 = vlaneseq
    %v11112 = vshrl.u32 %v11111, 7
    %v11113 = vsub.s32 %v11110, %v11112
    %v11114 = vrot.slane %v11104, %v11113
    %v11116 = vunpack.c.l.s4 1966171168
    %v11117 = vunpack.c.0.s8 %v11116
    %v11118 = vlaneseq
    %v11119 = vshrl.u32 %v11118, 7
    %v11120 = vsub.s32 %v11117, %v11119
    %v11121 = vrot.slane %v11105, %v11120
    %v11123 = vunpack.c.l.s4 1966171168
    %v11124 = vunpack.c.0.s8 %v11123
    %v11125 = vlaneseq
    %v11126 = vshrl.u32 %v11125, 7
    %v11127 = vsub.s32 %v11124, %v11126
    %v11128 = vrot.slane %v11106, %v11127
    %v11130 = vunpack.c.l.s4 1966171168
    %v11131 = vunpack.c.0.s8 %v11130
    %v11132 = vlaneseq
    %v11133 = vshrl.u32 %v11132, 7
    %v11134 = vsub.s32 %v11131, %v11133
    %v11135 = vrot.slane %v11107, %v11134
    %v11136 = vcombine.low %v11114, %v11121
    %v11137 = vcombine.low %v11128, %v11135
    %v11139 = vunpack.c.l.s4 1966171168
    %v11140 = vunpack.c.0.s8 %v11139
    %v11141 = vlaneseq
    %v11142 = vshrl.u32 %v11141, 7
    %v11143 = vsub.s32 %v11140, %v11142
    %v11144 = vrot.slane %v11136, %v11143
    %v11146 = vunpack.c.l.s4 1966171168
    %v11147 = vunpack.c.0.s8 %v11146
    %v11148 = vlaneseq
    %v11149 = vshrl.u32 %v11148, 7
    %v11150 = vsub.s32 %v11147, %v11149
    %v11151 = vrot.slane %v11137, %v11150
    %v11152 = vcombine.low %v11144, %v11151
    %v11153 = vcombine.low %v9608, %v9622
    %v11154 = vcombine.low %v9630, %v9632
    %v11155 = vcombine.low %v9615, %v9629
    %v11156 = vcombine.low %v9631, %v9633
    %v11158 = vunpack.c.l.s4 1966171168
    %v11159 = vunpack.c.0.s8 %v11158
    %v11160 = vlaneseq
    %v11161 = vshrl.u32 %v11160, 7
    %v11162 = vsub.s32 %v11159, %v11161
    %v11163 = vrot.slane %v11153, %v11162
    %v11165 = vunpack.c.l.s4 1966171168
    %v11166 = vunpack.c.0.s8 %v11165
    %v11167 = vlaneseq
    %v11168 = vshrl.u32 %v11167, 7
    %v11169 = vsub.s32 %v11166, %v11168
    %v11170 = vrot.slane %v11154, %v11169
    %v11172 = vunpack.c.l.s4 1966171168
    %v11173 = vunpack.c.0.s8 %v11172
    %v11174 = vlaneseq
    %v11175 = vshrl.u32 %v11174, 7
    %v11176 = vsub.s32 %v11173, %v11175
    %v11177 = vrot.slane %v11155, %v11176
    %v11179 = vunpack.c.l.s4 1966171168
    %v11180 = vunpack.c.0.s8 %v11179
    %v11181 = vlaneseq
    %v11182 = vshrl.u32 %v11181, 7
    %v11183 = vsub.s32 %v11180, %v11182
    %v11184 = vrot.slane %v11156, %v11183
    %v11185 = vcombine.low %v11163, %v11170
    %v11186 = vcombine.low %v11177, %v11184
    %v11188 = vunpack.c.l.s4 1966171168
    %v11189 = vunpack.c.0.s8 %v11188
    %v11190 = vlaneseq
    %v11191 = vshrl.u32 %v11190, 7
    %v11192 = vsub.s32 %v11189, %v11191
    %v11193 = vrot.slane %v11185, %v11192
    %v11195 = vunpack.c.l.s4 1966171168
    %v11196 = vunpack.c.0.s8 %v11195
    %v11197 = vlaneseq
    %v11198 = vshrl.u32 %v11197, 7
    %v11199 = vsub.s32 %v11196, %v11198
    %v11200 = vrot.slane %v11186, %v11199
    %v11201 = vcombine.low %v11193, %v11200
    %v11202 = vcombine.low %v9657, %v9671
    %v11203 = vcombine.low %v9679, %v9681
    %v11204 = vcombine.low %v9664, %v9678
    %v11205 = vcombine.low %v9680, %v9682
    %v11207 = vunpack.c.l.s4 1966171168
    %v11208 = vunpack.c.0.s8 %v11207
    %v11209 = vlaneseq
    %v11210 = vshrl.u32 %v11209, 7
    %v11211 = vsub.s32 %v11208, %v11210
    %v11212 = vrot.slane %v11202, %v11211
    %v11214 = vunpack.c.l.s4 1966171168
    %v11215 = vunpack.c.0.s8 %v11214
    %v11216 = vlaneseq
    %v11217 = vshrl.u32 %v11216, 7
    %v11218 = vsub.s32 %v11215, %v11217
    %v11219 = vrot.slane %v11203, %v11218
    %v11221 = vunpack.c.l.s4 1966171168
    %v11222 = vunpack.c.0.s8 %v11221
    %v11223 = vlaneseq
    %v11224 = vshrl.u32 %v11223, 7
    %v11225 = vsub.s32 %v11222, %v11224
    %v11226 = vrot.slane %v11204, %v11225
    %v11228 = vunpack.c.l.s4 1966171168
    %v11229 = vunpack.c.0.s8 %v11228
    %v11230 = vlaneseq
    %v11231 = vshrl.u32 %v11230, 7
    %v11232 = vsub.s32 %v11229, %v11231
    %v11233 = vrot.slane %v11205, %v11232
    %v11234 = vcombine.low %v11212, %v11219
    %v11235 = vcombine.low %v11226, %v11233
    %v11237 = vunpack.c.l.s4 1966171168
    %v11238 = vunpack.c.0.s8 %v11237
    %v11239 = vlaneseq
    %v11240 = vshrl.u32 %v11239, 7
    %v11241 = vsub.s32 %v11238, %v11240
    %v11242 = vrot.slane %v11234, %v11241
    %v11244 = vunpack.c.l.s4 1966171168
    %v11245 = vunpack.c.0.s8 %v11244
    %v11246 = vlaneseq
    %v11247 = vshrl.u32 %v11246, 7
    %v11248 = vsub.s32 %v11245, %v11247
    %v11249 = vrot.slane %v11235, %v11248
    %v11250 = vcombine.low %v11242, %v11249
    %v11251 = vcombine.low %v9706, %v9720
    %v11252 = vcombine.low %v9728, %v9730
    %v11253 = vcombine.low %v9713, %v9727
    %v11254 = vcombine.low %v9729, %v9731
    %v11256 = vunpack.c.l.s4 1966171168
    %v11257 = vunpack.c.0.s8 %v11256
    %v11258 = vlaneseq
    %v11259 = vshrl.u32 %v11258, 7
    %v11260 = vsub.s32 %v11257, %v11259
    %v11261 = vrot.slane %v11251, %v11260
    %v11263 = vunpack.c.l.s4 1966171168
    %v11264 = vunpack.c.0.s8 %v11263
    %v11265 = vlaneseq
    %v11266 = vshrl.u32 %v11265, 7
    %v11267 = vsub.s32 %v11264, %v11266
    %v11268 = vrot.slane %v11252, %v11267
    %v11270 = vunpack.c.l.s4 1966171168
    %v11271 = vunpack.c.0.s8 %v11270
    %v11272 = vlaneseq
    %v11273 = vshrl.u32 %v11272, 7
    %v11274 = vsub.s32 %v11271, %v11273
    %v11275 = vrot.slane %v11253, %v11274
    %v11277 = vunpack.c.l.s4 1966171168
    %v11278 = vunpack.c.0.s8 %v11277
    %v11279 = vlaneseq
    %v11280 = vshrl.u32 %v11279, 7
    %v11281 = vsub.s32 %v11278, %v11280
    %v11282 = vrot.slane %v11254, %v11281
    %v11283 = vcombine.low %v11261, %v11268
    %v11284 = vcombine.low %v11275, %v11282
    %v11286 = vunpack.c.l.s4 1966171168
    %v11287 = vunpack.c.0.s8 %v11286
    %v11288 = vlaneseq
    %v11289 = vshrl.u32 %v11288, 7
    %v11290 = vsub.s32 %v11287, %v11289
    %v11291 = vrot.slane %v11283, %v11290
    %v11293 = vunpack.c.l.s4 1966171168
    %v11294 = vunpack.c.0.s8 %v11293
    %v11295 = vlaneseq
    %v11296 = vshrl.u32 %v11295, 7
    %v11297 = vsub.s32 %v11294, %v11296
    %v11298 = vrot.slane %v11284, %v11297
    %v11299 = vcombine.low %v11291, %v11298
    %v11300 = vcombine.low %v9755, %v9769
    %v11301 = vcombine.low %v9777, %v9779
    %v11302 = vcombine.low %v9762, %v9776
    %v11303 = vcombine.low %v9778, %v9780
    %v11305 = vunpack.c.l.s4 1966171168
    %v11306 = vunpack.c.0.s8 %v11305
    %v11307 = vlaneseq
    %v11308 = vshrl.u32 %v11307, 7
    %v11309 = vsub.s32 %v11306, %v11308
    %v11310 = vrot.slane %v11300, %v11309
    %v11312 = vunpack.c.l.s4 1966171168
    %v11313 = vunpack.c.0.s8 %v11312
    %v11314 = vlaneseq
    %v11315 = vshrl.u32 %v11314, 7
    %v11316 = vsub.s32 %v11313, %v11315
    %v11317 = vrot.slane %v11301, %v11316
    %v11319 = vunpack.c.l.s4 1966171168
    %v11320 = vunpack.c.0.s8 %v11319
    %v11321 = vlaneseq
    %v11322 = vshrl.u32 %v11321, 7
    %v11323 = vsub.s32 %v11320, %v11322
    %v11324 = vrot.slane %v11302, %v11323
    %v11326 = vunpack.c.l.s4 1966171168
    %v11327 = vunpack.c.0.s8 %v11326
    %v11328 = vlaneseq
    %v11329 = vshrl.u32 %v11328, 7
    %v11330 = vsub.s32 %v11327, %v11329
    %v11331 = vrot.slane %v11303, %v11330
    %v11332 = vcombine.low %v11310, %v11317
    %v11333 = vcombine.low %v11324, %v11331
    %v11335 = vunpack.c.l.s4 1966171168
    %v11336 = vunpack.c.0.s8 %v11335
    %v11337 = vlaneseq
    %v11338 = vshrl.u32 %v11337, 7
    %v11339 = vsub.s32 %v11336, %v11338
    %v11340 = vrot.slane %v11332, %v11339
    %v11342 = vunpack.c.l.s4 1966171168
    %v11343 = vunpack.c.0.s8 %v11342
    %v11344 = vlaneseq
    %v11345 = vshrl.u32 %v11344, 7
    %v11346 = vsub.s32 %v11343, %v11345
    %v11347 = vrot.slane %v11333, %v11346
    %v11348 = vcombine.low %v11340, %v11347
    %v11349 = vcombine.low %v9804, %v9818
    %v11350 = vcombine.low %v9826, %v9828
    %v11351 = vcombine.low %v9811, %v9825
    %v11352 = vcombine.low %v9827, %v9829
    %v11354 = vunpack.c.l.s4 1966171168
    %v11355 = vunpack.c.0.s8 %v11354
    %v11356 = vlaneseq
    %v11357 = vshrl.u32 %v11356, 7
    %v11358 = vsub.s32 %v11355, %v11357
    %v11359 = vrot.slane %v11349, %v11358
    %v11361 = vunpack.c.l.s4 1966171168
    %v11362 = vunpack.c.0.s8 %v11361
    %v11363 = vlaneseq
    %v11364 = vshrl.u32 %v11363, 7
    %v11365 = vsub.s32 %v11362, %v11364
    %v11366 = vrot.slane %v11350, %v11365
    %v11368 = vunpack.c.l.s4 1966171168
    %v11369 = vunpack.c.0.s8 %v11368
    %v11370 = vlaneseq
    %v11371 = vshrl.u32 %v11370, 7
    %v11372 = vsub.s32 %v11369, %v11371
    %v11373 = vrot.slane %v11351, %v11372
    %v11375 = vunpack.c.l.s4 1966171168
    %v11376 = vunpack.c.0.s8 %v11375
    %v11377 = vlaneseq
    %v11378 = vshrl.u32 %v11377, 7
    %v11379 = vsub.s32 %v11376, %v11378
    %v11380 = vrot.slane %v11352, %v11379
    %v11381 = vcombine.low %v11359, %v11366
    %v11382 = vcombine.low %v11373, %v11380
    %v11384 = vunpack.c.l.s4 1966171168
    %v11385 = vunpack.c.0.s8 %v11384
    %v11386 = vlaneseq
    %v11387 = vshrl.u32 %v11386, 7
    %v11388 = vsub.s32 %v11385, %v11387
    %v11389 = vrot.slane %v11381, %v11388
    %v11391 = vunpack.c.l.s4 1966171168
    %v11392 = vunpack.c.0.s8 %v11391
    %v11393 = vlaneseq
    %v11394 = vshrl.u32 %v11393, 7
    %v11395 = vsub.s32 %v11392, %v11394
    %v11396 = vrot.slane %v11382, %v11395
    %v11397 = vcombine.low %v11389, %v11396
    %v11398 = vcombine.low %v9853, %v9867
    %v11399 = vcombine.low %v9875, %v9877
    %v11400 = vcombine.low %v9860, %v9874
    %v11401 = vcombine.low %v9876, %v9878
    %v11403 = vunpack.c.l.s4 1966171168
    %v11404 = vunpack.c.0.s8 %v11403
    %v11405 = vlaneseq
    %v11406 = vshrl.u32 %v11405, 7
    %v11407 = vsub.s32 %v11404, %v11406
    %v11408 = vrot.slane %v11398, %v11407
    %v11410 = vunpack.c.l.s4 1966171168
    %v11411 = vunpack.c.0.s8 %v11410
    %v11412 = vlaneseq
    %v11413 = vshrl.u32 %v11412, 7
    %v11414 = vsub.s32 %v11411, %v11413
    %v11415 = vrot.slane %v11399, %v11414
    %v11417 = vunpack.c.l.s4 1966171168
    %v11418 = vunpack.c.0.s8 %v11417
    %v11419 = vlaneseq
    %v11420 = vshrl.u32 %v11419, 7
    %v11421 = vsub.s32 %v11418, %v11420
    %v11422 = vrot.slane %v11400, %v11421
    %v11424 = vunpack.c.l.s4 1966171168
    %v11425 = vunpack.c.0.s8 %v11424
    %v11426 = vlaneseq
    %v11427 = vshrl.u32 %v11426, 7
    %v11428 = vsub.s32 %v11425, %v11427
    %v11429 = vrot.slane %v11401, %v11428
    %v11430 = vcombine.low %v11408, %v11415
    %v11431 = vcombine.low %v11422, %v11429
    %v11433 = vunpack.c.l.s4 1966171168
    %v11434 = vunpack.c.0.s8 %v11433
    %v11435 = vlaneseq
    %v11436 = vshrl.u32 %v11435, 7
    %v11437 = vsub.s32 %v11434, %v11436
    %v11438 = vrot.slane %v11430, %v11437
    %v11440 = vunpack.c.l.s4 1966171168
    %v11441 = vunpack.c.0.s8 %v11440
    %v11442 = vlaneseq
    %v11443 = vshrl.u32 %v11442, 7
    %v11444 = vsub.s32 %v11441, %v11443
    %v11445 = vrot.slane %v11431, %v11444
    %v11446 = vcombine.low %v11438, %v11445
    %v11447 = vcombine.low %v9902, %v9916
    %v11448 = vcombine.low %v9924, %v9926
    %v11449 = vcombine.low %v9909, %v9923
    %v11450 = vcombine.low %v9925, %v9927
    %v11452 = vunpack.c.l.s4 1966171168
    %v11453 = vunpack.c.0.s8 %v11452
    %v11454 = vlaneseq
    %v11455 = vshrl.u32 %v11454, 7
    %v11456 = vsub.s32 %v11453, %v11455
    %v11457 = vrot.slane %v11447, %v11456
    %v11459 = vunpack.c.l.s4 1966171168
    %v11460 = vunpack.c.0.s8 %v11459
    %v11461 = vlaneseq
    %v11462 = vshrl.u32 %v11461, 7
    %v11463 = vsub.s32 %v11460, %v11462
    %v11464 = vrot.slane %v11448, %v11463
    %v11466 = vunpack.c.l.s4 1966171168
    %v11467 = vunpack.c.0.s8 %v11466
    %v11468 = vlaneseq
    %v11469 = vshrl.u32 %v11468, 7
    %v11470 = vsub.s32 %v11467, %v11469
    %v11471 = vrot.slane %v11449, %v11470
    %v11473 = vunpack.c.l.s4 1966171168
    %v11474 = vunpack.c.0.s8 %v11473
    %v11475 = vlaneseq
    %v11476 = vshrl.u32 %v11475, 7
    %v11477 = vsub.s32 %v11474, %v11476
    %v11478 = vrot.slane %v11450, %v11477
    %v11479 = vcombine.low %v11457, %v11464
    %v11480 = vcombine.low %v11471, %v11478
    %v11482 = vunpack.c.l.s4 1966171168
    %v11483 = vunpack.c.0.s8 %v11482
    %v11484 = vlaneseq
    %v11485 = vshrl.u32 %v11484, 7
    %v11486 = vsub.s32 %v11483, %v11485
    %v11487 = vrot.slane %v11479, %v11486
    %v11489 = vunpack.c.l.s4 1966171168
    %v11490 = vunpack.c.0.s8 %v11489
    %v11491 = vlaneseq
    %v11492 = vshrl.u32 %v11491, 7
    %v11493 = vsub.s32 %v11490, %v11492
    %v11494 = vrot.slane %v11480, %v11493
    %v11495 = vcombine.low %v11487, %v11494
    %v11496 = vcombine.low %v9951, %v9965
    %v11497 = vcombine.low %v9973, %v9975
    %v11498 = vcombine.low %v9958, %v9972
    %v11499 = vcombine.low %v9974, %v9976
    %v11501 = vunpack.c.l.s4 1966171168
    %v11502 = vunpack.c.0.s8 %v11501
    %v11503 = vlaneseq
    %v11504 = vshrl.u32 %v11503, 7
    %v11505 = vsub.s32 %v11502, %v11504
    %v11506 = vrot.slane %v11496, %v11505
    %v11508 = vunpack.c.l.s4 1966171168
    %v11509 = vunpack.c.0.s8 %v11508
    %v11510 = vlaneseq
    %v11511 = vshrl.u32 %v11510, 7
    %v11512 = vsub.s32 %v11509, %v11511
    %v11513 = vrot.slane %v11497, %v11512
    %v11515 = vunpack.c.l.s4 1966171168
    %v11516 = vunpack.c.0.s8 %v11515
    %v11517 = vlaneseq
    %v11518 = vshrl.u32 %v11517, 7
    %v11519 = vsub.s32 %v11516, %v11518
    %v11520 = vrot.slane %v11498, %v11519
    %v11522 = vunpack.c.l.s4 1966171168
    %v11523 = vunpack.c.0.s8 %v11522
    %v11524 = vlaneseq
    %v11525 = vshrl.u32 %v11524, 7
    %v11526 = vsub.s32 %v11523, %v11525
    %v11527 = vrot.slane %v11499, %v11526
    %v11528 = vcombine.low %v11506, %v11513
    %v11529 = vcombine.low %v11520, %v11527
    %v11531 = vunpack.c.l.s4 1966171168
    %v11532 = vunpack.c.0.s8 %v11531
    %v11533 = vlaneseq
    %v11534 = vshrl.u32 %v11533, 7
    %v11535 = vsub.s32 %v11532, %v11534
    %v11536 = vrot.slane %v11528, %v11535
    %v11538 = vunpack.c.l.s4 1966171168
    %v11539 = vunpack.c.0.s8 %v11538
    %v11540 = vlaneseq
    %v11541 = vshrl.u32 %v11540, 7
    %v11542 = vsub.s32 %v11539, %v11541
    %v11543 = vrot.slane %v11529, %v11542
    %v11544 = vcombine.low %v11536, %v11543
    %v11545 = vcombine.low %v10000, %v10014
    %v11546 = vcombine.low %v10022, %v10024
    %v11547 = vcombine.low %v10007, %v10021
    %v11548 = vcombine.low %v10023, %v10025
    %v11550 = vunpack.c.l.s4 1966171168
    %v11551 = vunpack.c.0.s8 %v11550
    %v11552 = vlaneseq
    %v11553 = vshrl.u32 %v11552, 7
    %v11554 = vsub.s32 %v11551, %v11553
    %v11555 = vrot.slane %v11545, %v11554
    %v11557 = vunpack.c.l.s4 1966171168
    %v11558 = vunpack.c.0.s8 %v11557
    %v11559 = vlaneseq
    %v11560 = vshrl.u32 %v11559, 7
    %v11561 = vsub.s32 %v11558, %v11560
    %v11562 = vrot.slane %v11546, %v11561
    %v11564 = vunpack.c.l.s4 1966171168
    %v11565 = vunpack.c.0.s8 %v11564
    %v11566 = vlaneseq
    %v11567 = vshrl.u32 %v11566, 7
    %v11568 = vsub.s32 %v11565, %v11567
    %v11569 = vrot.slane %v11547, %v11568
    %v11571 = vunpack.c.l.s4 1966171168
    %v11572 = vunpack.c.0.s8 %v11571
    %v11573 = vlaneseq
    %v11574 = vshrl.u32 %v11573, 7
    %v11575 = vsub.s32 %v11572, %v11574
    %v11576 = vrot.slane %v11548, %v11575
    %v11577 = vcombine.low %v11555, %v11562
    %v11578 = vcombine.low %v11569, %v11576
    %v11580 = vunpack.c.l.s4 1966171168
    %v11581 = vunpack.c.0.s8 %v11580
    %v11582 = vlaneseq
    %v11583 = vshrl.u32 %v11582, 7
    %v11584 = vsub.s32 %v11581, %v11583
    %v11585 = vrot.slane %v11577, %v11584
    %v11587 = vunpack.c.l.s4 1966171168
    %v11588 = vunpack.c.0.s8 %v11587
    %v11589 = vlaneseq
    %v11590 = vshrl.u32 %v11589, 7
    %v11591 = vsub.s32 %v11588, %v11590
    %v11592 = vrot.slane %v11578, %v11591
    %v11593 = vcombine.low %v11585, %v11592
    %v11594 = vcombine.low %v10049, %v10063
    %v11595 = vcombine.low %v10071, %v10073
    %v11596 = vcombine.low %v10056, %v10070
    %v11597 = vcombine.low %v10072, %v10074
    %v11599 = vunpack.c.l.s4 1966171168
    %v11600 = vunpack.c.0.s8 %v11599
    %v11601 = vlaneseq
    %v11602 = vshrl.u32 %v11601, 7
    %v11603 = vsub.s32 %v11600, %v11602
    %v11604 = vrot.slane %v11594, %v11603
    %v11606 = vunpack.c.l.s4 1966171168
    %v11607 = vunpack.c.0.s8 %v11606
    %v11608 = vlaneseq
    %v11609 = vshrl.u32 %v11608, 7
    %v11610 = vsub.s32 %v11607, %v11609
    %v11611 = vrot.slane %v11595, %v11610
    %v11613 = vunpack.c.l.s4 1966171168
    %v11614 = vunpack.c.0.s8 %v11613
    %v11615 = vlaneseq
    %v11616 = vshrl.u32 %v11615, 7
    %v11617 = vsub.s32 %v11614, %v11616
    %v11618 = vrot.slane %v11596, %v11617
    %v11620 = vunpack.c.l.s4 1966171168
    %v11621 = vunpack.c.0.s8 %v11620
    %v11622 = vlaneseq
    %v11623 = vshrl.u32 %v11622, 7
    %v11624 = vsub.s32 %v11621, %v11623
    %v11625 = vrot.slane %v11597, %v11624
    %v11626 = vcombine.low %v11604, %v11611
    %v11627 = vcombine.low %v11618, %v11625
    %v11629 = vunpack.c.l.s4 1966171168
    %v11630 = vunpack.c.0.s8 %v11629
    %v11631 = vlaneseq
    %v11632 = vshrl.u32 %v11631, 7
    %v11633 = vsub.s32 %v11630, %v11632
    %v11634 = vrot.slane %v11626, %v11633
    %v11636 = vunpack.c.l.s4 1966171168
    %v11637 = vunpack.c.0.s8 %v11636
    %v11638 = vlaneseq
    %v11639 = vshrl.u32 %v11638, 7
    %v11640 = vsub.s32 %v11637, %v11639
    %v11641 = vrot.slane %v11627, %v11640
    %v11642 = vcombine.low %v11634, %v11641
    %v11643 = vcombine.low %v10098, %v10112
    %v11644 = vcombine.low %v10120, %v10122
    %v11645 = vcombine.low %v10105, %v10119
    %v11646 = vcombine.low %v10121, %v10123
    %v11648 = vunpack.c.l.s4 1966171168
    %v11649 = vunpack.c.0.s8 %v11648
    %v11650 = vlaneseq
    %v11651 = vshrl.u32 %v11650, 7
    %v11652 = vsub.s32 %v11649, %v11651
    %v11653 = vrot.slane %v11643, %v11652
    %v11655 = vunpack.c.l.s4 1966171168
    %v11656 = vunpack.c.0.s8 %v11655
    %v11657 = vlaneseq
    %v11658 = vshrl.u32 %v11657, 7
    %v11659 = vsub.s32 %v11656, %v11658
    %v11660 = vrot.slane %v11644, %v11659
    %v11662 = vunpack.c.l.s4 1966171168
    %v11663 = vunpack.c.0.s8 %v11662
    %v11664 = vlaneseq
    %v11665 = vshrl.u32 %v11664, 7
    %v11666 = vsub.s32 %v11663, %v11665
    %v11667 = vrot.slane %v11645, %v11666
    %v11669 = vunpack.c.l.s4 1966171168
    %v11670 = vunpack.c.0.s8 %v11669
    %v11671 = vlaneseq
    %v11672 = vshrl.u32 %v11671, 7
    %v11673 = vsub.s32 %v11670, %v11672
    %v11674 = vrot.slane %v11646, %v11673
    %v11675 = vcombine.low %v11653, %v11660
    %v11676 = vcombine.low %v11667, %v11674
    %v11678 = vunpack.c.l.s4 1966171168
    %v11679 = vunpack.c.0.s8 %v11678
    %v11680 = vlaneseq
    %v11681 = vshrl.u32 %v11680, 7
    %v11682 = vsub.s32 %v11679, %v11681
    %v11683 = vrot.slane %v11675, %v11682
    %v11685 = vunpack.c.l.s4 1966171168
    %v11686 = vunpack.c.0.s8 %v11685
    %v11687 = vlaneseq
    %v11688 = vshrl.u32 %v11687, 7
    %v11689 = vsub.s32 %v11686, %v11688
    %v11690 = vrot.slane %v11676, %v11689
    %v11691 = vcombine.low %v11683, %v11690
    %v11692 = vcombine.low %v10147, %v10161
    %v11693 = vcombine.low %v10169, %v10171
    %v11694 = vcombine.low %v10154, %v10168
    %v11695 = vcombine.low %v10170, %v10172
    %v11697 = vunpack.c.l.s4 1966171168
    %v11698 = vunpack.c.0.s8 %v11697
    %v11699 = vlaneseq
    %v11700 = vshrl.u32 %v11699, 7
    %v11701 = vsub.s32 %v11698, %v11700
    %v11702 = vrot.slane %v11692, %v11701
    %v11704 = vunpack.c.l.s4 1966171168
    %v11705 = vunpack.c.0.s8 %v11704
    %v11706 = vlaneseq
    %v11707 = vshrl.u32 %v11706, 7
    %v11708 = vsub.s32 %v11705, %v11707
    %v11709 = vrot.slane %v11693, %v11708
    %v11711 = vunpack.c.l.s4 1966171168
    %v11712 = vunpack.c.0.s8 %v11711
    %v11713 = vlaneseq
    %v11714 = vshrl.u32 %v11713, 7
    %v11715 = vsub.s32 %v11712, %v11714
    %v11716 = vrot.slane %v11694, %v11715
    %v11718 = vunpack.c.l.s4 1966171168
    %v11719 = vunpack.c.0.s8 %v11718
    %v11720 = vlaneseq
    %v11721 = vshrl.u32 %v11720, 7
    %v11722 = vsub.s32 %v11719, %v11721
    %v11723 = vrot.slane %v11695, %v11722
    %v11724 = vcombine.low %v11702, %v11709
    %v11725 = vcombine.low %v11716, %v11723
    %v11727 = vunpack.c.l.s4 1966171168
    %v11728 = vunpack.c.0.s8 %v11727
    %v11729 = vlaneseq
    %v11730 = vshrl.u32 %v11729, 7
    %v11731 = vsub.s32 %v11728, %v11730
    %v11732 = vrot.slane %v11724, %v11731
    %v11734 = vunpack.c.l.s4 1966171168
    %v11735 = vunpack.c.0.s8 %v11734
    %v11736 = vlaneseq
    %v11737 = vshrl.u32 %v11736, 7
    %v11738 = vsub.s32 %v11735, %v11737
    %v11739 = vrot.slane %v11725, %v11738
    %v11740 = vcombine.low %v11732, %v11739
    %v11741 = vcombine.low %v10196, %v10210
    %v11742 = vcombine.low %v10218, %v10220
    %v11743 = vcombine.low %v10203, %v10217
    %v11744 = vcombine.low %v10219, %v10221
    %v11746 = vunpack.c.l.s4 1966171168
    %v11747 = vunpack.c.0.s8 %v11746
    %v11748 = vlaneseq
    %v11749 = vshrl.u32 %v11748, 7
    %v11750 = vsub.s32 %v11747, %v11749
    %v11751 = vrot.slane %v11741, %v11750
    %v11753 = vunpack.c.l.s4 1966171168
    %v11754 = vunpack.c.0.s8 %v11753
    %v11755 = vlaneseq
    %v11756 = vshrl.u32 %v11755, 7
    %v11757 = vsub.s32 %v11754, %v11756
    %v11758 = vrot.slane %v11742, %v11757
    %v11760 = vunpack.c.l.s4 1966171168
    %v11761 = vunpack.c.0.s8 %v11760
    %v11762 = vlaneseq
    %v11763 = vshrl.u32 %v11762, 7
    %v11764 = vsub.s32 %v11761, %v11763
    %v11765 = vrot.slane %v11743, %v11764
    %v11767 = vunpack.c.l.s4 1966171168
    %v11768 = vunpack.c.0.s8 %v11767
    %v11769 = vlaneseq
    %v11770 = vshrl.u32 %v11769, 7
    %v11771 = vsub.s32 %v11768, %v11770
    %v11772 = vrot.slane %v11744, %v11771
    %v11773 = vcombine.low %v11751, %v11758
    %v11774 = vcombine.low %v11765, %v11772
    %v11776 = vunpack.c.l.s4 1966171168
    %v11777 = vunpack.c.0.s8 %v11776
    %v11778 = vlaneseq
    %v11779 = vshrl.u32 %v11778, 7
    %v11780 = vsub.s32 %v11777, %v11779
    %v11781 = vrot.slane %v11773, %v11780
    %v11783 = vunpack.c.l.s4 1966171168
    %v11784 = vunpack.c.0.s8 %v11783
    %v11785 = vlaneseq
    %v11786 = vshrl.u32 %v11785, 7
    %v11787 = vsub.s32 %v11784, %v11786
    %v11788 = vrot.slane %v11774, %v11787
    %v11789 = vcombine.low %v11781, %v11788
    %v11790 = vcombine.low %v10245, %v10259
    %v11791 = vcombine.low %v10267, %v10269
    %v11792 = vcombine.low %v10252, %v10266
    %v11793 = vcombine.low %v10268, %v10270
    %v11795 = vunpack.c.l.s4 1966171168
    %v11796 = vunpack.c.0.s8 %v11795
    %v11797 = vlaneseq
    %v11798 = vshrl.u32 %v11797, 7
    %v11799 = vsub.s32 %v11796, %v11798
    %v11800 = vrot.slane %v11790, %v11799
    %v11802 = vunpack.c.l.s4 1966171168
    %v11803 = vunpack.c.0.s8 %v11802
    %v11804 = vlaneseq
    %v11805 = vshrl.u32 %v11804, 7
    %v11806 = vsub.s32 %v11803, %v11805
    %v11807 = vrot.slane %v11791, %v11806
    %v11809 = vunpack.c.l.s4 1966171168
    %v11810 = vunpack.c.0.s8 %v11809
    %v11811 = vlaneseq
    %v11812 = vshrl.u32 %v11811, 7
    %v11813 = vsub.s32 %v11810, %v11812
    %v11814 = vrot.slane %v11792, %v11813
    %v11816 = vunpack.c.l.s4 1966171168
    %v11817 = vunpack.c.0.s8 %v11816
    %v11818 = vlaneseq
    %v11819 = vshrl.u32 %v11818, 7
    %v11820 = vsub.s32 %v11817, %v11819
    %v11821 = vrot.slane %v11793, %v11820
    %v11822 = vcombine.low %v11800, %v11807
    %v11823 = vcombine.low %v11814, %v11821
    %v11825 = vunpack.c.l.s4 1966171168
    %v11826 = vunpack.c.0.s8 %v11825
    %v11827 = vlaneseq
    %v11828 = vshrl.u32 %v11827, 7
    %v11829 = vsub.s32 %v11826, %v11828
    %v11830 = vrot.slane %v11822, %v11829
    %v11832 = vunpack.c.l.s4 1966171168
    %v11833 = vunpack.c.0.s8 %v11832
    %v11834 = vlaneseq
    %v11835 = vshrl.u32 %v11834, 7
    %v11836 = vsub.s32 %v11833, %v11835
    %v11837 = vrot.slane %v11823, %v11836
    %v11838 = vcombine.low %v11830, %v11837
    %v11839 = vcombine.low %v10294, %v10308
    %v11840 = vcombine.low %v10316, %v10318
    %v11841 = vcombine.low %v10301, %v10315
    %v11842 = vcombine.low %v10317, %v10319
    %v11844 = vunpack.c.l.s4 1966171168
    %v11845 = vunpack.c.0.s8 %v11844
    %v11846 = vlaneseq
    %v11847 = vshrl.u32 %v11846, 7
    %v11848 = vsub.s32 %v11845, %v11847
    %v11849 = vrot.slane %v11839, %v11848
    %v11851 = vunpack.c.l.s4 1966171168
    %v11852 = vunpack.c.0.s8 %v11851
    %v11853 = vlaneseq
    %v11854 = vshrl.u32 %v11853, 7
    %v11855 = vsub.s32 %v11852, %v11854
    %v11856 = vrot.slane %v11840, %v11855
    %v11858 = vunpack.c.l.s4 1966171168
    %v11859 = vunpack.c.0.s8 %v11858
    %v11860 = vlaneseq
    %v11861 = vshrl.u32 %v11860, 7
    %v11862 = vsub.s32 %v11859, %v11861
    %v11863 = vrot.slane %v11841, %v11862
    %v11865 = vunpack.c.l.s4 1966171168
    %v11866 = vunpack.c.0.s8 %v11865
    %v11867 = vlaneseq
    %v11868 = vshrl.u32 %v11867, 7
    %v11869 = vsub.s32 %v11866, %v11868
    %v11870 = vrot.slane %v11842, %v11869
    %v11871 = vcombine.low %v11849, %v11856
    %v11872 = vcombine.low %v11863, %v11870
    %v11874 = vunpack.c.l.s4 1966171168
    %v11875 = vunpack.c.0.s8 %v11874
    %v11876 = vlaneseq
    %v11877 = vshrl.u32 %v11876, 7
    %v11878 = vsub.s32 %v11875, %v11877
    %v11879 = vrot.slane %v11871, %v11878
    %v11881 = vunpack.c.l.s4 1966171168
    %v11882 = vunpack.c.0.s8 %v11881
    %v11883 = vlaneseq
    %v11884 = vshrl.u32 %v11883, 7
    %v11885 = vsub.s32 %v11882, %v11884
    %v11886 = vrot.slane %v11872, %v11885
    %v11887 = vcombine.low %v11879, %v11886
    %v11888 = vcombine.low %v10343, %v10357
    %v11889 = vcombine.low %v10365, %v10367
    %v11890 = vcombine.low %v10350, %v10364
    %v11891 = vcombine.low %v10366, %v10368
    %v11893 = vunpack.c.l.s4 1966171168
    %v11894 = vunpack.c.0.s8 %v11893
    %v11895 = vlaneseq
    %v11896 = vshrl.u32 %v11895, 7
    %v11897 = vsub.s32 %v11894, %v11896
    %v11898 = vrot.slane %v11888, %v11897
    %v11900 = vunpack.c.l.s4 1966171168
    %v11901 = vunpack.c.0.s8 %v11900
    %v11902 = vlaneseq
    %v11903 = vshrl.u32 %v11902, 7
    %v11904 = vsub.s32 %v11901, %v11903
    %v11905 = vrot.slane %v11889, %v11904
    %v11907 = vunpack.c.l.s4 1966171168
    %v11908 = vunpack.c.0.s8 %v11907
    %v11909 = vlaneseq
    %v11910 = vshrl.u32 %v11909, 7
    %v11911 = vsub.s32 %v11908, %v11910
    %v11912 = vrot.slane %v11890, %v11911
    %v11914 = vunpack.c.l.s4 1966171168
    %v11915 = vunpack.c.0.s8 %v11914
    %v11916 = vlaneseq
    %v11917 = vshrl.u32 %v11916, 7
    %v11918 = vsub.s32 %v11915, %v11917
    %v11919 = vrot.slane %v11891, %v11918
    %v11920 = vcombine.low %v11898, %v11905
    %v11921 = vcombine.low %v11912, %v11919
    %v11923 = vunpack.c.l.s4 1966171168
    %v11924 = vunpack.c.0.s8 %v11923
    %v11925 = vlaneseq
    %v11926 = vshrl.u32 %v11925, 7
    %v11927 = vsub.s32 %v11924, %v11926
    %v11928 = vrot.slane %v11920, %v11927
    %v11930 = vunpack.c.l.s4 1966171168
    %v11931 = vunpack.c.0.s8 %v11930
    %v11932 = vlaneseq
    %v11933 = vshrl.u32 %v11932, 7
    %v11934 = vsub.s32 %v11931, %v11933
    %v11935 = vrot.slane %v11921, %v11934
    %v11936 = vcombine.low %v11928, %v11935
    %v11937 = vcombine.low %v10392, %v10406
    %v11938 = vcombine.low %v10414, %v10416
    %v11939 = vcombine.low %v10399, %v10413
    %v11940 = vcombine.low %v10415, %v10417
    %v11942 = vunpack.c.l.s4 1966171168
    %v11943 = vunpack.c.0.s8 %v11942
    %v11944 = vlaneseq
    %v11945 = vshrl.u32 %v11944, 7
    %v11946 = vsub.s32 %v11943, %v11945
    %v11947 = vrot.slane %v11937, %v11946
    %v11949 = vunpack.c.l.s4 1966171168
    %v11950 = vunpack.c.0.s8 %v11949
    %v11951 = vlaneseq
    %v11952 = vshrl.u32 %v11951, 7
    %v11953 = vsub.s32 %v11950, %v11952
    %v11954 = vrot.slane %v11938, %v11953
    %v11956 = vunpack.c.l.s4 1966171168
    %v11957 = vunpack.c.0.s8 %v11956
    %v11958 = vlaneseq
    %v11959 = vshrl.u32 %v11958, 7
    %v11960 = vsub.s32 %v11957, %v11959
    %v11961 = vrot.slane %v11939, %v11960
    %v11963 = vunpack.c.l.s4 1966171168
    %v11964 = vunpack.c.0.s8 %v11963
    %v11965 = vlaneseq
    %v11966 = vshrl.u32 %v11965, 7
    %v11967 = vsub.s32 %v11964, %v11966
    %v11968 = vrot.slane %v11940, %v11967
    %v11969 = vcombine.low %v11947, %v11954
    %v11970 = vcombine.low %v11961, %v11968
    %v11972 = vunpack.c.l.s4 1966171168
    %v11973 = vunpack.c.0.s8 %v11972
    %v11974 = vlaneseq
    %v11975 = vshrl.u32 %v11974, 7
    %v11976 = vsub.s32 %v11973, %v11975
    %v11977 = vrot.slane %v11969, %v11976
    %v11979 = vunpack.c.l.s4 1966171168
    %v11980 = vunpack.c.0.s8 %v11979
    %v11981 = vlaneseq
    %v11982 = vshrl.u32 %v11981, 7
    %v11983 = vsub.s32 %v11980, %v11982
    %v11984 = vrot.slane %v11970, %v11983
    %v11985 = vcombine.low %v11977, %v11984
    %v11986 = vcombine.low %v10441, %v10455
    %v11987 = vcombine.low %v10463, %v10465
    %v11988 = vcombine.low %v10448, %v10462
    %v11989 = vcombine.low %v10464, %v10466
    %v11991 = vunpack.c.l.s4 1966171168
    %v11992 = vunpack.c.0.s8 %v11991
    %v11993 = vlaneseq
    %v11994 = vshrl.u32 %v11993, 7
    %v11995 = vsub.s32 %v11992, %v11994
    %v11996 = vrot.slane %v11986, %v11995
    %v11998 = vunpack.c.l.s4 1966171168
    %v11999 = vunpack.c.0.s8 %v11998
    %v12000 = vlaneseq
    %v12001 = vshrl.u32 %v12000, 7
    %v12002 = vsub.s32 %v11999, %v12001
    %v12003 = vrot.slane %v11987, %v12002
    %v12005 = vunpack.c.l.s4 1966171168
    %v12006 = vunpack.c.0.s8 %v12005
    %v12007 = vlaneseq
    %v12008 = vshrl.u32 %v12007, 7
    %v12009 = vsub.s32 %v12006, %v12008
    %v12010 = vrot.slane %v11988, %v12009
    %v12012 = vunpack.c.l.s4 1966171168
    %v12013 = vunpack.c.0.s8 %v12012
    %v12014 = vlaneseq
    %v12015 = vshrl.u32 %v12014, 7
    %v12016 = vsub.s32 %v12013, %v12015
    %v12017 = vrot.slane %v11989, %v12016
    %v12018 = vcombine.low %v11996, %v12003
    %v12019 = vcombine.low %v12010, %v12017
    %v12021 = vunpack.c.l.s4 1966171168
    %v12022 = vunpack.c.0.s8 %v12021
    %v12023 = vlaneseq
    %v12024 = vshrl.u32 %v12023, 7
    %v12025 = vsub.s32 %v12022, %v12024
    %v12026 = vrot.slane %v12018, %v12025
    %v12028 = vunpack.c.l.s4 1966171168
    %v12029 = vunpack.c.0.s8 %v12028
    %v12030 = vlaneseq
    %v12031 = vshrl.u32 %v12030, 7
    %v12032 = vsub.s32 %v12029, %v12031
    %v12033 = vrot.slane %v12019, %v12032
    %v12034 = vcombine.low %v12026, %v12033
    %v12035 = vcombine.low %v10490, %v10504
    %v12036 = vcombine.low %v10512, %v10514
    %v12037 = vcombine.low %v10497, %v10511
    %v12038 = vcombine.low %v10513, %v10515
    %v12040 = vunpack.c.l.s4 1966171168
    %v12041 = vunpack.c.0.s8 %v12040
    %v12042 = vlaneseq
    %v12043 = vshrl.u32 %v12042, 7
    %v12044 = vsub.s32 %v12041, %v12043
    %v12045 = vrot.slane %v12035, %v12044
    %v12047 = vunpack.c.l.s4 1966171168
    %v12048 = vunpack.c.0.s8 %v12047
    %v12049 = vlaneseq
    %v12050 = vshrl.u32 %v12049, 7
    %v12051 = vsub.s32 %v12048, %v12050
    %v12052 = vrot.slane %v12036, %v12051
    %v12054 = vunpack.c.l.s4 1966171168
    %v12055 = vunpack.c.0.s8 %v12054
    %v12056 = vlaneseq
    %v12057 = vshrl.u32 %v12056, 7
    %v12058 = vsub.s32 %v12055, %v12057
    %v12059 = vrot.slane %v12037, %v12058
    %v12061 = vunpack.c.l.s4 1966171168
    %v12062 = vunpack.c.0.s8 %v12061
    %v12063 = vlaneseq
    %v12064 = vshrl.u32 %v12063, 7
    %v12065 = vsub.s32 %v12062, %v12064
    %v12066 = vrot.slane %v12038, %v12065
    %v12067 = vcombine.low %v12045, %v12052
    %v12068 = vcombine.low %v12059, %v12066
    %v12070 = vunpack.c.l.s4 1966171168
    %v12071 = vunpack.c.0.s8 %v12070
    %v12072 = vlaneseq
    %v12073 = vshrl.u32 %v12072, 7
    %v12074 = vsub.s32 %v12071, %v12073
    %v12075 = vrot.slane %v12067, %v12074
    %v12077 = vunpack.c.l.s4 1966171168
    %v12078 = vunpack.c.0.s8 %v12077
    %v12079 = vlaneseq
    %v12080 = vshrl.u32 %v12079, 7
    %v12081 = vsub.s32 %v12078, %v12080
    %v12082 = vrot.slane %v12068, %v12081
    %v12083 = vcombine.low %v12075, %v12082
    %v12084 = vcombine.low %v10539, %v10553
    %v12085 = vcombine.low %v10561, %v10563
    %v12086 = vcombine.low %v10546, %v10560
    %v12087 = vcombine.low %v10562, %v10564
    %v12089 = vunpack.c.l.s4 1966171168
    %v12090 = vunpack.c.0.s8 %v12089
    %v12091 = vlaneseq
    %v12092 = vshrl.u32 %v12091, 7
    %v12093 = vsub.s32 %v12090, %v12092
    %v12094 = vrot.slane %v12084, %v12093
    %v12096 = vunpack.c.l.s4 1966171168
    %v12097 = vunpack.c.0.s8 %v12096
    %v12098 = vlaneseq
    %v12099 = vshrl.u32 %v12098, 7
    %v12100 = vsub.s32 %v12097, %v12099
    %v12101 = vrot.slane %v12085, %v12100
    %v12103 = vunpack.c.l.s4 1966171168
    %v12104 = vunpack.c.0.s8 %v12103
    %v12105 = vlaneseq
    %v12106 = vshrl.u32 %v12105, 7
    %v12107 = vsub.s32 %v12104, %v12106
    %v12108 = vrot.slane %v12086, %v12107
    %v12110 = vunpack.c.l.s4 1966171168
    %v12111 = vunpack.c.0.s8 %v12110
    %v12112 = vlaneseq
    %v12113 = vshrl.u32 %v12112, 7
    %v12114 = vsub.s32 %v12111, %v12113
    %v12115 = vrot.slane %v12087, %v12114
    %v12116 = vcombine.low %v12094, %v12101
    %v12117 = vcombine.low %v12108, %v12115
    %v12119 = vunpack.c.l.s4 1966171168
    %v12120 = vunpack.c.0.s8 %v12119
    %v12121 = vlaneseq
    %v12122 = vshrl.u32 %v12121, 7
    %v12123 = vsub.s32 %v12120, %v12122
    %v12124 = vrot.slane %v12116, %v12123
    %v12126 = vunpack.c.l.s4 1966171168
    %v12127 = vunpack.c.0.s8 %v12126
    %v12128 = vlaneseq
    %v12129 = vshrl.u32 %v12128, 7
    %v12130 = vsub.s32 %v12127, %v12129
    %v12131 = vrot.slane %v12117, %v12130
    %v12132 = vcombine.low %v12124, %v12131
    %v12133 = vcombine.low %v10588, %v10602
    %v12134 = vcombine.low %v10610, %v10612
    %v12135 = vcombine.low %v10595, %v10609
    %v12136 = vcombine.low %v10611, %v10613
    %v12138 = vunpack.c.l.s4 1966171168
    %v12139 = vunpack.c.0.s8 %v12138
    %v12140 = vlaneseq
    %v12141 = vshrl.u32 %v12140, 7
    %v12142 = vsub.s32 %v12139, %v12141
    %v12143 = vrot.slane %v12133, %v12142
    %v12145 = vunpack.c.l.s4 1966171168
    %v12146 = vunpack.c.0.s8 %v12145
    %v12147 = vlaneseq
    %v12148 = vshrl.u32 %v12147, 7
    %v12149 = vsub.s32 %v12146, %v12148
    %v12150 = vrot.slane %v12134, %v12149
    %v12152 = vunpack.c.l.s4 1966171168
    %v12153 = vunpack.c.0.s8 %v12152
    %v12154 = vlaneseq
    %v12155 = vshrl.u32 %v12154, 7
    %v12156 = vsub.s32 %v12153, %v12155
    %v12157 = vrot.slane %v12135, %v12156
    %v12159 = vunpack.c.l.s4 1966171168
    %v12160 = vunpack.c.0.s8 %v12159
    %v12161 = vlaneseq
    %v12162 = vshrl.u32 %v12161, 7
    %v12163 = vsub.s32 %v12160, %v12162
    %v12164 = vrot.slane %v12136, %v12163
    %v12165 = vcombine.low %v12143, %v12150
    %v12166 = vcombine.low %v12157, %v12164
    %v12168 = vunpack.c.l.s4 1966171168
    %v12169 = vunpack.c.0.s8 %v12168
    %v12170 = vlaneseq
    %v12171 = vshrl.u32 %v12170, 7
    %v12172 = vsub.s32 %v12169, %v12171
    %v12173 = vrot.slane %v12165, %v12172
    %v12175 = vunpack.c.l.s4 1966171168
    %v12176 = vunpack.c.0.s8 %v12175
    %v12177 = vlaneseq
    %v12178 = vshrl.u32 %v12177, 7
    %v12179 = vsub.s32 %v12176, %v12178
    %v12180 = vrot.slane %v12166, %v12179
    %v12181 = vcombine.low %v12173, %v12180
    %v12182 = vcombine.low %v10637, %v10651
    %v12183 = vcombine.low %v10659, %v10661
    %v12184 = vcombine.low %v10644, %v10658
    %v12185 = vcombine.low %v10660, %v10662
    %v12187 = vunpack.c.l.s4 1966171168
    %v12188 = vunpack.c.0.s8 %v12187
    %v12189 = vlaneseq
    %v12190 = vshrl.u32 %v12189, 7
    %v12191 = vsub.s32 %v12188, %v12190
    %v12192 = vrot.slane %v12182, %v12191
    %v12194 = vunpack.c.l.s4 1966171168
    %v12195 = vunpack.c.0.s8 %v12194
    %v12196 = vlaneseq
    %v12197 = vshrl.u32 %v12196, 7
    %v12198 = vsub.s32 %v12195, %v12197
    %v12199 = vrot.slane %v12183, %v12198
    %v12201 = vunpack.c.l.s4 1966171168
    %v12202 = vunpack.c.0.s8 %v12201
    %v12203 = vlaneseq
    %v12204 = vshrl.u32 %v12203, 7
    %v12205 = vsub.s32 %v12202, %v12204
    %v12206 = vrot.slane %v12184, %v12205
    %v12208 = vunpack.c.l.s4 1966171168
    %v12209 = vunpack.c.0.s8 %v12208
    %v12210 = vlaneseq
    %v12211 = vshrl.u32 %v12210, 7
    %v12212 = vsub.s32 %v12209, %v12211
    %v12213 = vrot.slane %v12185, %v12212
    %v12214 = vcombine.low %v12192, %v12199
    %v12215 = vcombine.low %v12206, %v12213
    %v12217 = vunpack.c.l.s4 1966171168
    %v12218 = vunpack.c.0.s8 %v12217
    %v12219 = vlaneseq
    %v12220 = vshrl.u32 %v12219, 7
    %v12221 = vsub.s32 %v12218, %v12220
    %v12222 = vrot.slane %v12214, %v12221
    %v12224 = vunpack.c.l.s4 1966171168
    %v12225 = vunpack.c.0.s8 %v12224
    %v12226 = vlaneseq
    %v12227 = vshrl.u32 %v12226, 7
    %v12228 = vsub.s32 %v12225, %v12227
    %v12229 = vrot.slane %v12215, %v12228
    %v12230 = vcombine.low %v12222, %v12229
    %v12231 = vcombine.low %v10686, %v10700
    %v12232 = vcombine.low %v10708, %v10710
    %v12233 = vcombine.low %v10693, %v10707
    %v12234 = vcombine.low %v10709, %v10711
    %v12236 = vunpack.c.l.s4 1966171168
    %v12237 = vunpack.c.0.s8 %v12236
    %v12238 = vlaneseq
    %v12239 = vshrl.u32 %v12238, 7
    %v12240 = vsub.s32 %v12237, %v12239
    %v12241 = vrot.slane %v12231, %v12240
    %v12243 = vunpack.c.l.s4 1966171168
    %v12244 = vunpack.c.0.s8 %v12243
    %v12245 = vlaneseq
    %v12246 = vshrl.u32 %v12245, 7
    %v12247 = vsub.s32 %v12244, %v12246
    %v12248 = vrot.slane %v12232, %v12247
    %v12250 = vunpack.c.l.s4 1966171168
    %v12251 = vunpack.c.0.s8 %v12250
    %v12252 = vlaneseq
    %v12253 = vshrl.u32 %v12252, 7
    %v12254 = vsub.s32 %v12251, %v12253
    %v12255 = vrot.slane %v12233, %v12254
    %v12257 = vunpack.c.l.s4 1966171168
    %v12258 = vunpack.c.0.s8 %v12257
    %v12259 = vlaneseq
    %v12260 = vshrl.u32 %v12259, 7
    %v12261 = vsub.s32 %v12258, %v12260
    %v12262 = vrot.slane %v12234, %v12261
    %v12263 = vcombine.low %v12241, %v12248
    %v12264 = vcombine.low %v12255, %v12262
    %v12266 = vunpack.c.l.s4 1966171168
    %v12267 = vunpack.c.0.s8 %v12266
    %v12268 = vlaneseq
    %v12269 = vshrl.u32 %v12268, 7
    %v12270 = vsub.s32 %v12267, %v12269
    %v12271 = vrot.slane %v12263, %v12270
    %v12273 = vunpack.c.l.s4 1966171168
    %v12274 = vunpack.c.0.s8 %v12273
    %v12275 = vlaneseq
    %v12276 = vshrl.u32 %v12275, 7
    %v12277 = vsub.s32 %v12274, %v12276
    %v12278 = vrot.slane %v12264, %v12277
    %v12279 = vcombine.low %v12271, %v12278
    %v12280 = vcombine.low %v10735, %v10749
    %v12281 = vcombine.low %v10757, %v10759
    %v12282 = vcombine.low %v10742, %v10756
    %v12283 = vcombine.low %v10758, %v10760
    %v12285 = vunpack.c.l.s4 1966171168
    %v12286 = vunpack.c.0.s8 %v12285
    %v12287 = vlaneseq
    %v12288 = vshrl.u32 %v12287, 7
    %v12289 = vsub.s32 %v12286, %v12288
    %v12290 = vrot.slane %v12280, %v12289
    %v12292 = vunpack.c.l.s4 1966171168
    %v12293 = vunpack.c.0.s8 %v12292
    %v12294 = vlaneseq
    %v12295 = vshrl.u32 %v12294, 7
    %v12296 = vsub.s32 %v12293, %v12295
    %v12297 = vrot.slane %v12281, %v12296
    %v12299 = vunpack.c.l.s4 1966171168
    %v12300 = vunpack.c.0.s8 %v12299
    %v12301 = vlaneseq
    %v12302 = vshrl.u32 %v12301, 7
    %v12303 = vsub.s32 %v12300, %v12302
    %v12304 = vrot.slane %v12282, %v12303
    %v12306 = vunpack.c.l.s4 1966171168
    %v12307 = vunpack.c.0.s8 %v12306
    %v12308 = vlaneseq
    %v12309 = vshrl.u32 %v12308, 7
    %v12310 = vsub.s32 %v12307, %v12309
    %v12311 = vrot.slane %v12283, %v12310
    %v12312 = vcombine.low %v12290, %v12297
    %v12313 = vcombine.low %v12304, %v12311
    %v12315 = vunpack.c.l.s4 1966171168
    %v12316 = vunpack.c.0.s8 %v12315
    %v12317 = vlaneseq
    %v12318 = vshrl.u32 %v12317, 7
    %v12319 = vsub.s32 %v12316, %v12318
    %v12320 = vrot.slane %v12312, %v12319
    %v12322 = vunpack.c.l.s4 1966171168
    %v12323 = vunpack.c.0.s8 %v12322
    %v12324 = vlaneseq
    %v12325 = vshrl.u32 %v12324, 7
    %v12326 = vsub.s32 %v12323, %v12325
    %v12327 = vrot.slane %v12313, %v12326
    %v12328 = vcombine.low %v12320, %v12327
    %12329 = vset.pattern.permute.xlu0 0
    %12330 = vperm.xlu0 %12329, %v10809
    %v12331 = vpop.permute.xlu0 %12330
    %12332 = vset.pattern.permute.xlu0 0
    %12333 = vperm.xlu0 %12332, %v10858
    %v12334 = vpop.permute.xlu0 %12333
    %12335 = vset.pattern.permute.xlu0 0
    %12336 = vperm.xlu0 %12335, %v10907
    %v12337 = vpop.permute.xlu0 %12336
    %12338 = vset.pattern.permute.xlu0 0
    %12339 = vperm.xlu0 %12338, %v10956
    %v12340 = vpop.permute.xlu0 %12339
    %12341 = vset.pattern.permute.xlu0 0
    %12342 = vperm.xlu0 %12341, %v11005
    %v12343 = vpop.permute.xlu0 %12342
    %12344 = vset.pattern.permute.xlu0 0
    %12345 = vperm.xlu0 %12344, %v11054
    %v12346 = vpop.permute.xlu0 %12345
    %12347 = vset.pattern.permute.xlu0 0
    %12348 = vperm.xlu0 %12347, %v11103
    %v12349 = vpop.permute.xlu0 %12348
    %12350 = vset.pattern.permute.xlu0 0
    %12351 = vperm.xlu0 %12350, %v11152
    %v12352 = vpop.permute.xlu0 %12351
    %12353 = vset.pattern.permute.xlu0 0
    %12354 = vperm.xlu0 %12353, %v11201
    %v12355 = vpop.permute.xlu0 %12354
    %12356 = vset.pattern.permute.xlu0 0
    %12357 = vperm.xlu0 %12356, %v11250
    %v12358 = vpop.permute.xlu0 %12357
    %12359 = vset.pattern.permute.xlu0 0
    %12360 = vperm.xlu0 %12359, %v11299
    %v12361 = vpop.permute.xlu0 %12360
    %12362 = vset.pattern.permute.xlu0 0
    %12363 = vperm.xlu0 %12362, %v11348
    %v12364 = vpop.permute.xlu0 %12363
    %12365 = vset.pattern.permute.xlu0 0
    %12366 = vperm.xlu0 %12365, %v11397
    %v12367 = vpop.permute.xlu0 %12366
    %12368 = vset.pattern.permute.xlu0 0
    %12369 = vperm.xlu0 %12368, %v11446
    %v12370 = vpop.permute.xlu0 %12369
    %12371 = vset.pattern.permute.xlu0 0
    %12372 = vperm.xlu0 %12371, %v11495
    %v12373 = vpop.permute.xlu0 %12372
    %12374 = vset.pattern.permute.xlu0 0
    %12375 = vperm.xlu0 %12374, %v11544
    %v12376 = vpop.permute.xlu0 %12375
    %12377 = vset.pattern.permute.xlu0 0
    %12378 = vperm.xlu0 %12377, %v11593
    %v12379 = vpop.permute.xlu0 %12378
    %12380 = vset.pattern.permute.xlu0 0
    %12381 = vperm.xlu0 %12380, %v11642
    %v12382 = vpop.permute.xlu0 %12381
    %12383 = vset.pattern.permute.xlu0 0
    %12384 = vperm.xlu0 %12383, %v11691
    %v12385 = vpop.permute.xlu0 %12384
    %12386 = vset.pattern.permute.xlu0 0
    %12387 = vperm.xlu0 %12386, %v11740
    %v12388 = vpop.permute.xlu0 %12387
    %12389 = vset.pattern.permute.xlu0 0
    %12390 = vperm.xlu0 %12389, %v11789
    %v12391 = vpop.permute.xlu0 %12390
    %12392 = vset.pattern.permute.xlu0 0
    %12393 = vperm.xlu0 %12392, %v11838
    %v12394 = vpop.permute.xlu0 %12393
    %12395 = vset.pattern.permute.xlu0 0
    %12396 = vperm.xlu0 %12395, %v11887
    %v12397 = vpop.permute.xlu0 %12396
    %12398 = vset.pattern.permute.xlu0 0
    %12399 = vperm.xlu0 %12398, %v11936
    %v12400 = vpop.permute.xlu0 %12399
    %12401 = vset.pattern.permute.xlu0 0
    %12402 = vperm.xlu0 %12401, %v11985
    %v12403 = vpop.permute.xlu0 %12402
    %12404 = vset.pattern.permute.xlu0 0
    %12405 = vperm.xlu0 %12404, %v12034
    %v12406 = vpop.permute.xlu0 %12405
    %12407 = vset.pattern.permute.xlu0 0
    %12408 = vperm.xlu0 %12407, %v12083
    %v12409 = vpop.permute.xlu0 %12408
    %12410 = vset.pattern.permute.xlu0 0
    %12411 = vperm.xlu0 %12410, %v12132
    %v12412 = vpop.permute.xlu0 %12411
    %12413 = vset.pattern.permute.xlu0 0
    %12414 = vperm.xlu0 %12413, %v12181
    %v12415 = vpop.permute.xlu0 %12414
    %12416 = vset.pattern.permute.xlu0 0
    %12417 = vperm.xlu0 %12416, %v12230
    %v12418 = vpop.permute.xlu0 %12417
    %12419 = vset.pattern.permute.xlu0 0
    %12420 = vperm.xlu0 %12419, %v12279
    %v12421 = vpop.permute.xlu0 %12420
    %12422 = vset.pattern.permute.xlu0 0
    %12423 = vperm.xlu0 %12422, %v12328
    %v12424 = vpop.permute.xlu0 %12423
    %v12425 = vlaneseq
    %v12426 = vand.u32 %v12425, 127
    %v12427 = vlaneseq
    %v12428 = vshrl.u32 %v12427, 7
    %v12429 = vsub.s32 %v12426, %v12428
    %v12430 = vrot.slane %v12331, %v12429
    %v12431 = vadd.s32 %v12426, 4294967288
    %v12432 = vlaneseq
    %v12433 = vshrl.u32 %v12432, 7
    %v12434 = vsub.s32 %v12431, %v12433
    %v12435 = vrot.slane %v12334, %v12434
    %vm12436 = vcmask 130112
    %v12437 = vsel %vm12436, %v12435, %v12430
    %v12438 = vadd.s32 %v12426, 4294967280
    %v12439 = vlaneseq
    %v12440 = vshrl.u32 %v12439, 7
    %v12441 = vsub.s32 %v12438, %v12440
    %v12442 = vrot.slane %v12337, %v12441
    %vm12443 = vcmask 195712
    %v12444 = vsel %vm12443, %v12442, %v12437
    %v12445 = vadd.s32 %v12426, 4294967272
    %v12446 = vlaneseq
    %v12447 = vshrl.u32 %v12446, 7
    %v12448 = vsub.s32 %v12445, %v12447
    %v12449 = vrot.slane %v12340, %v12448
    %vm12450 = vcmask 261312
    %v12451 = vsel %vm12450, %v12449, %v12444
    %v12452 = vadd.s32 %v12426, 4294967264
    %v12453 = vlaneseq
    %v12454 = vshrl.u32 %v12453, 7
    %v12455 = vsub.s32 %v12452, %v12454
    %v12456 = vrot.slane %v12343, %v12455
    %vm12457 = vcmask 326912
    %v12458 = vsel %vm12457, %v12456, %v12451
    %v12459 = vadd.s32 %v12426, 4294967256
    %v12460 = vlaneseq
    %v12461 = vshrl.u32 %v12460, 7
    %v12462 = vsub.s32 %v12459, %v12461
    %v12463 = vrot.slane %v12346, %v12462
    %vm12464 = vcmask 392512
    %v12465 = vsel %vm12464, %v12463, %v12458
    %v12466 = vadd.s32 %v12426, 4294967248
    %v12467 = vlaneseq
    %v12468 = vshrl.u32 %v12467, 7
    %v12469 = vsub.s32 %v12466, %v12468
    %v12470 = vrot.slane %v12349, %v12469
    %vm12471 = vcmask 458112
    %v12472 = vsel %vm12471, %v12470, %v12465
    %v12473 = vadd.s32 %v12426, 4294967240
    %v12474 = vlaneseq
    %v12475 = vshrl.u32 %v12474, 7
    %v12476 = vsub.s32 %v12473, %v12475
    %v12477 = vrot.slane %v12352, %v12476
    %vm12478 = vcmask 523712
    %v12479 = vsel %vm12478, %v12477, %v12472
    %v12480 = vadd.s32 %v12426, 4294967232
    %v12481 = vlaneseq
    %v12482 = vshrl.u32 %v12481, 7
    %v12483 = vsub.s32 %v12480, %v12482
    %v12484 = vrot.slane %v12355, %v12483
    %vm12485 = vcmask 589312
    %v12486 = vsel %vm12485, %v12484, %v12479
    %v12487 = vadd.s32 %v12426, 4294967224
    %v12488 = vlaneseq
    %v12489 = vshrl.u32 %v12488, 7
    %v12490 = vsub.s32 %v12487, %v12489
    %v12491 = vrot.slane %v12358, %v12490
    %vm12492 = vcmask 654912
    %v12493 = vsel %vm12492, %v12491, %v12486
    %v12494 = vadd.s32 %v12426, 4294967216
    %v12495 = vlaneseq
    %v12496 = vshrl.u32 %v12495, 7
    %v12497 = vsub.s32 %v12494, %v12496
    %v12498 = vrot.slane %v12361, %v12497
    %vm12499 = vcmask 720512
    %v12500 = vsel %vm12499, %v12498, %v12493
    %v12501 = vadd.s32 %v12426, 4294967208
    %v12502 = vlaneseq
    %v12503 = vshrl.u32 %v12502, 7
    %v12504 = vsub.s32 %v12501, %v12503
    %v12505 = vrot.slane %v12364, %v12504
    %vm12506 = vcmask 786112
    %v12507 = vsel %vm12506, %v12505, %v12500
    %v12508 = vadd.s32 %v12426, 4294967200
    %v12509 = vlaneseq
    %v12510 = vshrl.u32 %v12509, 7
    %v12511 = vsub.s32 %v12508, %v12510
    %v12512 = vrot.slane %v12367, %v12511
    %vm12513 = vcmask 851712
    %v12514 = vsel %vm12513, %v12512, %v12507
    %v12515 = vadd.s32 %v12426, 4294967192
    %v12516 = vlaneseq
    %v12517 = vshrl.u32 %v12516, 7
    %v12518 = vsub.s32 %v12515, %v12517
    %v12519 = vrot.slane %v12370, %v12518
    %vm12520 = vcmask 917312
    %v12521 = vsel %vm12520, %v12519, %v12514
    %v12522 = vadd.s32 %v12426, 4294967184
    %v12523 = vlaneseq
    %v12524 = vshrl.u32 %v12523, 7
    %v12525 = vsub.s32 %v12522, %v12524
    %v12526 = vrot.slane %v12373, %v12525
    %vm12527 = vcmask 982912
    %v12528 = vsel %vm12527, %v12526, %v12521
    %v12529 = vadd.s32 %v12426, 4294967176
    %v12530 = vlaneseq
    %v12531 = vshrl.u32 %v12530, 7
    %v12532 = vsub.s32 %v12529, %v12531
    %v12533 = vrot.slane %v12376, %v12532
    %vm12534 = vcmask 1048512
    %v12535 = vsel %vm12534, %v12533, %v12528
    %v12536 = vlaneseq
    %v12537 = vshrl.u32 %v12536, 7
    %v12538 = vsub.s32 %v12426, %v12537
    %v12539 = vrot.slane %v12379, %v12538
    %v12540 = vlaneseq
    %v12541 = vshrl.u32 %v12540, 7
    %v12542 = vsub.s32 %v12431, %v12541
    %v12543 = vrot.slane %v12382, %v12542
    %v12544 = vsel %vm12436, %v12543, %v12539
    %v12545 = vlaneseq
    %v12546 = vshrl.u32 %v12545, 7
    %v12547 = vsub.s32 %v12438, %v12546
    %v12548 = vrot.slane %v12385, %v12547
    %v12549 = vsel %vm12443, %v12548, %v12544
    %v12550 = vlaneseq
    %v12551 = vshrl.u32 %v12550, 7
    %v12552 = vsub.s32 %v12445, %v12551
    %v12553 = vrot.slane %v12388, %v12552
    %v12554 = vsel %vm12450, %v12553, %v12549
    %v12555 = vlaneseq
    %v12556 = vshrl.u32 %v12555, 7
    %v12557 = vsub.s32 %v12452, %v12556
    %v12558 = vrot.slane %v12391, %v12557
    %v12559 = vsel %vm12457, %v12558, %v12554
    %v12560 = vlaneseq
    %v12561 = vshrl.u32 %v12560, 7
    %v12562 = vsub.s32 %v12459, %v12561
    %v12563 = vrot.slane %v12394, %v12562
    %v12564 = vsel %vm12464, %v12563, %v12559
    %v12565 = vlaneseq
    %v12566 = vshrl.u32 %v12565, 7
    %v12567 = vsub.s32 %v12466, %v12566
    %v12568 = vrot.slane %v12397, %v12567
    %v12569 = vsel %vm12471, %v12568, %v12564
    %v12570 = vlaneseq
    %v12571 = vshrl.u32 %v12570, 7
    %v12572 = vsub.s32 %v12473, %v12571
    %v12573 = vrot.slane %v12400, %v12572
    %v12574 = vsel %vm12478, %v12573, %v12569
    %v12575 = vlaneseq
    %v12576 = vshrl.u32 %v12575, 7
    %v12577 = vsub.s32 %v12480, %v12576
    %v12578 = vrot.slane %v12403, %v12577
    %v12579 = vsel %vm12485, %v12578, %v12574
    %v12580 = vlaneseq
    %v12581 = vshrl.u32 %v12580, 7
    %v12582 = vsub.s32 %v12487, %v12581
    %v12583 = vrot.slane %v12406, %v12582
    %v12584 = vsel %vm12492, %v12583, %v12579
    %v12585 = vlaneseq
    %v12586 = vshrl.u32 %v12585, 7
    %v12587 = vsub.s32 %v12494, %v12586
    %v12588 = vrot.slane %v12409, %v12587
    %v12589 = vsel %vm12499, %v12588, %v12584
    %v12590 = vlaneseq
    %v12591 = vshrl.u32 %v12590, 7
    %v12592 = vsub.s32 %v12501, %v12591
    %v12593 = vrot.slane %v12412, %v12592
    %v12594 = vsel %vm12506, %v12593, %v12589
    %v12595 = vlaneseq
    %v12596 = vshrl.u32 %v12595, 7
    %v12597 = vsub.s32 %v12508, %v12596
    %v12598 = vrot.slane %v12415, %v12597
    %v12599 = vsel %vm12513, %v12598, %v12594
    %v12600 = vlaneseq
    %v12601 = vshrl.u32 %v12600, 7
    %v12602 = vsub.s32 %v12515, %v12601
    %v12603 = vrot.slane %v12418, %v12602
    %v12604 = vsel %vm12520, %v12603, %v12599
    %v12605 = vlaneseq
    %v12606 = vshrl.u32 %v12605, 7
    %v12607 = vsub.s32 %v12522, %v12606
    %v12608 = vrot.slane %v12421, %v12607
    %v12609 = vsel %vm12527, %v12608, %v12604
    %v12610 = vlaneseq
    %v12611 = vshrl.u32 %v12610, 7
    %v12612 = vsub.s32 %v12529, %v12611
    %v12613 = vrot.slane %v12424, %v12612
    %v12614 = vsel %vm12534, %v12613, %v12609
    %v12615 = vcombine.low %v12535, %v12614
    %v12617 = vunpack.c.l.s4 1966171168
    %v12618 = vunpack.c.0.s8 %v12617
    %v12619 = vlaneseq
    %v12620 = vshrl.u32 %v12619, 7
    %v12621 = vsub.s32 %v12618, %v12620
    %v12622 = vrot.slane %v12615, %v12621
    %v12624 = vunpack.c.l.s4 1966171168
    %v12625 = vunpack.c.0.s8 %v12624
    %v12626 = vlaneseq
    %v12627 = vshrl.u32 %v12626, 7
    %v12628 = vsub.s32 %v12625, %v12627
    %v12629 = vrot.slane %v12622, %v12628
    %v12631 = vlaneseq
    %vm12632 = vcmp.ge.s32.totalorder %v12631, 0
    %vm12633 = vcmp.lt.s32.totalorder %v12631, 256
    %vm12634 = vmand %vm12632, %vm12633
    %12635 = vst.msk [vmem:[#allocation14] sm:$0x3] %vm12634, %v12629
    // Predicated region
    $region54: #{tpu_custom_call.1} parent=1 // pred_check
      _
    $region55: #{tpu_custom_call.1} parent=1 // pred_check_branch
      %12637 = sbr.rel (0) target = $region57
    $region56: #{tpu_custom_call.1} parent=1 // pred_region
      %s12639 = ssub.s32 32, 32
      %12640 = vsyncadd [#allocation5], %s12639
      %s12642 = sshll.u32 [#allocation14], 4
      %s12643 = int_to_ptr.vmem [resolvable:$true] %s12642
      %12645 = dma.vmem_to_hbm [thread:$0]  %s12643, 32, %s7, [#allocation5]
    $region57: #{tpu_custom_call.1} parent=1 // pred_fallthru
      _
    // Predicated region
    $region58: #{tpu_custom_call.1} parent=1 // pred_check
      _
    $region59: #{tpu_custom_call.1} parent=1 // pred_check_branch
      %12647 = sbr.rel (0) target = $region61
    $region60: #{tpu_custom_call.1} parent=1 // pred_region
      %12648 = dma.done [#allocation5], 32
    $region61: #{tpu_custom_call.1} parent=1 // pred_fallthru
      _
    %12649 = vsyncpa [#allocation4], 1
    %12650 = vsyncpa [#allocation7], 1
    %12651 = vsyncpa [#allocation10], 1
    %12652 = vsyncpa [#allocation13], 1
    %12653 = vsyncpa [#allocation5], 1

</llo_original>
